<compile_context>
chip_gen: v7x
topology: tpu7x:2x2x1
jax: 0.10.0
libtpu: 0.0.40
codegen_flags: <defaults>
</compile_context>

<pallas_src>
import jax
import jax.numpy as jnp
from jax.experimental import pallas as pl
from jax.experimental.pallas import tpu as pltpu


def _round_up(x, m):
    return (x + m - 1) // m * m


def _choose_tm(m):
    if m >= 1024:
        return 256          # bigger M tiles for the late (large-M) layers
    if m >= 128:
        return 128
    return _round_up(m, 16)  # tiny layers: one block equal to the full M


# ---------------------------------------------------------------------------
# Pallas kernels
# ---------------------------------------------------------------------------

def _mm_bias_stats_kernel(x_ref, w_ref, b_ref, o_ref, sum_ref, ssq_ref):
    """out = x@w + b (bf16) ; also per-column sum / sumsq of the f32 accumulator
    (pre-bias), so BatchNorm statistics need no extra pass over the activation."""
    acc = jnp.dot(x_ref[...], w_ref[...], preferred_element_type=jnp.float32)
    sum_ref[...] = jnp.sum(acc, axis=0, keepdims=True)[None]
    ssq_ref[...] = jnp.sum(acc * acc, axis=0, keepdims=True)[None]
    o_ref[...] = (acc + b_ref[...]).astype(o_ref.dtype)


def _mm_bias_tanh_kernel(x_ref, w_ref, b_ref, o_ref):
    """Final layer: tanh fused into the matmul epilogue (EUP slot is free)."""
    acc = jnp.dot(x_ref[...], w_ref[...], preferred_element_type=jnp.float32)
    o_ref[...] = jnp.tanh(acc + b_ref[...]).astype(o_ref.dtype)


def _affine_relu_kernel(x_ref, scale_ref, shift_ref, o_ref):
    y = x_ref[...].astype(jnp.float32) * scale_ref[...] + shift_ref[...]
    o_ref[...] = jnp.maximum(y, 0.0).astype(o_ref.dtype)


# ---------------------------------------------------------------------------
# Pallas wrappers
# ---------------------------------------------------------------------------

def matmul_fused(x, w, b, *, epilogue, tn=128):
    """(M,K)bf16 @ (K,N)bf16 + b[N].
    epilogue='stats' -> (out bf16, col_sum f32[N], col_sumsq f32[N])  (sums of
                        the pre-bias accumulator; zero-padded rows add nothing)
    epilogue='tanh'  -> tanh(out) as f32.
    K is taken as a single tile (K <= 2048 here), so the grid is 2-D."""
    M, K = x.shape
    K2, N = w.shape
    assert K == K2 and N % tn == 0 and K % 8 == 0
    tm = _choose_tm(M)
    Mp = _round_up(M, tm)
    if Mp != M:
        x = jnp.pad(x, ((0, Mp - M), (0, 0)))
    nm, nn = Mp // tm, N // tn
    b2 = b.reshape(1, N).astype(jnp.float32)

    in_specs = (
        pl.BlockSpec((tm, K), lambda i, j: (i, 0)),
        pl.BlockSpec((K, tn), lambda i, j: (0, j)),
        pl.BlockSpec((1, tn), lambda i, j: (0, j)),
    )
    if epilogue == "stats":
        kernel = _mm_bias_stats_kernel
        out_shape = (
            jax.ShapeDtypeStruct((Mp, N), jnp.bfloat16),
            jax.ShapeDtypeStruct((nm, 1, N), jnp.float32),
            jax.ShapeDtypeStruct((nm, 1, N), jnp.float32),
        )
        out_specs = (
            pl.BlockSpec((tm, tn), lambda i, j: (i, j)),
            pl.BlockSpec((1, 1, tn), lambda i, j: (i, 0, j)),
            pl.BlockSpec((1, 1, tn), lambda i, j: (i, 0, j)),
        )
    else:  # 'tanh'
        kernel = _mm_bias_tanh_kernel
        out_shape = jax.ShapeDtypeStruct((Mp, N), jnp.float32)
        out_specs = pl.BlockSpec((tm, tn), lambda i, j: (i, j))

    res = pl.pallas_call(
        kernel,
        out_shape=out_shape,
        grid_spec=pltpu.PrefetchScalarGridSpec(
            num_scalar_prefetch=0,
            grid=(nm, nn),
            in_specs=in_specs,
            out_specs=out_specs,
        ),
        compiler_params=pltpu.CompilerParams(
            dimension_semantics=("parallel", "parallel")),
    )(x, w, b2)

    if epilogue == "stats":
        out, s, q = res
        return out, s.reshape(nm, N).sum(axis=0), q.reshape(nm, N).sum(axis=0)
    return res


def affine_relu(x2d, scale, shift, *, tr=512):
    """relu(x * scale + shift), per-column scale/shift; tiled rows, lane-dense N."""
    M, N = x2d.shape
    assert N % 128 == 0
    if M < tr:
        tr = _round_up(M, 16)
    Mp = _round_up(M, tr)
    if Mp != M:
        x2d = jnp.pad(x2d, ((0, Mp - M), (0, 0)))
    out = pl.pallas_call(
        _affine_relu_kernel,
        out_shape=jax.ShapeDtypeStruct((Mp, N), jnp.bfloat16),
        grid_spec=pltpu.PrefetchScalarGridSpec(
            num_scalar_prefetch=0,
            grid=(Mp // tr,),
            in_specs=[
                pl.BlockSpec((tr, N), lambda i: (i, 0)),
                pl.BlockSpec((1, N), lambda i: (0, 0)),
                pl.BlockSpec((1, N), lambda i: (0, 0)),
            ],
            out_specs=pl.BlockSpec((tr, N), lambda i: (i, 0)),
        ),
        compiler_params=pltpu.CompilerParams(dimension_semantics=("parallel",)),
    )(x2d, scale.reshape(1, N).astype(jnp.float32),
      shift.reshape(1, N).astype(jnp.float32))
    return out[:M] if Mp != M else out


def _bn_scale_shift(col_sum, col_ssq, bias, gamma, beta, count, eps=1e-5):
    """Training-mode BatchNorm (biased variance) from single-pass column sums
    of the PRE-bias accumulator: mean(out)=sum/count+bias, var(out)=var(acc)."""
    mean_acc = col_sum / count
    var = jnp.maximum(col_ssq / count - mean_acc * mean_acc, 0.0)
    mean = mean_acc + bias
    inv = jax.lax.rsqrt(var + eps)
    scale = gamma * inv
    shift = beta - mean * scale
    return scale, shift


# ---------------------------------------------------------------------------
# Phase decomposition of ConvTranspose2d(k=4, stride=2, pad=1)
#   out[2q+py, 2r+px] = b + sum_{ty,tx,ci} x[q+dy[ty], r+dx[tx], ci] * W[ci,:,ky[ty],kx[tx]]
#   py=0: (ky,dy) in {(1,0),(3,-1)} ; py=1: {(0,+1),(2,0)}   (same for x axis)
# ---------------------------------------------------------------------------
_K_TAPS = {0: (1, 3), 1: (0, 2)}
_D_TAPS = {0: (0, -1), 1: (1, 0)}
_PHASES = [(0, 0), (0, 1), (1, 0), (1, 1)]


class ImageGeneratorPallas:
    """Mirror of the PyTorch ImageGenerator forward pass (training-mode BN)."""

    def __init__(self, z_dim=100, channels=3, key=None):
        specs = [(z_dim, 512, 1, 0),
                 (512, 256, 2, 1),
                 (256, 128, 2, 1),
                 (128, 64, 2, 1),
                 (64, channels, 2, 1)]
        keys = jax.random.split(key, 2 * len(specs))
        raw = []
        for i, (cin, cout, _s, _p) in enumerate(specs):
            w = 0.02 * jax.random.normal(keys[2 * i], (cin, cout, 4, 4), jnp.float32)
            b = 0.01 * jax.random.normal(keys[2 * i + 1], (cout,), jnp.float32)
            raw.append((w, b, cin, cout))

        # ---- layer 1: stride 1, pad 0, 1x1 input -> pure GEMM, cols = (oy,ox,co)
        w0, b0, cin0, cout0 = raw[0]
        kp = _round_up(cin0, 8)
        wmat0 = jnp.transpose(w0, (0, 2, 3, 1)).reshape(cin0, 16 * cout0)
        wmat0 = jnp.pad(wmat0, ((0, kp - cin0), (0, 0))).astype(jnp.bfloat16)
        self.layer0 = dict(
            w=wmat0, bias_cols=jnp.tile(b0, 16), b=b0,
            gamma=jnp.ones((cout0,), jnp.float32),
            beta=jnp.zeros((cout0,), jnp.float32),
            cout=cout0, kp=kp)

        # ---- layers 2..5: stride 2 -> 4 phase weight matrices (4*Cin, Cout_pad)
        self.layers = []
        for (w, b, cin, cout) in raw[1:]:
            cpad = _round_up(cout, 128)
            wlist = []
            for (py, px) in _PHASES:
                wg = w[:, :, list(_K_TAPS[py]), :][:, :, :, list(_K_TAPS[px])]
                wg = jnp.transpose(wg, (2, 3, 0, 1)).reshape(4 * cin, cout)
                wg = jnp.pad(wg, ((0, 0), (0, cpad - cout))).astype(jnp.bfloat16)
                wlist.append(wg)
            self.layers.append(dict(
                w=wlist,
                bias_pad=jnp.pad(b, (0, cpad - cout)),
                gamma_pad=jnp.pad(jnp.ones((cout,), jnp.float32), (0, cpad - cout)),
                beta_pad=jnp.zeros((cpad,), jnp.float32),
                cout=cout, cpad=cpad))
        # TODO(synk): BN running_mean/running_var buffer updates (training
        # side-effect) are not modeled; they do not affect train-mode outputs.

    # ---- one stride-2 transposed-conv layer via 4 phase GEMMs ----
    def _deconv_s2(self, x, lp, last):
        B, H, W, Cin = x.shape
        cout, cpad = lp["cout"], lp["cpad"]
        xpad = jnp.pad(x, ((0, 0), (1, 1), (1, 1), (0, 0)))
        M = B * H * W
        phase_outs = []
        col_sum = jnp.zeros((cpad,), jnp.float32)
        col_ssq = jnp.zeros((cpad,), jnp.float32)
        for pi, (py, px) in enumerate(_PHASES):
            views = [xpad[:, 1 + dy:1 + dy + H, 1 + dx:1 + dx + W, :]
                     for dy in _D_TAPS[py] for dx in _D_TAPS[px]]
            patches = jnp.stack(views, axis=3).reshape(M, 4 * Cin)
            patches = patches.astype(jnp.bfloat16)
            if last:
                o = matmul_fused(patches, lp["w"][pi], lp["bias_pad"],
                                 epilogue="tanh")
                phase_outs.append(o[:M, :cout].reshape(B, H, W, cout))
            else:
                o, s, q = matmul_fused(patches, lp["w"][pi], lp["bias_pad"],
                                       epilogue="stats")
                col_sum = col_sum + s
                col_ssq = col_ssq + q
                phase_outs.append(o)            # padded (Mp, cpad) bf16 slab

        if not last:
            scale, shift = _bn_scale_shift(col_sum, col_ssq, lp["bias_pad"],
                                           lp["gamma_pad"], lp["beta_pad"],
                                           count=float(4 * M))
            phase_outs = [affine_relu(o, scale, shift)[:M, :cout]
                          .reshape(B, H, W, cout) for o in phase_outs]

        # interleave the 4 phases -> (B, 2H, 2W, cout)
        y = jnp.stack(phase_outs, axis=3).reshape(B, H, W, 2, 2, cout)
        y = jnp.transpose(y, (0, 1, 3, 2, 4, 5)).reshape(B, 2 * H, 2 * W, cout)
        return y

    def __call__(self, z):
        B, zdim = z.shape
        p0 = self.layer0
        cout = p0["cout"]

        # layer 1: (B, z) @ (z, 4*4*Cout)  [+ fused single-pass BN stats]
        z2 = jnp.pad(z, ((0, 0), (0, p0["kp"] - zdim))).astype(jnp.bfloat16)
        out, s, q = matmul_fused(z2, p0["w"], p0["bias_cols"], epilogue="stats")
        s = s.reshape(16, cout).sum(axis=0)     # fold (oy,ox) into the batch axis
        q = q.reshape(16, cout).sum(axis=0)
        scale, shift = _bn_scale_shift(s, q, p0["b"], p0["gamma"], p0["beta"],
                                       count=float(B * 16))
        a = out[:B].reshape(B * 16, cout)       # row-major view: rows=(b,oy,ox)
        a = affine_relu(a, scale, shift)
        x = a.reshape(B, 4, 4, cout)            # NHWC, bf16

        # layers 2..5: phase-decomposed stride-2 transposed convs
        nlayers = len(self.layers)
        for li, lp in enumerate(self.layers):
            x = self._deconv_s2(x, lp, last=(li == nlayers - 1))

        return jnp.transpose(x.astype(jnp.float32), (0, 3, 1, 2))   # NCHW


if __name__ == "__main__":
    key = jax.random.PRNGKey(0)
    kz, kparams = jax.random.split(key)

    batch, z_dim, channels = 2, 32, 3
    gen = ImageGeneratorPallas(z_dim=z_dim, channels=channels, key=kparams)
    z = jax.random.normal(kz, (batch, z_dim), jnp.float32)

    img = jax.jit(gen.__call__)(z)
    img = jax.block_until_ready(img)

    assert img.shape == (batch, channels, 64, 64), img.shape
    assert img.dtype == jnp.float32
    assert bool(jnp.all(jnp.isfinite(img)))
    assert bool(jnp.all(jnp.abs(img) <= 1.0))   # Tanh output range
    print("KERNEL_OK")
</pallas_src>

<mosaic_0001>
module attributes {stable_mosaic.version = 11 : i64} {
  func.func @_mm_bias_stats_kernel(%arg0: i32, %arg1: i32, %arg2: memref<16x32xbf16, #tpu.memory_space<vmem>>, %arg3: memref<32x128xbf16, #tpu.memory_space<vmem>>, %arg4: memref<1x128xf32, #tpu.memory_space<vmem>>, %arg5: memref<16x128xbf16, #tpu.memory_space<vmem>>, %arg6: memref<1x1x128xf32, #tpu.memory_space<vmem>>, %arg7: memref<1x1x128xf32, #tpu.memory_space<vmem>>) attributes {dimension_semantics = [#tpu.dimension_semantics<parallel>, #tpu.dimension_semantics<parallel>], iteration_bounds = array<i64: 1, 64>, scalar_prefetch = 0 : i64, scratch_operands = 0 : i64, tpu.core_type = #tpu.core_type<tc>, window_params = [{transform_indices = @transform_0, window_bounds = array<i64: 16, 32>}, {transform_indices = @transform_1, window_bounds = array<i64: 32, 128>}, {transform_indices = @transform_2, window_bounds = array<i64: 1, 128>}, {transform_indices = @transform_3, window_bounds = array<i64: 16, 128>}, {transform_indices = @transform_4, window_bounds = array<i64: 1, 1, 128>}, {transform_indices = @transform_5, window_bounds = array<i64: 1, 1, 128>}]} {
    %c0 = arith.constant 0 : index
    %c0_0 = arith.constant 0 : index
    %0 = vector.load %arg2[%c0, %c0_0] : memref<16x32xbf16, #tpu.memory_space<vmem>>, vector<16x32xbf16>
    %c0_1 = arith.constant 0 : index
    %c0_2 = arith.constant 0 : index
    %1 = vector.load %arg3[%c0_1, %c0_2] : memref<32x128xbf16, #tpu.memory_space<vmem>>, vector<32x128xbf16>
    %cst = arith.constant dense<0.000000e+00> : vector<16x128xf32>
    %2 = tpu.matmul %0, %1, %cst {dimension_numbers = #tpu.dot_dimension_numbers<[1], [0], [0], [1], [0, 0, 1, 1], [], []>} : vector<16x32xbf16>, vector<32x128xbf16>, vector<16x128xf32> -> vector<16x128xf32>
    %cst_3 = arith.constant dense<0.000000e+00> : vector<128xf32>
    %3 = vector.multi_reduction <add>, %2, %cst_3 [0] : vector<16x128xf32> to vector<128xf32>
    %4 = vector.shape_cast %3 : vector<128xf32> to vector<1x128xf32>
    %5 = vector.shape_cast %4 : vector<1x128xf32> to vector<1x1x128xf32>
    %c0_4 = arith.constant 0 : index
    %c0_5 = arith.constant 0 : index
    %c0_6 = arith.constant 0 : index
    %6 = vector.load %arg6[%c0_4, %c0_5, %c0_6] : memref<1x1x128xf32, #tpu.memory_space<vmem>>, vector<1x1x128xf32>
    tpu.vector_store %arg6[%c0_4, %c0_5, %c0_6], %5 {strides = array<i32>} : memref<1x1x128xf32, #tpu.memory_space<vmem>>, vector<1x1x128xf32>,
    %7 = arith.mulf %2, %2 : vector<16x128xf32>
    %cst_7 = arith.constant dense<0.000000e+00> : vector<128xf32>
    %8 = vector.multi_reduction <add>, %7, %cst_7 [0] : vector<16x128xf32> to vector<128xf32>
    %9 = vector.shape_cast %8 : vector<128xf32> to vector<1x128xf32>
    %10 = vector.shape_cast %9 : vector<1x128xf32> to vector<1x1x128xf32>
    %c0_8 = arith.constant 0 : index
    %c0_9 = arith.constant 0 : index
    %c0_10 = arith.constant 0 : index
    %11 = vector.load %arg7[%c0_8, %c0_9, %c0_10] : memref<1x1x128xf32, #tpu.memory_space<vmem>>, vector<1x1x128xf32>
    tpu.vector_store %arg7[%c0_8, %c0_9, %c0_10], %10 {strides = array<i32>} : memref<1x1x128xf32, #tpu.memory_space<vmem>>, vector<1x1x128xf32>,
    %c0_11 = arith.constant 0 : index
    %c0_12 = arith.constant 0 : index
    %12 = vector.load %arg4[%c0_11, %c0_12] : memref<1x128xf32, #tpu.memory_space<vmem>>, vector<1x128xf32>
    %13 = vector.broadcast %12 : vector<1x128xf32> to vector<16x128xf32>
    %14 = arith.addf %2, %13 : vector<16x128xf32>
    %15 = arith.truncf %14 : vector<16x128xf32> to vector<16x128xbf16>
    %c0_13 = arith.constant 0 : index
    %c0_14 = arith.constant 0 : index
    %16 = vector.load %arg5[%c0_13, %c0_14] : memref<16x128xbf16, #tpu.memory_space<vmem>>, vector<16x128xbf16>
    tpu.vector_store %arg5[%c0_13, %c0_14], %15 {strides = array<i32>} : memref<16x128xbf16, #tpu.memory_space<vmem>>, vector<16x128xbf16>,
    return
  }
  func.func @transform_0(%arg0: i32, %arg1: i32) -> (i32, i32) {
    %c0_i32 = arith.constant 0 : i32
    %c0_i32_0 = arith.constant 0 : i32
    return %arg0, %c0_i32 : i32, i32
  }
  func.func @transform_1(%arg0: i32, %arg1: i32) -> (i32, i32) {
    %c0_i32 = arith.constant 0 : i32
    %c0_i32_0 = arith.constant 0 : i32
    return %c0_i32, %arg1 : i32, i32
  }
  func.func @transform_2(%arg0: i32, %arg1: i32) -> (i32, i32) {
    %c0_i32 = arith.constant 0 : i32
    %c0_i32_0 = arith.constant 0 : i32
    return %c0_i32, %arg1 : i32, i32
  }
  func.func @transform_3(%arg0: i32, %arg1: i32) -> (i32, i32) {
    %c0_i32 = arith.constant 0 : i32
    return %arg0, %arg1 : i32, i32
  }
  func.func @transform_4(%arg0: i32, %arg1: i32) -> (i32, i32, i32) {
    %c0_i32 = arith.constant 0 : i32
    %c0_i32_0 = arith.constant 0 : i32
    return %arg0, %c0_i32, %arg1 : i32, i32, i32
  }
  func.func @transform_5(%arg0: i32, %arg1: i32) -> (i32, i32, i32) {
    %c0_i32 = arith.constant 0 : i32
    %c0_i32_0 = arith.constant 0 : i32
    return %arg0, %c0_i32, %arg1 : i32, i32, i32
  }
}

module attributes {stable_mosaic.version = 11 : i64} {
  func.func @_affine_relu_kernel(%arg0: i32, %arg1: memref<32x512xbf16, #tpu.memory_space<vmem>>, %arg2: memref<1x512xf32, #tpu.memory_space<vmem>>, %arg3: memref<1x512xf32, #tpu.memory_space<vmem>>, %arg4: memref<32x512xbf16, #tpu.memory_space<vmem>>) attributes {dimension_semantics = [#tpu.dimension_semantics<parallel>], iteration_bounds = array<i64: 1>, scalar_prefetch = 0 : i64, scratch_operands = 0 : i64, tpu.core_type = #tpu.core_type<tc>, window_params = [{transform_indices = @transform_0, window_bounds = array<i64: 32, 512>}, {pipeline_mode = #tpu.pipeline_mode<synchronous>, transform_indices = @transform_1, window_bounds = array<i64: 1, 512>}, {pipeline_mode = #tpu.pipeline_mode<synchronous>, transform_indices = @transform_2, window_bounds = array<i64: 1, 512>}, {transform_indices = @transform_3, window_bounds = array<i64: 32, 512>}]} {
    %c0 = arith.constant 0 : index
    %c0_0 = arith.constant 0 : index
    %0 = vector.load %arg1[%c0, %c0_0] : memref<32x512xbf16, #tpu.memory_space<vmem>>, vector<32x512xbf16>
    %1 = arith.extf %0 : vector<32x512xbf16> to vector<32x512xf32>
    %c0_1 = arith.constant 0 : index
    %c0_2 = arith.constant 0 : index
    %2 = vector.load %arg2[%c0_1, %c0_2] : memref<1x512xf32, #tpu.memory_space<vmem>>, vector<1x512xf32>
    %3 = vector.broadcast %2 : vector<1x512xf32> to vector<32x512xf32>
    %4 = arith.mulf %1, %3 : vector<32x512xf32>
    %c0_3 = arith.constant 0 : index
    %c0_4 = arith.constant 0 : index
    %5 = vector.load %arg3[%c0_3, %c0_4] : memref<1x512xf32, #tpu.memory_space<vmem>>, vector<1x512xf32>
    %6 = vector.broadcast %5 : vector<1x512xf32> to vector<32x512xf32>
    %7 = arith.addf %4, %6 : vector<32x512xf32>
    %cst = arith.constant 0.000000e+00 : f32
    %8 = vector.broadcast %cst : f32 to vector<32x512xf32>
    %9 = arith.maximumf %7, %8 : vector<32x512xf32>
    %10 = arith.truncf %9 : vector<32x512xf32> to vector<32x512xbf16>
    %c0_5 = arith.constant 0 : index
    %c0_6 = arith.constant 0 : index
    %11 = vector.load %arg4[%c0_5, %c0_6] : memref<32x512xbf16, #tpu.memory_space<vmem>>, vector<32x512xbf16>
    tpu.vector_store %arg4[%c0_5, %c0_6], %10 {strides = array<i32>} : memref<32x512xbf16, #tpu.memory_space<vmem>>, vector<32x512xbf16>,
    return
  }
  func.func @transform_0(%arg0: i32) -> (i32, i32) {
    %c0_i32 = arith.constant 0 : i32
    %c0_i32_0 = arith.constant 0 : i32
    return %arg0, %c0_i32 : i32, i32
  }
  func.func @transform_1(%arg0: i32) -> (i32, i32) {
    %c0_i32 = arith.constant 0 : i32
    %c0_i32_0 = arith.constant 0 : i32
    %c0_i32_1 = arith.constant 0 : i32
    return %c0_i32, %c0_i32_0 : i32, i32
  }
  func.func @transform_2(%arg0: i32) -> (i32, i32) {
    %c0_i32 = arith.constant 0 : i32
    %c0_i32_0 = arith.constant 0 : i32
    %c0_i32_1 = arith.constant 0 : i32
    return %c0_i32, %c0_i32_0 : i32, i32
  }
  func.func @transform_3(%arg0: i32) -> (i32, i32) {
    %c0_i32 = arith.constant 0 : i32
    %c0_i32_0 = arith.constant 0 : i32
    return %arg0, %c0_i32 : i32, i32
  }
}

module attributes {stable_mosaic.version = 11 : i64} {
  func.func @_mm_bias_stats_kernel(%arg0: i32, %arg1: i32, %arg2: memref<32x2048xbf16, #tpu.memory_space<vmem>>, %arg3: memref<2048x128xbf16, #tpu.memory_space<vmem>>, %arg4: memref<1x128xf32, #tpu.memory_space<vmem>>, %arg5: memref<32x128xbf16, #tpu.memory_space<vmem>>, %arg6: memref<1x1x128xf32, #tpu.memory_space<vmem>>, %arg7: memref<1x1x128xf32, #tpu.memory_space<vmem>>) attributes {dimension_semantics = [#tpu.dimension_semantics<parallel>, #tpu.dimension_semantics<parallel>], iteration_bounds = array<i64: 1, 2>, scalar_prefetch = 0 : i64, scratch_operands = 0 : i64, tpu.core_type = #tpu.core_type<tc>, window_params = [{transform_indices = @transform_0, window_bounds = array<i64: 32, 2048>}, {transform_indices = @transform_1, window_bounds = array<i64: 2048, 128>}, {transform_indices = @transform_2, window_bounds = array<i64: 1, 128>}, {transform_indices = @transform_3, window_bounds = array<i64: 32, 128>}, {transform_indices = @transform_4, window_bounds = array<i64: 1, 1, 128>}, {transform_indices = @transform_5, window_bounds = array<i64: 1, 1, 128>}]} {
    %c0 = arith.constant 0 : index
    %c0_0 = arith.constant 0 : index
    %0 = vector.load %arg2[%c0, %c0_0] : memref<32x2048xbf16, #tpu.memory_space<vmem>>, vector<32x2048xbf16>
    %c0_1 = arith.constant 0 : index
    %c0_2 = arith.constant 0 : index
    %1 = vector.load %arg3[%c0_1, %c0_2] : memref<2048x128xbf16, #tpu.memory_space<vmem>>, vector<2048x128xbf16>
    %cst = arith.constant dense<0.000000e+00> : vector<32x128xf32>
    %2 = tpu.matmul %0, %1, %cst {dimension_numbers = #tpu.dot_dimension_numbers<[1], [0], [0], [1], [0, 0, 1, 1], [], []>} : vector<32x2048xbf16>, vector<2048x128xbf16>, vector<32x128xf32> -> vector<32x128xf32>
    %cst_3 = arith.constant dense<0.000000e+00> : vector<128xf32>
    %3 = vector.multi_reduction <add>, %2, %cst_3 [0] : vector<32x128xf32> to vector<128xf32>
    %4 = vector.shape_cast %3 : vector<128xf32> to vector<1x128xf32>
    %5 = vector.shape_cast %4 : vector<1x128xf32> to vector<1x1x128xf32>
    %c0_4 = arith.constant 0 : index
    %c0_5 = arith.constant 0 : index
    %c0_6 = arith.constant 0 : index
    %6 = vector.load %arg6[%c0_4, %c0_5, %c0_6] : memref<1x1x128xf32, #tpu.memory_space<vmem>>, vector<1x1x128xf32>
    tpu.vector_store %arg6[%c0_4, %c0_5, %c0_6], %5 {strides = array<i32>} : memref<1x1x128xf32, #tpu.memory_space<vmem>>, vector<1x1x128xf32>,
    %7 = arith.mulf %2, %2 : vector<32x128xf32>
    %cst_7 = arith.constant dense<0.000000e+00> : vector<128xf32>
    %8 = vector.multi_reduction <add>, %7, %cst_7 [0] : vector<32x128xf32> to vector<128xf32>
    %9 = vector.shape_cast %8 : vector<128xf32> to vector<1x128xf32>
    %10 = vector.shape_cast %9 : vector<1x128xf32> to vector<1x1x128xf32>
    %c0_8 = arith.constant 0 : index
    %c0_9 = arith.constant 0 : index
    %c0_10 = arith.constant 0 : index
    %11 = vector.load %arg7[%c0_8, %c0_9, %c0_10] : memref<1x1x128xf32, #tpu.memory_space<vmem>>, vector<1x1x128xf32>
    tpu.vector_store %arg7[%c0_8, %c0_9, %c0_10], %10 {strides = array<i32>} : memref<1x1x128xf32, #tpu.memory_space<vmem>>, vector<1x1x128xf32>,
    %c0_11 = arith.constant 0 : index
    %c0_12 = arith.constant 0 : index
    %12 = vector.load %arg4[%c0_11, %c0_12] : memref<1x128xf32, #tpu.memory_space<vmem>>, vector<1x128xf32>
    %13 = vector.broadcast %12 : vector<1x128xf32> to vector<32x128xf32>
    %14 = arith.addf %2, %13 : vector<32x128xf32>
    %15 = arith.truncf %14 : vector<32x128xf32> to vector<32x128xbf16>
    %c0_13 = arith.constant 0 : index
    %c0_14 = arith.constant 0 : index
    %16 = vector.load %arg5[%c0_13, %c0_14] : memref<32x128xbf16, #tpu.memory_space<vmem>>, vector<32x128xbf16>
    tpu.vector_store %arg5[%c0_13, %c0_14], %15 {strides = array<i32>} : memref<32x128xbf16, #tpu.memory_space<vmem>>, vector<32x128xbf16>,
    return
  }
  func.func @transform_0(%arg0: i32, %arg1: i32) -> (i32, i32) {
    %c0_i32 = arith.constant 0 : i32
    %c0_i32_0 = arith.constant 0 : i32
    return %arg0, %c0_i32 : i32, i32
  }
  func.func @transform_1(%arg0: i32, %arg1: i32) -> (i32, i32) {
    %c0_i32 = arith.constant 0 : i32
    %c0_i32_0 = arith.constant 0 : i32
    return %c0_i32, %arg1 : i32, i32
  }
  func.func @transform_2(%arg0: i32, %arg1: i32) -> (i32, i32) {
    %c0_i32 = arith.constant 0 : i32
    %c0_i32_0 = arith.constant 0 : i32
    return %c0_i32, %arg1 : i32, i32
  }
  func.func @transform_3(%arg0: i32, %arg1: i32) -> (i32, i32) {
    %c0_i32 = arith.constant 0 : i32
    return %arg0, %arg1 : i32, i32
  }
  func.func @transform_4(%arg0: i32, %arg1: i32) -> (i32, i32, i32) {
    %c0_i32 = arith.constant 0 : i32
    %c0_i32_0 = arith.constant 0 : i32
    return %arg0, %c0_i32, %arg1 : i32, i32, i32
  }
  func.func @transform_5(%arg0: i32, %arg1: i32) -> (i32, i32, i32) {
    %c0_i32 = arith.constant 0 : i32
    %c0_i32_0 = arith.constant 0 : i32
    return %arg0, %c0_i32, %arg1 : i32, i32, i32
  }
}

module attributes {stable_mosaic.version = 11 : i64} {
  func.func @_affine_relu_kernel(%arg0: i32, %arg1: memref<32x256xbf16, #tpu.memory_space<vmem>>, %arg2: memref<1x256xf32, #tpu.memory_space<vmem>>, %arg3: memref<1x256xf32, #tpu.memory_space<vmem>>, %arg4: memref<32x256xbf16, #tpu.memory_space<vmem>>) attributes {dimension_semantics = [#tpu.dimension_semantics<parallel>], iteration_bounds = array<i64: 1>, scalar_prefetch = 0 : i64, scratch_operands = 0 : i64, tpu.core_type = #tpu.core_type<tc>, window_params = [{transform_indices = @transform_0, window_bounds = array<i64: 32, 256>}, {pipeline_mode = #tpu.pipeline_mode<synchronous>, transform_indices = @transform_1, window_bounds = array<i64: 1, 256>}, {pipeline_mode = #tpu.pipeline_mode<synchronous>, transform_indices = @transform_2, window_bounds = array<i64: 1, 256>}, {transform_indices = @transform_3, window_bounds = array<i64: 32, 256>}]} {
    %c0 = arith.constant 0 : index
    %c0_0 = arith.constant 0 : index
    %0 = vector.load %arg1[%c0, %c0_0] : memref<32x256xbf16, #tpu.memory_space<vmem>>, vector<32x256xbf16>
    %1 = arith.extf %0 : vector<32x256xbf16> to vector<32x256xf32>
    %c0_1 = arith.constant 0 : index
    %c0_2 = arith.constant 0 : index
    %2 = vector.load %arg2[%c0_1, %c0_2] : memref<1x256xf32, #tpu.memory_space<vmem>>, vector<1x256xf32>
    %3 = vector.broadcast %2 : vector<1x256xf32> to vector<32x256xf32>
    %4 = arith.mulf %1, %3 : vector<32x256xf32>
    %c0_3 = arith.constant 0 : index
    %c0_4 = arith.constant 0 : index
    %5 = vector.load %arg3[%c0_3, %c0_4] : memref<1x256xf32, #tpu.memory_space<vmem>>, vector<1x256xf32>
    %6 = vector.broadcast %5 : vector<1x256xf32> to vector<32x256xf32>
    %7 = arith.addf %4, %6 : vector<32x256xf32>
    %cst = arith.constant 0.000000e+00 : f32
    %8 = vector.broadcast %cst : f32 to vector<32x256xf32>
    %9 = arith.maximumf %7, %8 : vector<32x256xf32>
    %10 = arith.truncf %9 : vector<32x256xf32> to vector<32x256xbf16>
    %c0_5 = arith.constant 0 : index
    %c0_6 = arith.constant 0 : index
    %11 = vector.load %arg4[%c0_5, %c0_6] : memref<32x256xbf16, #tpu.memory_space<vmem>>, vector<32x256xbf16>
    tpu.vector_store %arg4[%c0_5, %c0_6], %10 {strides = array<i32>} : memref<32x256xbf16, #tpu.memory_space<vmem>>, vector<32x256xbf16>,
    return
  }
  func.func @transform_0(%arg0: i32) -> (i32, i32) {
    %c0_i32 = arith.constant 0 : i32
    %c0_i32_0 = arith.constant 0 : i32
    return %arg0, %c0_i32 : i32, i32
  }
  func.func @transform_1(%arg0: i32) -> (i32, i32) {
    %c0_i32 = arith.constant 0 : i32
    %c0_i32_0 = arith.constant 0 : i32
    %c0_i32_1 = arith.constant 0 : i32
    return %c0_i32, %c0_i32_0 : i32, i32
  }
  func.func @transform_2(%arg0: i32) -> (i32, i32) {
    %c0_i32 = arith.constant 0 : i32
    %c0_i32_0 = arith.constant 0 : i32
    %c0_i32_1 = arith.constant 0 : i32
    return %c0_i32, %c0_i32_0 : i32, i32
  }
  func.func @transform_3(%arg0: i32) -> (i32, i32) {
    %c0_i32 = arith.constant 0 : i32
    %c0_i32_0 = arith.constant 0 : i32
    return %arg0, %c0_i32 : i32, i32
  }
}

module attributes {stable_mosaic.version = 11 : i64} {
  func.func @_mm_bias_stats_kernel(%arg0: i32, %arg1: i32, %arg2: memref<128x1024xbf16, #tpu.memory_space<vmem>>, %arg3: memref<1024x128xbf16, #tpu.memory_space<vmem>>, %arg4: memref<1x128xf32, #tpu.memory_space<vmem>>, %arg5: memref<128x128xbf16, #tpu.memory_space<vmem>>, %arg6: memref<1x1x128xf32, #tpu.memory_space<vmem>>, %arg7: memref<1x1x128xf32, #tpu.memory_space<vmem>>) attributes {dimension_semantics = [#tpu.dimension_semantics<parallel>, #tpu.dimension_semantics<parallel>], iteration_bounds = array<i64: 1, 1>, scalar_prefetch = 0 : i64, scratch_operands = 0 : i64, tpu.core_type = #tpu.core_type<tc>, window_params = [{transform_indices = @transform_0, window_bounds = array<i64: 128, 1024>}, {transform_indices = @transform_1, window_bounds = array<i64: 1024, 128>}, {transform_indices = @transform_2, window_bounds = array<i64: 1, 128>}, {transform_indices = @transform_3, window_bounds = array<i64: 128, 128>}, {transform_indices = @transform_4, window_bounds = array<i64: 1, 1, 128>}, {transform_indices = @transform_5, window_bounds = array<i64: 1, 1, 128>}]} {
    %c0 = arith.constant 0 : index
    %c0_0 = arith.constant 0 : index
    %0 = vector.load %arg2[%c0, %c0_0] : memref<128x1024xbf16, #tpu.memory_space<vmem>>, vector<128x1024xbf16>
    %c0_1 = arith.constant 0 : index
    %c0_2 = arith.constant 0 : index
    %1 = vector.load %arg3[%c0_1, %c0_2] : memref<1024x128xbf16, #tpu.memory_space<vmem>>, vector<1024x128xbf16>
    %cst = arith.constant dense<0.000000e+00> : vector<128x128xf32>
    %2 = tpu.matmul %0, %1, %cst {dimension_numbers = #tpu.dot_dimension_numbers<[1], [0], [0], [1], [0, 0, 1, 1], [], []>} : vector<128x1024xbf16>, vector<1024x128xbf16>, vector<128x128xf32> -> vector<128x128xf32>
    %cst_3 = arith.constant dense<0.000000e+00> : vector<128xf32>
    %3 = vector.multi_reduction <add>, %2, %cst_3 [0] : vector<128x128xf32> to vector<128xf32>
    %4 = vector.shape_cast %3 : vector<128xf32> to vector<1x128xf32>
    %5 = vector.shape_cast %4 : vector<1x128xf32> to vector<1x1x128xf32>
    %c0_4 = arith.constant 0 : index
    %c0_5 = arith.constant 0 : index
    %c0_6 = arith.constant 0 : index
    %6 = vector.load %arg6[%c0_4, %c0_5, %c0_6] : memref<1x1x128xf32, #tpu.memory_space<vmem>>, vector<1x1x128xf32>
    tpu.vector_store %arg6[%c0_4, %c0_5, %c0_6], %5 {strides = array<i32>} : memref<1x1x128xf32, #tpu.memory_space<vmem>>, vector<1x1x128xf32>,
    %7 = arith.mulf %2, %2 : vector<128x128xf32>
    %cst_7 = arith.constant dense<0.000000e+00> : vector<128xf32>
    %8 = vector.multi_reduction <add>, %7, %cst_7 [0] : vector<128x128xf32> to vector<128xf32>
    %9 = vector.shape_cast %8 : vector<128xf32> to vector<1x128xf32>
    %10 = vector.shape_cast %9 : vector<1x128xf32> to vector<1x1x128xf32>
    %c0_8 = arith.constant 0 : index
    %c0_9 = arith.constant 0 : index
    %c0_10 = arith.constant 0 : index
    %11 = vector.load %arg7[%c0_8, %c0_9, %c0_10] : memref<1x1x128xf32, #tpu.memory_space<vmem>>, vector<1x1x128xf32>
    tpu.vector_store %arg7[%c0_8, %c0_9, %c0_10], %10 {strides = array<i32>} : memref<1x1x128xf32, #tpu.memory_space<vmem>>, vector<1x1x128xf32>,
    %c0_11 = arith.constant 0 : index
    %c0_12 = arith.constant 0 : index
    %12 = vector.load %arg4[%c0_11, %c0_12] : memref<1x128xf32, #tpu.memory_space<vmem>>, vector<1x128xf32>
    %13 = vector.broadcast %12 : vector<1x128xf32> to vector<128x128xf32>
    %14 = arith.addf %2, %13 : vector<128x128xf32>
    %15 = arith.truncf %14 : vector<128x128xf32> to vector<128x128xbf16>
    %c0_13 = arith.constant 0 : index
    %c0_14 = arith.constant 0 : index
    %16 = vector.load %arg5[%c0_13, %c0_14] : memref<128x128xbf16, #tpu.memory_space<vmem>>, vector<128x128xbf16>
    tpu.vector_store %arg5[%c0_13, %c0_14], %15 {strides = array<i32>} : memref<128x128xbf16, #tpu.memory_space<vmem>>, vector<128x128xbf16>,
    return
  }
  func.func @transform_0(%arg0: i32, %arg1: i32) -> (i32, i32) {
    %c0_i32 = arith.constant 0 : i32
    %c0_i32_0 = arith.constant 0 : i32
    return %arg0, %c0_i32 : i32, i32
  }
  func.func @transform_1(%arg0: i32, %arg1: i32) -> (i32, i32) {
    %c0_i32 = arith.constant 0 : i32
    %c0_i32_0 = arith.constant 0 : i32
    return %c0_i32, %arg1 : i32, i32
  }
  func.func @transform_2(%arg0: i32, %arg1: i32) -> (i32, i32) {
    %c0_i32 = arith.constant 0 : i32
    %c0_i32_0 = arith.constant 0 : i32
    return %c0_i32, %arg1 : i32, i32
  }
  func.func @transform_3(%arg0: i32, %arg1: i32) -> (i32, i32) {
    %c0_i32 = arith.constant 0 : i32
    return %arg0, %arg1 : i32, i32
  }
  func.func @transform_4(%arg0: i32, %arg1: i32) -> (i32, i32, i32) {
    %c0_i32 = arith.constant 0 : i32
    %c0_i32_0 = arith.constant 0 : i32
    return %arg0, %c0_i32, %arg1 : i32, i32, i32
  }
  func.func @transform_5(%arg0: i32, %arg1: i32) -> (i32, i32, i32) {
    %c0_i32 = arith.constant 0 : i32
    %c0_i32_0 = arith.constant 0 : i32
    return %arg0, %c0_i32, %arg1 : i32, i32, i32
  }
}

module attributes {stable_mosaic.version = 11 : i64} {
  func.func @_affine_relu_kernel(%arg0: i32, %arg1: memref<128x128xbf16, #tpu.memory_space<vmem>>, %arg2: memref<1x128xf32, #tpu.memory_space<vmem>>, %arg3: memref<1x128xf32, #tpu.memory_space<vmem>>, %arg4: memref<128x128xbf16, #tpu.memory_space<vmem>>) attributes {dimension_semantics = [#tpu.dimension_semantics<parallel>], iteration_bounds = array<i64: 1>, scalar_prefetch = 0 : i64, scratch_operands = 0 : i64, tpu.core_type = #tpu.core_type<tc>, window_params = [{transform_indices = @transform_0, window_bounds = array<i64: 128, 128>}, {pipeline_mode = #tpu.pipeline_mode<synchronous>, transform_indices = @transform_1, window_bounds = array<i64: 1, 128>}, {pipeline_mode = #tpu.pipeline_mode<synchronous>, transform_indices = @transform_2, window_bounds = array<i64: 1, 128>}, {transform_indices = @transform_3, window_bounds = array<i64: 128, 128>}]} {
    %c0 = arith.constant 0 : index
    %c0_0 = arith.constant 0 : index
    %0 = vector.load %arg1[%c0, %c0_0] : memref<128x128xbf16, #tpu.memory_space<vmem>>, vector<128x128xbf16>
    %1 = arith.extf %0 : vector<128x128xbf16> to vector<128x128xf32>
    %c0_1 = arith.constant 0 : index
    %c0_2 = arith.constant 0 : index
    %2 = vector.load %arg2[%c0_1, %c0_2] : memref<1x128xf32, #tpu.memory_space<vmem>>, vector<1x128xf32>
    %3 = vector.broadcast %2 : vector<1x128xf32> to vector<128x128xf32>
    %4 = arith.mulf %1, %3 : vector<128x128xf32>
    %c0_3 = arith.constant 0 : index
    %c0_4 = arith.constant 0 : index
    %5 = vector.load %arg3[%c0_3, %c0_4] : memref<1x128xf32, #tpu.memory_space<vmem>>, vector<1x128xf32>
    %6 = vector.broadcast %5 : vector<1x128xf32> to vector<128x128xf32>
    %7 = arith.addf %4, %6 : vector<128x128xf32>
    %cst = arith.constant 0.000000e+00 : f32
    %8 = vector.broadcast %cst : f32 to vector<128x128xf32>
    %9 = arith.maximumf %7, %8 : vector<128x128xf32>
    %10 = arith.truncf %9 : vector<128x128xf32> to vector<128x128xbf16>
    %c0_5 = arith.constant 0 : index
    %c0_6 = arith.constant 0 : index
    %11 = vector.load %arg4[%c0_5, %c0_6] : memref<128x128xbf16, #tpu.memory_space<vmem>>, vector<128x128xbf16>
    tpu.vector_store %arg4[%c0_5, %c0_6], %10 {strides = array<i32>} : memref<128x128xbf16, #tpu.memory_space<vmem>>, vector<128x128xbf16>,
    return
  }
  func.func @transform_0(%arg0: i32) -> (i32, i32) {
    %c0_i32 = arith.constant 0 : i32
    %c0_i32_0 = arith.constant 0 : i32
    return %arg0, %c0_i32 : i32, i32
  }
  func.func @transform_1(%arg0: i32) -> (i32, i32) {
    %c0_i32 = arith.constant 0 : i32
    %c0_i32_0 = arith.constant 0 : i32
    %c0_i32_1 = arith.constant 0 : i32
    return %c0_i32, %c0_i32_0 : i32, i32
  }
  func.func @transform_2(%arg0: i32) -> (i32, i32) {
    %c0_i32 = arith.constant 0 : i32
    %c0_i32_0 = arith.constant 0 : i32
    %c0_i32_1 = arith.constant 0 : i32
    return %c0_i32, %c0_i32_0 : i32, i32
  }
  func.func @transform_3(%arg0: i32) -> (i32, i32) {
    %c0_i32 = arith.constant 0 : i32
    %c0_i32_0 = arith.constant 0 : i32
    return %arg0, %c0_i32 : i32, i32
  }
}

module attributes {stable_mosaic.version = 11 : i64} {
  func.func @_mm_bias_stats_kernel(%arg0: i32, %arg1: i32, %arg2: memref<128x512xbf16, #tpu.memory_space<vmem>>, %arg3: memref<512x128xbf16, #tpu.memory_space<vmem>>, %arg4: memref<1x128xf32, #tpu.memory_space<vmem>>, %arg5: memref<128x128xbf16, #tpu.memory_space<vmem>>, %arg6: memref<1x1x128xf32, #tpu.memory_space<vmem>>, %arg7: memref<1x1x128xf32, #tpu.memory_space<vmem>>) attributes {dimension_semantics = [#tpu.dimension_semantics<parallel>, #tpu.dimension_semantics<parallel>], iteration_bounds = array<i64: 4, 1>, scalar_prefetch = 0 : i64, scratch_operands = 0 : i64, tpu.core_type = #tpu.core_type<tc>, window_params = [{transform_indices = @transform_0, window_bounds = array<i64: 128, 512>}, {transform_indices = @transform_1, window_bounds = array<i64: 512, 128>}, {transform_indices = @transform_2, window_bounds = array<i64: 1, 128>}, {transform_indices = @transform_3, window_bounds = array<i64: 128, 128>}, {transform_indices = @transform_4, window_bounds = array<i64: 1, 1, 128>}, {transform_indices = @transform_5, window_bounds = array<i64: 1, 1, 128>}]} {
    %c0 = arith.constant 0 : index
    %c0_0 = arith.constant 0 : index
    %0 = vector.load %arg2[%c0, %c0_0] : memref<128x512xbf16, #tpu.memory_space<vmem>>, vector<128x512xbf16>
    %c0_1 = arith.constant 0 : index
    %c0_2 = arith.constant 0 : index
    %1 = vector.load %arg3[%c0_1, %c0_2] : memref<512x128xbf16, #tpu.memory_space<vmem>>, vector<512x128xbf16>
    %cst = arith.constant dense<0.000000e+00> : vector<128x128xf32>
    %2 = tpu.matmul %0, %1, %cst {dimension_numbers = #tpu.dot_dimension_numbers<[1], [0], [0], [1], [0, 0, 1, 1], [], []>} : vector<128x512xbf16>, vector<512x128xbf16>, vector<128x128xf32> -> vector<128x128xf32>
    %cst_3 = arith.constant dense<0.000000e+00> : vector<128xf32>
    %3 = vector.multi_reduction <add>, %2, %cst_3 [0] : vector<128x128xf32> to vector<128xf32>
    %4 = vector.shape_cast %3 : vector<128xf32> to vector<1x128xf32>
    %5 = vector.shape_cast %4 : vector<1x128xf32> to vector<1x1x128xf32>
    %c0_4 = arith.constant 0 : index
    %c0_5 = arith.constant 0 : index
    %c0_6 = arith.constant 0 : index
    %6 = vector.load %arg6[%c0_4, %c0_5, %c0_6] : memref<1x1x128xf32, #tpu.memory_space<vmem>>, vector<1x1x128xf32>
    tpu.vector_store %arg6[%c0_4, %c0_5, %c0_6], %5 {strides = array<i32>} : memref<1x1x128xf32, #tpu.memory_space<vmem>>, vector<1x1x128xf32>,
    %7 = arith.mulf %2, %2 : vector<128x128xf32>
    %cst_7 = arith.constant dense<0.000000e+00> : vector<128xf32>
    %8 = vector.multi_reduction <add>, %7, %cst_7 [0] : vector<128x128xf32> to vector<128xf32>
    %9 = vector.shape_cast %8 : vector<128xf32> to vector<1x128xf32>
    %10 = vector.shape_cast %9 : vector<1x128xf32> to vector<1x1x128xf32>
    %c0_8 = arith.constant 0 : index
    %c0_9 = arith.constant 0 : index
    %c0_10 = arith.constant 0 : index
    %11 = vector.load %arg7[%c0_8, %c0_9, %c0_10] : memref<1x1x128xf32, #tpu.memory_space<vmem>>, vector<1x1x128xf32>
    tpu.vector_store %arg7[%c0_8, %c0_9, %c0_10], %10 {strides = array<i32>} : memref<1x1x128xf32, #tpu.memory_space<vmem>>, vector<1x1x128xf32>,
    %c0_11 = arith.constant 0 : index
    %c0_12 = arith.constant 0 : index
    %12 = vector.load %arg4[%c0_11, %c0_12] : memref<1x128xf32, #tpu.memory_space<vmem>>, vector<1x128xf32>
    %13 = vector.broadcast %12 : vector<1x128xf32> to vector<128x128xf32>
    %14 = arith.addf %2, %13 : vector<128x128xf32>
    %15 = arith.truncf %14 : vector<128x128xf32> to vector<128x128xbf16>
    %c0_13 = arith.constant 0 : index
    %c0_14 = arith.constant 0 : index
    %16 = vector.load %arg5[%c0_13, %c0_14] : memref<128x128xbf16, #tpu.memory_space<vmem>>, vector<128x128xbf16>
    tpu.vector_store %arg5[%c0_13, %c0_14], %15 {strides = array<i32>} : memref<128x128xbf16, #tpu.memory_space<vmem>>, vector<128x128xbf16>,
    return
  }
  func.func @transform_0(%arg0: i32, %arg1: i32) -> (i32, i32) {
    %c0_i32 = arith.constant 0 : i32
    %c0_i32_0 = arith.constant 0 : i32
    return %arg0, %c0_i32 : i32, i32
  }
  func.func @transform_1(%arg0: i32, %arg1: i32) -> (i32, i32) {
    %c0_i32 = arith.constant 0 : i32
    %c0_i32_0 = arith.constant 0 : i32
    return %c0_i32, %arg1 : i32, i32
  }
  func.func @transform_2(%arg0: i32, %arg1: i32) -> (i32, i32) {
    %c0_i32 = arith.constant 0 : i32
    %c0_i32_0 = arith.constant 0 : i32
    return %c0_i32, %arg1 : i32, i32
  }
  func.func @transform_3(%arg0: i32, %arg1: i32) -> (i32, i32) {
    %c0_i32 = arith.constant 0 : i32
    return %arg0, %arg1 : i32, i32
  }
  func.func @transform_4(%arg0: i32, %arg1: i32) -> (i32, i32, i32) {
    %c0_i32 = arith.constant 0 : i32
    %c0_i32_0 = arith.constant 0 : i32
    return %arg0, %c0_i32, %arg1 : i32, i32, i32
  }
  func.func @transform_5(%arg0: i32, %arg1: i32) -> (i32, i32, i32) {
    %c0_i32 = arith.constant 0 : i32
    %c0_i32_0 = arith.constant 0 : i32
    return %arg0, %c0_i32, %arg1 : i32, i32, i32
  }
}

module attributes {stable_mosaic.version = 11 : i64} {
  func.func @_affine_relu_kernel(%arg0: i32, %arg1: memref<512x128xbf16, #tpu.memory_space<vmem>>, %arg2: memref<1x128xf32, #tpu.memory_space<vmem>>, %arg3: memref<1x128xf32, #tpu.memory_space<vmem>>, %arg4: memref<512x128xbf16, #tpu.memory_space<vmem>>) attributes {dimension_semantics = [#tpu.dimension_semantics<parallel>], iteration_bounds = array<i64: 1>, scalar_prefetch = 0 : i64, scratch_operands = 0 : i64, tpu.core_type = #tpu.core_type<tc>, window_params = [{transform_indices = @transform_0, window_bounds = array<i64: 512, 128>}, {pipeline_mode = #tpu.pipeline_mode<synchronous>, transform_indices = @transform_1, window_bounds = array<i64: 1, 128>}, {pipeline_mode = #tpu.pipeline_mode<synchronous>, transform_indices = @transform_2, window_bounds = array<i64: 1, 128>}, {transform_indices = @transform_3, window_bounds = array<i64: 512, 128>}]} {
    %c0 = arith.constant 0 : index
    %c0_0 = arith.constant 0 : index
    %0 = vector.load %arg1[%c0, %c0_0] : memref<512x128xbf16, #tpu.memory_space<vmem>>, vector<512x128xbf16>
    %1 = arith.extf %0 : vector<512x128xbf16> to vector<512x128xf32>
    %c0_1 = arith.constant 0 : index
    %c0_2 = arith.constant 0 : index
    %2 = vector.load %arg2[%c0_1, %c0_2] : memref<1x128xf32, #tpu.memory_space<vmem>>, vector<1x128xf32>
    %3 = vector.broadcast %2 : vector<1x128xf32> to vector<512x128xf32>
    %4 = arith.mulf %1, %3 : vector<512x128xf32>
    %c0_3 = arith.constant 0 : index
    %c0_4 = arith.constant 0 : index
    %5 = vector.load %arg3[%c0_3, %c0_4] : memref<1x128xf32, #tpu.memory_space<vmem>>, vector<1x128xf32>
    %6 = vector.broadcast %5 : vector<1x128xf32> to vector<512x128xf32>
    %7 = arith.addf %4, %6 : vector<512x128xf32>
    %cst = arith.constant 0.000000e+00 : f32
    %8 = vector.broadcast %cst : f32 to vector<512x128xf32>
    %9 = arith.maximumf %7, %8 : vector<512x128xf32>
    %10 = arith.truncf %9 : vector<512x128xf32> to vector<512x128xbf16>
    %c0_5 = arith.constant 0 : index
    %c0_6 = arith.constant 0 : index
    %11 = vector.load %arg4[%c0_5, %c0_6] : memref<512x128xbf16, #tpu.memory_space<vmem>>, vector<512x128xbf16>
    tpu.vector_store %arg4[%c0_5, %c0_6], %10 {strides = array<i32>} : memref<512x128xbf16, #tpu.memory_space<vmem>>, vector<512x128xbf16>,
    return
  }
  func.func @transform_0(%arg0: i32) -> (i32, i32) {
    %c0_i32 = arith.constant 0 : i32
    %c0_i32_0 = arith.constant 0 : i32
    return %arg0, %c0_i32 : i32, i32
  }
  func.func @transform_1(%arg0: i32) -> (i32, i32) {
    %c0_i32 = arith.constant 0 : i32
    %c0_i32_0 = arith.constant 0 : i32
    %c0_i32_1 = arith.constant 0 : i32
    return %c0_i32, %c0_i32_0 : i32, i32
  }
  func.func @transform_2(%arg0: i32) -> (i32, i32) {
    %c0_i32 = arith.constant 0 : i32
    %c0_i32_0 = arith.constant 0 : i32
    %c0_i32_1 = arith.constant 0 : i32
    return %c0_i32, %c0_i32_0 : i32, i32
  }
  func.func @transform_3(%arg0: i32) -> (i32, i32) {
    %c0_i32 = arith.constant 0 : i32
    %c0_i32_0 = arith.constant 0 : i32
    return %arg0, %c0_i32 : i32, i32
  }
}

module attributes {stable_mosaic.version = 11 : i64} {
  func.func @_mm_bias_tanh_kernel(%arg0: i32, %arg1: i32, %arg2: memref<256x256xbf16, #tpu.memory_space<vmem>>, %arg3: memref<256x128xbf16, #tpu.memory_space<vmem>>, %arg4: memref<1x128xf32, #tpu.memory_space<vmem>>, %arg5: memref<256x128xf32, #tpu.memory_space<vmem>>) attributes {dimension_semantics = [#tpu.dimension_semantics<parallel>, #tpu.dimension_semantics<parallel>], iteration_bounds = array<i64: 8, 1>, scalar_prefetch = 0 : i64, scratch_operands = 0 : i64, tpu.core_type = #tpu.core_type<tc>, window_params = [{transform_indices = @transform_0, window_bounds = array<i64: 256, 256>}, {transform_indices = @transform_1, window_bounds = array<i64: 256, 128>}, {transform_indices = @transform_2, window_bounds = array<i64: 1, 128>}, {transform_indices = @transform_3, window_bounds = array<i64: 256, 128>}]} {
    %c0 = arith.constant 0 : index
    %c0_0 = arith.constant 0 : index
    %0 = vector.load %arg2[%c0, %c0_0] : memref<256x256xbf16, #tpu.memory_space<vmem>>, vector<256x256xbf16>
    %c0_1 = arith.constant 0 : index
    %c0_2 = arith.constant 0 : index
    %1 = vector.load %arg3[%c0_1, %c0_2] : memref<256x128xbf16, #tpu.memory_space<vmem>>, vector<256x128xbf16>
    %cst = arith.constant dense<0.000000e+00> : vector<256x128xf32>
    %2 = tpu.matmul %0, %1, %cst {dimension_numbers = #tpu.dot_dimension_numbers<[1], [0], [0], [1], [0, 0, 1, 1], [], []>} : vector<256x256xbf16>, vector<256x128xbf16>, vector<256x128xf32> -> vector<256x128xf32>
    %c0_3 = arith.constant 0 : index
    %c0_4 = arith.constant 0 : index
    %3 = vector.load %arg4[%c0_3, %c0_4] : memref<1x128xf32, #tpu.memory_space<vmem>>, vector<1x128xf32>
    %4 = vector.broadcast %3 : vector<1x128xf32> to vector<256x128xf32>
    %5 = arith.addf %2, %4 : vector<256x128xf32>
    %6 = math.tanh %5 : vector<256x128xf32>
    %c0_5 = arith.constant 0 : index
    %c0_6 = arith.constant 0 : index
    %7 = vector.load %arg5[%c0_5, %c0_6] : memref<256x128xf32, #tpu.memory_space<vmem>>, vector<256x128xf32>
    tpu.vector_store %arg5[%c0_5, %c0_6], %6 {strides = array<i32>} : memref<256x128xf32, #tpu.memory_space<vmem>>, vector<256x128xf32>,
    return
  }
  func.func @transform_0(%arg0: i32, %arg1: i32) -> (i32, i32) {
    %c0_i32 = arith.constant 0 : i32
    %c0_i32_0 = arith.constant 0 : i32
    return %arg0, %c0_i32 : i32, i32
  }
  func.func @transform_1(%arg0: i32, %arg1: i32) -> (i32, i32) {
    %c0_i32 = arith.constant 0 : i32
    %c0_i32_0 = arith.constant 0 : i32
    return %c0_i32, %arg1 : i32, i32
  }
  func.func @transform_2(%arg0: i32, %arg1: i32) -> (i32, i32) {
    %c0_i32 = arith.constant 0 : i32
    %c0_i32_0 = arith.constant 0 : i32
    return %c0_i32, %arg1 : i32, i32
  }
  func.func @transform_3(%arg0: i32, %arg1: i32) -> (i32, i32) {
    %c0_i32 = arith.constant 0 : i32
    return %arg0, %arg1 : i32, i32
  }
}

</mosaic_0001>

<llo_original>
// kernel: a_call__.30
$region0: #{a_call__.30}
  #allocation0 [shape = 'u32[]', space=smem, size = 0x4, offset = 0x4, fixed_abs, tag = 'smem constant byte address 0x4 - core index']
  #allocation1 [shape = 'u32[144,128]{1,0:T(1,128)}', space=vmem, size = 0x12000, scoped, tag = 'internal scratch']
  %s0 = inlined_call_operand.vmem [shape: bf16[16,32], index: 0, kind: input, shape index: {}]
  %s1 = inlined_call_operand.vmem [shape: bf16[32,8192], index: 1, kind: input, shape index: {}]
  %s2 = inlined_call_operand.hbm [shape: f32[1,8192], index: 2, kind: input, shape index: {}]
  %s3 = inlined_call_operand.vmem [shape: bf16[16,8192], index: 3, kind: output, shape index: {0}]
  %s4 = inlined_call_operand.vmem [shape: f32[1,1,8192], index: 4, kind: output, shape index: {1}]
  %s5 = inlined_call_operand.vmem [shape: f32[1,1,8192], index: 5, kind: output, shape index: {2}]
  %6 = xla_tuple %s3, %s4, %s5
  %s7 = sld [smem:[#allocation0]]
  $region143: #{a_call__.30} parent=0
    _
  %s9 = ssub.s32 1, %s7
  %s10 = scalar_select 0, %s9, %s7
  $region1: #{a_call__.30} parent=0
    #allocation2 [shape = 'u8[16384]{0}', space=vmem, size = 0x4000, scoped, tag = 'input window, operand 1']
    #allocation3 [shape = 'u8[1024]{0}', space=vmem, size = 0x400, scoped, tag = 'input window, operand 2']
    #allocation4 [shape = 's32[2]{0}', space=sflag, size = 0x8, scoped, tag = 'scoped memory for a_call__.30']
    #allocation5 [shape = 'u8[8192]{0}', space=vmem, size = 0x2000, scoped, tag = 'output window, operand 0']
    %11 = vsyncpa [#allocation4], 0
    %s12 = scalar_lea.sflag [#allocation4], 1
    %13 = vsyncpa %s12, 0
    loop: start=0, step=1, limit=66
    $region2: #{a_call__.30} parent=1 // loop_pre_header
      _
    $region3: #{a_call__.30} parent=1 // loop_header
      %s15 = sphi 0, %s19
      %p16 = scmp.ge.s32.totalorder %s15, 66
      %s22 = sphi 0, %s34
      %s23 = sphi 0, %s30
      %s24 = sphi 0, %s22
      %s25 = sphi 0, %s23
      %s26 = sphi 0, %s24
      %s27 = sphi 0, %s25
      %s37 = sphi 0, %s39
      %s40 = sphi 0, %s37
      %s41 = sphi 0, %s40
      %s57 = sphi 0, %s41
      %s63 = sphi 0, %s65
      %s66 = sphi 0, %s63
      %s67 = sphi 0, %s66
      %s83 = sphi 0, %s67
      %s89 = sphi 0, %s91
      %s92 = sphi 0, %s89
      %s93 = sphi 0, %s92
      %s109 = sphi 0, %s93
      %s117 = sphi 0, %s119
      %s120 = sphi 0, %s117
      %s121 = sphi 0, %s120
      %s137 = sphi 0, %s121
      %s145 = sphi 0, %s147
      %s148 = sphi 0, %s145
      %s149 = sphi 0, %s148
      %s165 = sphi 0, %s149
      %s173 = sphi 0, %s175
      %s176 = sphi 0, %s173
      %s177 = sphi 0, %s176
      %s193 = sphi 0, %s177
    $region4: #{a_call__.30} parent=1 // loop_header_branch
      %18 = sbr.rel (%p16) target = $region8
    $region5: #{a_call__.30} parent=1 // loop_body
      %s20 = ssub.s32 %s15, 1
      %s21 = ssub.s32 %s15, 2
      %s28 = sadd.s32 1, %s23
      %p29 = scmp.ge.s32.totalorder %s28, 64
      %s30 = scalar_select %p29, 0, %s28
      %s31 = sadd.s32 1, %s22
      %s32 = scalar_select %p29, %s31, %s22
      %p33 = scmp.ge.s32.totalorder %s32, 1
      %s34 = scalar_select %p33, 0, %s32
      %s35 = ssub.s32 %s22, %s34
      %p36 = scmp.eq.s32.totalorder %s35, 0
      %s38 = sadd.s32 %s37, 1
      %s39 = scalar_select %p36, %s37, %s38
      %p42 = pneg %p36
      %p43 = scmp.eq.s32.totalorder %s15, 63
      %p44 = por %p42, %p43
      %p45 = scmp.ne.s32.totalorder %s37, %s40
      %p46 = scmp.eq.s32.totalorder %s15, 0
      %p47 = por %p45, %p46
      %p48 = scmp.ne.s32.totalorder %s37, %s40
      %p49 = scmp.eq.s32.totalorder %s20, 63
      %p50 = por %p48, %p49
      %p51 = scmp.ne.s32.totalorder %s40, %s41
      %p52 = scmp.eq.s32.totalorder %s20, 0
      %p53 = por %p51, %p52
      %p54 = scmp.ne.s32.totalorder %s40, %s41
      %p55 = scmp.eq.s32.totalorder %s21, 63
      %p56 = por %p54, %p55
      %p58 = scmp.ne.s32.totalorder %s41, %s57
      %p59 = scmp.eq.s32.totalorder %s21, 0
      %p60 = por %p58, %p59
      %s61 = ssub.s32 %s23, %s30
      %p62 = scmp.eq.s32.totalorder %s61, 0
      %s64 = sadd.s32 %s63, 1
      %s65 = scalar_select %p62, %s63, %s64
      %p68 = pneg %p62
      %p69 = scmp.eq.s32.totalorder %s15, 63
      %p70 = por %p68, %p69
      %p71 = scmp.ne.s32.totalorder %s63, %s66
      %p72 = scmp.eq.s32.totalorder %s15, 0
      %p73 = por %p71, %p72
      %p74 = scmp.ne.s32.totalorder %s63, %s66
      %p75 = scmp.eq.s32.totalorder %s20, 63
      %p76 = por %p74, %p75
      %p77 = scmp.ne.s32.totalorder %s66, %s67
      %p78 = scmp.eq.s32.totalorder %s20, 0
      %p79 = por %p77, %p78
      %p80 = scmp.ne.s32.totalorder %s66, %s67
      %p81 = scmp.eq.s32.totalorder %s21, 63
      %p82 = por %p80, %p81
      %p84 = scmp.ne.s32.totalorder %s67, %s83
      %p85 = scmp.eq.s32.totalorder %s21, 0
      %p86 = por %p84, %p85
      %s87 = ssub.s32 %s23, %s30
      %p88 = scmp.eq.s32.totalorder %s87, 0
      %s90 = sadd.s32 %s89, 1
      %s91 = scalar_select %p88, %s89, %s90
      %p94 = pneg %p88
      %p95 = scmp.eq.s32.totalorder %s15, 63
      %p96 = por %p94, %p95
      %p97 = scmp.ne.s32.totalorder %s89, %s92
      %p98 = scmp.eq.s32.totalorder %s15, 0
      %p99 = por %p97, %p98
      %p100 = scmp.ne.s32.totalorder %s89, %s92
      %p101 = scmp.eq.s32.totalorder %s20, 63
      %p102 = por %p100, %p101
      %p103 = scmp.ne.s32.totalorder %s92, %s93
      %p104 = scmp.eq.s32.totalorder %s20, 0
      %p105 = por %p103, %p104
      %p106 = scmp.ne.s32.totalorder %s92, %s93
      %p107 = scmp.eq.s32.totalorder %s21, 63
      %p108 = por %p106, %p107
      %p110 = scmp.ne.s32.totalorder %s93, %s109
      %p111 = scmp.eq.s32.totalorder %s21, 0
      %p112 = por %p110, %p111
      %s113 = ssub.s32 %s22, %s34
      %s114 = ssub.s32 %s23, %s30
      %s115 = sor.u32 %s113, %s114
      %p116 = scmp.eq.s32.totalorder %s115, 0
      %s118 = sadd.s32 %s117, 1
      %s119 = scalar_select %p116, %s117, %s118
      %p122 = pneg %p116
      %p123 = scmp.eq.s32.totalorder %s15, 63
      %p124 = por %p122, %p123
      %p125 = scmp.ne.s32.totalorder %s117, %s120
      %p126 = scmp.eq.s32.totalorder %s15, 0
      %p127 = por %p125, %p126
      %p128 = scmp.ne.s32.totalorder %s117, %s120
      %p129 = scmp.eq.s32.totalorder %s20, 63
      %p130 = por %p128, %p129
      %p131 = scmp.ne.s32.totalorder %s120, %s121
      %p132 = scmp.eq.s32.totalorder %s20, 0
      %p133 = por %p131, %p132
      %p134 = scmp.ne.s32.totalorder %s120, %s121
      %p135 = scmp.eq.s32.totalorder %s21, 63
      %p136 = por %p134, %p135
      %p138 = scmp.ne.s32.totalorder %s121, %s137
      %p139 = scmp.eq.s32.totalorder %s21, 0
      %p140 = por %p138, %p139
      %s141 = ssub.s32 %s22, %s34
      %s142 = ssub.s32 %s23, %s30
      %s143 = sor.u32 %s141, %s142
      %p144 = scmp.eq.s32.totalorder %s143, 0
      %s146 = sadd.s32 %s145, 1
      %s147 = scalar_select %p144, %s145, %s146
      %p150 = pneg %p144
      %p151 = scmp.eq.s32.totalorder %s15, 63
      %p152 = por %p150, %p151
      %p153 = scmp.ne.s32.totalorder %s145, %s148
      %p154 = scmp.eq.s32.totalorder %s15, 0
      %p155 = por %p153, %p154
      %p156 = scmp.ne.s32.totalorder %s145, %s148
      %p157 = scmp.eq.s32.totalorder %s20, 63
      %p158 = por %p156, %p157
      %p159 = scmp.ne.s32.totalorder %s148, %s149
      %p160 = scmp.eq.s32.totalorder %s20, 0
      %p161 = por %p159, %p160
      %p162 = scmp.ne.s32.totalorder %s148, %s149
      %p163 = scmp.eq.s32.totalorder %s21, 63
      %p164 = por %p162, %p163
      %p166 = scmp.ne.s32.totalorder %s149, %s165
      %p167 = scmp.eq.s32.totalorder %s21, 0
      %p168 = por %p166, %p167
      %s169 = ssub.s32 %s22, %s34
      %s170 = ssub.s32 %s23, %s30
      %s171 = sor.u32 %s169, %s170
      %p172 = scmp.eq.s32.totalorder %s171, 0
      %s174 = sadd.s32 %s173, 1
      %s175 = scalar_select %p172, %s173, %s174
      %p178 = pneg %p172
      %p179 = scmp.eq.s32.totalorder %s15, 63
      %p180 = por %p178, %p179
      %p181 = scmp.ne.s32.totalorder %s173, %s176
      %p182 = scmp.eq.s32.totalorder %s15, 0
      %p183 = por %p181, %p182
      %p184 = scmp.ne.s32.totalorder %s173, %s176
      %p185 = scmp.eq.s32.totalorder %s20, 63
      %p186 = por %p184, %p185
      %p187 = scmp.ne.s32.totalorder %s176, %s177
      %p188 = scmp.eq.s32.totalorder %s20, 0
      %p189 = por %p187, %p188
      %p190 = scmp.ne.s32.totalorder %s176, %s177
      %p191 = scmp.eq.s32.totalorder %s21, 63
      %p192 = por %p190, %p191
      %p194 = scmp.ne.s32.totalorder %s177, %s193
      %p195 = scmp.eq.s32.totalorder %s21, 0
      %p196 = por %p194, %p195
      %p197 = scmp.le.s32.totalorder 1, %s15
      %p198 = scmp.lt.s32.totalorder %s15, 65
      %p199 = pnand %p197, %p198
      %p200 = pneg %p199
      // Predicated region
      $region9: #{a_call__.30} parent=5 // pred_check
        _
      $region10: #{a_call__.30} parent=5 // pred_check_branch
        %202 = sbr.rel (%p199) target = $region12
      $region11: #{a_call__.30} parent=5 // pred_region
        %s203 = ssub.s32 %s15, 1
        // Predicated region
        $region13: #{a_call__.30} parent=11 // pred_check
          %p204 = pneg %p53
        $region14: #{a_call__.30} parent=11 // pred_check_branch
          %206 = sbr.rel (%p204) target = $region16
        $region15: #{a_call__.30} parent=11 // pred_region
          %s207 = smul.u32 2, %s24
          %p208 = scmp.lt.s32.totalorder %s207, 1
          %s209 = scalar_select %p208, %s207, 1
          %s210 = smul.addr %s209, 4
          %s211 = scalar_lea.vmem %s0, %s210
          %s212 = smul.u32 2, %s24
        $region16: #{a_call__.30} parent=11 // pred_fallthru
          _
      $region12: #{a_call__.30} parent=5 // pred_fallthru
        _
      %p213 = scmp.lt.s32.totalorder %s15, 64
      // Predicated region
      $region17: #{a_call__.30} parent=5 // pred_check
        %p214 = pneg %p213
      $region18: #{a_call__.30} parent=5 // pred_check_branch
        %216 = sbr.rel (%p214) target = $region20
      $region19: #{a_call__.30} parent=5 // pred_region
        // Predicated region
        $region21: #{a_call__.30} parent=19 // pred_check
          %p217 = pneg %p73
        $region22: #{a_call__.30} parent=19 // pred_check_branch
          %219 = sbr.rel (%p217) target = $region24
        $region23: #{a_call__.30} parent=19 // pred_region
          %s220 = sand.u32 %s63, 1
          %s221 = sand.u32 %s63, 1
          %s222 = smul.addr %s221, 16
          %s223 = scalar_lea.vmem [#allocation2], %s222
          %s224 = smul.addr %s23, 4
          %s225 = scalar_lea.vmem %s1, %s224
          // Predicated region
          $region25: #{a_call__.30} parent=23 // pred_check
            _
          $region26: #{a_call__.30} parent=23 // pred_check_branch
            %227 = sbr.rel (0) target = $region28
          $region27: #{a_call__.30} parent=23 // pred_region
            // Predicated region
            $region29: #{a_call__.30} parent=27 // pred_check
              _
            $region30: #{a_call__.30} parent=27 // pred_check_branch
              %229 = sbr.rel target = $region32
            $region31: #{a_call__.30} parent=27 // pred_region
              // Predicated region
              $region44: #{a_call__.30} parent=31 // pred_check
                _
              $region45: #{a_call__.30} parent=31 // pred_check_branch
                %250 = sbr.rel (0) target = $region47
              $region46: #{a_call__.30} parent=31 // pred_region
                loop: start=0, step=1, limit=1
                $region48: #{a_call__.30} parent=46 // loop_pre_header
                  _
                $region49: #{a_call__.30} parent=46 // loop_header
                  %s252 = sphi 0, %s256
                  %p253 = scmp.ge.s32.totalorder %s252, 1
                  %s257 = sphi %s225, %s225
                  %s258 = sphi %s223, %s223
                $region50: #{a_call__.30} parent=46 // loop_header_branch
                  %255 = sbr.rel (%p253) target = $region54
                $region51: #{a_call__.30} parent=46 // loop_body
                  _
                $region52: #{a_call__.30} parent=46 // loop_footer
                  %s256 = sadd.s32 1, %s252
                $region53: #{a_call__.30} parent=46 // loop_footer_branch
                  %251 = sbr.rel target = $region49
                $region54: #{a_call__.30} parent=46 // loop_exit
                  _
                loop: start=0, step=1, limit=1
                $region55: #{a_call__.30} parent=46 // loop_pre_header
                  _
                $region56: #{a_call__.30} parent=46 // loop_header
                  %s261 = sphi 0, %s265
                  %p262 = scmp.ge.s32.totalorder %s261, 1
                  %s266 = sphi %s225, %s225
                  %s267 = sphi %s223, %s223
                $region57: #{a_call__.30} parent=46 // loop_header_branch
                  %264 = sbr.rel (%p262) target = $region61
                $region58: #{a_call__.30} parent=46 // loop_body
                  %v268 = vld [vmem:[%s266] sm:$0xf]
                  %269 = vst [vmem:[%s267] sm:$0xf] %v268
                  %v270 = vld [vmem:[%s266 + $0x100] sm:$0xf]
                  %271 = vst [vmem:[%s267 + $0x4] sm:$0xf] %v270
                  %v272 = vld [vmem:[%s266 + $0x200] sm:$0xf]
                  %273 = vst [vmem:[%s267 + $0x8] sm:$0xf] %v272
                  %v274 = vld [vmem:[%s266 + $0x300] sm:$0xf]
                  %275 = vst [vmem:[%s267 + $0xc] sm:$0xf] %v274
                $region59: #{a_call__.30} parent=46 // loop_footer
                  %s265 = sadd.s32 1, %s261
                $region60: #{a_call__.30} parent=46 // loop_footer_branch
                  %260 = sbr.rel target = $region56
                $region61: #{a_call__.30} parent=46 // loop_exit
                  _
              $region47: #{a_call__.30} parent=31 // pred_fallthru
                _
            $region32: #{a_call__.30} parent=27 // pred_fallthru
              _
            // Predicated region
            $region33: #{a_call__.30} parent=27 // pred_check
              _
            $region34: #{a_call__.30} parent=27 // pred_check_branch
              %231 = sbr.rel (0) target = $region36
            $region35: #{a_call__.30} parent=27 // pred_region
              loop: start=0, step=1, limit=1
              $region37: #{a_call__.30} parent=35 // loop_pre_header
                _
              $region38: #{a_call__.30} parent=35 // loop_header
                %s234 = sphi 0, %s238
                %p235 = scmp.ge.s32.totalorder %s234, 1
                %s239 = sphi %s225, %s225
                %s240 = sphi %s223, %s223
              $region39: #{a_call__.30} parent=35 // loop_header_branch
                %237 = sbr.rel (%p235) target = $region43
              $region40: #{a_call__.30} parent=35 // loop_body
                %v241 = vld [vmem:[%s239] sm:$0xf]
                %242 = vst [vmem:[%s240] sm:$0xf] %v241
                %v243 = vld [vmem:[%s239 + $0x100] sm:$0xf]
                %244 = vst [vmem:[%s240 + $0x4] sm:$0xf] %v243
                %v245 = vld [vmem:[%s239 + $0x200] sm:$0xf]
                %246 = vst [vmem:[%s240 + $0x8] sm:$0xf] %v245
                %v247 = vld [vmem:[%s239 + $0x300] sm:$0xf]
                %248 = vst [vmem:[%s240 + $0xc] sm:$0xf] %v247
              $region41: #{a_call__.30} parent=35 // loop_footer
                %s238 = sadd.s32 1, %s234
              $region42: #{a_call__.30} parent=35 // loop_footer_branch
                %233 = sbr.rel target = $region38
              $region43: #{a_call__.30} parent=35 // loop_exit
                _
            $region36: #{a_call__.30} parent=27 // pred_fallthru
              _
          $region28: #{a_call__.30} parent=23 // pred_fallthru
            _
          %276 = vnop
        $region24: #{a_call__.30} parent=19 // pred_fallthru
          _
        // Predicated region
        $region62: #{a_call__.30} parent=19 // pred_check
          %p277 = pneg %p99
        $region63: #{a_call__.30} parent=19 // pred_check_branch
          %279 = sbr.rel (%p277) target = $region65
        $region64: #{a_call__.30} parent=19 // pred_region
          %s280 = sand.u32 %s89, 1
          %s281 = scalar_lea.sflag [#allocation4], %s280
          %s282 = sand.u32 %s89, 1
          %s283 = scalar_lea.vmem [#allocation3], %s282
          %s285 = ssub.s32 16, 16
          %286 = vsyncadd %s281, %s285
          %s287 = smul.addr %s23, 16
          %s288 = scalar_lea.hbm %s2, %s287
          %s290 = sshll.u32 %s283, 4
          %s291 = int_to_ptr.vmem [resolvable:$true] %s290
          %293 = dma.hbm_to_vmem [thread:$0]  %s288, 16, %s291, %s281
        $region65: #{a_call__.30} parent=19 // pred_fallthru
          _
      $region20: #{a_call__.30} parent=5 // pred_fallthru
        _
      %p294 = scmp.le.s32.totalorder 1, %s15
      %p295 = scmp.lt.s32.totalorder %s15, 65
      %p296 = pnand %p294, %p295
      %p297 = pneg %p296
      // Predicated region
      $region66: #{a_call__.30} parent=5 // pred_check
        _
      $region67: #{a_call__.30} parent=5 // pred_check_branch
        %299 = sbr.rel (%p296) target = $region69
      $region68: #{a_call__.30} parent=5 // pred_region
        %s300 = ssub.s32 %s15, 1
        %s301 = sand.u32 %s66, 1
        %s302 = sand.u32 %s66, 1
        %s303 = smul.addr %s302, 16
        %s304 = scalar_lea.vmem [#allocation2], %s303
        // Predicated region
        $region70: #{a_call__.30} parent=68 // pred_check
          %p305 = pneg %p79
        $region71: #{a_call__.30} parent=68 // pred_check_branch
          %307 = sbr.rel (%p305) target = $region73
        $region72: #{a_call__.30} parent=68 // pred_region
          _
        $region73: #{a_call__.30} parent=68 // pred_fallthru
          _
        %s308 = sand.u32 %s92, 1
        %s309 = scalar_lea.sflag [#allocation4], %s308
        %s310 = sand.u32 %s92, 1
        %s311 = scalar_lea.vmem [#allocation3], %s310
        // Predicated region
        $region74: #{a_call__.30} parent=68 // pred_check
          %p312 = pneg %p105
        $region75: #{a_call__.30} parent=68 // pred_check_branch
          %314 = sbr.rel (%p312) target = $region77
        $region76: #{a_call__.30} parent=68 // pred_region
          %315 = dma.done %s309, 16
        $region77: #{a_call__.30} parent=68 // pred_fallthru
          _
        %s316 = smul.u32 2, %s24
        %p317 = scmp.lt.s32.totalorder %s316, 1
        %s318 = scalar_select %p317, %s316, 1
        %s319 = smul.addr %s318, 4
        %s320 = scalar_lea.vmem %s0, %s319
        %p321 = pneg %p53
        %p322 = pneg %p50
        %s323 = sand.u32 %s66, 1
        %s324 = sand.u32 %s66, 1
        %s325 = smul.addr %s324, 16
        %s326 = scalar_lea.vmem [#allocation2], %s325
        %p327 = pneg %p79
        %p328 = pneg %p76
        %s329 = sand.u32 %s92, 1
        %s330 = scalar_lea.sflag [#allocation4], %s329
        %s331 = sand.u32 %s92, 1
        %s332 = scalar_lea.vmem [#allocation3], %s331
        %p333 = pneg %p105
        %p334 = pneg %p102
        %p335 = pneg %p133
        %p336 = pneg %p130
        %s337 = sand.u32 %s120, 1
        %s338 = sand.u32 %s120, 1
        %s339 = smul.addr %s338, 8
        %s340 = scalar_lea.vmem [#allocation5], %s339
        %p341 = pneg %p161
        %p342 = pneg %p158
        %p343 = scmp.lt.s32.totalorder %s24, 0
        %s344 = scalar_select %p343, %s24, 0
        %p345 = scmp.lt.s32.totalorder %s25, 63
        %s346 = scalar_select %p345, %s25, 63
        %s347 = smul.addr %s344, 64
        %s348 = sadd.s32 %s346, %s347
        %s349 = scalar_lea.vmem %s4, %s348
        %p350 = pneg %p189
        %p351 = pneg %p186
        %p352 = scmp.lt.s32.totalorder %s24, 0
        %s353 = scalar_select %p352, %s24, 0
        %p354 = scmp.lt.s32.totalorder %s25, 63
        %s355 = scalar_select %p354, %s25, 63
        %s356 = smul.addr %s353, 64
        %s357 = sadd.s32 %s355, %s356
        %s358 = scalar_lea.vmem %s5, %s357
        %s359 = smul.u32 2, %s24
        %p360 = scmp.lt.s32.totalorder %s359, 1
        %s361 = scalar_select %p360, %s359, 1
        %s362 = smul.addr %s361, 4
        %s363 = scalar_lea.vmem %s0, %s362
        %s364 = smul.u32 2, %s24
        %s365 = smul.u32 2, %s24
        %p366 = scmp.lt.s32.totalorder %s24, 0
        %s367 = scalar_select %p366, %s24, 0
        %p368 = scmp.lt.s32.totalorder %s25, 63
        %s369 = scalar_select %p368, %s25, 63
        %s370 = smul.addr %s367, 64
        %s371 = sadd.s32 %s369, %s370
        %s372 = scalar_lea.vmem %s4, %s371
        %p373 = scmp.lt.s32.totalorder %s24, 0
        %s374 = scalar_select %p373, %s24, 0
        %p375 = scmp.lt.s32.totalorder %s25, 63
        %s376 = scalar_select %p375, %s25, 63
        %s377 = smul.addr %s374, 64
        %s378 = sadd.s32 %s376, %s377
        %s379 = scalar_lea.vmem %s5, %s378
        %v381 = vld [vmem:[%s363] sm:$0xf]
        %v382 = vld [vmem:[%s363 + $0x4] sm:$0xf]
        %v383 = vld [vmem:[%s304] sm:$0xf]
        %v384 = vld [vmem:[%s304 + $0x4] sm:$0xf]
        %v385 = vld [vmem:[%s304 + $0x8] sm:$0xf]
        %v386 = vld [vmem:[%s304 + $0xc] sm:$0xf]
        %v389 = vunpack.c.l.b16 %v381
        %v390 = vunpack.c.l.b16 %v382
        %v391 = vpack.c.b16 %v390, %v389
        %v396 = vunpack.c.l.b16 %v383
        %v397 = vunpack.c.l.b16 %v384
        %v398 = vunpack.c.l.b16 %v385
        %v399 = vunpack.c.l.b16 %v386
        %v400 = vpack.c.b16 %v397, %v396
        %v401 = vpack.c.b16 %v399, %v398
        %vm404 = vcmask 261120
        %v406 = vsel %vm404, %v391, 0
        %408 = vmatprep.subr.bf16.mxu0 0
        %409 = vmatpush1.bf16.msra.mxu0 %v400
        %410 = vmatprep.subr.bf16.mxu0 0
        %411 = vmatpush1.bf16.msra.mxu0 %v401
        %412 = vmatprep.subr.bf16.mxu0 0
        %413 = vmatpush1.bf16.msra.mxu0 0
        %414 = vmatprep.subr.bf16.mxu0 0
        %415 = vmatpush1.bf16.msra.mxu0 0
        %416 = vmatprep.subr.bf16.mxu0 0
        %417 = vmatpush1.bf16.msra.mxu0 0
        %418 = vmatprep.subr.bf16.mxu0 0
        %419 = vmatpush1.bf16.msra.mxu0 0
        %420 = vmatprep.subr.bf16.mxu0 0
        %421 = vmatpush1.bf16.msra.mxu0 0
        %422 = vmatprep.subr.bf16.mxu0 0
        %423 = vmatpush1.bf16.msra.mxu0 0
        %424 = vmatprep.subr.bf16.mxu0 0
        %425 = vmatpush1.bf16.msra.mxu0 0
        %426 = vmatprep.subr.bf16.mxu0 0
        %427 = vmatpush1.bf16.msra.mxu0 0
        %428 = vmatprep.subr.bf16.mxu0 0
        %429 = vmatpush1.bf16.msra.mxu0 0
        %430 = vmatprep.subr.bf16.mxu0 0
        %431 = vmatpush1.bf16.msra.mxu0 0
        %432 = vmatprep.subr.bf16.mxu0 0
        %433 = vmatpush1.bf16.msra.mxu0 0
        %434 = vmatprep.subr.bf16.mxu0 0
        %435 = vmatpush1.bf16.msra.mxu0 0
        %436 = vmatprep.subr.bf16.mxu0 0
        %437 = vmatpush1.bf16.msra.mxu0 0
        %438 = vmatprep.subr.bf16.mxu0 0
        %439 = vmatpush1.bf16.msra.mxu0 0
        %440 = vmatprep.mubr.bf16.mxu0 0
        %441 = vmatmul.mubr.bf16.gmra.mrb[0].mxu0 %v406
        %v442 = vpop.f32.mrb[0].mxu0
        %v443 = vadd.f32 0.0, %v442
        %v444 = vpop.f32.mrb[0].mxu0
        %v445 = vpop.f32.mrb[0].mxu0
        %v446 = vadd.f32 0.0, %v445
        %v447 = vpop.f32.mrb[0].mxu0
        %448 = vdwg.mxu0
        %v449 = vadd.f32 %v443, %v446
        %v450 = vrot.slane %v449, 4
        %v451 = vadd.f32 %v449, %v450
        %v452 = vrot.slane %v451, 2
        %v453 = vadd.f32 %v451, %v452
        %v454 = vrot.slane %v453, 1
        %v455 = vadd.f32 %v453, %v454
        %456 = vst [vmem:[%s372] sm:$0x1] %v455
        %v457 = vmul.f32 %v443, %v443
        %v458 = vmul.f32 %v446, %v446
        %v459 = vadd.f32 %v457, %v458
        %v460 = vrot.slane %v459, 4
        %v461 = vadd.f32 %v459, %v460
        %v462 = vrot.slane %v461, 2
        %v463 = vadd.f32 %v461, %v462
        %v464 = vrot.slane %v463, 1
        %v465 = vadd.f32 %v463, %v464
        %466 = vst [vmem:[%s379] sm:$0x1] %v465
        %v467 = vld [vmem:[%s311] sm:$0x1]
        %v469 = vlaneseq
        %v470 = vshrl.u32 %v469, 7
        %v471 = vsub.s32 0, %v470
        %v472 = vrot.slane %v467, %v471
        %v474 = vadd.f32 %v443, %v472
        %v475 = vadd.f32 %v446, %v472
        %v476 = vpack.c.bf16 %v475, %v474
        %v478 = vunpack.c.l.b16 %v476
        %v479 = vunpack.c.h.b16 %v476
        %v480 = vpack.c.b16 %v478, %v478
        %v481 = vpack.c.b16 %v479, %v479
        %484 = vst [vmem:[%s340] sm:$0xf] %v480
        %485 = vst [vmem:[%s340 + $0x4] sm:$0xf] %v481
        %s486 = sand.u32 %s120, 1
        %s487 = sand.u32 %s120, 1
        %s488 = smul.addr %s487, 8
        %s489 = scalar_lea.vmem [#allocation5], %s488
        %p490 = scmp.lt.s32.totalorder %s24, 0
        %s491 = scalar_select %p490, %s24, 0
        %p492 = scmp.lt.s32.totalorder %s25, 63
        %s493 = scalar_select %p492, %s25, 63
        %s494 = smul.addr %s491, 64
        %s495 = sadd.s32 %s493, %s494
        %s496 = scalar_lea.vmem %s4, %s495
        %p497 = scmp.lt.s32.totalorder %s24, 0
        %s498 = scalar_select %p497, %s24, 0
        %p499 = scmp.lt.s32.totalorder %s25, 63
        %s500 = scalar_select %p499, %s25, 63
        %s501 = smul.addr %s498, 64
        %s502 = sadd.s32 %s500, %s501
        %s503 = scalar_lea.vmem %s5, %s502
        // Predicated region
        $region78: #{a_call__.30} parent=68 // pred_check
          %p504 = pneg %p130
        $region79: #{a_call__.30} parent=68 // pred_check_branch
          %506 = sbr.rel (%p504) target = $region81
        $region80: #{a_call__.30} parent=68 // pred_region
          %s507 = smul.u32 2, %s24
          %s508 = smul.addr %s507, 64
          %s509 = sadd.s32 %s25, %s508
          %s510 = smul.addr %s509, 4
          %s511 = scalar_lea.vmem %s3, %s510
          // Predicated region
          $region82: #{a_call__.30} parent=80 // pred_check
            _
          $region83: #{a_call__.30} parent=80 // pred_check_branch
            %513 = sbr.rel (0) target = $region85
          $region84: #{a_call__.30} parent=80 // pred_region
            // Predicated region
            $region86: #{a_call__.30} parent=84 // pred_check
              _
            $region87: #{a_call__.30} parent=84 // pred_check_branch
              %515 = sbr.rel target = $region89
            $region88: #{a_call__.30} parent=84 // pred_region
              // Predicated region
              $region101: #{a_call__.30} parent=88 // pred_check
                _
              $region102: #{a_call__.30} parent=88 // pred_check_branch
                %532 = sbr.rel (0) target = $region104
              $region103: #{a_call__.30} parent=88 // pred_region
                loop: start=0, step=1, limit=1
                $region105: #{a_call__.30} parent=103 // loop_pre_header
                  _
                $region106: #{a_call__.30} parent=103 // loop_header
                  %s534 = sphi 0, %s538
                  %p535 = scmp.ge.s32.totalorder %s534, 1
                  %s539 = sphi %s489, %s489
                  %s540 = sphi %s511, %s511
                $region107: #{a_call__.30} parent=103 // loop_header_branch
                  %537 = sbr.rel (%p535) target = $region111
                $region108: #{a_call__.30} parent=103 // loop_body
                  _
                $region109: #{a_call__.30} parent=103 // loop_footer
                  %s538 = sadd.s32 1, %s534
                $region110: #{a_call__.30} parent=103 // loop_footer_branch
                  %533 = sbr.rel target = $region106
                $region111: #{a_call__.30} parent=103 // loop_exit
                  _
                loop: start=0, step=1, limit=1
                $region112: #{a_call__.30} parent=103 // loop_pre_header
                  _
                $region113: #{a_call__.30} parent=103 // loop_header
                  %s543 = sphi 0, %s547
                  %p544 = scmp.ge.s32.totalorder %s543, 1
                  %s548 = sphi %s489, %s489
                  %s549 = sphi %s511, %s511
                $region114: #{a_call__.30} parent=103 // loop_header_branch
                  %546 = sbr.rel (%p544) target = $region118
                $region115: #{a_call__.30} parent=103 // loop_body
                  %v550 = vld [vmem:[%s548] sm:$0xf]
                  %551 = vst [vmem:[%s549] sm:$0xf] %v550
                  %v552 = vld [vmem:[%s548 + $0x4] sm:$0xf]
                  %553 = vst [vmem:[%s549 + $0x100] sm:$0xf] %v552
                $region116: #{a_call__.30} parent=103 // loop_footer
                  %s547 = sadd.s32 1, %s543
                $region117: #{a_call__.30} parent=103 // loop_footer_branch
                  %542 = sbr.rel target = $region113
                $region118: #{a_call__.30} parent=103 // loop_exit
                  _
              $region104: #{a_call__.30} parent=88 // pred_fallthru
                _
            $region89: #{a_call__.30} parent=84 // pred_fallthru
              _
            // Predicated region
            $region90: #{a_call__.30} parent=84 // pred_check
              _
            $region91: #{a_call__.30} parent=84 // pred_check_branch
              %517 = sbr.rel (0) target = $region93
            $region92: #{a_call__.30} parent=84 // pred_region
              loop: start=0, step=1, limit=1
              $region94: #{a_call__.30} parent=92 // loop_pre_header
                _
              $region95: #{a_call__.30} parent=92 // loop_header
                %s520 = sphi 0, %s524
                %p521 = scmp.ge.s32.totalorder %s520, 1
                %s525 = sphi %s489, %s489
                %s526 = sphi %s511, %s511
              $region96: #{a_call__.30} parent=92 // loop_header_branch
                %523 = sbr.rel (%p521) target = $region100
              $region97: #{a_call__.30} parent=92 // loop_body
                %v527 = vld [vmem:[%s525] sm:$0xf]
                %528 = vst [vmem:[%s526] sm:$0xf] %v527
                %v529 = vld [vmem:[%s525 + $0x4] sm:$0xf]
                %530 = vst [vmem:[%s526 + $0x100] sm:$0xf] %v529
              $region98: #{a_call__.30} parent=92 // loop_footer
                %s524 = sadd.s32 1, %s520
              $region99: #{a_call__.30} parent=92 // loop_footer_branch
                %519 = sbr.rel target = $region95
              $region100: #{a_call__.30} parent=92 // loop_exit
                _
            $region93: #{a_call__.30} parent=84 // pred_fallthru
              _
          $region85: #{a_call__.30} parent=80 // pred_fallthru
            _
          %554 = vnop
        $region81: #{a_call__.30} parent=68 // pred_fallthru
          _
        // Predicated region
        $region119: #{a_call__.30} parent=68 // pred_check
          %p555 = pneg %p158
        $region120: #{a_call__.30} parent=68 // pred_check_branch
          %557 = sbr.rel (%p555) target = $region122
        $region121: #{a_call__.30} parent=68 // pred_region
          _
        $region122: #{a_call__.30} parent=68 // pred_fallthru
          _
        // Predicated region
        $region123: #{a_call__.30} parent=68 // pred_check
          %p558 = pneg %p186
        $region124: #{a_call__.30} parent=68 // pred_check_branch
          %560 = sbr.rel (%p558) target = $region126
        $region125: #{a_call__.30} parent=68 // pred_region
          _
        $region126: #{a_call__.30} parent=68 // pred_fallthru
          _
      $region69: #{a_call__.30} parent=5 // pred_fallthru
        _
      %p561 = scmp.le.s32.totalorder 2, %s15
      // Predicated region
      $region127: #{a_call__.30} parent=5 // pred_check
        %p562 = pneg %p561
      $region128: #{a_call__.30} parent=5 // pred_check_branch
        %564 = sbr.rel (%p562) target = $region130
      $region129: #{a_call__.30} parent=5 // pred_region
        %s565 = ssub.s32 %s15, 2
        // Predicated region
        $region131: #{a_call__.30} parent=129 // pred_check
          %p566 = pneg %p136
        $region132: #{a_call__.30} parent=129 // pred_check_branch
          %568 = sbr.rel (%p566) target = $region134
        $region133: #{a_call__.30} parent=129 // pred_region
          %s569 = sand.u32 %s121, 1
          %s570 = sand.u32 %s121, 1
          %s571 = smul.addr %s570, 8
          %s572 = scalar_lea.vmem [#allocation5], %s571
        $region134: #{a_call__.30} parent=129 // pred_fallthru
          _
        // Predicated region
        $region135: #{a_call__.30} parent=129 // pred_check
          %p573 = pneg %p164
        $region136: #{a_call__.30} parent=129 // pred_check_branch
          %575 = sbr.rel (%p573) target = $region138
        $region137: #{a_call__.30} parent=129 // pred_region
          %p576 = scmp.lt.s32.totalorder %s26, 0
          %s577 = scalar_select %p576, %s26, 0
          %p578 = scmp.lt.s32.totalorder %s27, 63
          %s579 = scalar_select %p578, %s27, 63
          %s580 = smul.addr %s577, 64
          %s581 = sadd.s32 %s579, %s580
          %s582 = scalar_lea.vmem %s4, %s581
        $region138: #{a_call__.30} parent=129 // pred_fallthru
          _
        // Predicated region
        $region139: #{a_call__.30} parent=129 // pred_check
          %p583 = pneg %p192
        $region140: #{a_call__.30} parent=129 // pred_check_branch
          %585 = sbr.rel (%p583) target = $region142
        $region141: #{a_call__.30} parent=129 // pred_region
          %p586 = scmp.lt.s32.totalorder %s26, 0
          %s587 = scalar_select %p586, %s26, 0
          %p588 = scmp.lt.s32.totalorder %s27, 63
          %s589 = scalar_select %p588, %s27, 63
          %s590 = smul.addr %s587, 64
          %s591 = sadd.s32 %s589, %s590
          %s592 = scalar_lea.vmem %s5, %s591
        $region142: #{a_call__.30} parent=129 // pred_fallthru
          _
      $region130: #{a_call__.30} parent=5 // pred_fallthru
        _
    $region6: #{a_call__.30} parent=1 // loop_footer
      %s19 = sadd.s32 1, %s15
    $region7: #{a_call__.30} parent=1 // loop_footer_branch
      %14 = sbr.rel target = $region3
    $region8: #{a_call__.30} parent=1 // loop_exit
      _
    %593 = vsyncpa [#allocation4], 1
    %s594 = scalar_lea.sflag [#allocation4], 1
    %595 = vsyncpa %s594, 1

// kernel: a_call__.31
$region0: #{a_call__.31}
  #allocation0 [shape = 'u32[]', space=smem, size = 0x4, offset = 0x4, fixed_abs, tag = 'smem constant byte address 0x4 - core index']
  #allocation1 [shape = 'u32[144,128]{1,0:T(1,128)}', space=vmem, size = 0x12000, scoped, tag = 'internal scratch']
  %s0 = inlined_call_operand.vmem [shape: bf16[32,512], index: 0, kind: input, shape index: {}]
  %s1 = inlined_call_operand.vmem [shape: f32[1,512], index: 1, kind: input, shape index: {}]
  %s2 = inlined_call_operand.vmem [shape: f32[1,512], index: 2, kind: input, shape index: {}]
  %s3 = inlined_call_operand.vmem [shape: bf16[32,512], index: 3, kind: output, shape index: {}]
  %s4 = sld [smem:[#allocation0]]
  $region22: #{a_call__.31} parent=0
    _
  %s6 = ssub.s32 1, %s4
  %s7 = scalar_select 0, %s6, %s4
  // Predicated region
  $region2: #{a_call__.31} parent=0 // pred_check
    _
  $region3: #{a_call__.31} parent=0 // pred_check_branch
    %9 = sbr.rel (0) target = $region5
  $region4: #{a_call__.31} parent=0 // pred_region
    _
  $region5: #{a_call__.31} parent=0 // pred_fallthru
    _
  // Predicated region
  $region6: #{a_call__.31} parent=0 // pred_check
    _
  $region7: #{a_call__.31} parent=0 // pred_check_branch
    %11 = sbr.rel (0) target = $region9
  $region8: #{a_call__.31} parent=0 // pred_region
    _
  $region9: #{a_call__.31} parent=0 // pred_fallthru
    _
  // Predicated region
  $region10: #{a_call__.31} parent=0 // pred_check
    _
  $region11: #{a_call__.31} parent=0 // pred_check_branch
    %13 = sbr.rel (0) target = $region13
  $region12: #{a_call__.31} parent=0 // pred_region
    _
  $region13: #{a_call__.31} parent=0 // pred_fallthru
    _
  %v14 = vld [vmem:[%s0] sm:$0xff]
  %v15 = vld [vmem:[%s0 + $0x8] sm:$0xff]
  %v16 = vld [vmem:[%s0 + $0x10] sm:$0xff]
  %v17 = vld [vmem:[%s0 + $0x18] sm:$0xff]
  %v18 = vld [vmem:[%s0 + $0x20] sm:$0xff]
  %v19 = vld [vmem:[%s0 + $0x28] sm:$0xff]
  %v20 = vld [vmem:[%s0 + $0x30] sm:$0xff]
  %v21 = vld [vmem:[%s0 + $0x38] sm:$0xff]
  %v22 = vunpack.c.l.bf16 %v14
  %v23 = vunpack.c.h.bf16 %v14
  %v24 = vunpack.c.l.bf16 %v15
  %v25 = vunpack.c.h.bf16 %v15
  %v26 = vunpack.c.l.bf16 %v16
  %v27 = vunpack.c.h.bf16 %v16
  %v28 = vunpack.c.l.bf16 %v17
  %v29 = vunpack.c.h.bf16 %v17
  %v30 = vunpack.c.l.bf16 %v18
  %v31 = vunpack.c.h.bf16 %v18
  %v32 = vunpack.c.l.bf16 %v19
  %v33 = vunpack.c.h.bf16 %v19
  %v34 = vunpack.c.l.bf16 %v20
  %v35 = vunpack.c.h.bf16 %v20
  %v36 = vunpack.c.l.bf16 %v21
  %v37 = vunpack.c.h.bf16 %v21
  %v38 = vld [vmem:[%s1] sm:$0xf]
  %v40 = vlaneseq
  %v41 = vshrl.u32 %v40, 7
  %v42 = vsub.s32 0, %v41
  %v43 = vrot.slane %v38, %v42
  %v44 = vlaneseq
  %v45 = vshrl.u32 %v44, 7
  %v46 = vsub.s32 1, %v45
  %v47 = vrot.slane %v38, %v46
  %v48 = vlaneseq
  %v49 = vshrl.u32 %v48, 7
  %v50 = vsub.s32 2, %v49
  %v51 = vrot.slane %v38, %v50
  %v52 = vlaneseq
  %v53 = vshrl.u32 %v52, 7
  %v54 = vsub.s32 3, %v53
  %v55 = vrot.slane %v38, %v54
  %v60 = vmul.f32 %v22, %v43
  %v61 = vmul.f32 %v23, %v47
  %v62 = vmul.f32 %v24, %v51
  %v63 = vmul.f32 %v25, %v55
  %v64 = vmul.f32 %v26, %v43
  %v65 = vmul.f32 %v27, %v47
  %v66 = vmul.f32 %v28, %v51
  %v67 = vmul.f32 %v29, %v55
  %v68 = vmul.f32 %v30, %v43
  %v69 = vmul.f32 %v31, %v47
  %v70 = vmul.f32 %v32, %v51
  %v71 = vmul.f32 %v33, %v55
  %v72 = vmul.f32 %v34, %v43
  %v73 = vmul.f32 %v35, %v47
  %v74 = vmul.f32 %v36, %v51
  %v75 = vmul.f32 %v37, %v55
  %v76 = vld [vmem:[%s2] sm:$0xf]
  %v78 = vlaneseq
  %v79 = vshrl.u32 %v78, 7
  %v80 = vsub.s32 0, %v79
  %v81 = vrot.slane %v76, %v80
  %v82 = vlaneseq
  %v83 = vshrl.u32 %v82, 7
  %v84 = vsub.s32 1, %v83
  %v85 = vrot.slane %v76, %v84
  %v86 = vlaneseq
  %v87 = vshrl.u32 %v86, 7
  %v88 = vsub.s32 2, %v87
  %v89 = vrot.slane %v76, %v88
  %v90 = vlaneseq
  %v91 = vshrl.u32 %v90, 7
  %v92 = vsub.s32 3, %v91
  %v93 = vrot.slane %v76, %v92
  %v98 = vadd.f32 %v60, %v81
  %v99 = vadd.f32 %v61, %v85
  %v100 = vadd.f32 %v62, %v89
  %v101 = vadd.f32 %v63, %v93
  %v102 = vadd.f32 %v64, %v81
  %v103 = vadd.f32 %v65, %v85
  %v104 = vadd.f32 %v66, %v89
  %v105 = vadd.f32 %v67, %v93
  %v106 = vadd.f32 %v68, %v81
  %v107 = vadd.f32 %v69, %v85
  %v108 = vadd.f32 %v70, %v89
  %v109 = vadd.f32 %v71, %v93
  %v110 = vadd.f32 %v72, %v81
  %v111 = vadd.f32 %v73, %v85
  %v112 = vadd.f32 %v74, %v89
  %v113 = vadd.f32 %v75, %v93
  %v114 = vmax.f32 %v98, 0.0
  %v115 = vmax.f32 %v99, 0.0
  %v116 = vmax.f32 %v100, 0.0
  %v117 = vmax.f32 %v101, 0.0
  %v118 = vmax.f32 %v102, 0.0
  %v119 = vmax.f32 %v103, 0.0
  %v120 = vmax.f32 %v104, 0.0
  %v121 = vmax.f32 %v105, 0.0
  %v122 = vmax.f32 %v106, 0.0
  %v123 = vmax.f32 %v107, 0.0
  %v124 = vmax.f32 %v108, 0.0
  %v125 = vmax.f32 %v109, 0.0
  %v126 = vmax.f32 %v110, 0.0
  %v127 = vmax.f32 %v111, 0.0
  %v128 = vmax.f32 %v112, 0.0
  %v129 = vmax.f32 %v113, 0.0
  %v130 = vpack.c.bf16 %v118, %v114
  %v131 = vpack.c.bf16 %v119, %v115
  %v132 = vpack.c.bf16 %v120, %v116
  %v133 = vpack.c.bf16 %v121, %v117
  %v134 = vpack.c.bf16 %v126, %v122
  %v135 = vpack.c.bf16 %v127, %v123
  %v136 = vpack.c.bf16 %v128, %v124
  %v137 = vpack.c.bf16 %v129, %v125
  %v146 = vunpack.c.l.b16 %v130
  %v147 = vunpack.c.l.b16 %v131
  %v148 = vunpack.c.l.b16 %v132
  %v149 = vunpack.c.l.b16 %v133
  %v150 = vunpack.c.h.b16 %v130
  %v151 = vunpack.c.h.b16 %v131
  %v152 = vunpack.c.h.b16 %v132
  %v153 = vunpack.c.h.b16 %v133
  %v154 = vunpack.c.l.b16 %v134
  %v155 = vunpack.c.l.b16 %v135
  %v156 = vunpack.c.l.b16 %v136
  %v157 = vunpack.c.l.b16 %v137
  %v158 = vunpack.c.h.b16 %v134
  %v159 = vunpack.c.h.b16 %v135
  %v160 = vunpack.c.h.b16 %v136
  %v161 = vunpack.c.h.b16 %v137
  %v162 = vpack.c.b16 %v147, %v146
  %v163 = vpack.c.b16 %v149, %v148
  %v164 = vpack.c.b16 %v151, %v150
  %v165 = vpack.c.b16 %v153, %v152
  %v166 = vpack.c.b16 %v155, %v154
  %v167 = vpack.c.b16 %v157, %v156
  %v168 = vpack.c.b16 %v159, %v158
  %v169 = vpack.c.b16 %v161, %v160
  %178 = vst [vmem:[%s3] sm:$0xff] %v162
  %179 = vst [vmem:[%s3 + $0x8] sm:$0xff] %v163
  %180 = vst [vmem:[%s3 + $0x10] sm:$0xff] %v164
  %181 = vst [vmem:[%s3 + $0x18] sm:$0xff] %v165
  %182 = vst [vmem:[%s3 + $0x20] sm:$0xff] %v166
  %183 = vst [vmem:[%s3 + $0x28] sm:$0xff] %v167
  %184 = vst [vmem:[%s3 + $0x30] sm:$0xff] %v168
  %185 = vst [vmem:[%s3 + $0x38] sm:$0xff] %v169
  // Predicated region
  $region14: #{a_call__.31} parent=0 // pred_check
    _
  $region15: #{a_call__.31} parent=0 // pred_check_branch
    %187 = sbr.rel (0) target = $region17
  $region16: #{a_call__.31} parent=0 // pred_region
    _
  $region17: #{a_call__.31} parent=0 // pred_fallthru
    _
  // Predicated region
  $region18: #{a_call__.31} parent=0 // pred_check
    _
  $region19: #{a_call__.31} parent=0 // pred_check_branch
    %189 = sbr.rel (0) target = $region21
  $region20: #{a_call__.31} parent=0 // pred_region
    _
  $region21: #{a_call__.31} parent=0 // pred_fallthru
    _

// kernel: a_call__.39
$region0: #{a_call__.39}
  #allocation0 [shape = 'u32[]', space=smem, size = 0x4, offset = 0x4, fixed_abs, tag = 'smem constant byte address 0x4 - core index']
  #allocation1 [shape = 'u32[144,128]{1,0:T(1,128)}', space=vmem, size = 0x12000, scoped, tag = 'internal scratch']
  %s0 = inlined_call_operand.vmem [shape: bf16[32,256], index: 0, kind: input, shape index: {}]
  %s1 = inlined_call_operand.vmem [shape: f32[1,256], index: 1, kind: input, shape index: {}]
  %s2 = inlined_call_operand.vmem [shape: f32[1,256], index: 2, kind: input, shape index: {}]
  %s3 = inlined_call_operand.vmem [shape: bf16[32,256], index: 3, kind: output, shape index: {}]
  %s4 = sld [smem:[#allocation0]]
  $region22: #{a_call__.39} parent=0
    _
  %s6 = ssub.s32 1, %s4
  %s7 = scalar_select 0, %s6, %s4
  // Predicated region
  $region2: #{a_call__.39} parent=0 // pred_check
    _
  $region3: #{a_call__.39} parent=0 // pred_check_branch
    %9 = sbr.rel (0) target = $region5
  $region4: #{a_call__.39} parent=0 // pred_region
    _
  $region5: #{a_call__.39} parent=0 // pred_fallthru
    _
  // Predicated region
  $region6: #{a_call__.39} parent=0 // pred_check
    _
  $region7: #{a_call__.39} parent=0 // pred_check_branch
    %11 = sbr.rel (0) target = $region9
  $region8: #{a_call__.39} parent=0 // pred_region
    _
  $region9: #{a_call__.39} parent=0 // pred_fallthru
    _
  // Predicated region
  $region10: #{a_call__.39} parent=0 // pred_check
    _
  $region11: #{a_call__.39} parent=0 // pred_check_branch
    %13 = sbr.rel (0) target = $region13
  $region12: #{a_call__.39} parent=0 // pred_region
    _
  $region13: #{a_call__.39} parent=0 // pred_fallthru
    _
  %v14 = vld [vmem:[%s0] sm:$0xff]
  %v15 = vld [vmem:[%s0 + $0x8] sm:$0xff]
  %v16 = vld [vmem:[%s0 + $0x10] sm:$0xff]
  %v17 = vld [vmem:[%s0 + $0x18] sm:$0xff]
  %v18 = vunpack.c.l.bf16 %v14
  %v19 = vunpack.c.h.bf16 %v14
  %v20 = vunpack.c.l.bf16 %v15
  %v21 = vunpack.c.h.bf16 %v15
  %v22 = vunpack.c.l.bf16 %v16
  %v23 = vunpack.c.h.bf16 %v16
  %v24 = vunpack.c.l.bf16 %v17
  %v25 = vunpack.c.h.bf16 %v17
  %v26 = vld [vmem:[%s1] sm:$0x3]
  %v28 = vlaneseq
  %v29 = vshrl.u32 %v28, 7
  %v30 = vsub.s32 0, %v29
  %v31 = vrot.slane %v26, %v30
  %v32 = vlaneseq
  %v33 = vshrl.u32 %v32, 7
  %v34 = vsub.s32 1, %v33
  %v35 = vrot.slane %v26, %v34
  %v38 = vmul.f32 %v18, %v31
  %v39 = vmul.f32 %v19, %v35
  %v40 = vmul.f32 %v20, %v31
  %v41 = vmul.f32 %v21, %v35
  %v42 = vmul.f32 %v22, %v31
  %v43 = vmul.f32 %v23, %v35
  %v44 = vmul.f32 %v24, %v31
  %v45 = vmul.f32 %v25, %v35
  %v46 = vld [vmem:[%s2] sm:$0x3]
  %v48 = vlaneseq
  %v49 = vshrl.u32 %v48, 7
  %v50 = vsub.s32 0, %v49
  %v51 = vrot.slane %v46, %v50
  %v52 = vlaneseq
  %v53 = vshrl.u32 %v52, 7
  %v54 = vsub.s32 1, %v53
  %v55 = vrot.slane %v46, %v54
  %v58 = vadd.f32 %v38, %v51
  %v59 = vadd.f32 %v39, %v55
  %v60 = vadd.f32 %v40, %v51
  %v61 = vadd.f32 %v41, %v55
  %v62 = vadd.f32 %v42, %v51
  %v63 = vadd.f32 %v43, %v55
  %v64 = vadd.f32 %v44, %v51
  %v65 = vadd.f32 %v45, %v55
  %v66 = vmax.f32 %v58, 0.0
  %v67 = vmax.f32 %v59, 0.0
  %v68 = vmax.f32 %v60, 0.0
  %v69 = vmax.f32 %v61, 0.0
  %v70 = vmax.f32 %v62, 0.0
  %v71 = vmax.f32 %v63, 0.0
  %v72 = vmax.f32 %v64, 0.0
  %v73 = vmax.f32 %v65, 0.0
  %v74 = vpack.c.bf16 %v68, %v66
  %v75 = vpack.c.bf16 %v69, %v67
  %v76 = vpack.c.bf16 %v72, %v70
  %v77 = vpack.c.bf16 %v73, %v71
  %v82 = vunpack.c.l.b16 %v74
  %v83 = vunpack.c.l.b16 %v75
  %v84 = vunpack.c.h.b16 %v74
  %v85 = vunpack.c.h.b16 %v75
  %v86 = vunpack.c.l.b16 %v76
  %v87 = vunpack.c.l.b16 %v77
  %v88 = vunpack.c.h.b16 %v76
  %v89 = vunpack.c.h.b16 %v77
  %v90 = vpack.c.b16 %v83, %v82
  %v91 = vpack.c.b16 %v85, %v84
  %v92 = vpack.c.b16 %v87, %v86
  %v93 = vpack.c.b16 %v89, %v88
  %98 = vst [vmem:[%s3] sm:$0xff] %v90
  %99 = vst [vmem:[%s3 + $0x8] sm:$0xff] %v91
  %100 = vst [vmem:[%s3 + $0x10] sm:$0xff] %v92
  %101 = vst [vmem:[%s3 + $0x18] sm:$0xff] %v93
  // Predicated region
  $region14: #{a_call__.39} parent=0 // pred_check
    _
  $region15: #{a_call__.39} parent=0 // pred_check_branch
    %103 = sbr.rel (0) target = $region17
  $region16: #{a_call__.39} parent=0 // pred_region
    _
  $region17: #{a_call__.39} parent=0 // pred_fallthru
    _
  // Predicated region
  $region18: #{a_call__.39} parent=0 // pred_check
    _
  $region19: #{a_call__.39} parent=0 // pred_check_branch
    %105 = sbr.rel (0) target = $region21
  $region20: #{a_call__.39} parent=0 // pred_region
    _
  $region21: #{a_call__.39} parent=0 // pred_fallthru
    _

// kernel: a_call__.32
$region0: #{a_call__.32}
  #allocation0 [shape = 'u32[]', space=smem, size = 0x4, offset = 0x4, fixed_abs, tag = 'smem constant byte address 0x4 - core index']
  #allocation1 [shape = 'u32[144,128]{1,0:T(1,128)}', space=vmem, size = 0x12000, scoped, tag = 'internal scratch']
  %s0 = inlined_call_operand.vmem [shape: bf16[32,2048], index: 0, kind: input, shape index: {}]
  %s1 = inlined_call_operand.vmem [shape: bf16[2048,256], index: 1, kind: input, shape index: {}]
  %s2 = inlined_call_operand.vmem [shape: f32[1,256], index: 2, kind: input, shape index: {}]
  %s3 = inlined_call_operand.vmem [shape: bf16[32,256], index: 3, kind: output, shape index: {0}]
  %s4 = inlined_call_operand.vmem [shape: f32[1,1,256], index: 4, kind: output, shape index: {1}]
  %s5 = inlined_call_operand.vmem [shape: f32[1,1,256], index: 5, kind: output, shape index: {2}]
  %6 = xla_tuple %s3, %s4, %s5
  %s7 = sld [smem:[#allocation0]]
  $region139: #{a_call__.32} parent=0
    _
  %s9 = ssub.s32 1, %s7
  %s10 = scalar_select 0, %s9, %s7
  $region1: #{a_call__.32} parent=0
    #allocation2 [shape = 'u8[1048576]{0}', space=vmem, size = 0x100000, scoped, tag = 'input window, operand 1']
    #allocation3 [shape = 'u8[16384]{0}', space=vmem, size = 0x4000, scoped, tag = 'output window, operand 0']
    loop: start=0, step=1, limit=4
    $region2: #{a_call__.32} parent=1 // loop_pre_header
      _
    $region3: #{a_call__.32} parent=1 // loop_header
      %s12 = sphi 0, %s16
      %p13 = scmp.ge.s32.totalorder %s12, 4
      %s19 = sphi 0, %s31
      %s20 = sphi 0, %s27
      %s21 = sphi 0, %s19
      %s22 = sphi 0, %s20
      %s23 = sphi 0, %s21
      %s24 = sphi 0, %s22
      %s34 = sphi 0, %s36
      %s37 = sphi 0, %s34
      %s38 = sphi 0, %s37
      %s54 = sphi 0, %s38
      %s60 = sphi 0, %s62
      %s63 = sphi 0, %s60
      %s64 = sphi 0, %s63
      %s80 = sphi 0, %s64
      %s86 = sphi 0, %s88
      %s89 = sphi 0, %s86
      %s90 = sphi 0, %s89
      %s106 = sphi 0, %s90
      %s114 = sphi 0, %s116
      %s117 = sphi 0, %s114
      %s118 = sphi 0, %s117
      %s134 = sphi 0, %s118
      %s142 = sphi 0, %s144
      %s145 = sphi 0, %s142
      %s146 = sphi 0, %s145
      %s162 = sphi 0, %s146
      %s170 = sphi 0, %s172
      %s173 = sphi 0, %s170
      %s174 = sphi 0, %s173
      %s190 = sphi 0, %s174
    $region4: #{a_call__.32} parent=1 // loop_header_branch
      %15 = sbr.rel (%p13) target = $region8
    $region5: #{a_call__.32} parent=1 // loop_body
      %s17 = ssub.s32 %s12, 1
      %s18 = ssub.s32 %s12, 2
      %s25 = sadd.s32 1, %s20
      %p26 = scmp.ge.s32.totalorder %s25, 2
      %s27 = scalar_select %p26, 0, %s25
      %s28 = sadd.s32 1, %s19
      %s29 = scalar_select %p26, %s28, %s19
      %p30 = scmp.ge.s32.totalorder %s29, 1
      %s31 = scalar_select %p30, 0, %s29
      %s32 = ssub.s32 %s19, %s31
      %p33 = scmp.eq.s32.totalorder %s32, 0
      %s35 = sadd.s32 %s34, 1
      %s36 = scalar_select %p33, %s34, %s35
      %p39 = pneg %p33
      %p40 = scmp.eq.s32.totalorder %s12, 1
      %p41 = por %p39, %p40
      %p42 = scmp.ne.s32.totalorder %s34, %s37
      %p43 = scmp.eq.s32.totalorder %s12, 0
      %p44 = por %p42, %p43
      %p45 = scmp.ne.s32.totalorder %s34, %s37
      %p46 = scmp.eq.s32.totalorder %s17, 1
      %p47 = por %p45, %p46
      %p48 = scmp.ne.s32.totalorder %s37, %s38
      %p49 = scmp.eq.s32.totalorder %s17, 0
      %p50 = por %p48, %p49
      %p51 = scmp.ne.s32.totalorder %s37, %s38
      %p52 = scmp.eq.s32.totalorder %s18, 1
      %p53 = por %p51, %p52
      %p55 = scmp.ne.s32.totalorder %s38, %s54
      %p56 = scmp.eq.s32.totalorder %s18, 0
      %p57 = por %p55, %p56
      %s58 = ssub.s32 %s20, %s27
      %p59 = scmp.eq.s32.totalorder %s58, 0
      %s61 = sadd.s32 %s60, 1
      %s62 = scalar_select %p59, %s60, %s61
      %p65 = pneg %p59
      %p66 = scmp.eq.s32.totalorder %s12, 1
      %p67 = por %p65, %p66
      %p68 = scmp.ne.s32.totalorder %s60, %s63
      %p69 = scmp.eq.s32.totalorder %s12, 0
      %p70 = por %p68, %p69
      %p71 = scmp.ne.s32.totalorder %s60, %s63
      %p72 = scmp.eq.s32.totalorder %s17, 1
      %p73 = por %p71, %p72
      %p74 = scmp.ne.s32.totalorder %s63, %s64
      %p75 = scmp.eq.s32.totalorder %s17, 0
      %p76 = por %p74, %p75
      %p77 = scmp.ne.s32.totalorder %s63, %s64
      %p78 = scmp.eq.s32.totalorder %s18, 1
      %p79 = por %p77, %p78
      %p81 = scmp.ne.s32.totalorder %s64, %s80
      %p82 = scmp.eq.s32.totalorder %s18, 0
      %p83 = por %p81, %p82
      %s84 = ssub.s32 %s20, %s27
      %p85 = scmp.eq.s32.totalorder %s84, 0
      %s87 = sadd.s32 %s86, 1
      %s88 = scalar_select %p85, %s86, %s87
      %p91 = pneg %p85
      %p92 = scmp.eq.s32.totalorder %s12, 1
      %p93 = por %p91, %p92
      %p94 = scmp.ne.s32.totalorder %s86, %s89
      %p95 = scmp.eq.s32.totalorder %s12, 0
      %p96 = por %p94, %p95
      %p97 = scmp.ne.s32.totalorder %s86, %s89
      %p98 = scmp.eq.s32.totalorder %s17, 1
      %p99 = por %p97, %p98
      %p100 = scmp.ne.s32.totalorder %s89, %s90
      %p101 = scmp.eq.s32.totalorder %s17, 0
      %p102 = por %p100, %p101
      %p103 = scmp.ne.s32.totalorder %s89, %s90
      %p104 = scmp.eq.s32.totalorder %s18, 1
      %p105 = por %p103, %p104
      %p107 = scmp.ne.s32.totalorder %s90, %s106
      %p108 = scmp.eq.s32.totalorder %s18, 0
      %p109 = por %p107, %p108
      %s110 = ssub.s32 %s19, %s31
      %s111 = ssub.s32 %s20, %s27
      %s112 = sor.u32 %s110, %s111
      %p113 = scmp.eq.s32.totalorder %s112, 0
      %s115 = sadd.s32 %s114, 1
      %s116 = scalar_select %p113, %s114, %s115
      %p119 = pneg %p113
      %p120 = scmp.eq.s32.totalorder %s12, 1
      %p121 = por %p119, %p120
      %p122 = scmp.ne.s32.totalorder %s114, %s117
      %p123 = scmp.eq.s32.totalorder %s12, 0
      %p124 = por %p122, %p123
      %p125 = scmp.ne.s32.totalorder %s114, %s117
      %p126 = scmp.eq.s32.totalorder %s17, 1
      %p127 = por %p125, %p126
      %p128 = scmp.ne.s32.totalorder %s117, %s118
      %p129 = scmp.eq.s32.totalorder %s17, 0
      %p130 = por %p128, %p129
      %p131 = scmp.ne.s32.totalorder %s117, %s118
      %p132 = scmp.eq.s32.totalorder %s18, 1
      %p133 = por %p131, %p132
      %p135 = scmp.ne.s32.totalorder %s118, %s134
      %p136 = scmp.eq.s32.totalorder %s18, 0
      %p137 = por %p135, %p136
      %s138 = ssub.s32 %s19, %s31
      %s139 = ssub.s32 %s20, %s27
      %s140 = sor.u32 %s138, %s139
      %p141 = scmp.eq.s32.totalorder %s140, 0
      %s143 = sadd.s32 %s142, 1
      %s144 = scalar_select %p141, %s142, %s143
      %p147 = pneg %p141
      %p148 = scmp.eq.s32.totalorder %s12, 1
      %p149 = por %p147, %p148
      %p150 = scmp.ne.s32.totalorder %s142, %s145
      %p151 = scmp.eq.s32.totalorder %s12, 0
      %p152 = por %p150, %p151
      %p153 = scmp.ne.s32.totalorder %s142, %s145
      %p154 = scmp.eq.s32.totalorder %s17, 1
      %p155 = por %p153, %p154
      %p156 = scmp.ne.s32.totalorder %s145, %s146
      %p157 = scmp.eq.s32.totalorder %s17, 0
      %p158 = por %p156, %p157
      %p159 = scmp.ne.s32.totalorder %s145, %s146
      %p160 = scmp.eq.s32.totalorder %s18, 1
      %p161 = por %p159, %p160
      %p163 = scmp.ne.s32.totalorder %s146, %s162
      %p164 = scmp.eq.s32.totalorder %s18, 0
      %p165 = por %p163, %p164
      %s166 = ssub.s32 %s19, %s31
      %s167 = ssub.s32 %s20, %s27
      %s168 = sor.u32 %s166, %s167
      %p169 = scmp.eq.s32.totalorder %s168, 0
      %s171 = sadd.s32 %s170, 1
      %s172 = scalar_select %p169, %s170, %s171
      %p175 = pneg %p169
      %p176 = scmp.eq.s32.totalorder %s12, 1
      %p177 = por %p175, %p176
      %p178 = scmp.ne.s32.totalorder %s170, %s173
      %p179 = scmp.eq.s32.totalorder %s12, 0
      %p180 = por %p178, %p179
      %p181 = scmp.ne.s32.totalorder %s170, %s173
      %p182 = scmp.eq.s32.totalorder %s17, 1
      %p183 = por %p181, %p182
      %p184 = scmp.ne.s32.totalorder %s173, %s174
      %p185 = scmp.eq.s32.totalorder %s17, 0
      %p186 = por %p184, %p185
      %p187 = scmp.ne.s32.totalorder %s173, %s174
      %p188 = scmp.eq.s32.totalorder %s18, 1
      %p189 = por %p187, %p188
      %p191 = scmp.ne.s32.totalorder %s174, %s190
      %p192 = scmp.eq.s32.totalorder %s18, 0
      %p193 = por %p191, %p192
      %p194 = scmp.le.s32.totalorder 1, %s12
      %p195 = scmp.lt.s32.totalorder %s12, 3
      %p196 = pnand %p194, %p195
      %p197 = pneg %p196
      // Predicated region
      $region9: #{a_call__.32} parent=5 // pred_check
        _
      $region10: #{a_call__.32} parent=5 // pred_check_branch
        %199 = sbr.rel (%p196) target = $region12
      $region11: #{a_call__.32} parent=5 // pred_region
        %s200 = ssub.s32 %s12, 1
        // Predicated region
        $region13: #{a_call__.32} parent=11 // pred_check
          %p201 = pneg %p50
        $region14: #{a_call__.32} parent=11 // pred_check_branch
          %203 = sbr.rel (%p201) target = $region16
        $region15: #{a_call__.32} parent=11 // pred_region
          %s204 = smul.u32 4, %s21
          %p205 = scmp.lt.s32.totalorder %s204, 3
          %s206 = scalar_select %p205, %s204, 3
          %s207 = smul.addr %s206, 16
          %s208 = smul.addr %s207, 4
          %s209 = scalar_lea.vmem %s0, %s208
          %s210 = smul.u32 4, %s21
        $region16: #{a_call__.32} parent=11 // pred_fallthru
          _
      $region12: #{a_call__.32} parent=5 // pred_fallthru
        _
      %p211 = scmp.lt.s32.totalorder %s12, 2
      // Predicated region
      $region17: #{a_call__.32} parent=5 // pred_check
        %p212 = pneg %p211
      $region18: #{a_call__.32} parent=5 // pred_check_branch
        %214 = sbr.rel (%p212) target = $region20
      $region19: #{a_call__.32} parent=5 // pred_region
        // Predicated region
        $region21: #{a_call__.32} parent=19 // pred_check
          %p215 = pneg %p70
        $region22: #{a_call__.32} parent=19 // pred_check_branch
          %217 = sbr.rel (%p215) target = $region24
        $region23: #{a_call__.32} parent=19 // pred_region
          %s218 = sand.u32 %s60, 1
          %s219 = sand.u32 %s60, 1
          %s220 = smul.addr %s219, 1024
          %s221 = scalar_lea.vmem [#allocation2], %s220
          %s222 = smul.addr %s20, 4
          %s223 = scalar_lea.vmem %s1, %s222
          // Predicated region
          $region25: #{a_call__.32} parent=23 // pred_check
            _
          $region26: #{a_call__.32} parent=23 // pred_check_branch
            %225 = sbr.rel (0) target = $region28
          $region27: #{a_call__.32} parent=23 // pred_region
            // Predicated region
            $region29: #{a_call__.32} parent=27 // pred_check
              _
            $region30: #{a_call__.32} parent=27 // pred_check_branch
              %227 = sbr.rel target = $region32
            $region31: #{a_call__.32} parent=27 // pred_region
              // Predicated region
              $region44: #{a_call__.32} parent=31 // pred_check
                _
              $region45: #{a_call__.32} parent=31 // pred_check_branch
                %752 = sbr.rel (0) target = $region47
              $region46: #{a_call__.32} parent=31 // pred_region
                loop: start=0, step=1, limit=1
                $region48: #{a_call__.32} parent=46 // loop_pre_header
                  _
                $region49: #{a_call__.32} parent=46 // loop_header
                  %s754 = sphi 0, %s758
                  %p755 = scmp.ge.s32.totalorder %s754, 1
                  %s759 = sphi %s223, %s223
                  %s760 = sphi %s221, %s221
                $region50: #{a_call__.32} parent=46 // loop_header_branch
                  %757 = sbr.rel (%p755) target = $region54
                $region51: #{a_call__.32} parent=46 // loop_body
                  _
                $region52: #{a_call__.32} parent=46 // loop_footer
                  %s758 = sadd.s32 1, %s754
                $region53: #{a_call__.32} parent=46 // loop_footer_branch
                  %753 = sbr.rel target = $region49
                $region54: #{a_call__.32} parent=46 // loop_exit
                  _
                loop: start=0, step=1, limit=1
                $region55: #{a_call__.32} parent=46 // loop_pre_header
                  _
                $region56: #{a_call__.32} parent=46 // loop_header
                  %s763 = sphi 0, %s767
                  %p764 = scmp.ge.s32.totalorder %s763, 1
                  %s768 = sphi %s223, %s223
                  %s769 = sphi %s221, %s221
                $region57: #{a_call__.32} parent=46 // loop_header_branch
                  %766 = sbr.rel (%p764) target = $region61
                $region58: #{a_call__.32} parent=46 // loop_body
                  %v770 = vld [vmem:[%s768] sm:$0xf]
                  %771 = vst [vmem:[%s769] sm:$0xf] %v770
                  %v772 = vld [vmem:[%s768 + $0x8] sm:$0xf]
                  %773 = vst [vmem:[%s769 + $0x4] sm:$0xf] %v772
                  %v774 = vld [vmem:[%s768 + $0x10] sm:$0xf]
                  %775 = vst [vmem:[%s769 + $0x8] sm:$0xf] %v774
                  %v776 = vld [vmem:[%s768 + $0x18] sm:$0xf]
                  %777 = vst [vmem:[%s769 + $0xc] sm:$0xf] %v776
                  %v778 = vld [vmem:[%s768 + $0x20] sm:$0xf]
                  %779 = vst [vmem:[%s769 + $0x10] sm:$0xf] %v778
                  %v780 = vld [vmem:[%s768 + $0x28] sm:$0xf]
                  %781 = vst [vmem:[%s769 + $0x14] sm:$0xf] %v780
                  %v782 = vld [vmem:[%s768 + $0x30] sm:$0xf]
                  %783 = vst [vmem:[%s769 + $0x18] sm:$0xf] %v782
                  %v784 = vld [vmem:[%s768 + $0x38] sm:$0xf]
                  %785 = vst [vmem:[%s769 + $0x1c] sm:$0xf] %v784
                  %v786 = vld [vmem:[%s768 + $0x40] sm:$0xf]
                  %787 = vst [vmem:[%s769 + $0x20] sm:$0xf] %v786
                  %v788 = vld [vmem:[%s768 + $0x48] sm:$0xf]
                  %789 = vst [vmem:[%s769 + $0x24] sm:$0xf] %v788
                  %v790 = vld [vmem:[%s768 + $0x50] sm:$0xf]
                  %791 = vst [vmem:[%s769 + $0x28] sm:$0xf] %v790
                  %v792 = vld [vmem:[%s768 + $0x58] sm:$0xf]
                  %793 = vst [vmem:[%s769 + $0x2c] sm:$0xf] %v792
                  %v794 = vld [vmem:[%s768 + $0x60] sm:$0xf]
                  %795 = vst [vmem:[%s769 + $0x30] sm:$0xf] %v794
                  %v796 = vld [vmem:[%s768 + $0x68] sm:$0xf]
                  %797 = vst [vmem:[%s769 + $0x34] sm:$0xf] %v796
                  %v798 = vld [vmem:[%s768 + $0x70] sm:$0xf]
                  %799 = vst [vmem:[%s769 + $0x38] sm:$0xf] %v798
                  %v800 = vld [vmem:[%s768 + $0x78] sm:$0xf]
                  %801 = vst [vmem:[%s769 + $0x3c] sm:$0xf] %v800
                  %v802 = vld [vmem:[%s768 + $0x80] sm:$0xf]
                  %803 = vst [vmem:[%s769 + $0x40] sm:$0xf] %v802
                  %v804 = vld [vmem:[%s768 + $0x88] sm:$0xf]
                  %805 = vst [vmem:[%s769 + $0x44] sm:$0xf] %v804
                  %v806 = vld [vmem:[%s768 + $0x90] sm:$0xf]
                  %807 = vst [vmem:[%s769 + $0x48] sm:$0xf] %v806
                  %v808 = vld [vmem:[%s768 + $0x98] sm:$0xf]
                  %809 = vst [vmem:[%s769 + $0x4c] sm:$0xf] %v808
                  %v810 = vld [vmem:[%s768 + $0xa0] sm:$0xf]
                  %811 = vst [vmem:[%s769 + $0x50] sm:$0xf] %v810
                  %v812 = vld [vmem:[%s768 + $0xa8] sm:$0xf]
                  %813 = vst [vmem:[%s769 + $0x54] sm:$0xf] %v812
                  %v814 = vld [vmem:[%s768 + $0xb0] sm:$0xf]
                  %815 = vst [vmem:[%s769 + $0x58] sm:$0xf] %v814
                  %v816 = vld [vmem:[%s768 + $0xb8] sm:$0xf]
                  %817 = vst [vmem:[%s769 + $0x5c] sm:$0xf] %v816
                  %v818 = vld [vmem:[%s768 + $0xc0] sm:$0xf]
                  %819 = vst [vmem:[%s769 + $0x60] sm:$0xf] %v818
                  %v820 = vld [vmem:[%s768 + $0xc8] sm:$0xf]
                  %821 = vst [vmem:[%s769 + $0x64] sm:$0xf] %v820
                  %v822 = vld [vmem:[%s768 + $0xd0] sm:$0xf]
                  %823 = vst [vmem:[%s769 + $0x68] sm:$0xf] %v822
                  %v824 = vld [vmem:[%s768 + $0xd8] sm:$0xf]
                  %825 = vst [vmem:[%s769 + $0x6c] sm:$0xf] %v824
                  %v826 = vld [vmem:[%s768 + $0xe0] sm:$0xf]
                  %827 = vst [vmem:[%s769 + $0x70] sm:$0xf] %v826
                  %v828 = vld [vmem:[%s768 + $0xe8] sm:$0xf]
                  %829 = vst [vmem:[%s769 + $0x74] sm:$0xf] %v828
                  %v830 = vld [vmem:[%s768 + $0xf0] sm:$0xf]
                  %831 = vst [vmem:[%s769 + $0x78] sm:$0xf] %v830
                  %v832 = vld [vmem:[%s768 + $0xf8] sm:$0xf]
                  %833 = vst [vmem:[%s769 + $0x7c] sm:$0xf] %v832
                  %v834 = vld [vmem:[%s768 + $0x100] sm:$0xf]
                  %835 = vst [vmem:[%s769 + $0x80] sm:$0xf] %v834
                  %v836 = vld [vmem:[%s768 + $0x108] sm:$0xf]
                  %837 = vst [vmem:[%s769 + $0x84] sm:$0xf] %v836
                  %v838 = vld [vmem:[%s768 + $0x110] sm:$0xf]
                  %839 = vst [vmem:[%s769 + $0x88] sm:$0xf] %v838
                  %v840 = vld [vmem:[%s768 + $0x118] sm:$0xf]
                  %841 = vst [vmem:[%s769 + $0x8c] sm:$0xf] %v840
                  %v842 = vld [vmem:[%s768 + $0x120] sm:$0xf]
                  %843 = vst [vmem:[%s769 + $0x90] sm:$0xf] %v842
                  %v844 = vld [vmem:[%s768 + $0x128] sm:$0xf]
                  %845 = vst [vmem:[%s769 + $0x94] sm:$0xf] %v844
                  %v846 = vld [vmem:[%s768 + $0x130] sm:$0xf]
                  %847 = vst [vmem:[%s769 + $0x98] sm:$0xf] %v846
                  %v848 = vld [vmem:[%s768 + $0x138] sm:$0xf]
                  %849 = vst [vmem:[%s769 + $0x9c] sm:$0xf] %v848
                  %v850 = vld [vmem:[%s768 + $0x140] sm:$0xf]
                  %851 = vst [vmem:[%s769 + $0xa0] sm:$0xf] %v850
                  %v852 = vld [vmem:[%s768 + $0x148] sm:$0xf]
                  %853 = vst [vmem:[%s769 + $0xa4] sm:$0xf] %v852
                  %v854 = vld [vmem:[%s768 + $0x150] sm:$0xf]
                  %855 = vst [vmem:[%s769 + $0xa8] sm:$0xf] %v854
                  %v856 = vld [vmem:[%s768 + $0x158] sm:$0xf]
                  %857 = vst [vmem:[%s769 + $0xac] sm:$0xf] %v856
                  %v858 = vld [vmem:[%s768 + $0x160] sm:$0xf]
                  %859 = vst [vmem:[%s769 + $0xb0] sm:$0xf] %v858
                  %v860 = vld [vmem:[%s768 + $0x168] sm:$0xf]
                  %861 = vst [vmem:[%s769 + $0xb4] sm:$0xf] %v860
                  %v862 = vld [vmem:[%s768 + $0x170] sm:$0xf]
                  %863 = vst [vmem:[%s769 + $0xb8] sm:$0xf] %v862
                  %v864 = vld [vmem:[%s768 + $0x178] sm:$0xf]
                  %865 = vst [vmem:[%s769 + $0xbc] sm:$0xf] %v864
                  %v866 = vld [vmem:[%s768 + $0x180] sm:$0xf]
                  %867 = vst [vmem:[%s769 + $0xc0] sm:$0xf] %v866
                  %v868 = vld [vmem:[%s768 + $0x188] sm:$0xf]
                  %869 = vst [vmem:[%s769 + $0xc4] sm:$0xf] %v868
                  %v870 = vld [vmem:[%s768 + $0x190] sm:$0xf]
                  %871 = vst [vmem:[%s769 + $0xc8] sm:$0xf] %v870
                  %v872 = vld [vmem:[%s768 + $0x198] sm:$0xf]
                  %873 = vst [vmem:[%s769 + $0xcc] sm:$0xf] %v872
                  %v874 = vld [vmem:[%s768 + $0x1a0] sm:$0xf]
                  %875 = vst [vmem:[%s769 + $0xd0] sm:$0xf] %v874
                  %v876 = vld [vmem:[%s768 + $0x1a8] sm:$0xf]
                  %877 = vst [vmem:[%s769 + $0xd4] sm:$0xf] %v876
                  %v878 = vld [vmem:[%s768 + $0x1b0] sm:$0xf]
                  %879 = vst [vmem:[%s769 + $0xd8] sm:$0xf] %v878
                  %v880 = vld [vmem:[%s768 + $0x1b8] sm:$0xf]
                  %881 = vst [vmem:[%s769 + $0xdc] sm:$0xf] %v880
                  %v882 = vld [vmem:[%s768 + $0x1c0] sm:$0xf]
                  %883 = vst [vmem:[%s769 + $0xe0] sm:$0xf] %v882
                  %v884 = vld [vmem:[%s768 + $0x1c8] sm:$0xf]
                  %885 = vst [vmem:[%s769 + $0xe4] sm:$0xf] %v884
                  %v886 = vld [vmem:[%s768 + $0x1d0] sm:$0xf]
                  %887 = vst [vmem:[%s769 + $0xe8] sm:$0xf] %v886
                  %v888 = vld [vmem:[%s768 + $0x1d8] sm:$0xf]
                  %889 = vst [vmem:[%s769 + $0xec] sm:$0xf] %v888
                  %v890 = vld [vmem:[%s768 + $0x1e0] sm:$0xf]
                  %891 = vst [vmem:[%s769 + $0xf0] sm:$0xf] %v890
                  %v892 = vld [vmem:[%s768 + $0x1e8] sm:$0xf]
                  %893 = vst [vmem:[%s769 + $0xf4] sm:$0xf] %v892
                  %v894 = vld [vmem:[%s768 + $0x1f0] sm:$0xf]
                  %895 = vst [vmem:[%s769 + $0xf8] sm:$0xf] %v894
                  %v896 = vld [vmem:[%s768 + $0x1f8] sm:$0xf]
                  %897 = vst [vmem:[%s769 + $0xfc] sm:$0xf] %v896
                  %v898 = vld [vmem:[%s768 + $0x200] sm:$0xf]
                  %899 = vst [vmem:[%s769 + $0x100] sm:$0xf] %v898
                  %v900 = vld [vmem:[%s768 + $0x208] sm:$0xf]
                  %901 = vst [vmem:[%s769 + $0x104] sm:$0xf] %v900
                  %v902 = vld [vmem:[%s768 + $0x210] sm:$0xf]
                  %903 = vst [vmem:[%s769 + $0x108] sm:$0xf] %v902
                  %v904 = vld [vmem:[%s768 + $0x218] sm:$0xf]
                  %905 = vst [vmem:[%s769 + $0x10c] sm:$0xf] %v904
                  %v906 = vld [vmem:[%s768 + $0x220] sm:$0xf]
                  %907 = vst [vmem:[%s769 + $0x110] sm:$0xf] %v906
                  %v908 = vld [vmem:[%s768 + $0x228] sm:$0xf]
                  %909 = vst [vmem:[%s769 + $0x114] sm:$0xf] %v908
                  %v910 = vld [vmem:[%s768 + $0x230] sm:$0xf]
                  %911 = vst [vmem:[%s769 + $0x118] sm:$0xf] %v910
                  %v912 = vld [vmem:[%s768 + $0x238] sm:$0xf]
                  %913 = vst [vmem:[%s769 + $0x11c] sm:$0xf] %v912
                  %v914 = vld [vmem:[%s768 + $0x240] sm:$0xf]
                  %915 = vst [vmem:[%s769 + $0x120] sm:$0xf] %v914
                  %v916 = vld [vmem:[%s768 + $0x248] sm:$0xf]
                  %917 = vst [vmem:[%s769 + $0x124] sm:$0xf] %v916
                  %v918 = vld [vmem:[%s768 + $0x250] sm:$0xf]
                  %919 = vst [vmem:[%s769 + $0x128] sm:$0xf] %v918
                  %v920 = vld [vmem:[%s768 + $0x258] sm:$0xf]
                  %921 = vst [vmem:[%s769 + $0x12c] sm:$0xf] %v920
                  %v922 = vld [vmem:[%s768 + $0x260] sm:$0xf]
                  %923 = vst [vmem:[%s769 + $0x130] sm:$0xf] %v922
                  %v924 = vld [vmem:[%s768 + $0x268] sm:$0xf]
                  %925 = vst [vmem:[%s769 + $0x134] sm:$0xf] %v924
                  %v926 = vld [vmem:[%s768 + $0x270] sm:$0xf]
                  %927 = vst [vmem:[%s769 + $0x138] sm:$0xf] %v926
                  %v928 = vld [vmem:[%s768 + $0x278] sm:$0xf]
                  %929 = vst [vmem:[%s769 + $0x13c] sm:$0xf] %v928
                  %v930 = vld [vmem:[%s768 + $0x280] sm:$0xf]
                  %931 = vst [vmem:[%s769 + $0x140] sm:$0xf] %v930
                  %v932 = vld [vmem:[%s768 + $0x288] sm:$0xf]
                  %933 = vst [vmem:[%s769 + $0x144] sm:$0xf] %v932
                  %v934 = vld [vmem:[%s768 + $0x290] sm:$0xf]
                  %935 = vst [vmem:[%s769 + $0x148] sm:$0xf] %v934
                  %v936 = vld [vmem:[%s768 + $0x298] sm:$0xf]
                  %937 = vst [vmem:[%s769 + $0x14c] sm:$0xf] %v936
                  %v938 = vld [vmem:[%s768 + $0x2a0] sm:$0xf]
                  %939 = vst [vmem:[%s769 + $0x150] sm:$0xf] %v938
                  %v940 = vld [vmem:[%s768 + $0x2a8] sm:$0xf]
                  %941 = vst [vmem:[%s769 + $0x154] sm:$0xf] %v940
                  %v942 = vld [vmem:[%s768 + $0x2b0] sm:$0xf]
                  %943 = vst [vmem:[%s769 + $0x158] sm:$0xf] %v942
                  %v944 = vld [vmem:[%s768 + $0x2b8] sm:$0xf]
                  %945 = vst [vmem:[%s769 + $0x15c] sm:$0xf] %v944
                  %v946 = vld [vmem:[%s768 + $0x2c0] sm:$0xf]
                  %947 = vst [vmem:[%s769 + $0x160] sm:$0xf] %v946
                  %v948 = vld [vmem:[%s768 + $0x2c8] sm:$0xf]
                  %949 = vst [vmem:[%s769 + $0x164] sm:$0xf] %v948
                  %v950 = vld [vmem:[%s768 + $0x2d0] sm:$0xf]
                  %951 = vst [vmem:[%s769 + $0x168] sm:$0xf] %v950
                  %v952 = vld [vmem:[%s768 + $0x2d8] sm:$0xf]
                  %953 = vst [vmem:[%s769 + $0x16c] sm:$0xf] %v952
                  %v954 = vld [vmem:[%s768 + $0x2e0] sm:$0xf]
                  %955 = vst [vmem:[%s769 + $0x170] sm:$0xf] %v954
                  %v956 = vld [vmem:[%s768 + $0x2e8] sm:$0xf]
                  %957 = vst [vmem:[%s769 + $0x174] sm:$0xf] %v956
                  %v958 = vld [vmem:[%s768 + $0x2f0] sm:$0xf]
                  %959 = vst [vmem:[%s769 + $0x178] sm:$0xf] %v958
                  %v960 = vld [vmem:[%s768 + $0x2f8] sm:$0xf]
                  %961 = vst [vmem:[%s769 + $0x17c] sm:$0xf] %v960
                  %v962 = vld [vmem:[%s768 + $0x300] sm:$0xf]
                  %963 = vst [vmem:[%s769 + $0x180] sm:$0xf] %v962
                  %v964 = vld [vmem:[%s768 + $0x308] sm:$0xf]
                  %965 = vst [vmem:[%s769 + $0x184] sm:$0xf] %v964
                  %v966 = vld [vmem:[%s768 + $0x310] sm:$0xf]
                  %967 = vst [vmem:[%s769 + $0x188] sm:$0xf] %v966
                  %v968 = vld [vmem:[%s768 + $0x318] sm:$0xf]
                  %969 = vst [vmem:[%s769 + $0x18c] sm:$0xf] %v968
                  %v970 = vld [vmem:[%s768 + $0x320] sm:$0xf]
                  %971 = vst [vmem:[%s769 + $0x190] sm:$0xf] %v970
                  %v972 = vld [vmem:[%s768 + $0x328] sm:$0xf]
                  %973 = vst [vmem:[%s769 + $0x194] sm:$0xf] %v972
                  %v974 = vld [vmem:[%s768 + $0x330] sm:$0xf]
                  %975 = vst [vmem:[%s769 + $0x198] sm:$0xf] %v974
                  %v976 = vld [vmem:[%s768 + $0x338] sm:$0xf]
                  %977 = vst [vmem:[%s769 + $0x19c] sm:$0xf] %v976
                  %v978 = vld [vmem:[%s768 + $0x340] sm:$0xf]
                  %979 = vst [vmem:[%s769 + $0x1a0] sm:$0xf] %v978
                  %v980 = vld [vmem:[%s768 + $0x348] sm:$0xf]
                  %981 = vst [vmem:[%s769 + $0x1a4] sm:$0xf] %v980
                  %v982 = vld [vmem:[%s768 + $0x350] sm:$0xf]
                  %983 = vst [vmem:[%s769 + $0x1a8] sm:$0xf] %v982
                  %v984 = vld [vmem:[%s768 + $0x358] sm:$0xf]
                  %985 = vst [vmem:[%s769 + $0x1ac] sm:$0xf] %v984
                  %v986 = vld [vmem:[%s768 + $0x360] sm:$0xf]
                  %987 = vst [vmem:[%s769 + $0x1b0] sm:$0xf] %v986
                  %v988 = vld [vmem:[%s768 + $0x368] sm:$0xf]
                  %989 = vst [vmem:[%s769 + $0x1b4] sm:$0xf] %v988
                  %v990 = vld [vmem:[%s768 + $0x370] sm:$0xf]
                  %991 = vst [vmem:[%s769 + $0x1b8] sm:$0xf] %v990
                  %v992 = vld [vmem:[%s768 + $0x378] sm:$0xf]
                  %993 = vst [vmem:[%s769 + $0x1bc] sm:$0xf] %v992
                  %v994 = vld [vmem:[%s768 + $0x380] sm:$0xf]
                  %995 = vst [vmem:[%s769 + $0x1c0] sm:$0xf] %v994
                  %v996 = vld [vmem:[%s768 + $0x388] sm:$0xf]
                  %997 = vst [vmem:[%s769 + $0x1c4] sm:$0xf] %v996
                  %v998 = vld [vmem:[%s768 + $0x390] sm:$0xf]
                  %999 = vst [vmem:[%s769 + $0x1c8] sm:$0xf] %v998
                  %v1000 = vld [vmem:[%s768 + $0x398] sm:$0xf]
                  %1001 = vst [vmem:[%s769 + $0x1cc] sm:$0xf] %v1000
                  %v1002 = vld [vmem:[%s768 + $0x3a0] sm:$0xf]
                  %1003 = vst [vmem:[%s769 + $0x1d0] sm:$0xf] %v1002
                  %v1004 = vld [vmem:[%s768 + $0x3a8] sm:$0xf]
                  %1005 = vst [vmem:[%s769 + $0x1d4] sm:$0xf] %v1004
                  %v1006 = vld [vmem:[%s768 + $0x3b0] sm:$0xf]
                  %1007 = vst [vmem:[%s769 + $0x1d8] sm:$0xf] %v1006
                  %v1008 = vld [vmem:[%s768 + $0x3b8] sm:$0xf]
                  %1009 = vst [vmem:[%s769 + $0x1dc] sm:$0xf] %v1008
                  %v1010 = vld [vmem:[%s768 + $0x3c0] sm:$0xf]
                  %1011 = vst [vmem:[%s769 + $0x1e0] sm:$0xf] %v1010
                  %v1012 = vld [vmem:[%s768 + $0x3c8] sm:$0xf]
                  %1013 = vst [vmem:[%s769 + $0x1e4] sm:$0xf] %v1012
                  %v1014 = vld [vmem:[%s768 + $0x3d0] sm:$0xf]
                  %1015 = vst [vmem:[%s769 + $0x1e8] sm:$0xf] %v1014
                  %v1016 = vld [vmem:[%s768 + $0x3d8] sm:$0xf]
                  %1017 = vst [vmem:[%s769 + $0x1ec] sm:$0xf] %v1016
                  %v1018 = vld [vmem:[%s768 + $0x3e0] sm:$0xf]
                  %1019 = vst [vmem:[%s769 + $0x1f0] sm:$0xf] %v1018
                  %v1020 = vld [vmem:[%s768 + $0x3e8] sm:$0xf]
                  %1021 = vst [vmem:[%s769 + $0x1f4] sm:$0xf] %v1020
                  %v1022 = vld [vmem:[%s768 + $0x3f0] sm:$0xf]
                  %1023 = vst [vmem:[%s769 + $0x1f8] sm:$0xf] %v1022
                  %v1024 = vld [vmem:[%s768 + $0x3f8] sm:$0xf]
                  %1025 = vst [vmem:[%s769 + $0x1fc] sm:$0xf] %v1024
                  %v1026 = vld [vmem:[%s768 + $0x400] sm:$0xf]
                  %1027 = vst [vmem:[%s769 + $0x200] sm:$0xf] %v1026
                  %v1028 = vld [vmem:[%s768 + $0x408] sm:$0xf]
                  %1029 = vst [vmem:[%s769 + $0x204] sm:$0xf] %v1028
                  %v1030 = vld [vmem:[%s768 + $0x410] sm:$0xf]
                  %1031 = vst [vmem:[%s769 + $0x208] sm:$0xf] %v1030
                  %v1032 = vld [vmem:[%s768 + $0x418] sm:$0xf]
                  %1033 = vst [vmem:[%s769 + $0x20c] sm:$0xf] %v1032
                  %v1034 = vld [vmem:[%s768 + $0x420] sm:$0xf]
                  %1035 = vst [vmem:[%s769 + $0x210] sm:$0xf] %v1034
                  %v1036 = vld [vmem:[%s768 + $0x428] sm:$0xf]
                  %1037 = vst [vmem:[%s769 + $0x214] sm:$0xf] %v1036
                  %v1038 = vld [vmem:[%s768 + $0x430] sm:$0xf]
                  %1039 = vst [vmem:[%s769 + $0x218] sm:$0xf] %v1038
                  %v1040 = vld [vmem:[%s768 + $0x438] sm:$0xf]
                  %1041 = vst [vmem:[%s769 + $0x21c] sm:$0xf] %v1040
                  %v1042 = vld [vmem:[%s768 + $0x440] sm:$0xf]
                  %1043 = vst [vmem:[%s769 + $0x220] sm:$0xf] %v1042
                  %v1044 = vld [vmem:[%s768 + $0x448] sm:$0xf]
                  %1045 = vst [vmem:[%s769 + $0x224] sm:$0xf] %v1044
                  %v1046 = vld [vmem:[%s768 + $0x450] sm:$0xf]
                  %1047 = vst [vmem:[%s769 + $0x228] sm:$0xf] %v1046
                  %v1048 = vld [vmem:[%s768 + $0x458] sm:$0xf]
                  %1049 = vst [vmem:[%s769 + $0x22c] sm:$0xf] %v1048
                  %v1050 = vld [vmem:[%s768 + $0x460] sm:$0xf]
                  %1051 = vst [vmem:[%s769 + $0x230] sm:$0xf] %v1050
                  %v1052 = vld [vmem:[%s768 + $0x468] sm:$0xf]
                  %1053 = vst [vmem:[%s769 + $0x234] sm:$0xf] %v1052
                  %v1054 = vld [vmem:[%s768 + $0x470] sm:$0xf]
                  %1055 = vst [vmem:[%s769 + $0x238] sm:$0xf] %v1054
                  %v1056 = vld [vmem:[%s768 + $0x478] sm:$0xf]
                  %1057 = vst [vmem:[%s769 + $0x23c] sm:$0xf] %v1056
                  %v1058 = vld [vmem:[%s768 + $0x480] sm:$0xf]
                  %1059 = vst [vmem:[%s769 + $0x240] sm:$0xf] %v1058
                  %v1060 = vld [vmem:[%s768 + $0x488] sm:$0xf]
                  %1061 = vst [vmem:[%s769 + $0x244] sm:$0xf] %v1060
                  %v1062 = vld [vmem:[%s768 + $0x490] sm:$0xf]
                  %1063 = vst [vmem:[%s769 + $0x248] sm:$0xf] %v1062
                  %v1064 = vld [vmem:[%s768 + $0x498] sm:$0xf]
                  %1065 = vst [vmem:[%s769 + $0x24c] sm:$0xf] %v1064
                  %v1066 = vld [vmem:[%s768 + $0x4a0] sm:$0xf]
                  %1067 = vst [vmem:[%s769 + $0x250] sm:$0xf] %v1066
                  %v1068 = vld [vmem:[%s768 + $0x4a8] sm:$0xf]
                  %1069 = vst [vmem:[%s769 + $0x254] sm:$0xf] %v1068
                  %v1070 = vld [vmem:[%s768 + $0x4b0] sm:$0xf]
                  %1071 = vst [vmem:[%s769 + $0x258] sm:$0xf] %v1070
                  %v1072 = vld [vmem:[%s768 + $0x4b8] sm:$0xf]
                  %1073 = vst [vmem:[%s769 + $0x25c] sm:$0xf] %v1072
                  %v1074 = vld [vmem:[%s768 + $0x4c0] sm:$0xf]
                  %1075 = vst [vmem:[%s769 + $0x260] sm:$0xf] %v1074
                  %v1076 = vld [vmem:[%s768 + $0x4c8] sm:$0xf]
                  %1077 = vst [vmem:[%s769 + $0x264] sm:$0xf] %v1076
                  %v1078 = vld [vmem:[%s768 + $0x4d0] sm:$0xf]
                  %1079 = vst [vmem:[%s769 + $0x268] sm:$0xf] %v1078
                  %v1080 = vld [vmem:[%s768 + $0x4d8] sm:$0xf]
                  %1081 = vst [vmem:[%s769 + $0x26c] sm:$0xf] %v1080
                  %v1082 = vld [vmem:[%s768 + $0x4e0] sm:$0xf]
                  %1083 = vst [vmem:[%s769 + $0x270] sm:$0xf] %v1082
                  %v1084 = vld [vmem:[%s768 + $0x4e8] sm:$0xf]
                  %1085 = vst [vmem:[%s769 + $0x274] sm:$0xf] %v1084
                  %v1086 = vld [vmem:[%s768 + $0x4f0] sm:$0xf]
                  %1087 = vst [vmem:[%s769 + $0x278] sm:$0xf] %v1086
                  %v1088 = vld [vmem:[%s768 + $0x4f8] sm:$0xf]
                  %1089 = vst [vmem:[%s769 + $0x27c] sm:$0xf] %v1088
                  %v1090 = vld [vmem:[%s768 + $0x500] sm:$0xf]
                  %1091 = vst [vmem:[%s769 + $0x280] sm:$0xf] %v1090
                  %v1092 = vld [vmem:[%s768 + $0x508] sm:$0xf]
                  %1093 = vst [vmem:[%s769 + $0x284] sm:$0xf] %v1092
                  %v1094 = vld [vmem:[%s768 + $0x510] sm:$0xf]
                  %1095 = vst [vmem:[%s769 + $0x288] sm:$0xf] %v1094
                  %v1096 = vld [vmem:[%s768 + $0x518] sm:$0xf]
                  %1097 = vst [vmem:[%s769 + $0x28c] sm:$0xf] %v1096
                  %v1098 = vld [vmem:[%s768 + $0x520] sm:$0xf]
                  %1099 = vst [vmem:[%s769 + $0x290] sm:$0xf] %v1098
                  %v1100 = vld [vmem:[%s768 + $0x528] sm:$0xf]
                  %1101 = vst [vmem:[%s769 + $0x294] sm:$0xf] %v1100
                  %v1102 = vld [vmem:[%s768 + $0x530] sm:$0xf]
                  %1103 = vst [vmem:[%s769 + $0x298] sm:$0xf] %v1102
                  %v1104 = vld [vmem:[%s768 + $0x538] sm:$0xf]
                  %1105 = vst [vmem:[%s769 + $0x29c] sm:$0xf] %v1104
                  %v1106 = vld [vmem:[%s768 + $0x540] sm:$0xf]
                  %1107 = vst [vmem:[%s769 + $0x2a0] sm:$0xf] %v1106
                  %v1108 = vld [vmem:[%s768 + $0x548] sm:$0xf]
                  %1109 = vst [vmem:[%s769 + $0x2a4] sm:$0xf] %v1108
                  %v1110 = vld [vmem:[%s768 + $0x550] sm:$0xf]
                  %1111 = vst [vmem:[%s769 + $0x2a8] sm:$0xf] %v1110
                  %v1112 = vld [vmem:[%s768 + $0x558] sm:$0xf]
                  %1113 = vst [vmem:[%s769 + $0x2ac] sm:$0xf] %v1112
                  %v1114 = vld [vmem:[%s768 + $0x560] sm:$0xf]
                  %1115 = vst [vmem:[%s769 + $0x2b0] sm:$0xf] %v1114
                  %v1116 = vld [vmem:[%s768 + $0x568] sm:$0xf]
                  %1117 = vst [vmem:[%s769 + $0x2b4] sm:$0xf] %v1116
                  %v1118 = vld [vmem:[%s768 + $0x570] sm:$0xf]
                  %1119 = vst [vmem:[%s769 + $0x2b8] sm:$0xf] %v1118
                  %v1120 = vld [vmem:[%s768 + $0x578] sm:$0xf]
                  %1121 = vst [vmem:[%s769 + $0x2bc] sm:$0xf] %v1120
                  %v1122 = vld [vmem:[%s768 + $0x580] sm:$0xf]
                  %1123 = vst [vmem:[%s769 + $0x2c0] sm:$0xf] %v1122
                  %v1124 = vld [vmem:[%s768 + $0x588] sm:$0xf]
                  %1125 = vst [vmem:[%s769 + $0x2c4] sm:$0xf] %v1124
                  %v1126 = vld [vmem:[%s768 + $0x590] sm:$0xf]
                  %1127 = vst [vmem:[%s769 + $0x2c8] sm:$0xf] %v1126
                  %v1128 = vld [vmem:[%s768 + $0x598] sm:$0xf]
                  %1129 = vst [vmem:[%s769 + $0x2cc] sm:$0xf] %v1128
                  %v1130 = vld [vmem:[%s768 + $0x5a0] sm:$0xf]
                  %1131 = vst [vmem:[%s769 + $0x2d0] sm:$0xf] %v1130
                  %v1132 = vld [vmem:[%s768 + $0x5a8] sm:$0xf]
                  %1133 = vst [vmem:[%s769 + $0x2d4] sm:$0xf] %v1132
                  %v1134 = vld [vmem:[%s768 + $0x5b0] sm:$0xf]
                  %1135 = vst [vmem:[%s769 + $0x2d8] sm:$0xf] %v1134
                  %v1136 = vld [vmem:[%s768 + $0x5b8] sm:$0xf]
                  %1137 = vst [vmem:[%s769 + $0x2dc] sm:$0xf] %v1136
                  %v1138 = vld [vmem:[%s768 + $0x5c0] sm:$0xf]
                  %1139 = vst [vmem:[%s769 + $0x2e0] sm:$0xf] %v1138
                  %v1140 = vld [vmem:[%s768 + $0x5c8] sm:$0xf]
                  %1141 = vst [vmem:[%s769 + $0x2e4] sm:$0xf] %v1140
                  %v1142 = vld [vmem:[%s768 + $0x5d0] sm:$0xf]
                  %1143 = vst [vmem:[%s769 + $0x2e8] sm:$0xf] %v1142
                  %v1144 = vld [vmem:[%s768 + $0x5d8] sm:$0xf]
                  %1145 = vst [vmem:[%s769 + $0x2ec] sm:$0xf] %v1144
                  %v1146 = vld [vmem:[%s768 + $0x5e0] sm:$0xf]
                  %1147 = vst [vmem:[%s769 + $0x2f0] sm:$0xf] %v1146
                  %v1148 = vld [vmem:[%s768 + $0x5e8] sm:$0xf]
                  %1149 = vst [vmem:[%s769 + $0x2f4] sm:$0xf] %v1148
                  %v1150 = vld [vmem:[%s768 + $0x5f0] sm:$0xf]
                  %1151 = vst [vmem:[%s769 + $0x2f8] sm:$0xf] %v1150
                  %v1152 = vld [vmem:[%s768 + $0x5f8] sm:$0xf]
                  %1153 = vst [vmem:[%s769 + $0x2fc] sm:$0xf] %v1152
                  %v1154 = vld [vmem:[%s768 + $0x600] sm:$0xf]
                  %1155 = vst [vmem:[%s769 + $0x300] sm:$0xf] %v1154
                  %v1156 = vld [vmem:[%s768 + $0x608] sm:$0xf]
                  %1157 = vst [vmem:[%s769 + $0x304] sm:$0xf] %v1156
                  %v1158 = vld [vmem:[%s768 + $0x610] sm:$0xf]
                  %1159 = vst [vmem:[%s769 + $0x308] sm:$0xf] %v1158
                  %v1160 = vld [vmem:[%s768 + $0x618] sm:$0xf]
                  %1161 = vst [vmem:[%s769 + $0x30c] sm:$0xf] %v1160
                  %v1162 = vld [vmem:[%s768 + $0x620] sm:$0xf]
                  %1163 = vst [vmem:[%s769 + $0x310] sm:$0xf] %v1162
                  %v1164 = vld [vmem:[%s768 + $0x628] sm:$0xf]
                  %1165 = vst [vmem:[%s769 + $0x314] sm:$0xf] %v1164
                  %v1166 = vld [vmem:[%s768 + $0x630] sm:$0xf]
                  %1167 = vst [vmem:[%s769 + $0x318] sm:$0xf] %v1166
                  %v1168 = vld [vmem:[%s768 + $0x638] sm:$0xf]
                  %1169 = vst [vmem:[%s769 + $0x31c] sm:$0xf] %v1168
                  %v1170 = vld [vmem:[%s768 + $0x640] sm:$0xf]
                  %1171 = vst [vmem:[%s769 + $0x320] sm:$0xf] %v1170
                  %v1172 = vld [vmem:[%s768 + $0x648] sm:$0xf]
                  %1173 = vst [vmem:[%s769 + $0x324] sm:$0xf] %v1172
                  %v1174 = vld [vmem:[%s768 + $0x650] sm:$0xf]
                  %1175 = vst [vmem:[%s769 + $0x328] sm:$0xf] %v1174
                  %v1176 = vld [vmem:[%s768 + $0x658] sm:$0xf]
                  %1177 = vst [vmem:[%s769 + $0x32c] sm:$0xf] %v1176
                  %v1178 = vld [vmem:[%s768 + $0x660] sm:$0xf]
                  %1179 = vst [vmem:[%s769 + $0x330] sm:$0xf] %v1178
                  %v1180 = vld [vmem:[%s768 + $0x668] sm:$0xf]
                  %1181 = vst [vmem:[%s769 + $0x334] sm:$0xf] %v1180
                  %v1182 = vld [vmem:[%s768 + $0x670] sm:$0xf]
                  %1183 = vst [vmem:[%s769 + $0x338] sm:$0xf] %v1182
                  %v1184 = vld [vmem:[%s768 + $0x678] sm:$0xf]
                  %1185 = vst [vmem:[%s769 + $0x33c] sm:$0xf] %v1184
                  %v1186 = vld [vmem:[%s768 + $0x680] sm:$0xf]
                  %1187 = vst [vmem:[%s769 + $0x340] sm:$0xf] %v1186
                  %v1188 = vld [vmem:[%s768 + $0x688] sm:$0xf]
                  %1189 = vst [vmem:[%s769 + $0x344] sm:$0xf] %v1188
                  %v1190 = vld [vmem:[%s768 + $0x690] sm:$0xf]
                  %1191 = vst [vmem:[%s769 + $0x348] sm:$0xf] %v1190
                  %v1192 = vld [vmem:[%s768 + $0x698] sm:$0xf]
                  %1193 = vst [vmem:[%s769 + $0x34c] sm:$0xf] %v1192
                  %v1194 = vld [vmem:[%s768 + $0x6a0] sm:$0xf]
                  %1195 = vst [vmem:[%s769 + $0x350] sm:$0xf] %v1194
                  %v1196 = vld [vmem:[%s768 + $0x6a8] sm:$0xf]
                  %1197 = vst [vmem:[%s769 + $0x354] sm:$0xf] %v1196
                  %v1198 = vld [vmem:[%s768 + $0x6b0] sm:$0xf]
                  %1199 = vst [vmem:[%s769 + $0x358] sm:$0xf] %v1198
                  %v1200 = vld [vmem:[%s768 + $0x6b8] sm:$0xf]
                  %1201 = vst [vmem:[%s769 + $0x35c] sm:$0xf] %v1200
                  %v1202 = vld [vmem:[%s768 + $0x6c0] sm:$0xf]
                  %1203 = vst [vmem:[%s769 + $0x360] sm:$0xf] %v1202
                  %v1204 = vld [vmem:[%s768 + $0x6c8] sm:$0xf]
                  %1205 = vst [vmem:[%s769 + $0x364] sm:$0xf] %v1204
                  %v1206 = vld [vmem:[%s768 + $0x6d0] sm:$0xf]
                  %1207 = vst [vmem:[%s769 + $0x368] sm:$0xf] %v1206
                  %v1208 = vld [vmem:[%s768 + $0x6d8] sm:$0xf]
                  %1209 = vst [vmem:[%s769 + $0x36c] sm:$0xf] %v1208
                  %v1210 = vld [vmem:[%s768 + $0x6e0] sm:$0xf]
                  %1211 = vst [vmem:[%s769 + $0x370] sm:$0xf] %v1210
                  %v1212 = vld [vmem:[%s768 + $0x6e8] sm:$0xf]
                  %1213 = vst [vmem:[%s769 + $0x374] sm:$0xf] %v1212
                  %v1214 = vld [vmem:[%s768 + $0x6f0] sm:$0xf]
                  %1215 = vst [vmem:[%s769 + $0x378] sm:$0xf] %v1214
                  %v1216 = vld [vmem:[%s768 + $0x6f8] sm:$0xf]
                  %1217 = vst [vmem:[%s769 + $0x37c] sm:$0xf] %v1216
                  %v1218 = vld [vmem:[%s768 + $0x700] sm:$0xf]
                  %1219 = vst [vmem:[%s769 + $0x380] sm:$0xf] %v1218
                  %v1220 = vld [vmem:[%s768 + $0x708] sm:$0xf]
                  %1221 = vst [vmem:[%s769 + $0x384] sm:$0xf] %v1220
                  %v1222 = vld [vmem:[%s768 + $0x710] sm:$0xf]
                  %1223 = vst [vmem:[%s769 + $0x388] sm:$0xf] %v1222
                  %v1224 = vld [vmem:[%s768 + $0x718] sm:$0xf]
                  %1225 = vst [vmem:[%s769 + $0x38c] sm:$0xf] %v1224
                  %v1226 = vld [vmem:[%s768 + $0x720] sm:$0xf]
                  %1227 = vst [vmem:[%s769 + $0x390] sm:$0xf] %v1226
                  %v1228 = vld [vmem:[%s768 + $0x728] sm:$0xf]
                  %1229 = vst [vmem:[%s769 + $0x394] sm:$0xf] %v1228
                  %v1230 = vld [vmem:[%s768 + $0x730] sm:$0xf]
                  %1231 = vst [vmem:[%s769 + $0x398] sm:$0xf] %v1230
                  %v1232 = vld [vmem:[%s768 + $0x738] sm:$0xf]
                  %1233 = vst [vmem:[%s769 + $0x39c] sm:$0xf] %v1232
                  %v1234 = vld [vmem:[%s768 + $0x740] sm:$0xf]
                  %1235 = vst [vmem:[%s769 + $0x3a0] sm:$0xf] %v1234
                  %v1236 = vld [vmem:[%s768 + $0x748] sm:$0xf]
                  %1237 = vst [vmem:[%s769 + $0x3a4] sm:$0xf] %v1236
                  %v1238 = vld [vmem:[%s768 + $0x750] sm:$0xf]
                  %1239 = vst [vmem:[%s769 + $0x3a8] sm:$0xf] %v1238
                  %v1240 = vld [vmem:[%s768 + $0x758] sm:$0xf]
                  %1241 = vst [vmem:[%s769 + $0x3ac] sm:$0xf] %v1240
                  %v1242 = vld [vmem:[%s768 + $0x760] sm:$0xf]
                  %1243 = vst [vmem:[%s769 + $0x3b0] sm:$0xf] %v1242
                  %v1244 = vld [vmem:[%s768 + $0x768] sm:$0xf]
                  %1245 = vst [vmem:[%s769 + $0x3b4] sm:$0xf] %v1244
                  %v1246 = vld [vmem:[%s768 + $0x770] sm:$0xf]
                  %1247 = vst [vmem:[%s769 + $0x3b8] sm:$0xf] %v1246
                  %v1248 = vld [vmem:[%s768 + $0x778] sm:$0xf]
                  %1249 = vst [vmem:[%s769 + $0x3bc] sm:$0xf] %v1248
                  %v1250 = vld [vmem:[%s768 + $0x780] sm:$0xf]
                  %1251 = vst [vmem:[%s769 + $0x3c0] sm:$0xf] %v1250
                  %v1252 = vld [vmem:[%s768 + $0x788] sm:$0xf]
                  %1253 = vst [vmem:[%s769 + $0x3c4] sm:$0xf] %v1252
                  %v1254 = vld [vmem:[%s768 + $0x790] sm:$0xf]
                  %1255 = vst [vmem:[%s769 + $0x3c8] sm:$0xf] %v1254
                  %v1256 = vld [vmem:[%s768 + $0x798] sm:$0xf]
                  %1257 = vst [vmem:[%s769 + $0x3cc] sm:$0xf] %v1256
                  %v1258 = vld [vmem:[%s768 + $0x7a0] sm:$0xf]
                  %1259 = vst [vmem:[%s769 + $0x3d0] sm:$0xf] %v1258
                  %v1260 = vld [vmem:[%s768 + $0x7a8] sm:$0xf]
                  %1261 = vst [vmem:[%s769 + $0x3d4] sm:$0xf] %v1260
                  %v1262 = vld [vmem:[%s768 + $0x7b0] sm:$0xf]
                  %1263 = vst [vmem:[%s769 + $0x3d8] sm:$0xf] %v1262
                  %v1264 = vld [vmem:[%s768 + $0x7b8] sm:$0xf]
                  %1265 = vst [vmem:[%s769 + $0x3dc] sm:$0xf] %v1264
                  %v1266 = vld [vmem:[%s768 + $0x7c0] sm:$0xf]
                  %1267 = vst [vmem:[%s769 + $0x3e0] sm:$0xf] %v1266
                  %v1268 = vld [vmem:[%s768 + $0x7c8] sm:$0xf]
                  %1269 = vst [vmem:[%s769 + $0x3e4] sm:$0xf] %v1268
                  %v1270 = vld [vmem:[%s768 + $0x7d0] sm:$0xf]
                  %1271 = vst [vmem:[%s769 + $0x3e8] sm:$0xf] %v1270
                  %v1272 = vld [vmem:[%s768 + $0x7d8] sm:$0xf]
                  %1273 = vst [vmem:[%s769 + $0x3ec] sm:$0xf] %v1272
                  %v1274 = vld [vmem:[%s768 + $0x7e0] sm:$0xf]
                  %1275 = vst [vmem:[%s769 + $0x3f0] sm:$0xf] %v1274
                  %v1276 = vld [vmem:[%s768 + $0x7e8] sm:$0xf]
                  %1277 = vst [vmem:[%s769 + $0x3f4] sm:$0xf] %v1276
                  %v1278 = vld [vmem:[%s768 + $0x7f0] sm:$0xf]
                  %1279 = vst [vmem:[%s769 + $0x3f8] sm:$0xf] %v1278
                  %v1280 = vld [vmem:[%s768 + $0x7f8] sm:$0xf]
                  %1281 = vst [vmem:[%s769 + $0x3fc] sm:$0xf] %v1280
                $region59: #{a_call__.32} parent=46 // loop_footer
                  %s767 = sadd.s32 1, %s763
                $region60: #{a_call__.32} parent=46 // loop_footer_branch
                  %762 = sbr.rel target = $region56
                $region61: #{a_call__.32} parent=46 // loop_exit
                  _
              $region47: #{a_call__.32} parent=31 // pred_fallthru
                _
            $region32: #{a_call__.32} parent=27 // pred_fallthru
              _
            // Predicated region
            $region33: #{a_call__.32} parent=27 // pred_check
              _
            $region34: #{a_call__.32} parent=27 // pred_check_branch
              %229 = sbr.rel (0) target = $region36
            $region35: #{a_call__.32} parent=27 // pred_region
              loop: start=0, step=1, limit=1
              $region37: #{a_call__.32} parent=35 // loop_pre_header
                _
              $region38: #{a_call__.32} parent=35 // loop_header
                %s232 = sphi 0, %s236
                %p233 = scmp.ge.s32.totalorder %s232, 1
                %s237 = sphi %s223, %s223
                %s238 = sphi %s221, %s221
              $region39: #{a_call__.32} parent=35 // loop_header_branch
                %235 = sbr.rel (%p233) target = $region43
              $region40: #{a_call__.32} parent=35 // loop_body
                %v239 = vld [vmem:[%s237] sm:$0xf]
                %240 = vst [vmem:[%s238] sm:$0xf] %v239
                %v241 = vld [vmem:[%s237 + $0x8] sm:$0xf]
                %242 = vst [vmem:[%s238 + $0x4] sm:$0xf] %v241
                %v243 = vld [vmem:[%s237 + $0x10] sm:$0xf]
                %244 = vst [vmem:[%s238 + $0x8] sm:$0xf] %v243
                %v245 = vld [vmem:[%s237 + $0x18] sm:$0xf]
                %246 = vst [vmem:[%s238 + $0xc] sm:$0xf] %v245
                %v247 = vld [vmem:[%s237 + $0x20] sm:$0xf]
                %248 = vst [vmem:[%s238 + $0x10] sm:$0xf] %v247
                %v249 = vld [vmem:[%s237 + $0x28] sm:$0xf]
                %250 = vst [vmem:[%s238 + $0x14] sm:$0xf] %v249
                %v251 = vld [vmem:[%s237 + $0x30] sm:$0xf]
                %252 = vst [vmem:[%s238 + $0x18] sm:$0xf] %v251
                %v253 = vld [vmem:[%s237 + $0x38] sm:$0xf]
                %254 = vst [vmem:[%s238 + $0x1c] sm:$0xf] %v253
                %v255 = vld [vmem:[%s237 + $0x40] sm:$0xf]
                %256 = vst [vmem:[%s238 + $0x20] sm:$0xf] %v255
                %v257 = vld [vmem:[%s237 + $0x48] sm:$0xf]
                %258 = vst [vmem:[%s238 + $0x24] sm:$0xf] %v257
                %v259 = vld [vmem:[%s237 + $0x50] sm:$0xf]
                %260 = vst [vmem:[%s238 + $0x28] sm:$0xf] %v259
                %v261 = vld [vmem:[%s237 + $0x58] sm:$0xf]
                %262 = vst [vmem:[%s238 + $0x2c] sm:$0xf] %v261
                %v263 = vld [vmem:[%s237 + $0x60] sm:$0xf]
                %264 = vst [vmem:[%s238 + $0x30] sm:$0xf] %v263
                %v265 = vld [vmem:[%s237 + $0x68] sm:$0xf]
                %266 = vst [vmem:[%s238 + $0x34] sm:$0xf] %v265
                %v267 = vld [vmem:[%s237 + $0x70] sm:$0xf]
                %268 = vst [vmem:[%s238 + $0x38] sm:$0xf] %v267
                %v269 = vld [vmem:[%s237 + $0x78] sm:$0xf]
                %270 = vst [vmem:[%s238 + $0x3c] sm:$0xf] %v269
                %v271 = vld [vmem:[%s237 + $0x80] sm:$0xf]
                %272 = vst [vmem:[%s238 + $0x40] sm:$0xf] %v271
                %v273 = vld [vmem:[%s237 + $0x88] sm:$0xf]
                %274 = vst [vmem:[%s238 + $0x44] sm:$0xf] %v273
                %v275 = vld [vmem:[%s237 + $0x90] sm:$0xf]
                %276 = vst [vmem:[%s238 + $0x48] sm:$0xf] %v275
                %v277 = vld [vmem:[%s237 + $0x98] sm:$0xf]
                %278 = vst [vmem:[%s238 + $0x4c] sm:$0xf] %v277
                %v279 = vld [vmem:[%s237 + $0xa0] sm:$0xf]
                %280 = vst [vmem:[%s238 + $0x50] sm:$0xf] %v279
                %v281 = vld [vmem:[%s237 + $0xa8] sm:$0xf]
                %282 = vst [vmem:[%s238 + $0x54] sm:$0xf] %v281
                %v283 = vld [vmem:[%s237 + $0xb0] sm:$0xf]
                %284 = vst [vmem:[%s238 + $0x58] sm:$0xf] %v283
                %v285 = vld [vmem:[%s237 + $0xb8] sm:$0xf]
                %286 = vst [vmem:[%s238 + $0x5c] sm:$0xf] %v285
                %v287 = vld [vmem:[%s237 + $0xc0] sm:$0xf]
                %288 = vst [vmem:[%s238 + $0x60] sm:$0xf] %v287
                %v289 = vld [vmem:[%s237 + $0xc8] sm:$0xf]
                %290 = vst [vmem:[%s238 + $0x64] sm:$0xf] %v289
                %v291 = vld [vmem:[%s237 + $0xd0] sm:$0xf]
                %292 = vst [vmem:[%s238 + $0x68] sm:$0xf] %v291
                %v293 = vld [vmem:[%s237 + $0xd8] sm:$0xf]
                %294 = vst [vmem:[%s238 + $0x6c] sm:$0xf] %v293
                %v295 = vld [vmem:[%s237 + $0xe0] sm:$0xf]
                %296 = vst [vmem:[%s238 + $0x70] sm:$0xf] %v295
                %v297 = vld [vmem:[%s237 + $0xe8] sm:$0xf]
                %298 = vst [vmem:[%s238 + $0x74] sm:$0xf] %v297
                %v299 = vld [vmem:[%s237 + $0xf0] sm:$0xf]
                %300 = vst [vmem:[%s238 + $0x78] sm:$0xf] %v299
                %v301 = vld [vmem:[%s237 + $0xf8] sm:$0xf]
                %302 = vst [vmem:[%s238 + $0x7c] sm:$0xf] %v301
                %v303 = vld [vmem:[%s237 + $0x100] sm:$0xf]
                %304 = vst [vmem:[%s238 + $0x80] sm:$0xf] %v303
                %v305 = vld [vmem:[%s237 + $0x108] sm:$0xf]
                %306 = vst [vmem:[%s238 + $0x84] sm:$0xf] %v305
                %v307 = vld [vmem:[%s237 + $0x110] sm:$0xf]
                %308 = vst [vmem:[%s238 + $0x88] sm:$0xf] %v307
                %v309 = vld [vmem:[%s237 + $0x118] sm:$0xf]
                %310 = vst [vmem:[%s238 + $0x8c] sm:$0xf] %v309
                %v311 = vld [vmem:[%s237 + $0x120] sm:$0xf]
                %312 = vst [vmem:[%s238 + $0x90] sm:$0xf] %v311
                %v313 = vld [vmem:[%s237 + $0x128] sm:$0xf]
                %314 = vst [vmem:[%s238 + $0x94] sm:$0xf] %v313
                %v315 = vld [vmem:[%s237 + $0x130] sm:$0xf]
                %316 = vst [vmem:[%s238 + $0x98] sm:$0xf] %v315
                %v317 = vld [vmem:[%s237 + $0x138] sm:$0xf]
                %318 = vst [vmem:[%s238 + $0x9c] sm:$0xf] %v317
                %v319 = vld [vmem:[%s237 + $0x140] sm:$0xf]
                %320 = vst [vmem:[%s238 + $0xa0] sm:$0xf] %v319
                %v321 = vld [vmem:[%s237 + $0x148] sm:$0xf]
                %322 = vst [vmem:[%s238 + $0xa4] sm:$0xf] %v321
                %v323 = vld [vmem:[%s237 + $0x150] sm:$0xf]
                %324 = vst [vmem:[%s238 + $0xa8] sm:$0xf] %v323
                %v325 = vld [vmem:[%s237 + $0x158] sm:$0xf]
                %326 = vst [vmem:[%s238 + $0xac] sm:$0xf] %v325
                %v327 = vld [vmem:[%s237 + $0x160] sm:$0xf]
                %328 = vst [vmem:[%s238 + $0xb0] sm:$0xf] %v327
                %v329 = vld [vmem:[%s237 + $0x168] sm:$0xf]
                %330 = vst [vmem:[%s238 + $0xb4] sm:$0xf] %v329
                %v331 = vld [vmem:[%s237 + $0x170] sm:$0xf]
                %332 = vst [vmem:[%s238 + $0xb8] sm:$0xf] %v331
                %v333 = vld [vmem:[%s237 + $0x178] sm:$0xf]
                %334 = vst [vmem:[%s238 + $0xbc] sm:$0xf] %v333
                %v335 = vld [vmem:[%s237 + $0x180] sm:$0xf]
                %336 = vst [vmem:[%s238 + $0xc0] sm:$0xf] %v335
                %v337 = vld [vmem:[%s237 + $0x188] sm:$0xf]
                %338 = vst [vmem:[%s238 + $0xc4] sm:$0xf] %v337
                %v339 = vld [vmem:[%s237 + $0x190] sm:$0xf]
                %340 = vst [vmem:[%s238 + $0xc8] sm:$0xf] %v339
                %v341 = vld [vmem:[%s237 + $0x198] sm:$0xf]
                %342 = vst [vmem:[%s238 + $0xcc] sm:$0xf] %v341
                %v343 = vld [vmem:[%s237 + $0x1a0] sm:$0xf]
                %344 = vst [vmem:[%s238 + $0xd0] sm:$0xf] %v343
                %v345 = vld [vmem:[%s237 + $0x1a8] sm:$0xf]
                %346 = vst [vmem:[%s238 + $0xd4] sm:$0xf] %v345
                %v347 = vld [vmem:[%s237 + $0x1b0] sm:$0xf]
                %348 = vst [vmem:[%s238 + $0xd8] sm:$0xf] %v347
                %v349 = vld [vmem:[%s237 + $0x1b8] sm:$0xf]
                %350 = vst [vmem:[%s238 + $0xdc] sm:$0xf] %v349
                %v351 = vld [vmem:[%s237 + $0x1c0] sm:$0xf]
                %352 = vst [vmem:[%s238 + $0xe0] sm:$0xf] %v351
                %v353 = vld [vmem:[%s237 + $0x1c8] sm:$0xf]
                %354 = vst [vmem:[%s238 + $0xe4] sm:$0xf] %v353
                %v355 = vld [vmem:[%s237 + $0x1d0] sm:$0xf]
                %356 = vst [vmem:[%s238 + $0xe8] sm:$0xf] %v355
                %v357 = vld [vmem:[%s237 + $0x1d8] sm:$0xf]
                %358 = vst [vmem:[%s238 + $0xec] sm:$0xf] %v357
                %v359 = vld [vmem:[%s237 + $0x1e0] sm:$0xf]
                %360 = vst [vmem:[%s238 + $0xf0] sm:$0xf] %v359
                %v361 = vld [vmem:[%s237 + $0x1e8] sm:$0xf]
                %362 = vst [vmem:[%s238 + $0xf4] sm:$0xf] %v361
                %v363 = vld [vmem:[%s237 + $0x1f0] sm:$0xf]
                %364 = vst [vmem:[%s238 + $0xf8] sm:$0xf] %v363
                %v365 = vld [vmem:[%s237 + $0x1f8] sm:$0xf]
                %366 = vst [vmem:[%s238 + $0xfc] sm:$0xf] %v365
                %v367 = vld [vmem:[%s237 + $0x200] sm:$0xf]
                %368 = vst [vmem:[%s238 + $0x100] sm:$0xf] %v367
                %v369 = vld [vmem:[%s237 + $0x208] sm:$0xf]
                %370 = vst [vmem:[%s238 + $0x104] sm:$0xf] %v369
                %v371 = vld [vmem:[%s237 + $0x210] sm:$0xf]
                %372 = vst [vmem:[%s238 + $0x108] sm:$0xf] %v371
                %v373 = vld [vmem:[%s237 + $0x218] sm:$0xf]
                %374 = vst [vmem:[%s238 + $0x10c] sm:$0xf] %v373
                %v375 = vld [vmem:[%s237 + $0x220] sm:$0xf]
                %376 = vst [vmem:[%s238 + $0x110] sm:$0xf] %v375
                %v377 = vld [vmem:[%s237 + $0x228] sm:$0xf]
                %378 = vst [vmem:[%s238 + $0x114] sm:$0xf] %v377
                %v379 = vld [vmem:[%s237 + $0x230] sm:$0xf]
                %380 = vst [vmem:[%s238 + $0x118] sm:$0xf] %v379
                %v381 = vld [vmem:[%s237 + $0x238] sm:$0xf]
                %382 = vst [vmem:[%s238 + $0x11c] sm:$0xf] %v381
                %v383 = vld [vmem:[%s237 + $0x240] sm:$0xf]
                %384 = vst [vmem:[%s238 + $0x120] sm:$0xf] %v383
                %v385 = vld [vmem:[%s237 + $0x248] sm:$0xf]
                %386 = vst [vmem:[%s238 + $0x124] sm:$0xf] %v385
                %v387 = vld [vmem:[%s237 + $0x250] sm:$0xf]
                %388 = vst [vmem:[%s238 + $0x128] sm:$0xf] %v387
                %v389 = vld [vmem:[%s237 + $0x258] sm:$0xf]
                %390 = vst [vmem:[%s238 + $0x12c] sm:$0xf] %v389
                %v391 = vld [vmem:[%s237 + $0x260] sm:$0xf]
                %392 = vst [vmem:[%s238 + $0x130] sm:$0xf] %v391
                %v393 = vld [vmem:[%s237 + $0x268] sm:$0xf]
                %394 = vst [vmem:[%s238 + $0x134] sm:$0xf] %v393
                %v395 = vld [vmem:[%s237 + $0x270] sm:$0xf]
                %396 = vst [vmem:[%s238 + $0x138] sm:$0xf] %v395
                %v397 = vld [vmem:[%s237 + $0x278] sm:$0xf]
                %398 = vst [vmem:[%s238 + $0x13c] sm:$0xf] %v397
                %v399 = vld [vmem:[%s237 + $0x280] sm:$0xf]
                %400 = vst [vmem:[%s238 + $0x140] sm:$0xf] %v399
                %v401 = vld [vmem:[%s237 + $0x288] sm:$0xf]
                %402 = vst [vmem:[%s238 + $0x144] sm:$0xf] %v401
                %v403 = vld [vmem:[%s237 + $0x290] sm:$0xf]
                %404 = vst [vmem:[%s238 + $0x148] sm:$0xf] %v403
                %v405 = vld [vmem:[%s237 + $0x298] sm:$0xf]
                %406 = vst [vmem:[%s238 + $0x14c] sm:$0xf] %v405
                %v407 = vld [vmem:[%s237 + $0x2a0] sm:$0xf]
                %408 = vst [vmem:[%s238 + $0x150] sm:$0xf] %v407
                %v409 = vld [vmem:[%s237 + $0x2a8] sm:$0xf]
                %410 = vst [vmem:[%s238 + $0x154] sm:$0xf] %v409
                %v411 = vld [vmem:[%s237 + $0x2b0] sm:$0xf]
                %412 = vst [vmem:[%s238 + $0x158] sm:$0xf] %v411
                %v413 = vld [vmem:[%s237 + $0x2b8] sm:$0xf]
                %414 = vst [vmem:[%s238 + $0x15c] sm:$0xf] %v413
                %v415 = vld [vmem:[%s237 + $0x2c0] sm:$0xf]
                %416 = vst [vmem:[%s238 + $0x160] sm:$0xf] %v415
                %v417 = vld [vmem:[%s237 + $0x2c8] sm:$0xf]
                %418 = vst [vmem:[%s238 + $0x164] sm:$0xf] %v417
                %v419 = vld [vmem:[%s237 + $0x2d0] sm:$0xf]
                %420 = vst [vmem:[%s238 + $0x168] sm:$0xf] %v419
                %v421 = vld [vmem:[%s237 + $0x2d8] sm:$0xf]
                %422 = vst [vmem:[%s238 + $0x16c] sm:$0xf] %v421
                %v423 = vld [vmem:[%s237 + $0x2e0] sm:$0xf]
                %424 = vst [vmem:[%s238 + $0x170] sm:$0xf] %v423
                %v425 = vld [vmem:[%s237 + $0x2e8] sm:$0xf]
                %426 = vst [vmem:[%s238 + $0x174] sm:$0xf] %v425
                %v427 = vld [vmem:[%s237 + $0x2f0] sm:$0xf]
                %428 = vst [vmem:[%s238 + $0x178] sm:$0xf] %v427
                %v429 = vld [vmem:[%s237 + $0x2f8] sm:$0xf]
                %430 = vst [vmem:[%s238 + $0x17c] sm:$0xf] %v429
                %v431 = vld [vmem:[%s237 + $0x300] sm:$0xf]
                %432 = vst [vmem:[%s238 + $0x180] sm:$0xf] %v431
                %v433 = vld [vmem:[%s237 + $0x308] sm:$0xf]
                %434 = vst [vmem:[%s238 + $0x184] sm:$0xf] %v433
                %v435 = vld [vmem:[%s237 + $0x310] sm:$0xf]
                %436 = vst [vmem:[%s238 + $0x188] sm:$0xf] %v435
                %v437 = vld [vmem:[%s237 + $0x318] sm:$0xf]
                %438 = vst [vmem:[%s238 + $0x18c] sm:$0xf] %v437
                %v439 = vld [vmem:[%s237 + $0x320] sm:$0xf]
                %440 = vst [vmem:[%s238 + $0x190] sm:$0xf] %v439
                %v441 = vld [vmem:[%s237 + $0x328] sm:$0xf]
                %442 = vst [vmem:[%s238 + $0x194] sm:$0xf] %v441
                %v443 = vld [vmem:[%s237 + $0x330] sm:$0xf]
                %444 = vst [vmem:[%s238 + $0x198] sm:$0xf] %v443
                %v445 = vld [vmem:[%s237 + $0x338] sm:$0xf]
                %446 = vst [vmem:[%s238 + $0x19c] sm:$0xf] %v445
                %v447 = vld [vmem:[%s237 + $0x340] sm:$0xf]
                %448 = vst [vmem:[%s238 + $0x1a0] sm:$0xf] %v447
                %v449 = vld [vmem:[%s237 + $0x348] sm:$0xf]
                %450 = vst [vmem:[%s238 + $0x1a4] sm:$0xf] %v449
                %v451 = vld [vmem:[%s237 + $0x350] sm:$0xf]
                %452 = vst [vmem:[%s238 + $0x1a8] sm:$0xf] %v451
                %v453 = vld [vmem:[%s237 + $0x358] sm:$0xf]
                %454 = vst [vmem:[%s238 + $0x1ac] sm:$0xf] %v453
                %v455 = vld [vmem:[%s237 + $0x360] sm:$0xf]
                %456 = vst [vmem:[%s238 + $0x1b0] sm:$0xf] %v455
                %v457 = vld [vmem:[%s237 + $0x368] sm:$0xf]
                %458 = vst [vmem:[%s238 + $0x1b4] sm:$0xf] %v457
                %v459 = vld [vmem:[%s237 + $0x370] sm:$0xf]
                %460 = vst [vmem:[%s238 + $0x1b8] sm:$0xf] %v459
                %v461 = vld [vmem:[%s237 + $0x378] sm:$0xf]
                %462 = vst [vmem:[%s238 + $0x1bc] sm:$0xf] %v461
                %v463 = vld [vmem:[%s237 + $0x380] sm:$0xf]
                %464 = vst [vmem:[%s238 + $0x1c0] sm:$0xf] %v463
                %v465 = vld [vmem:[%s237 + $0x388] sm:$0xf]
                %466 = vst [vmem:[%s238 + $0x1c4] sm:$0xf] %v465
                %v467 = vld [vmem:[%s237 + $0x390] sm:$0xf]
                %468 = vst [vmem:[%s238 + $0x1c8] sm:$0xf] %v467
                %v469 = vld [vmem:[%s237 + $0x398] sm:$0xf]
                %470 = vst [vmem:[%s238 + $0x1cc] sm:$0xf] %v469
                %v471 = vld [vmem:[%s237 + $0x3a0] sm:$0xf]
                %472 = vst [vmem:[%s238 + $0x1d0] sm:$0xf] %v471
                %v473 = vld [vmem:[%s237 + $0x3a8] sm:$0xf]
                %474 = vst [vmem:[%s238 + $0x1d4] sm:$0xf] %v473
                %v475 = vld [vmem:[%s237 + $0x3b0] sm:$0xf]
                %476 = vst [vmem:[%s238 + $0x1d8] sm:$0xf] %v475
                %v477 = vld [vmem:[%s237 + $0x3b8] sm:$0xf]
                %478 = vst [vmem:[%s238 + $0x1dc] sm:$0xf] %v477
                %v479 = vld [vmem:[%s237 + $0x3c0] sm:$0xf]
                %480 = vst [vmem:[%s238 + $0x1e0] sm:$0xf] %v479
                %v481 = vld [vmem:[%s237 + $0x3c8] sm:$0xf]
                %482 = vst [vmem:[%s238 + $0x1e4] sm:$0xf] %v481
                %v483 = vld [vmem:[%s237 + $0x3d0] sm:$0xf]
                %484 = vst [vmem:[%s238 + $0x1e8] sm:$0xf] %v483
                %v485 = vld [vmem:[%s237 + $0x3d8] sm:$0xf]
                %486 = vst [vmem:[%s238 + $0x1ec] sm:$0xf] %v485
                %v487 = vld [vmem:[%s237 + $0x3e0] sm:$0xf]
                %488 = vst [vmem:[%s238 + $0x1f0] sm:$0xf] %v487
                %v489 = vld [vmem:[%s237 + $0x3e8] sm:$0xf]
                %490 = vst [vmem:[%s238 + $0x1f4] sm:$0xf] %v489
                %v491 = vld [vmem:[%s237 + $0x3f0] sm:$0xf]
                %492 = vst [vmem:[%s238 + $0x1f8] sm:$0xf] %v491
                %v493 = vld [vmem:[%s237 + $0x3f8] sm:$0xf]
                %494 = vst [vmem:[%s238 + $0x1fc] sm:$0xf] %v493
                %v495 = vld [vmem:[%s237 + $0x400] sm:$0xf]
                %496 = vst [vmem:[%s238 + $0x200] sm:$0xf] %v495
                %v497 = vld [vmem:[%s237 + $0x408] sm:$0xf]
                %498 = vst [vmem:[%s238 + $0x204] sm:$0xf] %v497
                %v499 = vld [vmem:[%s237 + $0x410] sm:$0xf]
                %500 = vst [vmem:[%s238 + $0x208] sm:$0xf] %v499
                %v501 = vld [vmem:[%s237 + $0x418] sm:$0xf]
                %502 = vst [vmem:[%s238 + $0x20c] sm:$0xf] %v501
                %v503 = vld [vmem:[%s237 + $0x420] sm:$0xf]
                %504 = vst [vmem:[%s238 + $0x210] sm:$0xf] %v503
                %v505 = vld [vmem:[%s237 + $0x428] sm:$0xf]
                %506 = vst [vmem:[%s238 + $0x214] sm:$0xf] %v505
                %v507 = vld [vmem:[%s237 + $0x430] sm:$0xf]
                %508 = vst [vmem:[%s238 + $0x218] sm:$0xf] %v507
                %v509 = vld [vmem:[%s237 + $0x438] sm:$0xf]
                %510 = vst [vmem:[%s238 + $0x21c] sm:$0xf] %v509
                %v511 = vld [vmem:[%s237 + $0x440] sm:$0xf]
                %512 = vst [vmem:[%s238 + $0x220] sm:$0xf] %v511
                %v513 = vld [vmem:[%s237 + $0x448] sm:$0xf]
                %514 = vst [vmem:[%s238 + $0x224] sm:$0xf] %v513
                %v515 = vld [vmem:[%s237 + $0x450] sm:$0xf]
                %516 = vst [vmem:[%s238 + $0x228] sm:$0xf] %v515
                %v517 = vld [vmem:[%s237 + $0x458] sm:$0xf]
                %518 = vst [vmem:[%s238 + $0x22c] sm:$0xf] %v517
                %v519 = vld [vmem:[%s237 + $0x460] sm:$0xf]
                %520 = vst [vmem:[%s238 + $0x230] sm:$0xf] %v519
                %v521 = vld [vmem:[%s237 + $0x468] sm:$0xf]
                %522 = vst [vmem:[%s238 + $0x234] sm:$0xf] %v521
                %v523 = vld [vmem:[%s237 + $0x470] sm:$0xf]
                %524 = vst [vmem:[%s238 + $0x238] sm:$0xf] %v523
                %v525 = vld [vmem:[%s237 + $0x478] sm:$0xf]
                %526 = vst [vmem:[%s238 + $0x23c] sm:$0xf] %v525
                %v527 = vld [vmem:[%s237 + $0x480] sm:$0xf]
                %528 = vst [vmem:[%s238 + $0x240] sm:$0xf] %v527
                %v529 = vld [vmem:[%s237 + $0x488] sm:$0xf]
                %530 = vst [vmem:[%s238 + $0x244] sm:$0xf] %v529
                %v531 = vld [vmem:[%s237 + $0x490] sm:$0xf]
                %532 = vst [vmem:[%s238 + $0x248] sm:$0xf] %v531
                %v533 = vld [vmem:[%s237 + $0x498] sm:$0xf]
                %534 = vst [vmem:[%s238 + $0x24c] sm:$0xf] %v533
                %v535 = vld [vmem:[%s237 + $0x4a0] sm:$0xf]
                %536 = vst [vmem:[%s238 + $0x250] sm:$0xf] %v535
                %v537 = vld [vmem:[%s237 + $0x4a8] sm:$0xf]
                %538 = vst [vmem:[%s238 + $0x254] sm:$0xf] %v537
                %v539 = vld [vmem:[%s237 + $0x4b0] sm:$0xf]
                %540 = vst [vmem:[%s238 + $0x258] sm:$0xf] %v539
                %v541 = vld [vmem:[%s237 + $0x4b8] sm:$0xf]
                %542 = vst [vmem:[%s238 + $0x25c] sm:$0xf] %v541
                %v543 = vld [vmem:[%s237 + $0x4c0] sm:$0xf]
                %544 = vst [vmem:[%s238 + $0x260] sm:$0xf] %v543
                %v545 = vld [vmem:[%s237 + $0x4c8] sm:$0xf]
                %546 = vst [vmem:[%s238 + $0x264] sm:$0xf] %v545
                %v547 = vld [vmem:[%s237 + $0x4d0] sm:$0xf]
                %548 = vst [vmem:[%s238 + $0x268] sm:$0xf] %v547
                %v549 = vld [vmem:[%s237 + $0x4d8] sm:$0xf]
                %550 = vst [vmem:[%s238 + $0x26c] sm:$0xf] %v549
                %v551 = vld [vmem:[%s237 + $0x4e0] sm:$0xf]
                %552 = vst [vmem:[%s238 + $0x270] sm:$0xf] %v551
                %v553 = vld [vmem:[%s237 + $0x4e8] sm:$0xf]
                %554 = vst [vmem:[%s238 + $0x274] sm:$0xf] %v553
                %v555 = vld [vmem:[%s237 + $0x4f0] sm:$0xf]
                %556 = vst [vmem:[%s238 + $0x278] sm:$0xf] %v555
                %v557 = vld [vmem:[%s237 + $0x4f8] sm:$0xf]
                %558 = vst [vmem:[%s238 + $0x27c] sm:$0xf] %v557
                %v559 = vld [vmem:[%s237 + $0x500] sm:$0xf]
                %560 = vst [vmem:[%s238 + $0x280] sm:$0xf] %v559
                %v561 = vld [vmem:[%s237 + $0x508] sm:$0xf]
                %562 = vst [vmem:[%s238 + $0x284] sm:$0xf] %v561
                %v563 = vld [vmem:[%s237 + $0x510] sm:$0xf]
                %564 = vst [vmem:[%s238 + $0x288] sm:$0xf] %v563
                %v565 = vld [vmem:[%s237 + $0x518] sm:$0xf]
                %566 = vst [vmem:[%s238 + $0x28c] sm:$0xf] %v565
                %v567 = vld [vmem:[%s237 + $0x520] sm:$0xf]
                %568 = vst [vmem:[%s238 + $0x290] sm:$0xf] %v567
                %v569 = vld [vmem:[%s237 + $0x528] sm:$0xf]
                %570 = vst [vmem:[%s238 + $0x294] sm:$0xf] %v569
                %v571 = vld [vmem:[%s237 + $0x530] sm:$0xf]
                %572 = vst [vmem:[%s238 + $0x298] sm:$0xf] %v571
                %v573 = vld [vmem:[%s237 + $0x538] sm:$0xf]
                %574 = vst [vmem:[%s238 + $0x29c] sm:$0xf] %v573
                %v575 = vld [vmem:[%s237 + $0x540] sm:$0xf]
                %576 = vst [vmem:[%s238 + $0x2a0] sm:$0xf] %v575
                %v577 = vld [vmem:[%s237 + $0x548] sm:$0xf]
                %578 = vst [vmem:[%s238 + $0x2a4] sm:$0xf] %v577
                %v579 = vld [vmem:[%s237 + $0x550] sm:$0xf]
                %580 = vst [vmem:[%s238 + $0x2a8] sm:$0xf] %v579
                %v581 = vld [vmem:[%s237 + $0x558] sm:$0xf]
                %582 = vst [vmem:[%s238 + $0x2ac] sm:$0xf] %v581
                %v583 = vld [vmem:[%s237 + $0x560] sm:$0xf]
                %584 = vst [vmem:[%s238 + $0x2b0] sm:$0xf] %v583
                %v585 = vld [vmem:[%s237 + $0x568] sm:$0xf]
                %586 = vst [vmem:[%s238 + $0x2b4] sm:$0xf] %v585
                %v587 = vld [vmem:[%s237 + $0x570] sm:$0xf]
                %588 = vst [vmem:[%s238 + $0x2b8] sm:$0xf] %v587
                %v589 = vld [vmem:[%s237 + $0x578] sm:$0xf]
                %590 = vst [vmem:[%s238 + $0x2bc] sm:$0xf] %v589
                %v591 = vld [vmem:[%s237 + $0x580] sm:$0xf]
                %592 = vst [vmem:[%s238 + $0x2c0] sm:$0xf] %v591
                %v593 = vld [vmem:[%s237 + $0x588] sm:$0xf]
                %594 = vst [vmem:[%s238 + $0x2c4] sm:$0xf] %v593
                %v595 = vld [vmem:[%s237 + $0x590] sm:$0xf]
                %596 = vst [vmem:[%s238 + $0x2c8] sm:$0xf] %v595
                %v597 = vld [vmem:[%s237 + $0x598] sm:$0xf]
                %598 = vst [vmem:[%s238 + $0x2cc] sm:$0xf] %v597
                %v599 = vld [vmem:[%s237 + $0x5a0] sm:$0xf]
                %600 = vst [vmem:[%s238 + $0x2d0] sm:$0xf] %v599
                %v601 = vld [vmem:[%s237 + $0x5a8] sm:$0xf]
                %602 = vst [vmem:[%s238 + $0x2d4] sm:$0xf] %v601
                %v603 = vld [vmem:[%s237 + $0x5b0] sm:$0xf]
                %604 = vst [vmem:[%s238 + $0x2d8] sm:$0xf] %v603
                %v605 = vld [vmem:[%s237 + $0x5b8] sm:$0xf]
                %606 = vst [vmem:[%s238 + $0x2dc] sm:$0xf] %v605
                %v607 = vld [vmem:[%s237 + $0x5c0] sm:$0xf]
                %608 = vst [vmem:[%s238 + $0x2e0] sm:$0xf] %v607
                %v609 = vld [vmem:[%s237 + $0x5c8] sm:$0xf]
                %610 = vst [vmem:[%s238 + $0x2e4] sm:$0xf] %v609
                %v611 = vld [vmem:[%s237 + $0x5d0] sm:$0xf]
                %612 = vst [vmem:[%s238 + $0x2e8] sm:$0xf] %v611
                %v613 = vld [vmem:[%s237 + $0x5d8] sm:$0xf]
                %614 = vst [vmem:[%s238 + $0x2ec] sm:$0xf] %v613
                %v615 = vld [vmem:[%s237 + $0x5e0] sm:$0xf]
                %616 = vst [vmem:[%s238 + $0x2f0] sm:$0xf] %v615
                %v617 = vld [vmem:[%s237 + $0x5e8] sm:$0xf]
                %618 = vst [vmem:[%s238 + $0x2f4] sm:$0xf] %v617
                %v619 = vld [vmem:[%s237 + $0x5f0] sm:$0xf]
                %620 = vst [vmem:[%s238 + $0x2f8] sm:$0xf] %v619
                %v621 = vld [vmem:[%s237 + $0x5f8] sm:$0xf]
                %622 = vst [vmem:[%s238 + $0x2fc] sm:$0xf] %v621
                %v623 = vld [vmem:[%s237 + $0x600] sm:$0xf]
                %624 = vst [vmem:[%s238 + $0x300] sm:$0xf] %v623
                %v625 = vld [vmem:[%s237 + $0x608] sm:$0xf]
                %626 = vst [vmem:[%s238 + $0x304] sm:$0xf] %v625
                %v627 = vld [vmem:[%s237 + $0x610] sm:$0xf]
                %628 = vst [vmem:[%s238 + $0x308] sm:$0xf] %v627
                %v629 = vld [vmem:[%s237 + $0x618] sm:$0xf]
                %630 = vst [vmem:[%s238 + $0x30c] sm:$0xf] %v629
                %v631 = vld [vmem:[%s237 + $0x620] sm:$0xf]
                %632 = vst [vmem:[%s238 + $0x310] sm:$0xf] %v631
                %v633 = vld [vmem:[%s237 + $0x628] sm:$0xf]
                %634 = vst [vmem:[%s238 + $0x314] sm:$0xf] %v633
                %v635 = vld [vmem:[%s237 + $0x630] sm:$0xf]
                %636 = vst [vmem:[%s238 + $0x318] sm:$0xf] %v635
                %v637 = vld [vmem:[%s237 + $0x638] sm:$0xf]
                %638 = vst [vmem:[%s238 + $0x31c] sm:$0xf] %v637
                %v639 = vld [vmem:[%s237 + $0x640] sm:$0xf]
                %640 = vst [vmem:[%s238 + $0x320] sm:$0xf] %v639
                %v641 = vld [vmem:[%s237 + $0x648] sm:$0xf]
                %642 = vst [vmem:[%s238 + $0x324] sm:$0xf] %v641
                %v643 = vld [vmem:[%s237 + $0x650] sm:$0xf]
                %644 = vst [vmem:[%s238 + $0x328] sm:$0xf] %v643
                %v645 = vld [vmem:[%s237 + $0x658] sm:$0xf]
                %646 = vst [vmem:[%s238 + $0x32c] sm:$0xf] %v645
                %v647 = vld [vmem:[%s237 + $0x660] sm:$0xf]
                %648 = vst [vmem:[%s238 + $0x330] sm:$0xf] %v647
                %v649 = vld [vmem:[%s237 + $0x668] sm:$0xf]
                %650 = vst [vmem:[%s238 + $0x334] sm:$0xf] %v649
                %v651 = vld [vmem:[%s237 + $0x670] sm:$0xf]
                %652 = vst [vmem:[%s238 + $0x338] sm:$0xf] %v651
                %v653 = vld [vmem:[%s237 + $0x678] sm:$0xf]
                %654 = vst [vmem:[%s238 + $0x33c] sm:$0xf] %v653
                %v655 = vld [vmem:[%s237 + $0x680] sm:$0xf]
                %656 = vst [vmem:[%s238 + $0x340] sm:$0xf] %v655
                %v657 = vld [vmem:[%s237 + $0x688] sm:$0xf]
                %658 = vst [vmem:[%s238 + $0x344] sm:$0xf] %v657
                %v659 = vld [vmem:[%s237 + $0x690] sm:$0xf]
                %660 = vst [vmem:[%s238 + $0x348] sm:$0xf] %v659
                %v661 = vld [vmem:[%s237 + $0x698] sm:$0xf]
                %662 = vst [vmem:[%s238 + $0x34c] sm:$0xf] %v661
                %v663 = vld [vmem:[%s237 + $0x6a0] sm:$0xf]
                %664 = vst [vmem:[%s238 + $0x350] sm:$0xf] %v663
                %v665 = vld [vmem:[%s237 + $0x6a8] sm:$0xf]
                %666 = vst [vmem:[%s238 + $0x354] sm:$0xf] %v665
                %v667 = vld [vmem:[%s237 + $0x6b0] sm:$0xf]
                %668 = vst [vmem:[%s238 + $0x358] sm:$0xf] %v667
                %v669 = vld [vmem:[%s237 + $0x6b8] sm:$0xf]
                %670 = vst [vmem:[%s238 + $0x35c] sm:$0xf] %v669
                %v671 = vld [vmem:[%s237 + $0x6c0] sm:$0xf]
                %672 = vst [vmem:[%s238 + $0x360] sm:$0xf] %v671
                %v673 = vld [vmem:[%s237 + $0x6c8] sm:$0xf]
                %674 = vst [vmem:[%s238 + $0x364] sm:$0xf] %v673
                %v675 = vld [vmem:[%s237 + $0x6d0] sm:$0xf]
                %676 = vst [vmem:[%s238 + $0x368] sm:$0xf] %v675
                %v677 = vld [vmem:[%s237 + $0x6d8] sm:$0xf]
                %678 = vst [vmem:[%s238 + $0x36c] sm:$0xf] %v677
                %v679 = vld [vmem:[%s237 + $0x6e0] sm:$0xf]
                %680 = vst [vmem:[%s238 + $0x370] sm:$0xf] %v679
                %v681 = vld [vmem:[%s237 + $0x6e8] sm:$0xf]
                %682 = vst [vmem:[%s238 + $0x374] sm:$0xf] %v681
                %v683 = vld [vmem:[%s237 + $0x6f0] sm:$0xf]
                %684 = vst [vmem:[%s238 + $0x378] sm:$0xf] %v683
                %v685 = vld [vmem:[%s237 + $0x6f8] sm:$0xf]
                %686 = vst [vmem:[%s238 + $0x37c] sm:$0xf] %v685
                %v687 = vld [vmem:[%s237 + $0x700] sm:$0xf]
                %688 = vst [vmem:[%s238 + $0x380] sm:$0xf] %v687
                %v689 = vld [vmem:[%s237 + $0x708] sm:$0xf]
                %690 = vst [vmem:[%s238 + $0x384] sm:$0xf] %v689
                %v691 = vld [vmem:[%s237 + $0x710] sm:$0xf]
                %692 = vst [vmem:[%s238 + $0x388] sm:$0xf] %v691
                %v693 = vld [vmem:[%s237 + $0x718] sm:$0xf]
                %694 = vst [vmem:[%s238 + $0x38c] sm:$0xf] %v693
                %v695 = vld [vmem:[%s237 + $0x720] sm:$0xf]
                %696 = vst [vmem:[%s238 + $0x390] sm:$0xf] %v695
                %v697 = vld [vmem:[%s237 + $0x728] sm:$0xf]
                %698 = vst [vmem:[%s238 + $0x394] sm:$0xf] %v697
                %v699 = vld [vmem:[%s237 + $0x730] sm:$0xf]
                %700 = vst [vmem:[%s238 + $0x398] sm:$0xf] %v699
                %v701 = vld [vmem:[%s237 + $0x738] sm:$0xf]
                %702 = vst [vmem:[%s238 + $0x39c] sm:$0xf] %v701
                %v703 = vld [vmem:[%s237 + $0x740] sm:$0xf]
                %704 = vst [vmem:[%s238 + $0x3a0] sm:$0xf] %v703
                %v705 = vld [vmem:[%s237 + $0x748] sm:$0xf]
                %706 = vst [vmem:[%s238 + $0x3a4] sm:$0xf] %v705
                %v707 = vld [vmem:[%s237 + $0x750] sm:$0xf]
                %708 = vst [vmem:[%s238 + $0x3a8] sm:$0xf] %v707
                %v709 = vld [vmem:[%s237 + $0x758] sm:$0xf]
                %710 = vst [vmem:[%s238 + $0x3ac] sm:$0xf] %v709
                %v711 = vld [vmem:[%s237 + $0x760] sm:$0xf]
                %712 = vst [vmem:[%s238 + $0x3b0] sm:$0xf] %v711
                %v713 = vld [vmem:[%s237 + $0x768] sm:$0xf]
                %714 = vst [vmem:[%s238 + $0x3b4] sm:$0xf] %v713
                %v715 = vld [vmem:[%s237 + $0x770] sm:$0xf]
                %716 = vst [vmem:[%s238 + $0x3b8] sm:$0xf] %v715
                %v717 = vld [vmem:[%s237 + $0x778] sm:$0xf]
                %718 = vst [vmem:[%s238 + $0x3bc] sm:$0xf] %v717
                %v719 = vld [vmem:[%s237 + $0x780] sm:$0xf]
                %720 = vst [vmem:[%s238 + $0x3c0] sm:$0xf] %v719
                %v721 = vld [vmem:[%s237 + $0x788] sm:$0xf]
                %722 = vst [vmem:[%s238 + $0x3c4] sm:$0xf] %v721
                %v723 = vld [vmem:[%s237 + $0x790] sm:$0xf]
                %724 = vst [vmem:[%s238 + $0x3c8] sm:$0xf] %v723
                %v725 = vld [vmem:[%s237 + $0x798] sm:$0xf]
                %726 = vst [vmem:[%s238 + $0x3cc] sm:$0xf] %v725
                %v727 = vld [vmem:[%s237 + $0x7a0] sm:$0xf]
                %728 = vst [vmem:[%s238 + $0x3d0] sm:$0xf] %v727
                %v729 = vld [vmem:[%s237 + $0x7a8] sm:$0xf]
                %730 = vst [vmem:[%s238 + $0x3d4] sm:$0xf] %v729
                %v731 = vld [vmem:[%s237 + $0x7b0] sm:$0xf]
                %732 = vst [vmem:[%s238 + $0x3d8] sm:$0xf] %v731
                %v733 = vld [vmem:[%s237 + $0x7b8] sm:$0xf]
                %734 = vst [vmem:[%s238 + $0x3dc] sm:$0xf] %v733
                %v735 = vld [vmem:[%s237 + $0x7c0] sm:$0xf]
                %736 = vst [vmem:[%s238 + $0x3e0] sm:$0xf] %v735
                %v737 = vld [vmem:[%s237 + $0x7c8] sm:$0xf]
                %738 = vst [vmem:[%s238 + $0x3e4] sm:$0xf] %v737
                %v739 = vld [vmem:[%s237 + $0x7d0] sm:$0xf]
                %740 = vst [vmem:[%s238 + $0x3e8] sm:$0xf] %v739
                %v741 = vld [vmem:[%s237 + $0x7d8] sm:$0xf]
                %742 = vst [vmem:[%s238 + $0x3ec] sm:$0xf] %v741
                %v743 = vld [vmem:[%s237 + $0x7e0] sm:$0xf]
                %744 = vst [vmem:[%s238 + $0x3f0] sm:$0xf] %v743
                %v745 = vld [vmem:[%s237 + $0x7e8] sm:$0xf]
                %746 = vst [vmem:[%s238 + $0x3f4] sm:$0xf] %v745
                %v747 = vld [vmem:[%s237 + $0x7f0] sm:$0xf]
                %748 = vst [vmem:[%s238 + $0x3f8] sm:$0xf] %v747
                %v749 = vld [vmem:[%s237 + $0x7f8] sm:$0xf]
                %750 = vst [vmem:[%s238 + $0x3fc] sm:$0xf] %v749
              $region41: #{a_call__.32} parent=35 // loop_footer
                %s236 = sadd.s32 1, %s232
              $region42: #{a_call__.32} parent=35 // loop_footer_branch
                %231 = sbr.rel target = $region38
              $region43: #{a_call__.32} parent=35 // loop_exit
                _
            $region36: #{a_call__.32} parent=27 // pred_fallthru
              _
          $region28: #{a_call__.32} parent=23 // pred_fallthru
            _
          %1282 = vnop
        $region24: #{a_call__.32} parent=19 // pred_fallthru
          _
        // Predicated region
        $region62: #{a_call__.32} parent=19 // pred_check
          %p1283 = pneg %p96
        $region63: #{a_call__.32} parent=19 // pred_check_branch
          %1285 = sbr.rel (%p1283) target = $region65
        $region64: #{a_call__.32} parent=19 // pred_region
          %p1286 = scmp.lt.s32.totalorder %s20, 1
          %s1287 = scalar_select %p1286, %s20, 1
          %s1288 = scalar_lea.vmem %s2, %s1287
        $region65: #{a_call__.32} parent=19 // pred_fallthru
          _
      $region20: #{a_call__.32} parent=5 // pred_fallthru
        _
      %p1289 = scmp.le.s32.totalorder 1, %s12
      %p1290 = scmp.lt.s32.totalorder %s12, 3
      %p1291 = pnand %p1289, %p1290
      %p1292 = pneg %p1291
      // Predicated region
      $region66: #{a_call__.32} parent=5 // pred_check
        _
      $region67: #{a_call__.32} parent=5 // pred_check_branch
        %1294 = sbr.rel (%p1291) target = $region69
      $region68: #{a_call__.32} parent=5 // pred_region
        %s1295 = ssub.s32 %s12, 1
        %s1296 = sand.u32 %s63, 1
        %s1297 = sand.u32 %s63, 1
        %s1298 = smul.addr %s1297, 1024
        %s1299 = scalar_lea.vmem [#allocation2], %s1298
        // Predicated region
        $region70: #{a_call__.32} parent=68 // pred_check
          %p1300 = pneg %p76
        $region71: #{a_call__.32} parent=68 // pred_check_branch
          %1302 = sbr.rel (%p1300) target = $region73
        $region72: #{a_call__.32} parent=68 // pred_region
          _
        $region73: #{a_call__.32} parent=68 // pred_fallthru
          _
        %s1303 = smul.u32 4, %s21
        %p1304 = scmp.lt.s32.totalorder %s1303, 3
        %s1305 = scalar_select %p1304, %s1303, 3
        %s1306 = smul.addr %s1305, 16
        %s1307 = smul.addr %s1306, 4
        %s1308 = scalar_lea.vmem %s0, %s1307
        %p1309 = pneg %p50
        %p1310 = pneg %p47
        %s1311 = sand.u32 %s63, 1
        %s1312 = sand.u32 %s63, 1
        %s1313 = smul.addr %s1312, 1024
        %s1314 = scalar_lea.vmem [#allocation2], %s1313
        %p1315 = pneg %p76
        %p1316 = pneg %p73
        %p1317 = scmp.lt.s32.totalorder %s22, 1
        %s1318 = scalar_select %p1317, %s22, 1
        %s1319 = scalar_lea.vmem %s2, %s1318
        %p1320 = pneg %p102
        %p1321 = pneg %p99
        %p1322 = pneg %p130
        %p1323 = pneg %p127
        %s1324 = sand.u32 %s117, 1
        %s1325 = sand.u32 %s117, 1
        %s1326 = smul.addr %s1325, 16
        %s1327 = scalar_lea.vmem [#allocation3], %s1326
        %p1328 = pneg %p158
        %p1329 = pneg %p155
        %p1330 = scmp.lt.s32.totalorder %s21, 0
        %s1331 = scalar_select %p1330, %s21, 0
        %p1332 = scmp.lt.s32.totalorder %s22, 1
        %s1333 = scalar_select %p1332, %s22, 1
        %s1334 = smul.addr %s1331, 2
        %s1335 = sadd.s32 %s1333, %s1334
        %s1336 = scalar_lea.vmem %s4, %s1335
        %p1337 = pneg %p186
        %p1338 = pneg %p183
        %p1339 = scmp.lt.s32.totalorder %s21, 0
        %s1340 = scalar_select %p1339, %s21, 0
        %p1341 = scmp.lt.s32.totalorder %s22, 1
        %s1342 = scalar_select %p1341, %s22, 1
        %s1343 = smul.addr %s1340, 2
        %s1344 = sadd.s32 %s1342, %s1343
        %s1345 = scalar_lea.vmem %s5, %s1344
        %s1346 = smul.u32 4, %s21
        %p1347 = scmp.lt.s32.totalorder %s1346, 3
        %s1348 = scalar_select %p1347, %s1346, 3
        %s1349 = smul.addr %s1348, 16
        %s1350 = smul.addr %s1349, 4
        %s1351 = scalar_lea.vmem %s0, %s1350
        %s1352 = smul.u32 4, %s21
        %p1353 = scmp.lt.s32.totalorder %s22, 1
        %s1354 = scalar_select %p1353, %s22, 1
        %s1355 = scalar_lea.vmem %s2, %s1354
        %s1356 = smul.u32 4, %s21
        %p1357 = scmp.lt.s32.totalorder %s21, 0
        %s1358 = scalar_select %p1357, %s21, 0
        %p1359 = scmp.lt.s32.totalorder %s22, 1
        %s1360 = scalar_select %p1359, %s22, 1
        %s1361 = smul.addr %s1358, 2
        %s1362 = sadd.s32 %s1360, %s1361
        %s1363 = scalar_lea.vmem %s4, %s1362
        %p1364 = scmp.lt.s32.totalorder %s21, 0
        %s1365 = scalar_select %p1364, %s21, 0
        %p1366 = scmp.lt.s32.totalorder %s22, 1
        %s1367 = scalar_select %p1366, %s22, 1
        %s1368 = smul.addr %s1365, 2
        %s1369 = sadd.s32 %s1367, %s1368
        %s1370 = scalar_lea.vmem %s5, %s1369
        %v1372 = vld [vmem:[%s1351] sm:$0xff]
        %v1373 = vld [vmem:[%s1351 + $0x8] sm:$0xff]
        %v1374 = vld [vmem:[%s1351 + $0x10] sm:$0xff]
        %v1375 = vld [vmem:[%s1351 + $0x18] sm:$0xff]
        %v1376 = vld [vmem:[%s1351 + $0x20] sm:$0xff]
        %v1377 = vld [vmem:[%s1351 + $0x28] sm:$0xff]
        %v1378 = vld [vmem:[%s1351 + $0x30] sm:$0xff]
        %v1379 = vld [vmem:[%s1351 + $0x38] sm:$0xff]
        %v1380 = vld [vmem:[%s1351 + $0x40] sm:$0xff]
        %v1381 = vld [vmem:[%s1351 + $0x48] sm:$0xff]
        %v1382 = vld [vmem:[%s1351 + $0x50] sm:$0xff]
        %v1383 = vld [vmem:[%s1351 + $0x58] sm:$0xff]
        %v1384 = vld [vmem:[%s1351 + $0x60] sm:$0xff]
        %v1385 = vld [vmem:[%s1351 + $0x68] sm:$0xff]
        %v1386 = vld [vmem:[%s1351 + $0x70] sm:$0xff]
        %v1387 = vld [vmem:[%s1351 + $0x78] sm:$0xff]
        %v1388 = vld [vmem:[%s1351 + $0x80] sm:$0xff]
        %v1389 = vld [vmem:[%s1351 + $0x88] sm:$0xff]
        %v1390 = vld [vmem:[%s1351 + $0x90] sm:$0xff]
        %v1391 = vld [vmem:[%s1351 + $0x98] sm:$0xff]
        %v1392 = vld [vmem:[%s1351 + $0xa0] sm:$0xff]
        %v1393 = vld [vmem:[%s1351 + $0xa8] sm:$0xff]
        %v1394 = vld [vmem:[%s1351 + $0xb0] sm:$0xff]
        %v1395 = vld [vmem:[%s1351 + $0xb8] sm:$0xff]
        %v1396 = vld [vmem:[%s1351 + $0xc0] sm:$0xff]
        %v1397 = vld [vmem:[%s1351 + $0xc8] sm:$0xff]
        %v1398 = vld [vmem:[%s1351 + $0xd0] sm:$0xff]
        %v1399 = vld [vmem:[%s1351 + $0xd8] sm:$0xff]
        %v1400 = vld [vmem:[%s1351 + $0xe0] sm:$0xff]
        %v1401 = vld [vmem:[%s1351 + $0xe8] sm:$0xff]
        %v1402 = vld [vmem:[%s1351 + $0xf0] sm:$0xff]
        %v1403 = vld [vmem:[%s1351 + $0xf8] sm:$0xff]
        %v1404 = vld [vmem:[%s1299] sm:$0xf]
        %v1405 = vld [vmem:[%s1299 + $0x4] sm:$0xf]
        %v1406 = vld [vmem:[%s1299 + $0x8] sm:$0xf]
        %v1407 = vld [vmem:[%s1299 + $0xc] sm:$0xf]
        %v1408 = vld [vmem:[%s1299 + $0x10] sm:$0xf]
        %v1409 = vld [vmem:[%s1299 + $0x14] sm:$0xf]
        %v1410 = vld [vmem:[%s1299 + $0x18] sm:$0xf]
        %v1411 = vld [vmem:[%s1299 + $0x1c] sm:$0xf]
        %v1412 = vld [vmem:[%s1299 + $0x20] sm:$0xf]
        %v1413 = vld [vmem:[%s1299 + $0x24] sm:$0xf]
        %v1414 = vld [vmem:[%s1299 + $0x28] sm:$0xf]
        %v1415 = vld [vmem:[%s1299 + $0x2c] sm:$0xf]
        %v1416 = vld [vmem:[%s1299 + $0x30] sm:$0xf]
        %v1417 = vld [vmem:[%s1299 + $0x34] sm:$0xf]
        %v1418 = vld [vmem:[%s1299 + $0x38] sm:$0xf]
        %v1419 = vld [vmem:[%s1299 + $0x3c] sm:$0xf]
        %v1420 = vld [vmem:[%s1299 + $0x40] sm:$0xf]
        %v1421 = vld [vmem:[%s1299 + $0x44] sm:$0xf]
        %v1422 = vld [vmem:[%s1299 + $0x48] sm:$0xf]
        %v1423 = vld [vmem:[%s1299 + $0x4c] sm:$0xf]
        %v1424 = vld [vmem:[%s1299 + $0x50] sm:$0xf]
        %v1425 = vld [vmem:[%s1299 + $0x54] sm:$0xf]
        %v1426 = vld [vmem:[%s1299 + $0x58] sm:$0xf]
        %v1427 = vld [vmem:[%s1299 + $0x5c] sm:$0xf]
        %v1428 = vld [vmem:[%s1299 + $0x60] sm:$0xf]
        %v1429 = vld [vmem:[%s1299 + $0x64] sm:$0xf]
        %v1430 = vld [vmem:[%s1299 + $0x68] sm:$0xf]
        %v1431 = vld [vmem:[%s1299 + $0x6c] sm:$0xf]
        %v1432 = vld [vmem:[%s1299 + $0x70] sm:$0xf]
        %v1433 = vld [vmem:[%s1299 + $0x74] sm:$0xf]
        %v1434 = vld [vmem:[%s1299 + $0x78] sm:$0xf]
        %v1435 = vld [vmem:[%s1299 + $0x7c] sm:$0xf]
        %v1436 = vld [vmem:[%s1299 + $0x80] sm:$0xf]
        %v1437 = vld [vmem:[%s1299 + $0x84] sm:$0xf]
        %v1438 = vld [vmem:[%s1299 + $0x88] sm:$0xf]
        %v1439 = vld [vmem:[%s1299 + $0x8c] sm:$0xf]
        %v1440 = vld [vmem:[%s1299 + $0x90] sm:$0xf]
        %v1441 = vld [vmem:[%s1299 + $0x94] sm:$0xf]
        %v1442 = vld [vmem:[%s1299 + $0x98] sm:$0xf]
        %v1443 = vld [vmem:[%s1299 + $0x9c] sm:$0xf]
        %v1444 = vld [vmem:[%s1299 + $0xa0] sm:$0xf]
        %v1445 = vld [vmem:[%s1299 + $0xa4] sm:$0xf]
        %v1446 = vld [vmem:[%s1299 + $0xa8] sm:$0xf]
        %v1447 = vld [vmem:[%s1299 + $0xac] sm:$0xf]
        %v1448 = vld [vmem:[%s1299 + $0xb0] sm:$0xf]
        %v1449 = vld [vmem:[%s1299 + $0xb4] sm:$0xf]
        %v1450 = vld [vmem:[%s1299 + $0xb8] sm:$0xf]
        %v1451 = vld [vmem:[%s1299 + $0xbc] sm:$0xf]
        %v1452 = vld [vmem:[%s1299 + $0xc0] sm:$0xf]
        %v1453 = vld [vmem:[%s1299 + $0xc4] sm:$0xf]
        %v1454 = vld [vmem:[%s1299 + $0xc8] sm:$0xf]
        %v1455 = vld [vmem:[%s1299 + $0xcc] sm:$0xf]
        %v1456 = vld [vmem:[%s1299 + $0xd0] sm:$0xf]
        %v1457 = vld [vmem:[%s1299 + $0xd4] sm:$0xf]
        %v1458 = vld [vmem:[%s1299 + $0xd8] sm:$0xf]
        %v1459 = vld [vmem:[%s1299 + $0xdc] sm:$0xf]
        %v1460 = vld [vmem:[%s1299 + $0xe0] sm:$0xf]
        %v1461 = vld [vmem:[%s1299 + $0xe4] sm:$0xf]
        %v1462 = vld [vmem:[%s1299 + $0xe8] sm:$0xf]
        %v1463 = vld [vmem:[%s1299 + $0xec] sm:$0xf]
        %v1464 = vld [vmem:[%s1299 + $0xf0] sm:$0xf]
        %v1465 = vld [vmem:[%s1299 + $0xf4] sm:$0xf]
        %v1466 = vld [vmem:[%s1299 + $0xf8] sm:$0xf]
        %v1467 = vld [vmem:[%s1299 + $0xfc] sm:$0xf]
        %v1468 = vld [vmem:[%s1299 + $0x100] sm:$0xf]
        %v1469 = vld [vmem:[%s1299 + $0x104] sm:$0xf]
        %v1470 = vld [vmem:[%s1299 + $0x108] sm:$0xf]
        %v1471 = vld [vmem:[%s1299 + $0x10c] sm:$0xf]
        %v1472 = vld [vmem:[%s1299 + $0x110] sm:$0xf]
        %v1473 = vld [vmem:[%s1299 + $0x114] sm:$0xf]
        %v1474 = vld [vmem:[%s1299 + $0x118] sm:$0xf]
        %v1475 = vld [vmem:[%s1299 + $0x11c] sm:$0xf]
        %v1476 = vld [vmem:[%s1299 + $0x120] sm:$0xf]
        %v1477 = vld [vmem:[%s1299 + $0x124] sm:$0xf]
        %v1478 = vld [vmem:[%s1299 + $0x128] sm:$0xf]
        %v1479 = vld [vmem:[%s1299 + $0x12c] sm:$0xf]
        %v1480 = vld [vmem:[%s1299 + $0x130] sm:$0xf]
        %v1481 = vld [vmem:[%s1299 + $0x134] sm:$0xf]
        %v1482 = vld [vmem:[%s1299 + $0x138] sm:$0xf]
        %v1483 = vld [vmem:[%s1299 + $0x13c] sm:$0xf]
        %v1484 = vld [vmem:[%s1299 + $0x140] sm:$0xf]
        %v1485 = vld [vmem:[%s1299 + $0x144] sm:$0xf]
        %v1486 = vld [vmem:[%s1299 + $0x148] sm:$0xf]
        %v1487 = vld [vmem:[%s1299 + $0x14c] sm:$0xf]
        %v1488 = vld [vmem:[%s1299 + $0x150] sm:$0xf]
        %v1489 = vld [vmem:[%s1299 + $0x154] sm:$0xf]
        %v1490 = vld [vmem:[%s1299 + $0x158] sm:$0xf]
        %v1491 = vld [vmem:[%s1299 + $0x15c] sm:$0xf]
        %v1492 = vld [vmem:[%s1299 + $0x160] sm:$0xf]
        %v1493 = vld [vmem:[%s1299 + $0x164] sm:$0xf]
        %v1494 = vld [vmem:[%s1299 + $0x168] sm:$0xf]
        %v1495 = vld [vmem:[%s1299 + $0x16c] sm:$0xf]
        %v1496 = vld [vmem:[%s1299 + $0x170] sm:$0xf]
        %v1497 = vld [vmem:[%s1299 + $0x174] sm:$0xf]
        %v1498 = vld [vmem:[%s1299 + $0x178] sm:$0xf]
        %v1499 = vld [vmem:[%s1299 + $0x17c] sm:$0xf]
        %v1500 = vld [vmem:[%s1299 + $0x180] sm:$0xf]
        %v1501 = vld [vmem:[%s1299 + $0x184] sm:$0xf]
        %v1502 = vld [vmem:[%s1299 + $0x188] sm:$0xf]
        %v1503 = vld [vmem:[%s1299 + $0x18c] sm:$0xf]
        %v1504 = vld [vmem:[%s1299 + $0x190] sm:$0xf]
        %v1505 = vld [vmem:[%s1299 + $0x194] sm:$0xf]
        %v1506 = vld [vmem:[%s1299 + $0x198] sm:$0xf]
        %v1507 = vld [vmem:[%s1299 + $0x19c] sm:$0xf]
        %v1508 = vld [vmem:[%s1299 + $0x1a0] sm:$0xf]
        %v1509 = vld [vmem:[%s1299 + $0x1a4] sm:$0xf]
        %v1510 = vld [vmem:[%s1299 + $0x1a8] sm:$0xf]
        %v1511 = vld [vmem:[%s1299 + $0x1ac] sm:$0xf]
        %v1512 = vld [vmem:[%s1299 + $0x1b0] sm:$0xf]
        %v1513 = vld [vmem:[%s1299 + $0x1b4] sm:$0xf]
        %v1514 = vld [vmem:[%s1299 + $0x1b8] sm:$0xf]
        %v1515 = vld [vmem:[%s1299 + $0x1bc] sm:$0xf]
        %v1516 = vld [vmem:[%s1299 + $0x1c0] sm:$0xf]
        %v1517 = vld [vmem:[%s1299 + $0x1c4] sm:$0xf]
        %v1518 = vld [vmem:[%s1299 + $0x1c8] sm:$0xf]
        %v1519 = vld [vmem:[%s1299 + $0x1cc] sm:$0xf]
        %v1520 = vld [vmem:[%s1299 + $0x1d0] sm:$0xf]
        %v1521 = vld [vmem:[%s1299 + $0x1d4] sm:$0xf]
        %v1522 = vld [vmem:[%s1299 + $0x1d8] sm:$0xf]
        %v1523 = vld [vmem:[%s1299 + $0x1dc] sm:$0xf]
        %v1524 = vld [vmem:[%s1299 + $0x1e0] sm:$0xf]
        %v1525 = vld [vmem:[%s1299 + $0x1e4] sm:$0xf]
        %v1526 = vld [vmem:[%s1299 + $0x1e8] sm:$0xf]
        %v1527 = vld [vmem:[%s1299 + $0x1ec] sm:$0xf]
        %v1528 = vld [vmem:[%s1299 + $0x1f0] sm:$0xf]
        %v1529 = vld [vmem:[%s1299 + $0x1f4] sm:$0xf]
        %v1530 = vld [vmem:[%s1299 + $0x1f8] sm:$0xf]
        %v1531 = vld [vmem:[%s1299 + $0x1fc] sm:$0xf]
        %v1532 = vld [vmem:[%s1299 + $0x200] sm:$0xf]
        %v1533 = vld [vmem:[%s1299 + $0x204] sm:$0xf]
        %v1534 = vld [vmem:[%s1299 + $0x208] sm:$0xf]
        %v1535 = vld [vmem:[%s1299 + $0x20c] sm:$0xf]
        %v1536 = vld [vmem:[%s1299 + $0x210] sm:$0xf]
        %v1537 = vld [vmem:[%s1299 + $0x214] sm:$0xf]
        %v1538 = vld [vmem:[%s1299 + $0x218] sm:$0xf]
        %v1539 = vld [vmem:[%s1299 + $0x21c] sm:$0xf]
        %v1540 = vld [vmem:[%s1299 + $0x220] sm:$0xf]
        %v1541 = vld [vmem:[%s1299 + $0x224] sm:$0xf]
        %v1542 = vld [vmem:[%s1299 + $0x228] sm:$0xf]
        %v1543 = vld [vmem:[%s1299 + $0x22c] sm:$0xf]
        %v1544 = vld [vmem:[%s1299 + $0x230] sm:$0xf]
        %v1545 = vld [vmem:[%s1299 + $0x234] sm:$0xf]
        %v1546 = vld [vmem:[%s1299 + $0x238] sm:$0xf]
        %v1547 = vld [vmem:[%s1299 + $0x23c] sm:$0xf]
        %v1548 = vld [vmem:[%s1299 + $0x240] sm:$0xf]
        %v1549 = vld [vmem:[%s1299 + $0x244] sm:$0xf]
        %v1550 = vld [vmem:[%s1299 + $0x248] sm:$0xf]
        %v1551 = vld [vmem:[%s1299 + $0x24c] sm:$0xf]
        %v1552 = vld [vmem:[%s1299 + $0x250] sm:$0xf]
        %v1553 = vld [vmem:[%s1299 + $0x254] sm:$0xf]
        %v1554 = vld [vmem:[%s1299 + $0x258] sm:$0xf]
        %v1555 = vld [vmem:[%s1299 + $0x25c] sm:$0xf]
        %v1556 = vld [vmem:[%s1299 + $0x260] sm:$0xf]
        %v1557 = vld [vmem:[%s1299 + $0x264] sm:$0xf]
        %v1558 = vld [vmem:[%s1299 + $0x268] sm:$0xf]
        %v1559 = vld [vmem:[%s1299 + $0x26c] sm:$0xf]
        %v1560 = vld [vmem:[%s1299 + $0x270] sm:$0xf]
        %v1561 = vld [vmem:[%s1299 + $0x274] sm:$0xf]
        %v1562 = vld [vmem:[%s1299 + $0x278] sm:$0xf]
        %v1563 = vld [vmem:[%s1299 + $0x27c] sm:$0xf]
        %v1564 = vld [vmem:[%s1299 + $0x280] sm:$0xf]
        %v1565 = vld [vmem:[%s1299 + $0x284] sm:$0xf]
        %v1566 = vld [vmem:[%s1299 + $0x288] sm:$0xf]
        %v1567 = vld [vmem:[%s1299 + $0x28c] sm:$0xf]
        %v1568 = vld [vmem:[%s1299 + $0x290] sm:$0xf]
        %v1569 = vld [vmem:[%s1299 + $0x294] sm:$0xf]
        %v1570 = vld [vmem:[%s1299 + $0x298] sm:$0xf]
        %v1571 = vld [vmem:[%s1299 + $0x29c] sm:$0xf]
        %v1572 = vld [vmem:[%s1299 + $0x2a0] sm:$0xf]
        %v1573 = vld [vmem:[%s1299 + $0x2a4] sm:$0xf]
        %v1574 = vld [vmem:[%s1299 + $0x2a8] sm:$0xf]
        %v1575 = vld [vmem:[%s1299 + $0x2ac] sm:$0xf]
        %v1576 = vld [vmem:[%s1299 + $0x2b0] sm:$0xf]
        %v1577 = vld [vmem:[%s1299 + $0x2b4] sm:$0xf]
        %v1578 = vld [vmem:[%s1299 + $0x2b8] sm:$0xf]
        %v1579 = vld [vmem:[%s1299 + $0x2bc] sm:$0xf]
        %v1580 = vld [vmem:[%s1299 + $0x2c0] sm:$0xf]
        %v1581 = vld [vmem:[%s1299 + $0x2c4] sm:$0xf]
        %v1582 = vld [vmem:[%s1299 + $0x2c8] sm:$0xf]
        %v1583 = vld [vmem:[%s1299 + $0x2cc] sm:$0xf]
        %v1584 = vld [vmem:[%s1299 + $0x2d0] sm:$0xf]
        %v1585 = vld [vmem:[%s1299 + $0x2d4] sm:$0xf]
        %v1586 = vld [vmem:[%s1299 + $0x2d8] sm:$0xf]
        %v1587 = vld [vmem:[%s1299 + $0x2dc] sm:$0xf]
        %v1588 = vld [vmem:[%s1299 + $0x2e0] sm:$0xf]
        %v1589 = vld [vmem:[%s1299 + $0x2e4] sm:$0xf]
        %v1590 = vld [vmem:[%s1299 + $0x2e8] sm:$0xf]
        %v1591 = vld [vmem:[%s1299 + $0x2ec] sm:$0xf]
        %v1592 = vld [vmem:[%s1299 + $0x2f0] sm:$0xf]
        %v1593 = vld [vmem:[%s1299 + $0x2f4] sm:$0xf]
        %v1594 = vld [vmem:[%s1299 + $0x2f8] sm:$0xf]
        %v1595 = vld [vmem:[%s1299 + $0x2fc] sm:$0xf]
        %v1596 = vld [vmem:[%s1299 + $0x300] sm:$0xf]
        %v1597 = vld [vmem:[%s1299 + $0x304] sm:$0xf]
        %v1598 = vld [vmem:[%s1299 + $0x308] sm:$0xf]
        %v1599 = vld [vmem:[%s1299 + $0x30c] sm:$0xf]
        %v1600 = vld [vmem:[%s1299 + $0x310] sm:$0xf]
        %v1601 = vld [vmem:[%s1299 + $0x314] sm:$0xf]
        %v1602 = vld [vmem:[%s1299 + $0x318] sm:$0xf]
        %v1603 = vld [vmem:[%s1299 + $0x31c] sm:$0xf]
        %v1604 = vld [vmem:[%s1299 + $0x320] sm:$0xf]
        %v1605 = vld [vmem:[%s1299 + $0x324] sm:$0xf]
        %v1606 = vld [vmem:[%s1299 + $0x328] sm:$0xf]
        %v1607 = vld [vmem:[%s1299 + $0x32c] sm:$0xf]
        %v1608 = vld [vmem:[%s1299 + $0x330] sm:$0xf]
        %v1609 = vld [vmem:[%s1299 + $0x334] sm:$0xf]
        %v1610 = vld [vmem:[%s1299 + $0x338] sm:$0xf]
        %v1611 = vld [vmem:[%s1299 + $0x33c] sm:$0xf]
        %v1612 = vld [vmem:[%s1299 + $0x340] sm:$0xf]
        %v1613 = vld [vmem:[%s1299 + $0x344] sm:$0xf]
        %v1614 = vld [vmem:[%s1299 + $0x348] sm:$0xf]
        %v1615 = vld [vmem:[%s1299 + $0x34c] sm:$0xf]
        %v1616 = vld [vmem:[%s1299 + $0x350] sm:$0xf]
        %v1617 = vld [vmem:[%s1299 + $0x354] sm:$0xf]
        %v1618 = vld [vmem:[%s1299 + $0x358] sm:$0xf]
        %v1619 = vld [vmem:[%s1299 + $0x35c] sm:$0xf]
        %v1620 = vld [vmem:[%s1299 + $0x360] sm:$0xf]
        %v1621 = vld [vmem:[%s1299 + $0x364] sm:$0xf]
        %v1622 = vld [vmem:[%s1299 + $0x368] sm:$0xf]
        %v1623 = vld [vmem:[%s1299 + $0x36c] sm:$0xf]
        %v1624 = vld [vmem:[%s1299 + $0x370] sm:$0xf]
        %v1625 = vld [vmem:[%s1299 + $0x374] sm:$0xf]
        %v1626 = vld [vmem:[%s1299 + $0x378] sm:$0xf]
        %v1627 = vld [vmem:[%s1299 + $0x37c] sm:$0xf]
        %v1628 = vld [vmem:[%s1299 + $0x380] sm:$0xf]
        %v1629 = vld [vmem:[%s1299 + $0x384] sm:$0xf]
        %v1630 = vld [vmem:[%s1299 + $0x388] sm:$0xf]
        %v1631 = vld [vmem:[%s1299 + $0x38c] sm:$0xf]
        %v1632 = vld [vmem:[%s1299 + $0x390] sm:$0xf]
        %v1633 = vld [vmem:[%s1299 + $0x394] sm:$0xf]
        %v1634 = vld [vmem:[%s1299 + $0x398] sm:$0xf]
        %v1635 = vld [vmem:[%s1299 + $0x39c] sm:$0xf]
        %v1636 = vld [vmem:[%s1299 + $0x3a0] sm:$0xf]
        %v1637 = vld [vmem:[%s1299 + $0x3a4] sm:$0xf]
        %v1638 = vld [vmem:[%s1299 + $0x3a8] sm:$0xf]
        %v1639 = vld [vmem:[%s1299 + $0x3ac] sm:$0xf]
        %v1640 = vld [vmem:[%s1299 + $0x3b0] sm:$0xf]
        %v1641 = vld [vmem:[%s1299 + $0x3b4] sm:$0xf]
        %v1642 = vld [vmem:[%s1299 + $0x3b8] sm:$0xf]
        %v1643 = vld [vmem:[%s1299 + $0x3bc] sm:$0xf]
        %v1644 = vld [vmem:[%s1299 + $0x3c0] sm:$0xf]
        %v1645 = vld [vmem:[%s1299 + $0x3c4] sm:$0xf]
        %v1646 = vld [vmem:[%s1299 + $0x3c8] sm:$0xf]
        %v1647 = vld [vmem:[%s1299 + $0x3cc] sm:$0xf]
        %v1648 = vld [vmem:[%s1299 + $0x3d0] sm:$0xf]
        %v1649 = vld [vmem:[%s1299 + $0x3d4] sm:$0xf]
        %v1650 = vld [vmem:[%s1299 + $0x3d8] sm:$0xf]
        %v1651 = vld [vmem:[%s1299 + $0x3dc] sm:$0xf]
        %v1652 = vld [vmem:[%s1299 + $0x3e0] sm:$0xf]
        %v1653 = vld [vmem:[%s1299 + $0x3e4] sm:$0xf]
        %v1654 = vld [vmem:[%s1299 + $0x3e8] sm:$0xf]
        %v1655 = vld [vmem:[%s1299 + $0x3ec] sm:$0xf]
        %v1656 = vld [vmem:[%s1299 + $0x3f0] sm:$0xf]
        %v1657 = vld [vmem:[%s1299 + $0x3f4] sm:$0xf]
        %v1658 = vld [vmem:[%s1299 + $0x3f8] sm:$0xf]
        %v1659 = vld [vmem:[%s1299 + $0x3fc] sm:$0xf]
        %v1692 = vunpack.c.l.b16 %v1372
        %v1693 = vunpack.c.h.b16 %v1372
        %v1694 = vunpack.c.l.b16 %v1373
        %v1695 = vunpack.c.h.b16 %v1373
        %v1696 = vunpack.c.l.b16 %v1374
        %v1697 = vunpack.c.h.b16 %v1374
        %v1698 = vunpack.c.l.b16 %v1375
        %v1699 = vunpack.c.h.b16 %v1375
        %v1700 = vunpack.c.l.b16 %v1376
        %v1701 = vunpack.c.h.b16 %v1376
        %v1702 = vunpack.c.l.b16 %v1377
        %v1703 = vunpack.c.h.b16 %v1377
        %v1704 = vunpack.c.l.b16 %v1378
        %v1705 = vunpack.c.h.b16 %v1378
        %v1706 = vunpack.c.l.b16 %v1379
        %v1707 = vunpack.c.h.b16 %v1379
        %v1708 = vunpack.c.l.b16 %v1380
        %v1709 = vunpack.c.h.b16 %v1380
        %v1710 = vunpack.c.l.b16 %v1381
        %v1711 = vunpack.c.h.b16 %v1381
        %v1712 = vunpack.c.l.b16 %v1382
        %v1713 = vunpack.c.h.b16 %v1382
        %v1714 = vunpack.c.l.b16 %v1383
        %v1715 = vunpack.c.h.b16 %v1383
        %v1716 = vunpack.c.l.b16 %v1384
        %v1717 = vunpack.c.h.b16 %v1384
        %v1718 = vunpack.c.l.b16 %v1385
        %v1719 = vunpack.c.h.b16 %v1385
        %v1720 = vunpack.c.l.b16 %v1386
        %v1721 = vunpack.c.h.b16 %v1386
        %v1722 = vunpack.c.l.b16 %v1387
        %v1723 = vunpack.c.h.b16 %v1387
        %v1724 = vunpack.c.l.b16 %v1388
        %v1725 = vunpack.c.h.b16 %v1388
        %v1726 = vunpack.c.l.b16 %v1389
        %v1727 = vunpack.c.h.b16 %v1389
        %v1728 = vunpack.c.l.b16 %v1390
        %v1729 = vunpack.c.h.b16 %v1390
        %v1730 = vunpack.c.l.b16 %v1391
        %v1731 = vunpack.c.h.b16 %v1391
        %v1732 = vunpack.c.l.b16 %v1392
        %v1733 = vunpack.c.h.b16 %v1392
        %v1734 = vunpack.c.l.b16 %v1393
        %v1735 = vunpack.c.h.b16 %v1393
        %v1736 = vunpack.c.l.b16 %v1394
        %v1737 = vunpack.c.h.b16 %v1394
        %v1738 = vunpack.c.l.b16 %v1395
        %v1739 = vunpack.c.h.b16 %v1395
        %v1740 = vunpack.c.l.b16 %v1396
        %v1741 = vunpack.c.h.b16 %v1396
        %v1742 = vunpack.c.l.b16 %v1397
        %v1743 = vunpack.c.h.b16 %v1397
        %v1744 = vunpack.c.l.b16 %v1398
        %v1745 = vunpack.c.h.b16 %v1398
        %v1746 = vunpack.c.l.b16 %v1399
        %v1747 = vunpack.c.h.b16 %v1399
        %v1748 = vunpack.c.l.b16 %v1400
        %v1749 = vunpack.c.h.b16 %v1400
        %v1750 = vunpack.c.l.b16 %v1401
        %v1751 = vunpack.c.h.b16 %v1401
        %v1752 = vunpack.c.l.b16 %v1402
        %v1753 = vunpack.c.h.b16 %v1402
        %v1754 = vunpack.c.l.b16 %v1403
        %v1755 = vunpack.c.h.b16 %v1403
        %v1756 = vpack.c.b16 %v1708, %v1692
        %v1757 = vpack.c.b16 %v1709, %v1693
        %v1758 = vpack.c.b16 %v1710, %v1694
        %v1759 = vpack.c.b16 %v1711, %v1695
        %v1760 = vpack.c.b16 %v1712, %v1696
        %v1761 = vpack.c.b16 %v1713, %v1697
        %v1762 = vpack.c.b16 %v1714, %v1698
        %v1763 = vpack.c.b16 %v1715, %v1699
        %v1764 = vpack.c.b16 %v1716, %v1700
        %v1765 = vpack.c.b16 %v1717, %v1701
        %v1766 = vpack.c.b16 %v1718, %v1702
        %v1767 = vpack.c.b16 %v1719, %v1703
        %v1768 = vpack.c.b16 %v1720, %v1704
        %v1769 = vpack.c.b16 %v1721, %v1705
        %v1770 = vpack.c.b16 %v1722, %v1706
        %v1771 = vpack.c.b16 %v1723, %v1707
        %v1772 = vpack.c.b16 %v1740, %v1724
        %v1773 = vpack.c.b16 %v1741, %v1725
        %v1774 = vpack.c.b16 %v1742, %v1726
        %v1775 = vpack.c.b16 %v1743, %v1727
        %v1776 = vpack.c.b16 %v1744, %v1728
        %v1777 = vpack.c.b16 %v1745, %v1729
        %v1778 = vpack.c.b16 %v1746, %v1730
        %v1779 = vpack.c.b16 %v1747, %v1731
        %v1780 = vpack.c.b16 %v1748, %v1732
        %v1781 = vpack.c.b16 %v1749, %v1733
        %v1782 = vpack.c.b16 %v1750, %v1734
        %v1783 = vpack.c.b16 %v1751, %v1735
        %v1784 = vpack.c.b16 %v1752, %v1736
        %v1785 = vpack.c.b16 %v1753, %v1737
        %v1786 = vpack.c.b16 %v1754, %v1738
        %v1787 = vpack.c.b16 %v1755, %v1739
        %v2076 = vunpack.c.l.b16 %v1404
        %v2077 = vunpack.c.l.b16 %v1405
        %v2078 = vunpack.c.l.b16 %v1406
        %v2079 = vunpack.c.l.b16 %v1407
        %v2080 = vunpack.c.l.b16 %v1408
        %v2081 = vunpack.c.l.b16 %v1409
        %v2082 = vunpack.c.l.b16 %v1410
        %v2083 = vunpack.c.l.b16 %v1411
        %v2084 = vunpack.c.l.b16 %v1412
        %v2085 = vunpack.c.l.b16 %v1413
        %v2086 = vunpack.c.l.b16 %v1414
        %v2087 = vunpack.c.l.b16 %v1415
        %v2088 = vunpack.c.l.b16 %v1416
        %v2089 = vunpack.c.l.b16 %v1417
        %v2090 = vunpack.c.l.b16 %v1418
        %v2091 = vunpack.c.l.b16 %v1419
        %v2092 = vunpack.c.l.b16 %v1420
        %v2093 = vunpack.c.l.b16 %v1421
        %v2094 = vunpack.c.l.b16 %v1422
        %v2095 = vunpack.c.l.b16 %v1423
        %v2096 = vunpack.c.l.b16 %v1424
        %v2097 = vunpack.c.l.b16 %v1425
        %v2098 = vunpack.c.l.b16 %v1426
        %v2099 = vunpack.c.l.b16 %v1427
        %v2100 = vunpack.c.l.b16 %v1428
        %v2101 = vunpack.c.l.b16 %v1429
        %v2102 = vunpack.c.l.b16 %v1430
        %v2103 = vunpack.c.l.b16 %v1431
        %v2104 = vunpack.c.l.b16 %v1432
        %v2105 = vunpack.c.l.b16 %v1433
        %v2106 = vunpack.c.l.b16 %v1434
        %v2107 = vunpack.c.l.b16 %v1435
        %v2108 = vunpack.c.l.b16 %v1436
        %v2109 = vunpack.c.l.b16 %v1437
        %v2110 = vunpack.c.l.b16 %v1438
        %v2111 = vunpack.c.l.b16 %v1439
        %v2112 = vunpack.c.l.b16 %v1440
        %v2113 = vunpack.c.l.b16 %v1441
        %v2114 = vunpack.c.l.b16 %v1442
        %v2115 = vunpack.c.l.b16 %v1443
        %v2116 = vunpack.c.l.b16 %v1444
        %v2117 = vunpack.c.l.b16 %v1445
        %v2118 = vunpack.c.l.b16 %v1446
        %v2119 = vunpack.c.l.b16 %v1447
        %v2120 = vunpack.c.l.b16 %v1448
        %v2121 = vunpack.c.l.b16 %v1449
        %v2122 = vunpack.c.l.b16 %v1450
        %v2123 = vunpack.c.l.b16 %v1451
        %v2124 = vunpack.c.l.b16 %v1452
        %v2125 = vunpack.c.l.b16 %v1453
        %v2126 = vunpack.c.l.b16 %v1454
        %v2127 = vunpack.c.l.b16 %v1455
        %v2128 = vunpack.c.l.b16 %v1456
        %v2129 = vunpack.c.l.b16 %v1457
        %v2130 = vunpack.c.l.b16 %v1458
        %v2131 = vunpack.c.l.b16 %v1459
        %v2132 = vunpack.c.l.b16 %v1460
        %v2133 = vunpack.c.l.b16 %v1461
        %v2134 = vunpack.c.l.b16 %v1462
        %v2135 = vunpack.c.l.b16 %v1463
        %v2136 = vunpack.c.l.b16 %v1464
        %v2137 = vunpack.c.l.b16 %v1465
        %v2138 = vunpack.c.l.b16 %v1466
        %v2139 = vunpack.c.l.b16 %v1467
        %v2140 = vunpack.c.l.b16 %v1468
        %v2141 = vunpack.c.l.b16 %v1469
        %v2142 = vunpack.c.l.b16 %v1470
        %v2143 = vunpack.c.l.b16 %v1471
        %v2144 = vunpack.c.l.b16 %v1472
        %v2145 = vunpack.c.l.b16 %v1473
        %v2146 = vunpack.c.l.b16 %v1474
        %v2147 = vunpack.c.l.b16 %v1475
        %v2148 = vunpack.c.l.b16 %v1476
        %v2149 = vunpack.c.l.b16 %v1477
        %v2150 = vunpack.c.l.b16 %v1478
        %v2151 = vunpack.c.l.b16 %v1479
        %v2152 = vunpack.c.l.b16 %v1480
        %v2153 = vunpack.c.l.b16 %v1481
        %v2154 = vunpack.c.l.b16 %v1482
        %v2155 = vunpack.c.l.b16 %v1483
        %v2156 = vunpack.c.l.b16 %v1484
        %v2157 = vunpack.c.l.b16 %v1485
        %v2158 = vunpack.c.l.b16 %v1486
        %v2159 = vunpack.c.l.b16 %v1487
        %v2160 = vunpack.c.l.b16 %v1488
        %v2161 = vunpack.c.l.b16 %v1489
        %v2162 = vunpack.c.l.b16 %v1490
        %v2163 = vunpack.c.l.b16 %v1491
        %v2164 = vunpack.c.l.b16 %v1492
        %v2165 = vunpack.c.l.b16 %v1493
        %v2166 = vunpack.c.l.b16 %v1494
        %v2167 = vunpack.c.l.b16 %v1495
        %v2168 = vunpack.c.l.b16 %v1496
        %v2169 = vunpack.c.l.b16 %v1497
        %v2170 = vunpack.c.l.b16 %v1498
        %v2171 = vunpack.c.l.b16 %v1499
        %v2172 = vunpack.c.l.b16 %v1500
        %v2173 = vunpack.c.l.b16 %v1501
        %v2174 = vunpack.c.l.b16 %v1502
        %v2175 = vunpack.c.l.b16 %v1503
        %v2176 = vunpack.c.l.b16 %v1504
        %v2177 = vunpack.c.l.b16 %v1505
        %v2178 = vunpack.c.l.b16 %v1506
        %v2179 = vunpack.c.l.b16 %v1507
        %v2180 = vunpack.c.l.b16 %v1508
        %v2181 = vunpack.c.l.b16 %v1509
        %v2182 = vunpack.c.l.b16 %v1510
        %v2183 = vunpack.c.l.b16 %v1511
        %v2184 = vunpack.c.l.b16 %v1512
        %v2185 = vunpack.c.l.b16 %v1513
        %v2186 = vunpack.c.l.b16 %v1514
        %v2187 = vunpack.c.l.b16 %v1515
        %v2188 = vunpack.c.l.b16 %v1516
        %v2189 = vunpack.c.l.b16 %v1517
        %v2190 = vunpack.c.l.b16 %v1518
        %v2191 = vunpack.c.l.b16 %v1519
        %v2192 = vunpack.c.l.b16 %v1520
        %v2193 = vunpack.c.l.b16 %v1521
        %v2194 = vunpack.c.l.b16 %v1522
        %v2195 = vunpack.c.l.b16 %v1523
        %v2196 = vunpack.c.l.b16 %v1524
        %v2197 = vunpack.c.l.b16 %v1525
        %v2198 = vunpack.c.l.b16 %v1526
        %v2199 = vunpack.c.l.b16 %v1527
        %v2200 = vunpack.c.l.b16 %v1528
        %v2201 = vunpack.c.l.b16 %v1529
        %v2202 = vunpack.c.l.b16 %v1530
        %v2203 = vunpack.c.l.b16 %v1531
        %v2204 = vunpack.c.l.b16 %v1532
        %v2205 = vunpack.c.l.b16 %v1533
        %v2206 = vunpack.c.l.b16 %v1534
        %v2207 = vunpack.c.l.b16 %v1535
        %v2208 = vunpack.c.l.b16 %v1536
        %v2209 = vunpack.c.l.b16 %v1537
        %v2210 = vunpack.c.l.b16 %v1538
        %v2211 = vunpack.c.l.b16 %v1539
        %v2212 = vunpack.c.l.b16 %v1540
        %v2213 = vunpack.c.l.b16 %v1541
        %v2214 = vunpack.c.l.b16 %v1542
        %v2215 = vunpack.c.l.b16 %v1543
        %v2216 = vunpack.c.l.b16 %v1544
        %v2217 = vunpack.c.l.b16 %v1545
        %v2218 = vunpack.c.l.b16 %v1546
        %v2219 = vunpack.c.l.b16 %v1547
        %v2220 = vunpack.c.l.b16 %v1548
        %v2221 = vunpack.c.l.b16 %v1549
        %v2222 = vunpack.c.l.b16 %v1550
        %v2223 = vunpack.c.l.b16 %v1551
        %v2224 = vunpack.c.l.b16 %v1552
        %v2225 = vunpack.c.l.b16 %v1553
        %v2226 = vunpack.c.l.b16 %v1554
        %v2227 = vunpack.c.l.b16 %v1555
        %v2228 = vunpack.c.l.b16 %v1556
        %v2229 = vunpack.c.l.b16 %v1557
        %v2230 = vunpack.c.l.b16 %v1558
        %v2231 = vunpack.c.l.b16 %v1559
        %v2232 = vunpack.c.l.b16 %v1560
        %v2233 = vunpack.c.l.b16 %v1561
        %v2234 = vunpack.c.l.b16 %v1562
        %v2235 = vunpack.c.l.b16 %v1563
        %v2236 = vunpack.c.l.b16 %v1564
        %v2237 = vunpack.c.l.b16 %v1565
        %v2238 = vunpack.c.l.b16 %v1566
        %v2239 = vunpack.c.l.b16 %v1567
        %v2240 = vunpack.c.l.b16 %v1568
        %v2241 = vunpack.c.l.b16 %v1569
        %v2242 = vunpack.c.l.b16 %v1570
        %v2243 = vunpack.c.l.b16 %v1571
        %v2244 = vunpack.c.l.b16 %v1572
        %v2245 = vunpack.c.l.b16 %v1573
        %v2246 = vunpack.c.l.b16 %v1574
        %v2247 = vunpack.c.l.b16 %v1575
        %v2248 = vunpack.c.l.b16 %v1576
        %v2249 = vunpack.c.l.b16 %v1577
        %v2250 = vunpack.c.l.b16 %v1578
        %v2251 = vunpack.c.l.b16 %v1579
        %v2252 = vunpack.c.l.b16 %v1580
        %v2253 = vunpack.c.l.b16 %v1581
        %v2254 = vunpack.c.l.b16 %v1582
        %v2255 = vunpack.c.l.b16 %v1583
        %v2256 = vunpack.c.l.b16 %v1584
        %v2257 = vunpack.c.l.b16 %v1585
        %v2258 = vunpack.c.l.b16 %v1586
        %v2259 = vunpack.c.l.b16 %v1587
        %v2260 = vunpack.c.l.b16 %v1588
        %v2261 = vunpack.c.l.b16 %v1589
        %v2262 = vunpack.c.l.b16 %v1590
        %v2263 = vunpack.c.l.b16 %v1591
        %v2264 = vunpack.c.l.b16 %v1592
        %v2265 = vunpack.c.l.b16 %v1593
        %v2266 = vunpack.c.l.b16 %v1594
        %v2267 = vunpack.c.l.b16 %v1595
        %v2268 = vunpack.c.l.b16 %v1596
        %v2269 = vunpack.c.l.b16 %v1597
        %v2270 = vunpack.c.l.b16 %v1598
        %v2271 = vunpack.c.l.b16 %v1599
        %v2272 = vunpack.c.l.b16 %v1600
        %v2273 = vunpack.c.l.b16 %v1601
        %v2274 = vunpack.c.l.b16 %v1602
        %v2275 = vunpack.c.l.b16 %v1603
        %v2276 = vunpack.c.l.b16 %v1604
        %v2277 = vunpack.c.l.b16 %v1605
        %v2278 = vunpack.c.l.b16 %v1606
        %v2279 = vunpack.c.l.b16 %v1607
        %v2280 = vunpack.c.l.b16 %v1608
        %v2281 = vunpack.c.l.b16 %v1609
        %v2282 = vunpack.c.l.b16 %v1610
        %v2283 = vunpack.c.l.b16 %v1611
        %v2284 = vunpack.c.l.b16 %v1612
        %v2285 = vunpack.c.l.b16 %v1613
        %v2286 = vunpack.c.l.b16 %v1614
        %v2287 = vunpack.c.l.b16 %v1615
        %v2288 = vunpack.c.l.b16 %v1616
        %v2289 = vunpack.c.l.b16 %v1617
        %v2290 = vunpack.c.l.b16 %v1618
        %v2291 = vunpack.c.l.b16 %v1619
        %v2292 = vunpack.c.l.b16 %v1620
        %v2293 = vunpack.c.l.b16 %v1621
        %v2294 = vunpack.c.l.b16 %v1622
        %v2295 = vunpack.c.l.b16 %v1623
        %v2296 = vunpack.c.l.b16 %v1624
        %v2297 = vunpack.c.l.b16 %v1625
        %v2298 = vunpack.c.l.b16 %v1626
        %v2299 = vunpack.c.l.b16 %v1627
        %v2300 = vunpack.c.l.b16 %v1628
        %v2301 = vunpack.c.l.b16 %v1629
        %v2302 = vunpack.c.l.b16 %v1630
        %v2303 = vunpack.c.l.b16 %v1631
        %v2304 = vunpack.c.l.b16 %v1632
        %v2305 = vunpack.c.l.b16 %v1633
        %v2306 = vunpack.c.l.b16 %v1634
        %v2307 = vunpack.c.l.b16 %v1635
        %v2308 = vunpack.c.l.b16 %v1636
        %v2309 = vunpack.c.l.b16 %v1637
        %v2310 = vunpack.c.l.b16 %v1638
        %v2311 = vunpack.c.l.b16 %v1639
        %v2312 = vunpack.c.l.b16 %v1640
        %v2313 = vunpack.c.l.b16 %v1641
        %v2314 = vunpack.c.l.b16 %v1642
        %v2315 = vunpack.c.l.b16 %v1643
        %v2316 = vunpack.c.l.b16 %v1644
        %v2317 = vunpack.c.l.b16 %v1645
        %v2318 = vunpack.c.l.b16 %v1646
        %v2319 = vunpack.c.l.b16 %v1647
        %v2320 = vunpack.c.l.b16 %v1648
        %v2321 = vunpack.c.l.b16 %v1649
        %v2322 = vunpack.c.l.b16 %v1650
        %v2323 = vunpack.c.l.b16 %v1651
        %v2324 = vunpack.c.l.b16 %v1652
        %v2325 = vunpack.c.l.b16 %v1653
        %v2326 = vunpack.c.l.b16 %v1654
        %v2327 = vunpack.c.l.b16 %v1655
        %v2328 = vunpack.c.l.b16 %v1656
        %v2329 = vunpack.c.l.b16 %v1657
        %v2330 = vunpack.c.l.b16 %v1658
        %v2331 = vunpack.c.l.b16 %v1659
        %v2332 = vpack.c.b16 %v2077, %v2076
        %v2333 = vpack.c.b16 %v2079, %v2078
        %v2334 = vpack.c.b16 %v2081, %v2080
        %v2335 = vpack.c.b16 %v2083, %v2082
        %v2336 = vpack.c.b16 %v2085, %v2084
        %v2337 = vpack.c.b16 %v2087, %v2086
        %v2338 = vpack.c.b16 %v2089, %v2088
        %v2339 = vpack.c.b16 %v2091, %v2090
        %v2340 = vpack.c.b16 %v2093, %v2092
        %v2341 = vpack.c.b16 %v2095, %v2094
        %v2342 = vpack.c.b16 %v2097, %v2096
        %v2343 = vpack.c.b16 %v2099, %v2098
        %v2344 = vpack.c.b16 %v2101, %v2100
        %v2345 = vpack.c.b16 %v2103, %v2102
        %v2346 = vpack.c.b16 %v2105, %v2104
        %v2347 = vpack.c.b16 %v2107, %v2106
        %v2348 = vpack.c.b16 %v2109, %v2108
        %v2349 = vpack.c.b16 %v2111, %v2110
        %v2350 = vpack.c.b16 %v2113, %v2112
        %v2351 = vpack.c.b16 %v2115, %v2114
        %v2352 = vpack.c.b16 %v2117, %v2116
        %v2353 = vpack.c.b16 %v2119, %v2118
        %v2354 = vpack.c.b16 %v2121, %v2120
        %v2355 = vpack.c.b16 %v2123, %v2122
        %v2356 = vpack.c.b16 %v2125, %v2124
        %v2357 = vpack.c.b16 %v2127, %v2126
        %v2358 = vpack.c.b16 %v2129, %v2128
        %v2359 = vpack.c.b16 %v2131, %v2130
        %v2360 = vpack.c.b16 %v2133, %v2132
        %v2361 = vpack.c.b16 %v2135, %v2134
        %v2362 = vpack.c.b16 %v2137, %v2136
        %v2363 = vpack.c.b16 %v2139, %v2138
        %v2364 = vpack.c.b16 %v2141, %v2140
        %v2365 = vpack.c.b16 %v2143, %v2142
        %v2366 = vpack.c.b16 %v2145, %v2144
        %v2367 = vpack.c.b16 %v2147, %v2146
        %v2368 = vpack.c.b16 %v2149, %v2148
        %v2369 = vpack.c.b16 %v2151, %v2150
        %v2370 = vpack.c.b16 %v2153, %v2152
        %v2371 = vpack.c.b16 %v2155, %v2154
        %v2372 = vpack.c.b16 %v2157, %v2156
        %v2373 = vpack.c.b16 %v2159, %v2158
        %v2374 = vpack.c.b16 %v2161, %v2160
        %v2375 = vpack.c.b16 %v2163, %v2162
        %v2376 = vpack.c.b16 %v2165, %v2164
        %v2377 = vpack.c.b16 %v2167, %v2166
        %v2378 = vpack.c.b16 %v2169, %v2168
        %v2379 = vpack.c.b16 %v2171, %v2170
        %v2380 = vpack.c.b16 %v2173, %v2172
        %v2381 = vpack.c.b16 %v2175, %v2174
        %v2382 = vpack.c.b16 %v2177, %v2176
        %v2383 = vpack.c.b16 %v2179, %v2178
        %v2384 = vpack.c.b16 %v2181, %v2180
        %v2385 = vpack.c.b16 %v2183, %v2182
        %v2386 = vpack.c.b16 %v2185, %v2184
        %v2387 = vpack.c.b16 %v2187, %v2186
        %v2388 = vpack.c.b16 %v2189, %v2188
        %v2389 = vpack.c.b16 %v2191, %v2190
        %v2390 = vpack.c.b16 %v2193, %v2192
        %v2391 = vpack.c.b16 %v2195, %v2194
        %v2392 = vpack.c.b16 %v2197, %v2196
        %v2393 = vpack.c.b16 %v2199, %v2198
        %v2394 = vpack.c.b16 %v2201, %v2200
        %v2395 = vpack.c.b16 %v2203, %v2202
        %v2396 = vpack.c.b16 %v2205, %v2204
        %v2397 = vpack.c.b16 %v2207, %v2206
        %v2398 = vpack.c.b16 %v2209, %v2208
        %v2399 = vpack.c.b16 %v2211, %v2210
        %v2400 = vpack.c.b16 %v2213, %v2212
        %v2401 = vpack.c.b16 %v2215, %v2214
        %v2402 = vpack.c.b16 %v2217, %v2216
        %v2403 = vpack.c.b16 %v2219, %v2218
        %v2404 = vpack.c.b16 %v2221, %v2220
        %v2405 = vpack.c.b16 %v2223, %v2222
        %v2406 = vpack.c.b16 %v2225, %v2224
        %v2407 = vpack.c.b16 %v2227, %v2226
        %v2408 = vpack.c.b16 %v2229, %v2228
        %v2409 = vpack.c.b16 %v2231, %v2230
        %v2410 = vpack.c.b16 %v2233, %v2232
        %v2411 = vpack.c.b16 %v2235, %v2234
        %v2412 = vpack.c.b16 %v2237, %v2236
        %v2413 = vpack.c.b16 %v2239, %v2238
        %v2414 = vpack.c.b16 %v2241, %v2240
        %v2415 = vpack.c.b16 %v2243, %v2242
        %v2416 = vpack.c.b16 %v2245, %v2244
        %v2417 = vpack.c.b16 %v2247, %v2246
        %v2418 = vpack.c.b16 %v2249, %v2248
        %v2419 = vpack.c.b16 %v2251, %v2250
        %v2420 = vpack.c.b16 %v2253, %v2252
        %v2421 = vpack.c.b16 %v2255, %v2254
        %v2422 = vpack.c.b16 %v2257, %v2256
        %v2423 = vpack.c.b16 %v2259, %v2258
        %v2424 = vpack.c.b16 %v2261, %v2260
        %v2425 = vpack.c.b16 %v2263, %v2262
        %v2426 = vpack.c.b16 %v2265, %v2264
        %v2427 = vpack.c.b16 %v2267, %v2266
        %v2428 = vpack.c.b16 %v2269, %v2268
        %v2429 = vpack.c.b16 %v2271, %v2270
        %v2430 = vpack.c.b16 %v2273, %v2272
        %v2431 = vpack.c.b16 %v2275, %v2274
        %v2432 = vpack.c.b16 %v2277, %v2276
        %v2433 = vpack.c.b16 %v2279, %v2278
        %v2434 = vpack.c.b16 %v2281, %v2280
        %v2435 = vpack.c.b16 %v2283, %v2282
        %v2436 = vpack.c.b16 %v2285, %v2284
        %v2437 = vpack.c.b16 %v2287, %v2286
        %v2438 = vpack.c.b16 %v2289, %v2288
        %v2439 = vpack.c.b16 %v2291, %v2290
        %v2440 = vpack.c.b16 %v2293, %v2292
        %v2441 = vpack.c.b16 %v2295, %v2294
        %v2442 = vpack.c.b16 %v2297, %v2296
        %v2443 = vpack.c.b16 %v2299, %v2298
        %v2444 = vpack.c.b16 %v2301, %v2300
        %v2445 = vpack.c.b16 %v2303, %v2302
        %v2446 = vpack.c.b16 %v2305, %v2304
        %v2447 = vpack.c.b16 %v2307, %v2306
        %v2448 = vpack.c.b16 %v2309, %v2308
        %v2449 = vpack.c.b16 %v2311, %v2310
        %v2450 = vpack.c.b16 %v2313, %v2312
        %v2451 = vpack.c.b16 %v2315, %v2314
        %v2452 = vpack.c.b16 %v2317, %v2316
        %v2453 = vpack.c.b16 %v2319, %v2318
        %v2454 = vpack.c.b16 %v2321, %v2320
        %v2455 = vpack.c.b16 %v2323, %v2322
        %v2456 = vpack.c.b16 %v2325, %v2324
        %v2457 = vpack.c.b16 %v2327, %v2326
        %v2458 = vpack.c.b16 %v2329, %v2328
        %v2459 = vpack.c.b16 %v2331, %v2330
        %2588 = vmatprep.subr.bf16.mxu0 0
        %2589 = vmatpush1.bf16.msra.mxu0 %v2332
        %2590 = vmatprep.subr.bf16.mxu0 0
        %2591 = vmatpush1.bf16.msra.mxu0 %v2333
        %2592 = vmatprep.subr.bf16.mxu0 0
        %2593 = vmatpush1.bf16.msra.mxu0 %v2334
        %2594 = vmatprep.subr.bf16.mxu0 0
        %2595 = vmatpush1.bf16.msra.mxu0 %v2335
        %2596 = vmatprep.subr.bf16.mxu0 0
        %2597 = vmatpush1.bf16.msra.mxu0 %v2336
        %2598 = vmatprep.subr.bf16.mxu0 0
        %2599 = vmatpush1.bf16.msra.mxu0 %v2337
        %2600 = vmatprep.subr.bf16.mxu0 0
        %2601 = vmatpush1.bf16.msra.mxu0 %v2338
        %2602 = vmatprep.subr.bf16.mxu0 0
        %2603 = vmatpush1.bf16.msra.mxu0 %v2339
        %2604 = vmatprep.subr.bf16.mxu0 0
        %2605 = vmatpush1.bf16.msra.mxu0 %v2340
        %2606 = vmatprep.subr.bf16.mxu0 0
        %2607 = vmatpush1.bf16.msra.mxu0 %v2341
        %2608 = vmatprep.subr.bf16.mxu0 0
        %2609 = vmatpush1.bf16.msra.mxu0 %v2342
        %2610 = vmatprep.subr.bf16.mxu0 0
        %2611 = vmatpush1.bf16.msra.mxu0 %v2343
        %2612 = vmatprep.subr.bf16.mxu0 0
        %2613 = vmatpush1.bf16.msra.mxu0 %v2344
        %2614 = vmatprep.subr.bf16.mxu0 0
        %2615 = vmatpush1.bf16.msra.mxu0 %v2345
        %2616 = vmatprep.subr.bf16.mxu0 0
        %2617 = vmatpush1.bf16.msra.mxu0 %v2346
        %2618 = vmatprep.subr.bf16.mxu0 0
        %2619 = vmatpush1.bf16.msra.mxu0 %v2347
        %2620 = vmatprep.mubr.bf16.mxu0 %v1757
        %2621 = vmatmul.mubr.bf16.gmra.mrb[0].mxu0 %v1756
        %v2622 = vpop.f32.mrb[0].mxu0
        %v2623 = vadd.f32 0.0, %v2622
        %v2624 = vpop.f32.mrb[0].mxu0
        %v2625 = vpop.f32.mrb[0].mxu0
        %v2626 = vadd.f32 0.0, %v2625
        %v2627 = vpop.f32.mrb[0].mxu0
        %2628 = vmatprep.mubr.bf16.mxu0 %v1773
        %2629 = vmatmul.mubr.bf16.gmra.mrb[0].mxu0 %v1772
        %v2630 = vpop.f32.mrb[0].mxu0
        %v2631 = vadd.f32 0.0, %v2630
        %v2632 = vpop.f32.mrb[0].mxu0
        %v2633 = vpop.f32.mrb[0].mxu0
        %v2634 = vadd.f32 0.0, %v2633
        %v2635 = vpop.f32.mrb[0].mxu0
        %2636 = vdwg.mxu0
        %2637 = vmatprep.subr.bf16.mxu0 0
        %2638 = vmatpush1.bf16.msra.mxu0 %v2348
        %2639 = vmatprep.subr.bf16.mxu0 0
        %2640 = vmatpush1.bf16.msra.mxu0 %v2349
        %2641 = vmatprep.subr.bf16.mxu0 0
        %2642 = vmatpush1.bf16.msra.mxu0 %v2350
        %2643 = vmatprep.subr.bf16.mxu0 0
        %2644 = vmatpush1.bf16.msra.mxu0 %v2351
        %2645 = vmatprep.subr.bf16.mxu0 0
        %2646 = vmatpush1.bf16.msra.mxu0 %v2352
        %2647 = vmatprep.subr.bf16.mxu0 0
        %2648 = vmatpush1.bf16.msra.mxu0 %v2353
        %2649 = vmatprep.subr.bf16.mxu0 0
        %2650 = vmatpush1.bf16.msra.mxu0 %v2354
        %2651 = vmatprep.subr.bf16.mxu0 0
        %2652 = vmatpush1.bf16.msra.mxu0 %v2355
        %2653 = vmatprep.subr.bf16.mxu0 0
        %2654 = vmatpush1.bf16.msra.mxu0 %v2356
        %2655 = vmatprep.subr.bf16.mxu0 0
        %2656 = vmatpush1.bf16.msra.mxu0 %v2357
        %2657 = vmatprep.subr.bf16.mxu0 0
        %2658 = vmatpush1.bf16.msra.mxu0 %v2358
        %2659 = vmatprep.subr.bf16.mxu0 0
        %2660 = vmatpush1.bf16.msra.mxu0 %v2359
        %2661 = vmatprep.subr.bf16.mxu0 0
        %2662 = vmatpush1.bf16.msra.mxu0 %v2360
        %2663 = vmatprep.subr.bf16.mxu0 0
        %2664 = vmatpush1.bf16.msra.mxu0 %v2361
        %2665 = vmatprep.subr.bf16.mxu0 0
        %2666 = vmatpush1.bf16.msra.mxu0 %v2362
        %2667 = vmatprep.subr.bf16.mxu0 0
        %2668 = vmatpush1.bf16.msra.mxu0 %v2363
        %2669 = vmatprep.mubr.bf16.mxu0 %v1759
        %2670 = vmatmul.mubr.bf16.gmra.mrb[0].mxu0 %v1758
        %v2671 = vpop.f32.mrb[0].mxu0
        %v2672 = vadd.f32 %v2623, %v2671
        %v2673 = vpop.f32.mrb[0].mxu0
        %v2674 = vpop.f32.mrb[0].mxu0
        %v2675 = vadd.f32 %v2626, %v2674
        %v2676 = vpop.f32.mrb[0].mxu0
        %2677 = vmatprep.mubr.bf16.mxu0 %v1775
        %2678 = vmatmul.mubr.bf16.gmra.mrb[0].mxu0 %v1774
        %v2679 = vpop.f32.mrb[0].mxu0
        %v2680 = vadd.f32 %v2631, %v2679
        %v2681 = vpop.f32.mrb[0].mxu0
        %v2682 = vpop.f32.mrb[0].mxu0
        %v2683 = vadd.f32 %v2634, %v2682
        %v2684 = vpop.f32.mrb[0].mxu0
        %2685 = vdwg.mxu0
        %2686 = vmatprep.subr.bf16.mxu0 0
        %2687 = vmatpush1.bf16.msra.mxu0 %v2364
        %2688 = vmatprep.subr.bf16.mxu0 0
        %2689 = vmatpush1.bf16.msra.mxu0 %v2365
        %2690 = vmatprep.subr.bf16.mxu0 0
        %2691 = vmatpush1.bf16.msra.mxu0 %v2366
        %2692 = vmatprep.subr.bf16.mxu0 0
        %2693 = vmatpush1.bf16.msra.mxu0 %v2367
        %2694 = vmatprep.subr.bf16.mxu0 0
        %2695 = vmatpush1.bf16.msra.mxu0 %v2368
        %2696 = vmatprep.subr.bf16.mxu0 0
        %2697 = vmatpush1.bf16.msra.mxu0 %v2369
        %2698 = vmatprep.subr.bf16.mxu0 0
        %2699 = vmatpush1.bf16.msra.mxu0 %v2370
        %2700 = vmatprep.subr.bf16.mxu0 0
        %2701 = vmatpush1.bf16.msra.mxu0 %v2371
        %2702 = vmatprep.subr.bf16.mxu0 0
        %2703 = vmatpush1.bf16.msra.mxu0 %v2372
        %2704 = vmatprep.subr.bf16.mxu0 0
        %2705 = vmatpush1.bf16.msra.mxu0 %v2373
        %2706 = vmatprep.subr.bf16.mxu0 0
        %2707 = vmatpush1.bf16.msra.mxu0 %v2374
        %2708 = vmatprep.subr.bf16.mxu0 0
        %2709 = vmatpush1.bf16.msra.mxu0 %v2375
        %2710 = vmatprep.subr.bf16.mxu0 0
        %2711 = vmatpush1.bf16.msra.mxu0 %v2376
        %2712 = vmatprep.subr.bf16.mxu0 0
        %2713 = vmatpush1.bf16.msra.mxu0 %v2377
        %2714 = vmatprep.subr.bf16.mxu0 0
        %2715 = vmatpush1.bf16.msra.mxu0 %v2378
        %2716 = vmatprep.subr.bf16.mxu0 0
        %2717 = vmatpush1.bf16.msra.mxu0 %v2379
        %2718 = vmatprep.mubr.bf16.mxu0 %v1761
        %2719 = vmatmul.mubr.bf16.gmra.mrb[0].mxu0 %v1760
        %v2720 = vpop.f32.mrb[0].mxu0
        %v2721 = vadd.f32 %v2672, %v2720
        %v2722 = vpop.f32.mrb[0].mxu0
        %v2723 = vpop.f32.mrb[0].mxu0
        %v2724 = vadd.f32 %v2675, %v2723
        %v2725 = vpop.f32.mrb[0].mxu0
        %2726 = vmatprep.mubr.bf16.mxu0 %v1777
        %2727 = vmatmul.mubr.bf16.gmra.mrb[0].mxu0 %v1776
        %v2728 = vpop.f32.mrb[0].mxu0
        %v2729 = vadd.f32 %v2680, %v2728
        %v2730 = vpop.f32.mrb[0].mxu0
        %v2731 = vpop.f32.mrb[0].mxu0
        %v2732 = vadd.f32 %v2683, %v2731
        %v2733 = vpop.f32.mrb[0].mxu0
        %2734 = vdwg.mxu0
        %2735 = vmatprep.subr.bf16.mxu0 0
        %2736 = vmatpush1.bf16.msra.mxu0 %v2380
        %2737 = vmatprep.subr.bf16.mxu0 0
        %2738 = vmatpush1.bf16.msra.mxu0 %v2381
        %2739 = vmatprep.subr.bf16.mxu0 0
        %2740 = vmatpush1.bf16.msra.mxu0 %v2382
        %2741 = vmatprep.subr.bf16.mxu0 0
        %2742 = vmatpush1.bf16.msra.mxu0 %v2383
        %2743 = vmatprep.subr.bf16.mxu0 0
        %2744 = vmatpush1.bf16.msra.mxu0 %v2384
        %2745 = vmatprep.subr.bf16.mxu0 0
        %2746 = vmatpush1.bf16.msra.mxu0 %v2385
        %2747 = vmatprep.subr.bf16.mxu0 0
        %2748 = vmatpush1.bf16.msra.mxu0 %v2386
        %2749 = vmatprep.subr.bf16.mxu0 0
        %2750 = vmatpush1.bf16.msra.mxu0 %v2387
        %2751 = vmatprep.subr.bf16.mxu0 0
        %2752 = vmatpush1.bf16.msra.mxu0 %v2388
        %2753 = vmatprep.subr.bf16.mxu0 0
        %2754 = vmatpush1.bf16.msra.mxu0 %v2389
        %2755 = vmatprep.subr.bf16.mxu0 0
        %2756 = vmatpush1.bf16.msra.mxu0 %v2390
        %2757 = vmatprep.subr.bf16.mxu0 0
        %2758 = vmatpush1.bf16.msra.mxu0 %v2391
        %2759 = vmatprep.subr.bf16.mxu0 0
        %2760 = vmatpush1.bf16.msra.mxu0 %v2392
        %2761 = vmatprep.subr.bf16.mxu0 0
        %2762 = vmatpush1.bf16.msra.mxu0 %v2393
        %2763 = vmatprep.subr.bf16.mxu0 0
        %2764 = vmatpush1.bf16.msra.mxu0 %v2394
        %2765 = vmatprep.subr.bf16.mxu0 0
        %2766 = vmatpush1.bf16.msra.mxu0 %v2395
        %2767 = vmatprep.mubr.bf16.mxu0 %v1763
        %2768 = vmatmul.mubr.bf16.gmra.mrb[0].mxu0 %v1762
        %v2769 = vpop.f32.mrb[0].mxu0
        %v2770 = vadd.f32 %v2721, %v2769
        %v2771 = vpop.f32.mrb[0].mxu0
        %v2772 = vpop.f32.mrb[0].mxu0
        %v2773 = vadd.f32 %v2724, %v2772
        %v2774 = vpop.f32.mrb[0].mxu0
        %2775 = vmatprep.mubr.bf16.mxu0 %v1779
        %2776 = vmatmul.mubr.bf16.gmra.mrb[0].mxu0 %v1778
        %v2777 = vpop.f32.mrb[0].mxu0
        %v2778 = vadd.f32 %v2729, %v2777
        %v2779 = vpop.f32.mrb[0].mxu0
        %v2780 = vpop.f32.mrb[0].mxu0
        %v2781 = vadd.f32 %v2732, %v2780
        %v2782 = vpop.f32.mrb[0].mxu0
        %2783 = vdwg.mxu0
        %2784 = vmatprep.subr.bf16.mxu0 0
        %2785 = vmatpush1.bf16.msra.mxu0 %v2396
        %2786 = vmatprep.subr.bf16.mxu0 0
        %2787 = vmatpush1.bf16.msra.mxu0 %v2397
        %2788 = vmatprep.subr.bf16.mxu0 0
        %2789 = vmatpush1.bf16.msra.mxu0 %v2398
        %2790 = vmatprep.subr.bf16.mxu0 0
        %2791 = vmatpush1.bf16.msra.mxu0 %v2399
        %2792 = vmatprep.subr.bf16.mxu0 0
        %2793 = vmatpush1.bf16.msra.mxu0 %v2400
        %2794 = vmatprep.subr.bf16.mxu0 0
        %2795 = vmatpush1.bf16.msra.mxu0 %v2401
        %2796 = vmatprep.subr.bf16.mxu0 0
        %2797 = vmatpush1.bf16.msra.mxu0 %v2402
        %2798 = vmatprep.subr.bf16.mxu0 0
        %2799 = vmatpush1.bf16.msra.mxu0 %v2403
        %2800 = vmatprep.subr.bf16.mxu0 0
        %2801 = vmatpush1.bf16.msra.mxu0 %v2404
        %2802 = vmatprep.subr.bf16.mxu0 0
        %2803 = vmatpush1.bf16.msra.mxu0 %v2405
        %2804 = vmatprep.subr.bf16.mxu0 0
        %2805 = vmatpush1.bf16.msra.mxu0 %v2406
        %2806 = vmatprep.subr.bf16.mxu0 0
        %2807 = vmatpush1.bf16.msra.mxu0 %v2407
        %2808 = vmatprep.subr.bf16.mxu0 0
        %2809 = vmatpush1.bf16.msra.mxu0 %v2408
        %2810 = vmatprep.subr.bf16.mxu0 0
        %2811 = vmatpush1.bf16.msra.mxu0 %v2409
        %2812 = vmatprep.subr.bf16.mxu0 0
        %2813 = vmatpush1.bf16.msra.mxu0 %v2410
        %2814 = vmatprep.subr.bf16.mxu0 0
        %2815 = vmatpush1.bf16.msra.mxu0 %v2411
        %2816 = vmatprep.mubr.bf16.mxu0 %v1765
        %2817 = vmatmul.mubr.bf16.gmra.mrb[0].mxu0 %v1764
        %v2818 = vpop.f32.mrb[0].mxu0
        %v2819 = vadd.f32 %v2770, %v2818
        %v2820 = vpop.f32.mrb[0].mxu0
        %v2821 = vpop.f32.mrb[0].mxu0
        %v2822 = vadd.f32 %v2773, %v2821
        %v2823 = vpop.f32.mrb[0].mxu0
        %2824 = vmatprep.mubr.bf16.mxu0 %v1781
        %2825 = vmatmul.mubr.bf16.gmra.mrb[0].mxu0 %v1780
        %v2826 = vpop.f32.mrb[0].mxu0
        %v2827 = vadd.f32 %v2778, %v2826
        %v2828 = vpop.f32.mrb[0].mxu0
        %v2829 = vpop.f32.mrb[0].mxu0
        %v2830 = vadd.f32 %v2781, %v2829
        %v2831 = vpop.f32.mrb[0].mxu0
        %2832 = vdwg.mxu0
        %2833 = vmatprep.subr.bf16.mxu0 0
        %2834 = vmatpush1.bf16.msra.mxu0 %v2412
        %2835 = vmatprep.subr.bf16.mxu0 0
        %2836 = vmatpush1.bf16.msra.mxu0 %v2413
        %2837 = vmatprep.subr.bf16.mxu0 0
        %2838 = vmatpush1.bf16.msra.mxu0 %v2414
        %2839 = vmatprep.subr.bf16.mxu0 0
        %2840 = vmatpush1.bf16.msra.mxu0 %v2415
        %2841 = vmatprep.subr.bf16.mxu0 0
        %2842 = vmatpush1.bf16.msra.mxu0 %v2416
        %2843 = vmatprep.subr.bf16.mxu0 0
        %2844 = vmatpush1.bf16.msra.mxu0 %v2417
        %2845 = vmatprep.subr.bf16.mxu0 0
        %2846 = vmatpush1.bf16.msra.mxu0 %v2418
        %2847 = vmatprep.subr.bf16.mxu0 0
        %2848 = vmatpush1.bf16.msra.mxu0 %v2419
        %2849 = vmatprep.subr.bf16.mxu0 0
        %2850 = vmatpush1.bf16.msra.mxu0 %v2420
        %2851 = vmatprep.subr.bf16.mxu0 0
        %2852 = vmatpush1.bf16.msra.mxu0 %v2421
        %2853 = vmatprep.subr.bf16.mxu0 0
        %2854 = vmatpush1.bf16.msra.mxu0 %v2422
        %2855 = vmatprep.subr.bf16.mxu0 0
        %2856 = vmatpush1.bf16.msra.mxu0 %v2423
        %2857 = vmatprep.subr.bf16.mxu0 0
        %2858 = vmatpush1.bf16.msra.mxu0 %v2424
        %2859 = vmatprep.subr.bf16.mxu0 0
        %2860 = vmatpush1.bf16.msra.mxu0 %v2425
        %2861 = vmatprep.subr.bf16.mxu0 0
        %2862 = vmatpush1.bf16.msra.mxu0 %v2426
        %2863 = vmatprep.subr.bf16.mxu0 0
        %2864 = vmatpush1.bf16.msra.mxu0 %v2427
        %2865 = vmatprep.mubr.bf16.mxu0 %v1767
        %2866 = vmatmul.mubr.bf16.gmra.mrb[0].mxu0 %v1766
        %v2867 = vpop.f32.mrb[0].mxu0
        %v2868 = vadd.f32 %v2819, %v2867
        %v2869 = vpop.f32.mrb[0].mxu0
        %v2870 = vpop.f32.mrb[0].mxu0
        %v2871 = vadd.f32 %v2822, %v2870
        %v2872 = vpop.f32.mrb[0].mxu0
        %2873 = vmatprep.mubr.bf16.mxu0 %v1783
        %2874 = vmatmul.mubr.bf16.gmra.mrb[0].mxu0 %v1782
        %v2875 = vpop.f32.mrb[0].mxu0
        %v2876 = vadd.f32 %v2827, %v2875
        %v2877 = vpop.f32.mrb[0].mxu0
        %v2878 = vpop.f32.mrb[0].mxu0
        %v2879 = vadd.f32 %v2830, %v2878
        %v2880 = vpop.f32.mrb[0].mxu0
        %2881 = vdwg.mxu0
        %2882 = vmatprep.subr.bf16.mxu0 0
        %2883 = vmatpush1.bf16.msra.mxu0 %v2428
        %2884 = vmatprep.subr.bf16.mxu0 0
        %2885 = vmatpush1.bf16.msra.mxu0 %v2429
        %2886 = vmatprep.subr.bf16.mxu0 0
        %2887 = vmatpush1.bf16.msra.mxu0 %v2430
        %2888 = vmatprep.subr.bf16.mxu0 0
        %2889 = vmatpush1.bf16.msra.mxu0 %v2431
        %2890 = vmatprep.subr.bf16.mxu0 0
        %2891 = vmatpush1.bf16.msra.mxu0 %v2432
        %2892 = vmatprep.subr.bf16.mxu0 0
        %2893 = vmatpush1.bf16.msra.mxu0 %v2433
        %2894 = vmatprep.subr.bf16.mxu0 0
        %2895 = vmatpush1.bf16.msra.mxu0 %v2434
        %2896 = vmatprep.subr.bf16.mxu0 0
        %2897 = vmatpush1.bf16.msra.mxu0 %v2435
        %2898 = vmatprep.subr.bf16.mxu0 0
        %2899 = vmatpush1.bf16.msra.mxu0 %v2436
        %2900 = vmatprep.subr.bf16.mxu0 0
        %2901 = vmatpush1.bf16.msra.mxu0 %v2437
        %2902 = vmatprep.subr.bf16.mxu0 0
        %2903 = vmatpush1.bf16.msra.mxu0 %v2438
        %2904 = vmatprep.subr.bf16.mxu0 0
        %2905 = vmatpush1.bf16.msra.mxu0 %v2439
        %2906 = vmatprep.subr.bf16.mxu0 0
        %2907 = vmatpush1.bf16.msra.mxu0 %v2440
        %2908 = vmatprep.subr.bf16.mxu0 0
        %2909 = vmatpush1.bf16.msra.mxu0 %v2441
        %2910 = vmatprep.subr.bf16.mxu0 0
        %2911 = vmatpush1.bf16.msra.mxu0 %v2442
        %2912 = vmatprep.subr.bf16.mxu0 0
        %2913 = vmatpush1.bf16.msra.mxu0 %v2443
        %2914 = vmatprep.mubr.bf16.mxu0 %v1769
        %2915 = vmatmul.mubr.bf16.gmra.mrb[0].mxu0 %v1768
        %v2916 = vpop.f32.mrb[0].mxu0
        %v2917 = vadd.f32 %v2868, %v2916
        %v2918 = vpop.f32.mrb[0].mxu0
        %v2919 = vpop.f32.mrb[0].mxu0
        %v2920 = vadd.f32 %v2871, %v2919
        %v2921 = vpop.f32.mrb[0].mxu0
        %2922 = vmatprep.mubr.bf16.mxu0 %v1785
        %2923 = vmatmul.mubr.bf16.gmra.mrb[0].mxu0 %v1784
        %v2924 = vpop.f32.mrb[0].mxu0
        %v2925 = vadd.f32 %v2876, %v2924
        %v2926 = vpop.f32.mrb[0].mxu0
        %v2927 = vpop.f32.mrb[0].mxu0
        %v2928 = vadd.f32 %v2879, %v2927
        %v2929 = vpop.f32.mrb[0].mxu0
        %2930 = vdwg.mxu0
        %2931 = vmatprep.subr.bf16.mxu0 0
        %2932 = vmatpush1.bf16.msra.mxu0 %v2444
        %2933 = vmatprep.subr.bf16.mxu0 0
        %2934 = vmatpush1.bf16.msra.mxu0 %v2445
        %2935 = vmatprep.subr.bf16.mxu0 0
        %2936 = vmatpush1.bf16.msra.mxu0 %v2446
        %2937 = vmatprep.subr.bf16.mxu0 0
        %2938 = vmatpush1.bf16.msra.mxu0 %v2447
        %2939 = vmatprep.subr.bf16.mxu0 0
        %2940 = vmatpush1.bf16.msra.mxu0 %v2448
        %2941 = vmatprep.subr.bf16.mxu0 0
        %2942 = vmatpush1.bf16.msra.mxu0 %v2449
        %2943 = vmatprep.subr.bf16.mxu0 0
        %2944 = vmatpush1.bf16.msra.mxu0 %v2450
        %2945 = vmatprep.subr.bf16.mxu0 0
        %2946 = vmatpush1.bf16.msra.mxu0 %v2451
        %2947 = vmatprep.subr.bf16.mxu0 0
        %2948 = vmatpush1.bf16.msra.mxu0 %v2452
        %2949 = vmatprep.subr.bf16.mxu0 0
        %2950 = vmatpush1.bf16.msra.mxu0 %v2453
        %2951 = vmatprep.subr.bf16.mxu0 0
        %2952 = vmatpush1.bf16.msra.mxu0 %v2454
        %2953 = vmatprep.subr.bf16.mxu0 0
        %2954 = vmatpush1.bf16.msra.mxu0 %v2455
        %2955 = vmatprep.subr.bf16.mxu0 0
        %2956 = vmatpush1.bf16.msra.mxu0 %v2456
        %2957 = vmatprep.subr.bf16.mxu0 0
        %2958 = vmatpush1.bf16.msra.mxu0 %v2457
        %2959 = vmatprep.subr.bf16.mxu0 0
        %2960 = vmatpush1.bf16.msra.mxu0 %v2458
        %2961 = vmatprep.subr.bf16.mxu0 0
        %2962 = vmatpush1.bf16.msra.mxu0 %v2459
        %2963 = vmatprep.mubr.bf16.mxu0 %v1771
        %2964 = vmatmul.mubr.bf16.gmra.mrb[0].mxu0 %v1770
        %v2965 = vpop.f32.mrb[0].mxu0
        %v2966 = vadd.f32 %v2917, %v2965
        %v2967 = vpop.f32.mrb[0].mxu0
        %v2968 = vpop.f32.mrb[0].mxu0
        %v2969 = vadd.f32 %v2920, %v2968
        %v2970 = vpop.f32.mrb[0].mxu0
        %2971 = vmatprep.mubr.bf16.mxu0 %v1787
        %2972 = vmatmul.mubr.bf16.gmra.mrb[0].mxu0 %v1786
        %v2973 = vpop.f32.mrb[0].mxu0
        %v2974 = vadd.f32 %v2925, %v2973
        %v2975 = vpop.f32.mrb[0].mxu0
        %v2976 = vpop.f32.mrb[0].mxu0
        %v2977 = vadd.f32 %v2928, %v2976
        %v2978 = vpop.f32.mrb[0].mxu0
        %2979 = vdwg.mxu0
        %v2980 = vadd.f32 %v2966, %v2969
        %v2981 = vadd.f32 %v2980, %v2974
        %v2982 = vadd.f32 %v2981, %v2977
        %v2983 = vrot.slane %v2982, 4
        %v2984 = vadd.f32 %v2982, %v2983
        %v2985 = vrot.slane %v2984, 2
        %v2986 = vadd.f32 %v2984, %v2985
        %v2987 = vrot.slane %v2986, 1
        %v2988 = vadd.f32 %v2986, %v2987
        %2989 = vst [vmem:[%s1363] sm:$0x1] %v2988
        %v2990 = vmul.f32 %v2966, %v2966
        %v2991 = vmul.f32 %v2969, %v2969
        %v2992 = vmul.f32 %v2974, %v2974
        %v2993 = vmul.f32 %v2977, %v2977
        %v2994 = vadd.f32 %v2990, %v2991
        %v2995 = vadd.f32 %v2994, %v2992
        %v2996 = vadd.f32 %v2995, %v2993
        %v2997 = vrot.slane %v2996, 4
        %v2998 = vadd.f32 %v2996, %v2997
        %v2999 = vrot.slane %v2998, 2
        %v3000 = vadd.f32 %v2998, %v2999
        %v3001 = vrot.slane %v3000, 1
        %v3002 = vadd.f32 %v3000, %v3001
        %3003 = vst [vmem:[%s1370] sm:$0x1] %v3002
        %v3004 = vld [vmem:[%s1355] sm:$0x1]
        %v3006 = vlaneseq
        %v3007 = vshrl.u32 %v3006, 7
        %v3008 = vsub.s32 0, %v3007
        %v3009 = vrot.slane %v3004, %v3008
        %v3011 = vadd.f32 %v2966, %v3009
        %v3012 = vadd.f32 %v2969, %v3009
        %v3013 = vadd.f32 %v2974, %v3009
        %v3014 = vadd.f32 %v2977, %v3009
        %v3015 = vpack.c.bf16 %v3012, %v3011
        %v3016 = vpack.c.bf16 %v3014, %v3013
        %v3019 = vunpack.c.l.b16 %v3015
        %v3020 = vunpack.c.h.b16 %v3015
        %v3021 = vunpack.c.l.b16 %v3016
        %v3022 = vunpack.c.h.b16 %v3016
        %v3023 = vpack.c.b16 %v3019, %v3019
        %v3024 = vpack.c.b16 %v3020, %v3020
        %v3025 = vpack.c.b16 %v3021, %v3021
        %v3026 = vpack.c.b16 %v3022, %v3022
        %3031 = vst [vmem:[%s1327] sm:$0xf] %v3023
        %3032 = vst [vmem:[%s1327 + $0x4] sm:$0xf] %v3024
        %3033 = vst [vmem:[%s1327 + $0x8] sm:$0xf] %v3025
        %3034 = vst [vmem:[%s1327 + $0xc] sm:$0xf] %v3026
        %s3035 = sand.u32 %s117, 1
        %s3036 = sand.u32 %s117, 1
        %s3037 = smul.addr %s3036, 16
        %s3038 = scalar_lea.vmem [#allocation3], %s3037
        %p3039 = scmp.lt.s32.totalorder %s21, 0
        %s3040 = scalar_select %p3039, %s21, 0
        %p3041 = scmp.lt.s32.totalorder %s22, 1
        %s3042 = scalar_select %p3041, %s22, 1
        %s3043 = smul.addr %s3040, 2
        %s3044 = sadd.s32 %s3042, %s3043
        %s3045 = scalar_lea.vmem %s4, %s3044
        %p3046 = scmp.lt.s32.totalorder %s21, 0
        %s3047 = scalar_select %p3046, %s21, 0
        %p3048 = scmp.lt.s32.totalorder %s22, 1
        %s3049 = scalar_select %p3048, %s22, 1
        %s3050 = smul.addr %s3047, 2
        %s3051 = sadd.s32 %s3049, %s3050
        %s3052 = scalar_lea.vmem %s5, %s3051
        // Predicated region
        $region74: #{a_call__.32} parent=68 // pred_check
          %p3053 = pneg %p127
        $region75: #{a_call__.32} parent=68 // pred_check_branch
          %3055 = sbr.rel (%p3053) target = $region77
        $region76: #{a_call__.32} parent=68 // pred_region
          %s3056 = smul.u32 4, %s21
          %s3057 = smul.addr %s3056, 2
          %s3058 = sadd.s32 %s22, %s3057
          %s3059 = smul.addr %s3058, 4
          %s3060 = scalar_lea.vmem %s3, %s3059
          // Predicated region
          $region78: #{a_call__.32} parent=76 // pred_check
            _
          $region79: #{a_call__.32} parent=76 // pred_check_branch
            %3062 = sbr.rel (0) target = $region81
          $region80: #{a_call__.32} parent=76 // pred_region
            // Predicated region
            $region82: #{a_call__.32} parent=80 // pred_check
              _
            $region83: #{a_call__.32} parent=80 // pred_check_branch
              %3064 = sbr.rel target = $region85
            $region84: #{a_call__.32} parent=80 // pred_region
              // Predicated region
              $region97: #{a_call__.32} parent=84 // pred_check
                _
              $region98: #{a_call__.32} parent=84 // pred_check_branch
                %3085 = sbr.rel (0) target = $region100
              $region99: #{a_call__.32} parent=84 // pred_region
                loop: start=0, step=1, limit=1
                $region101: #{a_call__.32} parent=99 // loop_pre_header
                  _
                $region102: #{a_call__.32} parent=99 // loop_header
                  %s3087 = sphi 0, %s3091
                  %p3088 = scmp.ge.s32.totalorder %s3087, 1
                  %s3092 = sphi %s3038, %s3038
                  %s3093 = sphi %s3060, %s3060
                $region103: #{a_call__.32} parent=99 // loop_header_branch
                  %3090 = sbr.rel (%p3088) target = $region107
                $region104: #{a_call__.32} parent=99 // loop_body
                  _
                $region105: #{a_call__.32} parent=99 // loop_footer
                  %s3091 = sadd.s32 1, %s3087
                $region106: #{a_call__.32} parent=99 // loop_footer_branch
                  %3086 = sbr.rel target = $region102
                $region107: #{a_call__.32} parent=99 // loop_exit
                  _
                loop: start=0, step=1, limit=1
                $region108: #{a_call__.32} parent=99 // loop_pre_header
                  _
                $region109: #{a_call__.32} parent=99 // loop_header
                  %s3096 = sphi 0, %s3100
                  %p3097 = scmp.ge.s32.totalorder %s3096, 1
                  %s3101 = sphi %s3038, %s3038
                  %s3102 = sphi %s3060, %s3060
                $region110: #{a_call__.32} parent=99 // loop_header_branch
                  %3099 = sbr.rel (%p3097) target = $region114
                $region111: #{a_call__.32} parent=99 // loop_body
                  %v3103 = vld [vmem:[%s3101] sm:$0xf]
                  %3104 = vst [vmem:[%s3102] sm:$0xf] %v3103
                  %v3105 = vld [vmem:[%s3101 + $0x4] sm:$0xf]
                  %3106 = vst [vmem:[%s3102 + $0x8] sm:$0xf] %v3105
                  %v3107 = vld [vmem:[%s3101 + $0x8] sm:$0xf]
                  %3108 = vst [vmem:[%s3102 + $0x10] sm:$0xf] %v3107
                  %v3109 = vld [vmem:[%s3101 + $0xc] sm:$0xf]
                  %3110 = vst [vmem:[%s3102 + $0x18] sm:$0xf] %v3109
                $region112: #{a_call__.32} parent=99 // loop_footer
                  %s3100 = sadd.s32 1, %s3096
                $region113: #{a_call__.32} parent=99 // loop_footer_branch
                  %3095 = sbr.rel target = $region109
                $region114: #{a_call__.32} parent=99 // loop_exit
                  _
              $region100: #{a_call__.32} parent=84 // pred_fallthru
                _
            $region85: #{a_call__.32} parent=80 // pred_fallthru
              _
            // Predicated region
            $region86: #{a_call__.32} parent=80 // pred_check
              _
            $region87: #{a_call__.32} parent=80 // pred_check_branch
              %3066 = sbr.rel (0) target = $region89
            $region88: #{a_call__.32} parent=80 // pred_region
              loop: start=0, step=1, limit=1
              $region90: #{a_call__.32} parent=88 // loop_pre_header
                _
              $region91: #{a_call__.32} parent=88 // loop_header
                %s3069 = sphi 0, %s3073
                %p3070 = scmp.ge.s32.totalorder %s3069, 1
                %s3074 = sphi %s3038, %s3038
                %s3075 = sphi %s3060, %s3060
              $region92: #{a_call__.32} parent=88 // loop_header_branch
                %3072 = sbr.rel (%p3070) target = $region96
              $region93: #{a_call__.32} parent=88 // loop_body
                %v3076 = vld [vmem:[%s3074] sm:$0xf]
                %3077 = vst [vmem:[%s3075] sm:$0xf] %v3076
                %v3078 = vld [vmem:[%s3074 + $0x4] sm:$0xf]
                %3079 = vst [vmem:[%s3075 + $0x8] sm:$0xf] %v3078
                %v3080 = vld [vmem:[%s3074 + $0x8] sm:$0xf]
                %3081 = vst [vmem:[%s3075 + $0x10] sm:$0xf] %v3080
                %v3082 = vld [vmem:[%s3074 + $0xc] sm:$0xf]
                %3083 = vst [vmem:[%s3075 + $0x18] sm:$0xf] %v3082
              $region94: #{a_call__.32} parent=88 // loop_footer
                %s3073 = sadd.s32 1, %s3069
              $region95: #{a_call__.32} parent=88 // loop_footer_branch
                %3068 = sbr.rel target = $region91
              $region96: #{a_call__.32} parent=88 // loop_exit
                _
            $region89: #{a_call__.32} parent=80 // pred_fallthru
              _
          $region81: #{a_call__.32} parent=76 // pred_fallthru
            _
          %3111 = vnop
        $region77: #{a_call__.32} parent=68 // pred_fallthru
          _
        // Predicated region
        $region115: #{a_call__.32} parent=68 // pred_check
          %p3112 = pneg %p155
        $region116: #{a_call__.32} parent=68 // pred_check_branch
          %3114 = sbr.rel (%p3112) target = $region118
        $region117: #{a_call__.32} parent=68 // pred_region
          _
        $region118: #{a_call__.32} parent=68 // pred_fallthru
          _
        // Predicated region
        $region119: #{a_call__.32} parent=68 // pred_check
          %p3115 = pneg %p183
        $region120: #{a_call__.32} parent=68 // pred_check_branch
          %3117 = sbr.rel (%p3115) target = $region122
        $region121: #{a_call__.32} parent=68 // pred_region
          _
        $region122: #{a_call__.32} parent=68 // pred_fallthru
          _
      $region69: #{a_call__.32} parent=5 // pred_fallthru
        _
      %p3118 = scmp.le.s32.totalorder 2, %s12
      // Predicated region
      $region123: #{a_call__.32} parent=5 // pred_check
        %p3119 = pneg %p3118
      $region124: #{a_call__.32} parent=5 // pred_check_branch
        %3121 = sbr.rel (%p3119) target = $region126
      $region125: #{a_call__.32} parent=5 // pred_region
        %s3122 = ssub.s32 %s12, 2
        // Predicated region
        $region127: #{a_call__.32} parent=125 // pred_check
          %p3123 = pneg %p133
        $region128: #{a_call__.32} parent=125 // pred_check_branch
          %3125 = sbr.rel (%p3123) target = $region130
        $region129: #{a_call__.32} parent=125 // pred_region
          %s3126 = sand.u32 %s118, 1
          %s3127 = sand.u32 %s118, 1
          %s3128 = smul.addr %s3127, 16
          %s3129 = scalar_lea.vmem [#allocation3], %s3128
        $region130: #{a_call__.32} parent=125 // pred_fallthru
          _
        // Predicated region
        $region131: #{a_call__.32} parent=125 // pred_check
          %p3130 = pneg %p161
        $region132: #{a_call__.32} parent=125 // pred_check_branch
          %3132 = sbr.rel (%p3130) target = $region134
        $region133: #{a_call__.32} parent=125 // pred_region
          %p3133 = scmp.lt.s32.totalorder %s23, 0
          %s3134 = scalar_select %p3133, %s23, 0
          %p3135 = scmp.lt.s32.totalorder %s24, 1
          %s3136 = scalar_select %p3135, %s24, 1
          %s3137 = smul.addr %s3134, 2
          %s3138 = sadd.s32 %s3136, %s3137
          %s3139 = scalar_lea.vmem %s4, %s3138
        $region134: #{a_call__.32} parent=125 // pred_fallthru
          _
        // Predicated region
        $region135: #{a_call__.32} parent=125 // pred_check
          %p3140 = pneg %p189
        $region136: #{a_call__.32} parent=125 // pred_check_branch
          %3142 = sbr.rel (%p3140) target = $region138
        $region137: #{a_call__.32} parent=125 // pred_region
          %p3143 = scmp.lt.s32.totalorder %s23, 0
          %s3144 = scalar_select %p3143, %s23, 0
          %p3145 = scmp.lt.s32.totalorder %s24, 1
          %s3146 = scalar_select %p3145, %s24, 1
          %s3147 = smul.addr %s3144, 2
          %s3148 = sadd.s32 %s3146, %s3147
          %s3149 = scalar_lea.vmem %s5, %s3148
        $region138: #{a_call__.32} parent=125 // pred_fallthru
          _
      $region126: #{a_call__.32} parent=5 // pred_fallthru
        _
    $region6: #{a_call__.32} parent=1 // loop_footer
      %s16 = sadd.s32 1, %s12
    $region7: #{a_call__.32} parent=1 // loop_footer_branch
      %11 = sbr.rel target = $region3
    $region8: #{a_call__.32} parent=1 // loop_exit
      _

// kernel: a_call__.47
$region0: #{a_call__.47}
  #allocation0 [shape = 'u32[]', space=smem, size = 0x4, offset = 0x4, fixed_abs, tag = 'smem constant byte address 0x4 - core index']
  #allocation1 [shape = 'u32[144,128]{1,0:T(1,128)}', space=vmem, size = 0x12000, scoped, tag = 'internal scratch']
  %s0 = inlined_call_operand.vmem [shape: bf16[128,128], index: 0, kind: input, shape index: {}]
  %s1 = inlined_call_operand.vmem [shape: f32[1,128], index: 1, kind: input, shape index: {}]
  %s2 = inlined_call_operand.vmem [shape: f32[1,128], index: 2, kind: input, shape index: {}]
  %s3 = inlined_call_operand.vmem [shape: bf16[128,128], index: 3, kind: output, shape index: {}]
  %s4 = sld [smem:[#allocation0]]
  $region22: #{a_call__.47} parent=0
    _
  %s6 = ssub.s32 1, %s4
  %s7 = scalar_select 0, %s6, %s4
  // Predicated region
  $region2: #{a_call__.47} parent=0 // pred_check
    _
  $region3: #{a_call__.47} parent=0 // pred_check_branch
    %9 = sbr.rel (0) target = $region5
  $region4: #{a_call__.47} parent=0 // pred_region
    _
  $region5: #{a_call__.47} parent=0 // pred_fallthru
    _
  // Predicated region
  $region6: #{a_call__.47} parent=0 // pred_check
    _
  $region7: #{a_call__.47} parent=0 // pred_check_branch
    %11 = sbr.rel (0) target = $region9
  $region8: #{a_call__.47} parent=0 // pred_region
    _
  $region9: #{a_call__.47} parent=0 // pred_fallthru
    _
  // Predicated region
  $region10: #{a_call__.47} parent=0 // pred_check
    _
  $region11: #{a_call__.47} parent=0 // pred_check_branch
    %13 = sbr.rel (0) target = $region13
  $region12: #{a_call__.47} parent=0 // pred_region
    _
  $region13: #{a_call__.47} parent=0 // pred_fallthru
    _
  %v14 = vld [vmem:[%s0] sm:$0xf]
  %v15 = vld [vmem:[%s0 + $0x4] sm:$0xf]
  %v16 = vld [vmem:[%s0 + $0x8] sm:$0xf]
  %v17 = vld [vmem:[%s0 + $0xc] sm:$0xf]
  %v18 = vld [vmem:[%s0 + $0x10] sm:$0xf]
  %v19 = vld [vmem:[%s0 + $0x14] sm:$0xf]
  %v20 = vld [vmem:[%s0 + $0x18] sm:$0xf]
  %v21 = vld [vmem:[%s0 + $0x1c] sm:$0xf]
  %v22 = vld [vmem:[%s0 + $0x20] sm:$0xf]
  %v23 = vld [vmem:[%s0 + $0x24] sm:$0xf]
  %v24 = vld [vmem:[%s0 + $0x28] sm:$0xf]
  %v25 = vld [vmem:[%s0 + $0x2c] sm:$0xf]
  %v26 = vld [vmem:[%s0 + $0x30] sm:$0xf]
  %v27 = vld [vmem:[%s0 + $0x34] sm:$0xf]
  %v28 = vld [vmem:[%s0 + $0x38] sm:$0xf]
  %v29 = vld [vmem:[%s0 + $0x3c] sm:$0xf]
  %v30 = vunpack.c.l.bf16 %v14
  %v31 = vunpack.c.l.bf16 %v15
  %v32 = vunpack.c.l.bf16 %v16
  %v33 = vunpack.c.l.bf16 %v17
  %v34 = vunpack.c.l.bf16 %v18
  %v35 = vunpack.c.l.bf16 %v19
  %v36 = vunpack.c.l.bf16 %v20
  %v37 = vunpack.c.l.bf16 %v21
  %v38 = vunpack.c.l.bf16 %v22
  %v39 = vunpack.c.l.bf16 %v23
  %v40 = vunpack.c.l.bf16 %v24
  %v41 = vunpack.c.l.bf16 %v25
  %v42 = vunpack.c.l.bf16 %v26
  %v43 = vunpack.c.l.bf16 %v27
  %v44 = vunpack.c.l.bf16 %v28
  %v45 = vunpack.c.l.bf16 %v29
  %v46 = vld [vmem:[%s1] sm:$0x1]
  %v48 = vlaneseq
  %v49 = vshrl.u32 %v48, 7
  %v50 = vsub.s32 0, %v49
  %v51 = vrot.slane %v46, %v50
  %v53 = vmul.f32 %v30, %v51
  %v54 = vmul.f32 %v31, %v51
  %v55 = vmul.f32 %v32, %v51
  %v56 = vmul.f32 %v33, %v51
  %v57 = vmul.f32 %v34, %v51
  %v58 = vmul.f32 %v35, %v51
  %v59 = vmul.f32 %v36, %v51
  %v60 = vmul.f32 %v37, %v51
  %v61 = vmul.f32 %v38, %v51
  %v62 = vmul.f32 %v39, %v51
  %v63 = vmul.f32 %v40, %v51
  %v64 = vmul.f32 %v41, %v51
  %v65 = vmul.f32 %v42, %v51
  %v66 = vmul.f32 %v43, %v51
  %v67 = vmul.f32 %v44, %v51
  %v68 = vmul.f32 %v45, %v51
  %v69 = vld [vmem:[%s2] sm:$0x1]
  %v71 = vlaneseq
  %v72 = vshrl.u32 %v71, 7
  %v73 = vsub.s32 0, %v72
  %v74 = vrot.slane %v69, %v73
  %v76 = vadd.f32 %v53, %v74
  %v77 = vadd.f32 %v54, %v74
  %v78 = vadd.f32 %v55, %v74
  %v79 = vadd.f32 %v56, %v74
  %v80 = vadd.f32 %v57, %v74
  %v81 = vadd.f32 %v58, %v74
  %v82 = vadd.f32 %v59, %v74
  %v83 = vadd.f32 %v60, %v74
  %v84 = vadd.f32 %v61, %v74
  %v85 = vadd.f32 %v62, %v74
  %v86 = vadd.f32 %v63, %v74
  %v87 = vadd.f32 %v64, %v74
  %v88 = vadd.f32 %v65, %v74
  %v89 = vadd.f32 %v66, %v74
  %v90 = vadd.f32 %v67, %v74
  %v91 = vadd.f32 %v68, %v74
  %v92 = vmax.f32 %v76, 0.0
  %v93 = vmax.f32 %v77, 0.0
  %v94 = vmax.f32 %v78, 0.0
  %v95 = vmax.f32 %v79, 0.0
  %v96 = vmax.f32 %v80, 0.0
  %v97 = vmax.f32 %v81, 0.0
  %v98 = vmax.f32 %v82, 0.0
  %v99 = vmax.f32 %v83, 0.0
  %v100 = vmax.f32 %v84, 0.0
  %v101 = vmax.f32 %v85, 0.0
  %v102 = vmax.f32 %v86, 0.0
  %v103 = vmax.f32 %v87, 0.0
  %v104 = vmax.f32 %v88, 0.0
  %v105 = vmax.f32 %v89, 0.0
  %v106 = vmax.f32 %v90, 0.0
  %v107 = vmax.f32 %v91, 0.0
  %v108 = vpack.c.bf16 %v93, %v92
  %v109 = vpack.c.bf16 %v95, %v94
  %v110 = vpack.c.bf16 %v97, %v96
  %v111 = vpack.c.bf16 %v99, %v98
  %v112 = vpack.c.bf16 %v101, %v100
  %v113 = vpack.c.bf16 %v103, %v102
  %v114 = vpack.c.bf16 %v105, %v104
  %v115 = vpack.c.bf16 %v107, %v106
  %v124 = vunpack.c.l.b16 %v108
  %v125 = vunpack.c.h.b16 %v108
  %v126 = vunpack.c.l.b16 %v109
  %v127 = vunpack.c.h.b16 %v109
  %v128 = vunpack.c.l.b16 %v110
  %v129 = vunpack.c.h.b16 %v110
  %v130 = vunpack.c.l.b16 %v111
  %v131 = vunpack.c.h.b16 %v111
  %v132 = vunpack.c.l.b16 %v112
  %v133 = vunpack.c.h.b16 %v112
  %v134 = vunpack.c.l.b16 %v113
  %v135 = vunpack.c.h.b16 %v113
  %v136 = vunpack.c.l.b16 %v114
  %v137 = vunpack.c.h.b16 %v114
  %v138 = vunpack.c.l.b16 %v115
  %v139 = vunpack.c.h.b16 %v115
  %v140 = vpack.c.b16 %v124, %v124
  %v141 = vpack.c.b16 %v125, %v125
  %v142 = vpack.c.b16 %v126, %v126
  %v143 = vpack.c.b16 %v127, %v127
  %v144 = vpack.c.b16 %v128, %v128
  %v145 = vpack.c.b16 %v129, %v129
  %v146 = vpack.c.b16 %v130, %v130
  %v147 = vpack.c.b16 %v131, %v131
  %v148 = vpack.c.b16 %v132, %v132
  %v149 = vpack.c.b16 %v133, %v133
  %v150 = vpack.c.b16 %v134, %v134
  %v151 = vpack.c.b16 %v135, %v135
  %v152 = vpack.c.b16 %v136, %v136
  %v153 = vpack.c.b16 %v137, %v137
  %v154 = vpack.c.b16 %v138, %v138
  %v155 = vpack.c.b16 %v139, %v139
  %172 = vst [vmem:[%s3] sm:$0xf] %v140
  %173 = vst [vmem:[%s3 + $0x4] sm:$0xf] %v141
  %174 = vst [vmem:[%s3 + $0x8] sm:$0xf] %v142
  %175 = vst [vmem:[%s3 + $0xc] sm:$0xf] %v143
  %176 = vst [vmem:[%s3 + $0x10] sm:$0xf] %v144
  %177 = vst [vmem:[%s3 + $0x14] sm:$0xf] %v145
  %178 = vst [vmem:[%s3 + $0x18] sm:$0xf] %v146
  %179 = vst [vmem:[%s3 + $0x1c] sm:$0xf] %v147
  %180 = vst [vmem:[%s3 + $0x20] sm:$0xf] %v148
  %181 = vst [vmem:[%s3 + $0x24] sm:$0xf] %v149
  %182 = vst [vmem:[%s3 + $0x28] sm:$0xf] %v150
  %183 = vst [vmem:[%s3 + $0x2c] sm:$0xf] %v151
  %184 = vst [vmem:[%s3 + $0x30] sm:$0xf] %v152
  %185 = vst [vmem:[%s3 + $0x34] sm:$0xf] %v153
  %186 = vst [vmem:[%s3 + $0x38] sm:$0xf] %v154
  %187 = vst [vmem:[%s3 + $0x3c] sm:$0xf] %v155
  // Predicated region
  $region14: #{a_call__.47} parent=0 // pred_check
    _
  $region15: #{a_call__.47} parent=0 // pred_check_branch
    %189 = sbr.rel (0) target = $region17
  $region16: #{a_call__.47} parent=0 // pred_region
    _
  $region17: #{a_call__.47} parent=0 // pred_fallthru
    _
  // Predicated region
  $region18: #{a_call__.47} parent=0 // pred_check
    _
  $region19: #{a_call__.47} parent=0 // pred_check_branch
    %191 = sbr.rel (0) target = $region21
  $region20: #{a_call__.47} parent=0 // pred_region
    _
  $region21: #{a_call__.47} parent=0 // pred_fallthru
    _

// kernel: a_call__.41
$region0: #{a_call__.41}
  #allocation0 [shape = 'u32[]', space=smem, size = 0x4, offset = 0x4, fixed_abs, tag = 'smem constant byte address 0x4 - core index']
  #allocation1 [shape = 'u32[144,128]{1,0:T(1,128)}', space=vmem, size = 0x12000, scoped, tag = 'internal scratch']
  %s0 = inlined_call_operand.vmem [shape: bf16[128,1024], index: 0, kind: input, shape index: {}]
  %s1 = inlined_call_operand.vmem [shape: bf16[1024,128], index: 1, kind: input, shape index: {}]
  %s2 = inlined_call_operand.vmem [shape: f32[1,128], index: 2, kind: input, shape index: {}]
  %s3 = inlined_call_operand.vmem [shape: bf16[128,128], index: 3, kind: output, shape index: {0}]
  %s4 = inlined_call_operand.vmem [shape: f32[1,1,128], index: 4, kind: output, shape index: {1}]
  %s5 = inlined_call_operand.vmem [shape: f32[1,1,128], index: 5, kind: output, shape index: {2}]
  %6 = xla_tuple %s3, %s4, %s5
  %s7 = sld [smem:[#allocation0]]
  $region38: #{a_call__.41} parent=0
    _
  %s9 = ssub.s32 1, %s7
  %s10 = scalar_select 0, %s9, %s7
  // Predicated region
  $region2: #{a_call__.41} parent=0 // pred_check
    _
  $region3: #{a_call__.41} parent=0 // pred_check_branch
    %12 = sbr.rel (0) target = $region5
  $region4: #{a_call__.41} parent=0 // pred_region
    _
  $region5: #{a_call__.41} parent=0 // pred_fallthru
    _
  // Predicated region
  $region6: #{a_call__.41} parent=0 // pred_check
    _
  $region7: #{a_call__.41} parent=0 // pred_check_branch
    %14 = sbr.rel (0) target = $region9
  $region8: #{a_call__.41} parent=0 // pred_region
    _
  $region9: #{a_call__.41} parent=0 // pred_fallthru
    _
  // Predicated region
  $region10: #{a_call__.41} parent=0 // pred_check
    _
  $region11: #{a_call__.41} parent=0 // pred_check_branch
    %16 = sbr.rel (0) target = $region13
  $region12: #{a_call__.41} parent=0 // pred_region
    _
  $region13: #{a_call__.41} parent=0 // pred_fallthru
    _
  %v18 = vld [vmem:[%s0] sm:$0xff]
  %v19 = vld [vmem:[%s0 + $0x8] sm:$0xff]
  %v20 = vld [vmem:[%s0 + $0x10] sm:$0xff]
  %v21 = vld [vmem:[%s0 + $0x18] sm:$0xff]
  %v22 = vld [vmem:[%s0 + $0x20] sm:$0xff]
  %v23 = vld [vmem:[%s0 + $0x28] sm:$0xff]
  %v24 = vld [vmem:[%s0 + $0x30] sm:$0xff]
  %v25 = vld [vmem:[%s0 + $0x38] sm:$0xff]
  %v26 = vld [vmem:[%s0 + $0x40] sm:$0xff]
  %v27 = vld [vmem:[%s0 + $0x48] sm:$0xff]
  %v28 = vld [vmem:[%s0 + $0x50] sm:$0xff]
  %v29 = vld [vmem:[%s0 + $0x58] sm:$0xff]
  %v30 = vld [vmem:[%s0 + $0x60] sm:$0xff]
  %v31 = vld [vmem:[%s0 + $0x68] sm:$0xff]
  %v32 = vld [vmem:[%s0 + $0x70] sm:$0xff]
  %v33 = vld [vmem:[%s0 + $0x78] sm:$0xff]
  %v34 = vld [vmem:[%s0 + $0x80] sm:$0xff]
  %v35 = vld [vmem:[%s0 + $0x88] sm:$0xff]
  %v36 = vld [vmem:[%s0 + $0x90] sm:$0xff]
  %v37 = vld [vmem:[%s0 + $0x98] sm:$0xff]
  %v38 = vld [vmem:[%s0 + $0xa0] sm:$0xff]
  %v39 = vld [vmem:[%s0 + $0xa8] sm:$0xff]
  %v40 = vld [vmem:[%s0 + $0xb0] sm:$0xff]
  %v41 = vld [vmem:[%s0 + $0xb8] sm:$0xff]
  %v42 = vld [vmem:[%s0 + $0xc0] sm:$0xff]
  %v43 = vld [vmem:[%s0 + $0xc8] sm:$0xff]
  %v44 = vld [vmem:[%s0 + $0xd0] sm:$0xff]
  %v45 = vld [vmem:[%s0 + $0xd8] sm:$0xff]
  %v46 = vld [vmem:[%s0 + $0xe0] sm:$0xff]
  %v47 = vld [vmem:[%s0 + $0xe8] sm:$0xff]
  %v48 = vld [vmem:[%s0 + $0xf0] sm:$0xff]
  %v49 = vld [vmem:[%s0 + $0xf8] sm:$0xff]
  %v50 = vld [vmem:[%s0 + $0x100] sm:$0xff]
  %v51 = vld [vmem:[%s0 + $0x108] sm:$0xff]
  %v52 = vld [vmem:[%s0 + $0x110] sm:$0xff]
  %v53 = vld [vmem:[%s0 + $0x118] sm:$0xff]
  %v54 = vld [vmem:[%s0 + $0x120] sm:$0xff]
  %v55 = vld [vmem:[%s0 + $0x128] sm:$0xff]
  %v56 = vld [vmem:[%s0 + $0x130] sm:$0xff]
  %v57 = vld [vmem:[%s0 + $0x138] sm:$0xff]
  %v58 = vld [vmem:[%s0 + $0x140] sm:$0xff]
  %v59 = vld [vmem:[%s0 + $0x148] sm:$0xff]
  %v60 = vld [vmem:[%s0 + $0x150] sm:$0xff]
  %v61 = vld [vmem:[%s0 + $0x158] sm:$0xff]
  %v62 = vld [vmem:[%s0 + $0x160] sm:$0xff]
  %v63 = vld [vmem:[%s0 + $0x168] sm:$0xff]
  %v64 = vld [vmem:[%s0 + $0x170] sm:$0xff]
  %v65 = vld [vmem:[%s0 + $0x178] sm:$0xff]
  %v66 = vld [vmem:[%s0 + $0x180] sm:$0xff]
  %v67 = vld [vmem:[%s0 + $0x188] sm:$0xff]
  %v68 = vld [vmem:[%s0 + $0x190] sm:$0xff]
  %v69 = vld [vmem:[%s0 + $0x198] sm:$0xff]
  %v70 = vld [vmem:[%s0 + $0x1a0] sm:$0xff]
  %v71 = vld [vmem:[%s0 + $0x1a8] sm:$0xff]
  %v72 = vld [vmem:[%s0 + $0x1b0] sm:$0xff]
  %v73 = vld [vmem:[%s0 + $0x1b8] sm:$0xff]
  %v74 = vld [vmem:[%s0 + $0x1c0] sm:$0xff]
  %v75 = vld [vmem:[%s0 + $0x1c8] sm:$0xff]
  %v76 = vld [vmem:[%s0 + $0x1d0] sm:$0xff]
  %v77 = vld [vmem:[%s0 + $0x1d8] sm:$0xff]
  %v78 = vld [vmem:[%s0 + $0x1e0] sm:$0xff]
  %v79 = vld [vmem:[%s0 + $0x1e8] sm:$0xff]
  %v80 = vld [vmem:[%s0 + $0x1f0] sm:$0xff]
  %v81 = vld [vmem:[%s0 + $0x1f8] sm:$0xff]
  %v82 = vld [vmem:[%s1] sm:$0xf]
  %v83 = vld [vmem:[%s1 + $0x4] sm:$0xf]
  %v84 = vld [vmem:[%s1 + $0x8] sm:$0xf]
  %v85 = vld [vmem:[%s1 + $0xc] sm:$0xf]
  %v86 = vld [vmem:[%s1 + $0x10] sm:$0xf]
  %v87 = vld [vmem:[%s1 + $0x14] sm:$0xf]
  %v88 = vld [vmem:[%s1 + $0x18] sm:$0xf]
  %v89 = vld [vmem:[%s1 + $0x1c] sm:$0xf]
  %v90 = vld [vmem:[%s1 + $0x20] sm:$0xf]
  %v91 = vld [vmem:[%s1 + $0x24] sm:$0xf]
  %v92 = vld [vmem:[%s1 + $0x28] sm:$0xf]
  %v93 = vld [vmem:[%s1 + $0x2c] sm:$0xf]
  %v94 = vld [vmem:[%s1 + $0x30] sm:$0xf]
  %v95 = vld [vmem:[%s1 + $0x34] sm:$0xf]
  %v96 = vld [vmem:[%s1 + $0x38] sm:$0xf]
  %v97 = vld [vmem:[%s1 + $0x3c] sm:$0xf]
  %v98 = vld [vmem:[%s1 + $0x40] sm:$0xf]
  %v99 = vld [vmem:[%s1 + $0x44] sm:$0xf]
  %v100 = vld [vmem:[%s1 + $0x48] sm:$0xf]
  %v101 = vld [vmem:[%s1 + $0x4c] sm:$0xf]
  %v102 = vld [vmem:[%s1 + $0x50] sm:$0xf]
  %v103 = vld [vmem:[%s1 + $0x54] sm:$0xf]
  %v104 = vld [vmem:[%s1 + $0x58] sm:$0xf]
  %v105 = vld [vmem:[%s1 + $0x5c] sm:$0xf]
  %v106 = vld [vmem:[%s1 + $0x60] sm:$0xf]
  %v107 = vld [vmem:[%s1 + $0x64] sm:$0xf]
  %v108 = vld [vmem:[%s1 + $0x68] sm:$0xf]
  %v109 = vld [vmem:[%s1 + $0x6c] sm:$0xf]
  %v110 = vld [vmem:[%s1 + $0x70] sm:$0xf]
  %v111 = vld [vmem:[%s1 + $0x74] sm:$0xf]
  %v112 = vld [vmem:[%s1 + $0x78] sm:$0xf]
  %v113 = vld [vmem:[%s1 + $0x7c] sm:$0xf]
  %v114 = vld [vmem:[%s1 + $0x80] sm:$0xf]
  %v115 = vld [vmem:[%s1 + $0x84] sm:$0xf]
  %v116 = vld [vmem:[%s1 + $0x88] sm:$0xf]
  %v117 = vld [vmem:[%s1 + $0x8c] sm:$0xf]
  %v118 = vld [vmem:[%s1 + $0x90] sm:$0xf]
  %v119 = vld [vmem:[%s1 + $0x94] sm:$0xf]
  %v120 = vld [vmem:[%s1 + $0x98] sm:$0xf]
  %v121 = vld [vmem:[%s1 + $0x9c] sm:$0xf]
  %v122 = vld [vmem:[%s1 + $0xa0] sm:$0xf]
  %v123 = vld [vmem:[%s1 + $0xa4] sm:$0xf]
  %v124 = vld [vmem:[%s1 + $0xa8] sm:$0xf]
  %v125 = vld [vmem:[%s1 + $0xac] sm:$0xf]
  %v126 = vld [vmem:[%s1 + $0xb0] sm:$0xf]
  %v127 = vld [vmem:[%s1 + $0xb4] sm:$0xf]
  %v128 = vld [vmem:[%s1 + $0xb8] sm:$0xf]
  %v129 = vld [vmem:[%s1 + $0xbc] sm:$0xf]
  %v130 = vld [vmem:[%s1 + $0xc0] sm:$0xf]
  %v131 = vld [vmem:[%s1 + $0xc4] sm:$0xf]
  %v132 = vld [vmem:[%s1 + $0xc8] sm:$0xf]
  %v133 = vld [vmem:[%s1 + $0xcc] sm:$0xf]
  %v134 = vld [vmem:[%s1 + $0xd0] sm:$0xf]
  %v135 = vld [vmem:[%s1 + $0xd4] sm:$0xf]
  %v136 = vld [vmem:[%s1 + $0xd8] sm:$0xf]
  %v137 = vld [vmem:[%s1 + $0xdc] sm:$0xf]
  %v138 = vld [vmem:[%s1 + $0xe0] sm:$0xf]
  %v139 = vld [vmem:[%s1 + $0xe4] sm:$0xf]
  %v140 = vld [vmem:[%s1 + $0xe8] sm:$0xf]
  %v141 = vld [vmem:[%s1 + $0xec] sm:$0xf]
  %v142 = vld [vmem:[%s1 + $0xf0] sm:$0xf]
  %v143 = vld [vmem:[%s1 + $0xf4] sm:$0xf]
  %v144 = vld [vmem:[%s1 + $0xf8] sm:$0xf]
  %v145 = vld [vmem:[%s1 + $0xfc] sm:$0xf]
  %v146 = vld [vmem:[%s1 + $0x100] sm:$0xf]
  %v147 = vld [vmem:[%s1 + $0x104] sm:$0xf]
  %v148 = vld [vmem:[%s1 + $0x108] sm:$0xf]
  %v149 = vld [vmem:[%s1 + $0x10c] sm:$0xf]
  %v150 = vld [vmem:[%s1 + $0x110] sm:$0xf]
  %v151 = vld [vmem:[%s1 + $0x114] sm:$0xf]
  %v152 = vld [vmem:[%s1 + $0x118] sm:$0xf]
  %v153 = vld [vmem:[%s1 + $0x11c] sm:$0xf]
  %v154 = vld [vmem:[%s1 + $0x120] sm:$0xf]
  %v155 = vld [vmem:[%s1 + $0x124] sm:$0xf]
  %v156 = vld [vmem:[%s1 + $0x128] sm:$0xf]
  %v157 = vld [vmem:[%s1 + $0x12c] sm:$0xf]
  %v158 = vld [vmem:[%s1 + $0x130] sm:$0xf]
  %v159 = vld [vmem:[%s1 + $0x134] sm:$0xf]
  %v160 = vld [vmem:[%s1 + $0x138] sm:$0xf]
  %v161 = vld [vmem:[%s1 + $0x13c] sm:$0xf]
  %v162 = vld [vmem:[%s1 + $0x140] sm:$0xf]
  %v163 = vld [vmem:[%s1 + $0x144] sm:$0xf]
  %v164 = vld [vmem:[%s1 + $0x148] sm:$0xf]
  %v165 = vld [vmem:[%s1 + $0x14c] sm:$0xf]
  %v166 = vld [vmem:[%s1 + $0x150] sm:$0xf]
  %v167 = vld [vmem:[%s1 + $0x154] sm:$0xf]
  %v168 = vld [vmem:[%s1 + $0x158] sm:$0xf]
  %v169 = vld [vmem:[%s1 + $0x15c] sm:$0xf]
  %v170 = vld [vmem:[%s1 + $0x160] sm:$0xf]
  %v171 = vld [vmem:[%s1 + $0x164] sm:$0xf]
  %v172 = vld [vmem:[%s1 + $0x168] sm:$0xf]
  %v173 = vld [vmem:[%s1 + $0x16c] sm:$0xf]
  %v174 = vld [vmem:[%s1 + $0x170] sm:$0xf]
  %v175 = vld [vmem:[%s1 + $0x174] sm:$0xf]
  %v176 = vld [vmem:[%s1 + $0x178] sm:$0xf]
  %v177 = vld [vmem:[%s1 + $0x17c] sm:$0xf]
  %v178 = vld [vmem:[%s1 + $0x180] sm:$0xf]
  %v179 = vld [vmem:[%s1 + $0x184] sm:$0xf]
  %v180 = vld [vmem:[%s1 + $0x188] sm:$0xf]
  %v181 = vld [vmem:[%s1 + $0x18c] sm:$0xf]
  %v182 = vld [vmem:[%s1 + $0x190] sm:$0xf]
  %v183 = vld [vmem:[%s1 + $0x194] sm:$0xf]
  %v184 = vld [vmem:[%s1 + $0x198] sm:$0xf]
  %v185 = vld [vmem:[%s1 + $0x19c] sm:$0xf]
  %v186 = vld [vmem:[%s1 + $0x1a0] sm:$0xf]
  %v187 = vld [vmem:[%s1 + $0x1a4] sm:$0xf]
  %v188 = vld [vmem:[%s1 + $0x1a8] sm:$0xf]
  %v189 = vld [vmem:[%s1 + $0x1ac] sm:$0xf]
  %v190 = vld [vmem:[%s1 + $0x1b0] sm:$0xf]
  %v191 = vld [vmem:[%s1 + $0x1b4] sm:$0xf]
  %v192 = vld [vmem:[%s1 + $0x1b8] sm:$0xf]
  %v193 = vld [vmem:[%s1 + $0x1bc] sm:$0xf]
  %v194 = vld [vmem:[%s1 + $0x1c0] sm:$0xf]
  %v195 = vld [vmem:[%s1 + $0x1c4] sm:$0xf]
  %v196 = vld [vmem:[%s1 + $0x1c8] sm:$0xf]
  %v197 = vld [vmem:[%s1 + $0x1cc] sm:$0xf]
  %v198 = vld [vmem:[%s1 + $0x1d0] sm:$0xf]
  %v199 = vld [vmem:[%s1 + $0x1d4] sm:$0xf]
  %v200 = vld [vmem:[%s1 + $0x1d8] sm:$0xf]
  %v201 = vld [vmem:[%s1 + $0x1dc] sm:$0xf]
  %v202 = vld [vmem:[%s1 + $0x1e0] sm:$0xf]
  %v203 = vld [vmem:[%s1 + $0x1e4] sm:$0xf]
  %v204 = vld [vmem:[%s1 + $0x1e8] sm:$0xf]
  %v205 = vld [vmem:[%s1 + $0x1ec] sm:$0xf]
  %v206 = vld [vmem:[%s1 + $0x1f0] sm:$0xf]
  %v207 = vld [vmem:[%s1 + $0x1f4] sm:$0xf]
  %v208 = vld [vmem:[%s1 + $0x1f8] sm:$0xf]
  %v209 = vld [vmem:[%s1 + $0x1fc] sm:$0xf]
  %v274 = vunpack.c.l.b16 %v18
  %v275 = vunpack.c.h.b16 %v18
  %v276 = vunpack.c.l.b16 %v19
  %v277 = vunpack.c.h.b16 %v19
  %v278 = vunpack.c.l.b16 %v20
  %v279 = vunpack.c.h.b16 %v20
  %v280 = vunpack.c.l.b16 %v21
  %v281 = vunpack.c.h.b16 %v21
  %v282 = vunpack.c.l.b16 %v22
  %v283 = vunpack.c.h.b16 %v22
  %v284 = vunpack.c.l.b16 %v23
  %v285 = vunpack.c.h.b16 %v23
  %v286 = vunpack.c.l.b16 %v24
  %v287 = vunpack.c.h.b16 %v24
  %v288 = vunpack.c.l.b16 %v25
  %v289 = vunpack.c.h.b16 %v25
  %v290 = vunpack.c.l.b16 %v26
  %v291 = vunpack.c.h.b16 %v26
  %v292 = vunpack.c.l.b16 %v27
  %v293 = vunpack.c.h.b16 %v27
  %v294 = vunpack.c.l.b16 %v28
  %v295 = vunpack.c.h.b16 %v28
  %v296 = vunpack.c.l.b16 %v29
  %v297 = vunpack.c.h.b16 %v29
  %v298 = vunpack.c.l.b16 %v30
  %v299 = vunpack.c.h.b16 %v30
  %v300 = vunpack.c.l.b16 %v31
  %v301 = vunpack.c.h.b16 %v31
  %v302 = vunpack.c.l.b16 %v32
  %v303 = vunpack.c.h.b16 %v32
  %v304 = vunpack.c.l.b16 %v33
  %v305 = vunpack.c.h.b16 %v33
  %v306 = vunpack.c.l.b16 %v34
  %v307 = vunpack.c.h.b16 %v34
  %v308 = vunpack.c.l.b16 %v35
  %v309 = vunpack.c.h.b16 %v35
  %v310 = vunpack.c.l.b16 %v36
  %v311 = vunpack.c.h.b16 %v36
  %v312 = vunpack.c.l.b16 %v37
  %v313 = vunpack.c.h.b16 %v37
  %v314 = vunpack.c.l.b16 %v38
  %v315 = vunpack.c.h.b16 %v38
  %v316 = vunpack.c.l.b16 %v39
  %v317 = vunpack.c.h.b16 %v39
  %v318 = vunpack.c.l.b16 %v40
  %v319 = vunpack.c.h.b16 %v40
  %v320 = vunpack.c.l.b16 %v41
  %v321 = vunpack.c.h.b16 %v41
  %v322 = vunpack.c.l.b16 %v42
  %v323 = vunpack.c.h.b16 %v42
  %v324 = vunpack.c.l.b16 %v43
  %v325 = vunpack.c.h.b16 %v43
  %v326 = vunpack.c.l.b16 %v44
  %v327 = vunpack.c.h.b16 %v44
  %v328 = vunpack.c.l.b16 %v45
  %v329 = vunpack.c.h.b16 %v45
  %v330 = vunpack.c.l.b16 %v46
  %v331 = vunpack.c.h.b16 %v46
  %v332 = vunpack.c.l.b16 %v47
  %v333 = vunpack.c.h.b16 %v47
  %v334 = vunpack.c.l.b16 %v48
  %v335 = vunpack.c.h.b16 %v48
  %v336 = vunpack.c.l.b16 %v49
  %v337 = vunpack.c.h.b16 %v49
  %v338 = vunpack.c.l.b16 %v50
  %v339 = vunpack.c.h.b16 %v50
  %v340 = vunpack.c.l.b16 %v51
  %v341 = vunpack.c.h.b16 %v51
  %v342 = vunpack.c.l.b16 %v52
  %v343 = vunpack.c.h.b16 %v52
  %v344 = vunpack.c.l.b16 %v53
  %v345 = vunpack.c.h.b16 %v53
  %v346 = vunpack.c.l.b16 %v54
  %v347 = vunpack.c.h.b16 %v54
  %v348 = vunpack.c.l.b16 %v55
  %v349 = vunpack.c.h.b16 %v55
  %v350 = vunpack.c.l.b16 %v56
  %v351 = vunpack.c.h.b16 %v56
  %v352 = vunpack.c.l.b16 %v57
  %v353 = vunpack.c.h.b16 %v57
  %v354 = vunpack.c.l.b16 %v58
  %v355 = vunpack.c.h.b16 %v58
  %v356 = vunpack.c.l.b16 %v59
  %v357 = vunpack.c.h.b16 %v59
  %v358 = vunpack.c.l.b16 %v60
  %v359 = vunpack.c.h.b16 %v60
  %v360 = vunpack.c.l.b16 %v61
  %v361 = vunpack.c.h.b16 %v61
  %v362 = vunpack.c.l.b16 %v62
  %v363 = vunpack.c.h.b16 %v62
  %v364 = vunpack.c.l.b16 %v63
  %v365 = vunpack.c.h.b16 %v63
  %v366 = vunpack.c.l.b16 %v64
  %v367 = vunpack.c.h.b16 %v64
  %v368 = vunpack.c.l.b16 %v65
  %v369 = vunpack.c.h.b16 %v65
  %v370 = vunpack.c.l.b16 %v66
  %v371 = vunpack.c.h.b16 %v66
  %v372 = vunpack.c.l.b16 %v67
  %v373 = vunpack.c.h.b16 %v67
  %v374 = vunpack.c.l.b16 %v68
  %v375 = vunpack.c.h.b16 %v68
  %v376 = vunpack.c.l.b16 %v69
  %v377 = vunpack.c.h.b16 %v69
  %v378 = vunpack.c.l.b16 %v70
  %v379 = vunpack.c.h.b16 %v70
  %v380 = vunpack.c.l.b16 %v71
  %v381 = vunpack.c.h.b16 %v71
  %v382 = vunpack.c.l.b16 %v72
  %v383 = vunpack.c.h.b16 %v72
  %v384 = vunpack.c.l.b16 %v73
  %v385 = vunpack.c.h.b16 %v73
  %v386 = vunpack.c.l.b16 %v74
  %v387 = vunpack.c.h.b16 %v74
  %v388 = vunpack.c.l.b16 %v75
  %v389 = vunpack.c.h.b16 %v75
  %v390 = vunpack.c.l.b16 %v76
  %v391 = vunpack.c.h.b16 %v76
  %v392 = vunpack.c.l.b16 %v77
  %v393 = vunpack.c.h.b16 %v77
  %v394 = vunpack.c.l.b16 %v78
  %v395 = vunpack.c.h.b16 %v78
  %v396 = vunpack.c.l.b16 %v79
  %v397 = vunpack.c.h.b16 %v79
  %v398 = vunpack.c.l.b16 %v80
  %v399 = vunpack.c.h.b16 %v80
  %v400 = vunpack.c.l.b16 %v81
  %v401 = vunpack.c.h.b16 %v81
  %v402 = vpack.c.b16 %v282, %v274
  %v403 = vpack.c.b16 %v283, %v275
  %v404 = vpack.c.b16 %v284, %v276
  %v405 = vpack.c.b16 %v285, %v277
  %v406 = vpack.c.b16 %v286, %v278
  %v407 = vpack.c.b16 %v287, %v279
  %v408 = vpack.c.b16 %v288, %v280
  %v409 = vpack.c.b16 %v289, %v281
  %v410 = vpack.c.b16 %v298, %v290
  %v411 = vpack.c.b16 %v299, %v291
  %v412 = vpack.c.b16 %v300, %v292
  %v413 = vpack.c.b16 %v301, %v293
  %v414 = vpack.c.b16 %v302, %v294
  %v415 = vpack.c.b16 %v303, %v295
  %v416 = vpack.c.b16 %v304, %v296
  %v417 = vpack.c.b16 %v305, %v297
  %v418 = vpack.c.b16 %v314, %v306
  %v419 = vpack.c.b16 %v315, %v307
  %v420 = vpack.c.b16 %v316, %v308
  %v421 = vpack.c.b16 %v317, %v309
  %v422 = vpack.c.b16 %v318, %v310
  %v423 = vpack.c.b16 %v319, %v311
  %v424 = vpack.c.b16 %v320, %v312
  %v425 = vpack.c.b16 %v321, %v313
  %v426 = vpack.c.b16 %v330, %v322
  %v427 = vpack.c.b16 %v331, %v323
  %v428 = vpack.c.b16 %v332, %v324
  %v429 = vpack.c.b16 %v333, %v325
  %v430 = vpack.c.b16 %v334, %v326
  %v431 = vpack.c.b16 %v335, %v327
  %v432 = vpack.c.b16 %v336, %v328
  %v433 = vpack.c.b16 %v337, %v329
  %v434 = vpack.c.b16 %v346, %v338
  %v435 = vpack.c.b16 %v347, %v339
  %v436 = vpack.c.b16 %v348, %v340
  %v437 = vpack.c.b16 %v349, %v341
  %v438 = vpack.c.b16 %v350, %v342
  %v439 = vpack.c.b16 %v351, %v343
  %v440 = vpack.c.b16 %v352, %v344
  %v441 = vpack.c.b16 %v353, %v345
  %v442 = vpack.c.b16 %v362, %v354
  %v443 = vpack.c.b16 %v363, %v355
  %v444 = vpack.c.b16 %v364, %v356
  %v445 = vpack.c.b16 %v365, %v357
  %v446 = vpack.c.b16 %v366, %v358
  %v447 = vpack.c.b16 %v367, %v359
  %v448 = vpack.c.b16 %v368, %v360
  %v449 = vpack.c.b16 %v369, %v361
  %v450 = vpack.c.b16 %v378, %v370
  %v451 = vpack.c.b16 %v379, %v371
  %v452 = vpack.c.b16 %v380, %v372
  %v453 = vpack.c.b16 %v381, %v373
  %v454 = vpack.c.b16 %v382, %v374
  %v455 = vpack.c.b16 %v383, %v375
  %v456 = vpack.c.b16 %v384, %v376
  %v457 = vpack.c.b16 %v385, %v377
  %v458 = vpack.c.b16 %v394, %v386
  %v459 = vpack.c.b16 %v395, %v387
  %v460 = vpack.c.b16 %v396, %v388
  %v461 = vpack.c.b16 %v397, %v389
  %v462 = vpack.c.b16 %v398, %v390
  %v463 = vpack.c.b16 %v399, %v391
  %v464 = vpack.c.b16 %v400, %v392
  %v465 = vpack.c.b16 %v401, %v393
  %v658 = vunpack.c.l.b16 %v82
  %v659 = vunpack.c.l.b16 %v83
  %v660 = vunpack.c.l.b16 %v84
  %v661 = vunpack.c.l.b16 %v85
  %v662 = vunpack.c.l.b16 %v86
  %v663 = vunpack.c.l.b16 %v87
  %v664 = vunpack.c.l.b16 %v88
  %v665 = vunpack.c.l.b16 %v89
  %v666 = vunpack.c.l.b16 %v90
  %v667 = vunpack.c.l.b16 %v91
  %v668 = vunpack.c.l.b16 %v92
  %v669 = vunpack.c.l.b16 %v93
  %v670 = vunpack.c.l.b16 %v94
  %v671 = vunpack.c.l.b16 %v95
  %v672 = vunpack.c.l.b16 %v96
  %v673 = vunpack.c.l.b16 %v97
  %v674 = vunpack.c.l.b16 %v98
  %v675 = vunpack.c.l.b16 %v99
  %v676 = vunpack.c.l.b16 %v100
  %v677 = vunpack.c.l.b16 %v101
  %v678 = vunpack.c.l.b16 %v102
  %v679 = vunpack.c.l.b16 %v103
  %v680 = vunpack.c.l.b16 %v104
  %v681 = vunpack.c.l.b16 %v105
  %v682 = vunpack.c.l.b16 %v106
  %v683 = vunpack.c.l.b16 %v107
  %v684 = vunpack.c.l.b16 %v108
  %v685 = vunpack.c.l.b16 %v109
  %v686 = vunpack.c.l.b16 %v110
  %v687 = vunpack.c.l.b16 %v111
  %v688 = vunpack.c.l.b16 %v112
  %v689 = vunpack.c.l.b16 %v113
  %v690 = vunpack.c.l.b16 %v114
  %v691 = vunpack.c.l.b16 %v115
  %v692 = vunpack.c.l.b16 %v116
  %v693 = vunpack.c.l.b16 %v117
  %v694 = vunpack.c.l.b16 %v118
  %v695 = vunpack.c.l.b16 %v119
  %v696 = vunpack.c.l.b16 %v120
  %v697 = vunpack.c.l.b16 %v121
  %v698 = vunpack.c.l.b16 %v122
  %v699 = vunpack.c.l.b16 %v123
  %v700 = vunpack.c.l.b16 %v124
  %v701 = vunpack.c.l.b16 %v125
  %v702 = vunpack.c.l.b16 %v126
  %v703 = vunpack.c.l.b16 %v127
  %v704 = vunpack.c.l.b16 %v128
  %v705 = vunpack.c.l.b16 %v129
  %v706 = vunpack.c.l.b16 %v130
  %v707 = vunpack.c.l.b16 %v131
  %v708 = vunpack.c.l.b16 %v132
  %v709 = vunpack.c.l.b16 %v133
  %v710 = vunpack.c.l.b16 %v134
  %v711 = vunpack.c.l.b16 %v135
  %v712 = vunpack.c.l.b16 %v136
  %v713 = vunpack.c.l.b16 %v137
  %v714 = vunpack.c.l.b16 %v138
  %v715 = vunpack.c.l.b16 %v139
  %v716 = vunpack.c.l.b16 %v140
  %v717 = vunpack.c.l.b16 %v141
  %v718 = vunpack.c.l.b16 %v142
  %v719 = vunpack.c.l.b16 %v143
  %v720 = vunpack.c.l.b16 %v144
  %v721 = vunpack.c.l.b16 %v145
  %v722 = vunpack.c.l.b16 %v146
  %v723 = vunpack.c.l.b16 %v147
  %v724 = vunpack.c.l.b16 %v148
  %v725 = vunpack.c.l.b16 %v149
  %v726 = vunpack.c.l.b16 %v150
  %v727 = vunpack.c.l.b16 %v151
  %v728 = vunpack.c.l.b16 %v152
  %v729 = vunpack.c.l.b16 %v153
  %v730 = vunpack.c.l.b16 %v154
  %v731 = vunpack.c.l.b16 %v155
  %v732 = vunpack.c.l.b16 %v156
  %v733 = vunpack.c.l.b16 %v157
  %v734 = vunpack.c.l.b16 %v158
  %v735 = vunpack.c.l.b16 %v159
  %v736 = vunpack.c.l.b16 %v160
  %v737 = vunpack.c.l.b16 %v161
  %v738 = vunpack.c.l.b16 %v162
  %v739 = vunpack.c.l.b16 %v163
  %v740 = vunpack.c.l.b16 %v164
  %v741 = vunpack.c.l.b16 %v165
  %v742 = vunpack.c.l.b16 %v166
  %v743 = vunpack.c.l.b16 %v167
  %v744 = vunpack.c.l.b16 %v168
  %v745 = vunpack.c.l.b16 %v169
  %v746 = vunpack.c.l.b16 %v170
  %v747 = vunpack.c.l.b16 %v171
  %v748 = vunpack.c.l.b16 %v172
  %v749 = vunpack.c.l.b16 %v173
  %v750 = vunpack.c.l.b16 %v174
  %v751 = vunpack.c.l.b16 %v175
  %v752 = vunpack.c.l.b16 %v176
  %v753 = vunpack.c.l.b16 %v177
  %v754 = vunpack.c.l.b16 %v178
  %v755 = vunpack.c.l.b16 %v179
  %v756 = vunpack.c.l.b16 %v180
  %v757 = vunpack.c.l.b16 %v181
  %v758 = vunpack.c.l.b16 %v182
  %v759 = vunpack.c.l.b16 %v183
  %v760 = vunpack.c.l.b16 %v184
  %v761 = vunpack.c.l.b16 %v185
  %v762 = vunpack.c.l.b16 %v186
  %v763 = vunpack.c.l.b16 %v187
  %v764 = vunpack.c.l.b16 %v188
  %v765 = vunpack.c.l.b16 %v189
  %v766 = vunpack.c.l.b16 %v190
  %v767 = vunpack.c.l.b16 %v191
  %v768 = vunpack.c.l.b16 %v192
  %v769 = vunpack.c.l.b16 %v193
  %v770 = vunpack.c.l.b16 %v194
  %v771 = vunpack.c.l.b16 %v195
  %v772 = vunpack.c.l.b16 %v196
  %v773 = vunpack.c.l.b16 %v197
  %v774 = vunpack.c.l.b16 %v198
  %v775 = vunpack.c.l.b16 %v199
  %v776 = vunpack.c.l.b16 %v200
  %v777 = vunpack.c.l.b16 %v201
  %v778 = vunpack.c.l.b16 %v202
  %v779 = vunpack.c.l.b16 %v203
  %v780 = vunpack.c.l.b16 %v204
  %v781 = vunpack.c.l.b16 %v205
  %v782 = vunpack.c.l.b16 %v206
  %v783 = vunpack.c.l.b16 %v207
  %v784 = vunpack.c.l.b16 %v208
  %v785 = vunpack.c.l.b16 %v209
  %v786 = vpack.c.b16 %v659, %v658
  %v787 = vpack.c.b16 %v661, %v660
  %v788 = vpack.c.b16 %v663, %v662
  %v789 = vpack.c.b16 %v665, %v664
  %v790 = vpack.c.b16 %v667, %v666
  %v791 = vpack.c.b16 %v669, %v668
  %v792 = vpack.c.b16 %v671, %v670
  %v793 = vpack.c.b16 %v673, %v672
  %v794 = vpack.c.b16 %v675, %v674
  %v795 = vpack.c.b16 %v677, %v676
  %v796 = vpack.c.b16 %v679, %v678
  %v797 = vpack.c.b16 %v681, %v680
  %v798 = vpack.c.b16 %v683, %v682
  %v799 = vpack.c.b16 %v685, %v684
  %v800 = vpack.c.b16 %v687, %v686
  %v801 = vpack.c.b16 %v689, %v688
  %v802 = vpack.c.b16 %v691, %v690
  %v803 = vpack.c.b16 %v693, %v692
  %v804 = vpack.c.b16 %v695, %v694
  %v805 = vpack.c.b16 %v697, %v696
  %v806 = vpack.c.b16 %v699, %v698
  %v807 = vpack.c.b16 %v701, %v700
  %v808 = vpack.c.b16 %v703, %v702
  %v809 = vpack.c.b16 %v705, %v704
  %v810 = vpack.c.b16 %v707, %v706
  %v811 = vpack.c.b16 %v709, %v708
  %v812 = vpack.c.b16 %v711, %v710
  %v813 = vpack.c.b16 %v713, %v712
  %v814 = vpack.c.b16 %v715, %v714
  %v815 = vpack.c.b16 %v717, %v716
  %v816 = vpack.c.b16 %v719, %v718
  %v817 = vpack.c.b16 %v721, %v720
  %v818 = vpack.c.b16 %v723, %v722
  %v819 = vpack.c.b16 %v725, %v724
  %v820 = vpack.c.b16 %v727, %v726
  %v821 = vpack.c.b16 %v729, %v728
  %v822 = vpack.c.b16 %v731, %v730
  %v823 = vpack.c.b16 %v733, %v732
  %v824 = vpack.c.b16 %v735, %v734
  %v825 = vpack.c.b16 %v737, %v736
  %v826 = vpack.c.b16 %v739, %v738
  %v827 = vpack.c.b16 %v741, %v740
  %v828 = vpack.c.b16 %v743, %v742
  %v829 = vpack.c.b16 %v745, %v744
  %v830 = vpack.c.b16 %v747, %v746
  %v831 = vpack.c.b16 %v749, %v748
  %v832 = vpack.c.b16 %v751, %v750
  %v833 = vpack.c.b16 %v753, %v752
  %v834 = vpack.c.b16 %v755, %v754
  %v835 = vpack.c.b16 %v757, %v756
  %v836 = vpack.c.b16 %v759, %v758
  %v837 = vpack.c.b16 %v761, %v760
  %v838 = vpack.c.b16 %v763, %v762
  %v839 = vpack.c.b16 %v765, %v764
  %v840 = vpack.c.b16 %v767, %v766
  %v841 = vpack.c.b16 %v769, %v768
  %v842 = vpack.c.b16 %v771, %v770
  %v843 = vpack.c.b16 %v773, %v772
  %v844 = vpack.c.b16 %v775, %v774
  %v845 = vpack.c.b16 %v777, %v776
  %v846 = vpack.c.b16 %v779, %v778
  %v847 = vpack.c.b16 %v781, %v780
  %v848 = vpack.c.b16 %v783, %v782
  %v849 = vpack.c.b16 %v785, %v784
  %914 = vmatprep.subr.bf16.mxu0 0
  %915 = vmatpush1.bf16.msra.mxu0 %v786
  %916 = vmatprep.subr.bf16.mxu0 0
  %917 = vmatpush1.bf16.msra.mxu0 %v787
  %918 = vmatprep.subr.bf16.mxu0 0
  %919 = vmatpush1.bf16.msra.mxu0 %v788
  %920 = vmatprep.subr.bf16.mxu0 0
  %921 = vmatpush1.bf16.msra.mxu0 %v789
  %922 = vmatprep.subr.bf16.mxu0 0
  %923 = vmatpush1.bf16.msra.mxu0 %v790
  %924 = vmatprep.subr.bf16.mxu0 0
  %925 = vmatpush1.bf16.msra.mxu0 %v791
  %926 = vmatprep.subr.bf16.mxu0 0
  %927 = vmatpush1.bf16.msra.mxu0 %v792
  %928 = vmatprep.subr.bf16.mxu0 0
  %929 = vmatpush1.bf16.msra.mxu0 %v793
  %930 = vmatprep.subr.bf16.mxu0 0
  %931 = vmatpush1.bf16.msra.mxu0 %v794
  %932 = vmatprep.subr.bf16.mxu0 0
  %933 = vmatpush1.bf16.msra.mxu0 %v795
  %934 = vmatprep.subr.bf16.mxu0 0
  %935 = vmatpush1.bf16.msra.mxu0 %v796
  %936 = vmatprep.subr.bf16.mxu0 0
  %937 = vmatpush1.bf16.msra.mxu0 %v797
  %938 = vmatprep.subr.bf16.mxu0 0
  %939 = vmatpush1.bf16.msra.mxu0 %v798
  %940 = vmatprep.subr.bf16.mxu0 0
  %941 = vmatpush1.bf16.msra.mxu0 %v799
  %942 = vmatprep.subr.bf16.mxu0 0
  %943 = vmatpush1.bf16.msra.mxu0 %v800
  %944 = vmatprep.subr.bf16.mxu0 0
  %945 = vmatpush1.bf16.msra.mxu0 %v801
  %946 = vmatprep.mubr.bf16.mxu0 %v403
  %947 = vmatmul.mubr.bf16.gmra.mrb[0].mxu0 %v402
  %v948 = vpop.f32.mrb[0].mxu0
  %v949 = vadd.f32 0.0, %v948
  %v950 = vpop.f32.mrb[0].mxu0
  %v951 = vpop.f32.mrb[0].mxu0
  %v952 = vadd.f32 0.0, %v951
  %v953 = vpop.f32.mrb[0].mxu0
  %954 = vmatprep.mubr.bf16.mxu0 %v411
  %955 = vmatmul.mubr.bf16.gmra.mrb[0].mxu0 %v410
  %v956 = vpop.f32.mrb[0].mxu0
  %v957 = vadd.f32 0.0, %v956
  %v958 = vpop.f32.mrb[0].mxu0
  %v959 = vpop.f32.mrb[0].mxu0
  %v960 = vadd.f32 0.0, %v959
  %v961 = vpop.f32.mrb[0].mxu0
  %962 = vmatprep.mubr.bf16.mxu0 %v419
  %963 = vmatmul.mubr.bf16.gmra.mrb[0].mxu0 %v418
  %v964 = vpop.f32.mrb[0].mxu0
  %v965 = vadd.f32 0.0, %v964
  %v966 = vpop.f32.mrb[0].mxu0
  %v967 = vpop.f32.mrb[0].mxu0
  %v968 = vadd.f32 0.0, %v967
  %v969 = vpop.f32.mrb[0].mxu0
  %970 = vmatprep.mubr.bf16.mxu0 %v427
  %971 = vmatmul.mubr.bf16.gmra.mrb[0].mxu0 %v426
  %v972 = vpop.f32.mrb[0].mxu0
  %v973 = vadd.f32 0.0, %v972
  %v974 = vpop.f32.mrb[0].mxu0
  %v975 = vpop.f32.mrb[0].mxu0
  %v976 = vadd.f32 0.0, %v975
  %v977 = vpop.f32.mrb[0].mxu0
  %978 = vmatprep.mubr.bf16.mxu0 %v435
  %979 = vmatmul.mubr.bf16.gmra.mrb[0].mxu0 %v434
  %v980 = vpop.f32.mrb[0].mxu0
  %v981 = vadd.f32 0.0, %v980
  %v982 = vpop.f32.mrb[0].mxu0
  %v983 = vpop.f32.mrb[0].mxu0
  %v984 = vadd.f32 0.0, %v983
  %v985 = vpop.f32.mrb[0].mxu0
  %986 = vmatprep.mubr.bf16.mxu0 %v443
  %987 = vmatmul.mubr.bf16.gmra.mrb[0].mxu0 %v442
  %v988 = vpop.f32.mrb[0].mxu0
  %v989 = vadd.f32 0.0, %v988
  %v990 = vpop.f32.mrb[0].mxu0
  %v991 = vpop.f32.mrb[0].mxu0
  %v992 = vadd.f32 0.0, %v991
  %v993 = vpop.f32.mrb[0].mxu0
  %994 = vmatprep.mubr.bf16.mxu0 %v451
  %995 = vmatmul.mubr.bf16.gmra.mrb[0].mxu0 %v450
  %v996 = vpop.f32.mrb[0].mxu0
  %v997 = vadd.f32 0.0, %v996
  %v998 = vpop.f32.mrb[0].mxu0
  %v999 = vpop.f32.mrb[0].mxu0
  %v1000 = vadd.f32 0.0, %v999
  %v1001 = vpop.f32.mrb[0].mxu0
  %1002 = vmatprep.mubr.bf16.mxu0 %v459
  %1003 = vmatmul.mubr.bf16.gmra.mrb[0].mxu0 %v458
  %v1004 = vpop.f32.mrb[0].mxu0
  %v1005 = vadd.f32 0.0, %v1004
  %v1006 = vpop.f32.mrb[0].mxu0
  %v1007 = vpop.f32.mrb[0].mxu0
  %v1008 = vadd.f32 0.0, %v1007
  %v1009 = vpop.f32.mrb[0].mxu0
  %1010 = vdwg.mxu0
  %1011 = vmatprep.subr.bf16.mxu0 0
  %1012 = vmatpush1.bf16.msra.mxu0 %v802
  %1013 = vmatprep.subr.bf16.mxu0 0
  %1014 = vmatpush1.bf16.msra.mxu0 %v803
  %1015 = vmatprep.subr.bf16.mxu0 0
  %1016 = vmatpush1.bf16.msra.mxu0 %v804
  %1017 = vmatprep.subr.bf16.mxu0 0
  %1018 = vmatpush1.bf16.msra.mxu0 %v805
  %1019 = vmatprep.subr.bf16.mxu0 0
  %1020 = vmatpush1.bf16.msra.mxu0 %v806
  %1021 = vmatprep.subr.bf16.mxu0 0
  %1022 = vmatpush1.bf16.msra.mxu0 %v807
  %1023 = vmatprep.subr.bf16.mxu0 0
  %1024 = vmatpush1.bf16.msra.mxu0 %v808
  %1025 = vmatprep.subr.bf16.mxu0 0
  %1026 = vmatpush1.bf16.msra.mxu0 %v809
  %1027 = vmatprep.subr.bf16.mxu0 0
  %1028 = vmatpush1.bf16.msra.mxu0 %v810
  %1029 = vmatprep.subr.bf16.mxu0 0
  %1030 = vmatpush1.bf16.msra.mxu0 %v811
  %1031 = vmatprep.subr.bf16.mxu0 0
  %1032 = vmatpush1.bf16.msra.mxu0 %v812
  %1033 = vmatprep.subr.bf16.mxu0 0
  %1034 = vmatpush1.bf16.msra.mxu0 %v813
  %1035 = vmatprep.subr.bf16.mxu0 0
  %1036 = vmatpush1.bf16.msra.mxu0 %v814
  %1037 = vmatprep.subr.bf16.mxu0 0
  %1038 = vmatpush1.bf16.msra.mxu0 %v815
  %1039 = vmatprep.subr.bf16.mxu0 0
  %1040 = vmatpush1.bf16.msra.mxu0 %v816
  %1041 = vmatprep.subr.bf16.mxu0 0
  %1042 = vmatpush1.bf16.msra.mxu0 %v817
  %1043 = vmatprep.mubr.bf16.mxu0 %v405
  %1044 = vmatmul.mubr.bf16.gmra.mrb[0].mxu0 %v404
  %v1045 = vpop.f32.mrb[0].mxu0
  %v1046 = vadd.f32 %v949, %v1045
  %v1047 = vpop.f32.mrb[0].mxu0
  %v1048 = vpop.f32.mrb[0].mxu0
  %v1049 = vadd.f32 %v952, %v1048
  %v1050 = vpop.f32.mrb[0].mxu0
  %1051 = vmatprep.mubr.bf16.mxu0 %v413
  %1052 = vmatmul.mubr.bf16.gmra.mrb[0].mxu0 %v412
  %v1053 = vpop.f32.mrb[0].mxu0
  %v1054 = vadd.f32 %v957, %v1053
  %v1055 = vpop.f32.mrb[0].mxu0
  %v1056 = vpop.f32.mrb[0].mxu0
  %v1057 = vadd.f32 %v960, %v1056
  %v1058 = vpop.f32.mrb[0].mxu0
  %1059 = vmatprep.mubr.bf16.mxu0 %v421
  %1060 = vmatmul.mubr.bf16.gmra.mrb[0].mxu0 %v420
  %v1061 = vpop.f32.mrb[0].mxu0
  %v1062 = vadd.f32 %v965, %v1061
  %v1063 = vpop.f32.mrb[0].mxu0
  %v1064 = vpop.f32.mrb[0].mxu0
  %v1065 = vadd.f32 %v968, %v1064
  %v1066 = vpop.f32.mrb[0].mxu0
  %1067 = vmatprep.mubr.bf16.mxu0 %v429
  %1068 = vmatmul.mubr.bf16.gmra.mrb[0].mxu0 %v428
  %v1069 = vpop.f32.mrb[0].mxu0
  %v1070 = vadd.f32 %v973, %v1069
  %v1071 = vpop.f32.mrb[0].mxu0
  %v1072 = vpop.f32.mrb[0].mxu0
  %v1073 = vadd.f32 %v976, %v1072
  %v1074 = vpop.f32.mrb[0].mxu0
  %1075 = vmatprep.mubr.bf16.mxu0 %v437
  %1076 = vmatmul.mubr.bf16.gmra.mrb[0].mxu0 %v436
  %v1077 = vpop.f32.mrb[0].mxu0
  %v1078 = vadd.f32 %v981, %v1077
  %v1079 = vpop.f32.mrb[0].mxu0
  %v1080 = vpop.f32.mrb[0].mxu0
  %v1081 = vadd.f32 %v984, %v1080
  %v1082 = vpop.f32.mrb[0].mxu0
  %1083 = vmatprep.mubr.bf16.mxu0 %v445
  %1084 = vmatmul.mubr.bf16.gmra.mrb[0].mxu0 %v444
  %v1085 = vpop.f32.mrb[0].mxu0
  %v1086 = vadd.f32 %v989, %v1085
  %v1087 = vpop.f32.mrb[0].mxu0
  %v1088 = vpop.f32.mrb[0].mxu0
  %v1089 = vadd.f32 %v992, %v1088
  %v1090 = vpop.f32.mrb[0].mxu0
  %1091 = vmatprep.mubr.bf16.mxu0 %v453
  %1092 = vmatmul.mubr.bf16.gmra.mrb[0].mxu0 %v452
  %v1093 = vpop.f32.mrb[0].mxu0
  %v1094 = vadd.f32 %v997, %v1093
  %v1095 = vpop.f32.mrb[0].mxu0
  %v1096 = vpop.f32.mrb[0].mxu0
  %v1097 = vadd.f32 %v1000, %v1096
  %v1098 = vpop.f32.mrb[0].mxu0
  %1099 = vmatprep.mubr.bf16.mxu0 %v461
  %1100 = vmatmul.mubr.bf16.gmra.mrb[0].mxu0 %v460
  %v1101 = vpop.f32.mrb[0].mxu0
  %v1102 = vadd.f32 %v1005, %v1101
  %v1103 = vpop.f32.mrb[0].mxu0
  %v1104 = vpop.f32.mrb[0].mxu0
  %v1105 = vadd.f32 %v1008, %v1104
  %v1106 = vpop.f32.mrb[0].mxu0
  %1107 = vdwg.mxu0
  %1108 = vmatprep.subr.bf16.mxu0 0
  %1109 = vmatpush1.bf16.msra.mxu0 %v818
  %1110 = vmatprep.subr.bf16.mxu0 0
  %1111 = vmatpush1.bf16.msra.mxu0 %v819
  %1112 = vmatprep.subr.bf16.mxu0 0
  %1113 = vmatpush1.bf16.msra.mxu0 %v820
  %1114 = vmatprep.subr.bf16.mxu0 0
  %1115 = vmatpush1.bf16.msra.mxu0 %v821
  %1116 = vmatprep.subr.bf16.mxu0 0
  %1117 = vmatpush1.bf16.msra.mxu0 %v822
  %1118 = vmatprep.subr.bf16.mxu0 0
  %1119 = vmatpush1.bf16.msra.mxu0 %v823
  %1120 = vmatprep.subr.bf16.mxu0 0
  %1121 = vmatpush1.bf16.msra.mxu0 %v824
  %1122 = vmatprep.subr.bf16.mxu0 0
  %1123 = vmatpush1.bf16.msra.mxu0 %v825
  %1124 = vmatprep.subr.bf16.mxu0 0
  %1125 = vmatpush1.bf16.msra.mxu0 %v826
  %1126 = vmatprep.subr.bf16.mxu0 0
  %1127 = vmatpush1.bf16.msra.mxu0 %v827
  %1128 = vmatprep.subr.bf16.mxu0 0
  %1129 = vmatpush1.bf16.msra.mxu0 %v828
  %1130 = vmatprep.subr.bf16.mxu0 0
  %1131 = vmatpush1.bf16.msra.mxu0 %v829
  %1132 = vmatprep.subr.bf16.mxu0 0
  %1133 = vmatpush1.bf16.msra.mxu0 %v830
  %1134 = vmatprep.subr.bf16.mxu0 0
  %1135 = vmatpush1.bf16.msra.mxu0 %v831
  %1136 = vmatprep.subr.bf16.mxu0 0
  %1137 = vmatpush1.bf16.msra.mxu0 %v832
  %1138 = vmatprep.subr.bf16.mxu0 0
  %1139 = vmatpush1.bf16.msra.mxu0 %v833
  %1140 = vmatprep.mubr.bf16.mxu0 %v407
  %1141 = vmatmul.mubr.bf16.gmra.mrb[0].mxu0 %v406
  %v1142 = vpop.f32.mrb[0].mxu0
  %v1143 = vadd.f32 %v1046, %v1142
  %v1144 = vpop.f32.mrb[0].mxu0
  %v1145 = vpop.f32.mrb[0].mxu0
  %v1146 = vadd.f32 %v1049, %v1145
  %v1147 = vpop.f32.mrb[0].mxu0
  %1148 = vmatprep.mubr.bf16.mxu0 %v415
  %1149 = vmatmul.mubr.bf16.gmra.mrb[0].mxu0 %v414
  %v1150 = vpop.f32.mrb[0].mxu0
  %v1151 = vadd.f32 %v1054, %v1150
  %v1152 = vpop.f32.mrb[0].mxu0
  %v1153 = vpop.f32.mrb[0].mxu0
  %v1154 = vadd.f32 %v1057, %v1153
  %v1155 = vpop.f32.mrb[0].mxu0
  %1156 = vmatprep.mubr.bf16.mxu0 %v423
  %1157 = vmatmul.mubr.bf16.gmra.mrb[0].mxu0 %v422
  %v1158 = vpop.f32.mrb[0].mxu0
  %v1159 = vadd.f32 %v1062, %v1158
  %v1160 = vpop.f32.mrb[0].mxu0
  %v1161 = vpop.f32.mrb[0].mxu0
  %v1162 = vadd.f32 %v1065, %v1161
  %v1163 = vpop.f32.mrb[0].mxu0
  %1164 = vmatprep.mubr.bf16.mxu0 %v431
  %1165 = vmatmul.mubr.bf16.gmra.mrb[0].mxu0 %v430
  %v1166 = vpop.f32.mrb[0].mxu0
  %v1167 = vadd.f32 %v1070, %v1166
  %v1168 = vpop.f32.mrb[0].mxu0
  %v1169 = vpop.f32.mrb[0].mxu0
  %v1170 = vadd.f32 %v1073, %v1169
  %v1171 = vpop.f32.mrb[0].mxu0
  %1172 = vmatprep.mubr.bf16.mxu0 %v439
  %1173 = vmatmul.mubr.bf16.gmra.mrb[0].mxu0 %v438
  %v1174 = vpop.f32.mrb[0].mxu0
  %v1175 = vadd.f32 %v1078, %v1174
  %v1176 = vpop.f32.mrb[0].mxu0
  %v1177 = vpop.f32.mrb[0].mxu0
  %v1178 = vadd.f32 %v1081, %v1177
  %v1179 = vpop.f32.mrb[0].mxu0
  %1180 = vmatprep.mubr.bf16.mxu0 %v447
  %1181 = vmatmul.mubr.bf16.gmra.mrb[0].mxu0 %v446
  %v1182 = vpop.f32.mrb[0].mxu0
  %v1183 = vadd.f32 %v1086, %v1182
  %v1184 = vpop.f32.mrb[0].mxu0
  %v1185 = vpop.f32.mrb[0].mxu0
  %v1186 = vadd.f32 %v1089, %v1185
  %v1187 = vpop.f32.mrb[0].mxu0
  %1188 = vmatprep.mubr.bf16.mxu0 %v455
  %1189 = vmatmul.mubr.bf16.gmra.mrb[0].mxu0 %v454
  %v1190 = vpop.f32.mrb[0].mxu0
  %v1191 = vadd.f32 %v1094, %v1190
  %v1192 = vpop.f32.mrb[0].mxu0
  %v1193 = vpop.f32.mrb[0].mxu0
  %v1194 = vadd.f32 %v1097, %v1193
  %v1195 = vpop.f32.mrb[0].mxu0
  %1196 = vmatprep.mubr.bf16.mxu0 %v463
  %1197 = vmatmul.mubr.bf16.gmra.mrb[0].mxu0 %v462
  %v1198 = vpop.f32.mrb[0].mxu0
  %v1199 = vadd.f32 %v1102, %v1198
  %v1200 = vpop.f32.mrb[0].mxu0
  %v1201 = vpop.f32.mrb[0].mxu0
  %v1202 = vadd.f32 %v1105, %v1201
  %v1203 = vpop.f32.mrb[0].mxu0
  %1204 = vdwg.mxu0
  %1205 = vmatprep.subr.bf16.mxu0 0
  %1206 = vmatpush1.bf16.msra.mxu0 %v834
  %1207 = vmatprep.subr.bf16.mxu0 0
  %1208 = vmatpush1.bf16.msra.mxu0 %v835
  %1209 = vmatprep.subr.bf16.mxu0 0
  %1210 = vmatpush1.bf16.msra.mxu0 %v836
  %1211 = vmatprep.subr.bf16.mxu0 0
  %1212 = vmatpush1.bf16.msra.mxu0 %v837
  %1213 = vmatprep.subr.bf16.mxu0 0
  %1214 = vmatpush1.bf16.msra.mxu0 %v838
  %1215 = vmatprep.subr.bf16.mxu0 0
  %1216 = vmatpush1.bf16.msra.mxu0 %v839
  %1217 = vmatprep.subr.bf16.mxu0 0
  %1218 = vmatpush1.bf16.msra.mxu0 %v840
  %1219 = vmatprep.subr.bf16.mxu0 0
  %1220 = vmatpush1.bf16.msra.mxu0 %v841
  %1221 = vmatprep.subr.bf16.mxu0 0
  %1222 = vmatpush1.bf16.msra.mxu0 %v842
  %1223 = vmatprep.subr.bf16.mxu0 0
  %1224 = vmatpush1.bf16.msra.mxu0 %v843
  %1225 = vmatprep.subr.bf16.mxu0 0
  %1226 = vmatpush1.bf16.msra.mxu0 %v844
  %1227 = vmatprep.subr.bf16.mxu0 0
  %1228 = vmatpush1.bf16.msra.mxu0 %v845
  %1229 = vmatprep.subr.bf16.mxu0 0
  %1230 = vmatpush1.bf16.msra.mxu0 %v846
  %1231 = vmatprep.subr.bf16.mxu0 0
  %1232 = vmatpush1.bf16.msra.mxu0 %v847
  %1233 = vmatprep.subr.bf16.mxu0 0
  %1234 = vmatpush1.bf16.msra.mxu0 %v848
  %1235 = vmatprep.subr.bf16.mxu0 0
  %1236 = vmatpush1.bf16.msra.mxu0 %v849
  %1237 = vmatprep.mubr.bf16.mxu0 %v409
  %1238 = vmatmul.mubr.bf16.gmra.mrb[0].mxu0 %v408
  %v1239 = vpop.f32.mrb[0].mxu0
  %v1240 = vadd.f32 %v1143, %v1239
  %v1241 = vpop.f32.mrb[0].mxu0
  %v1242 = vpop.f32.mrb[0].mxu0
  %v1243 = vadd.f32 %v1146, %v1242
  %v1244 = vpop.f32.mrb[0].mxu0
  %1245 = vmatprep.mubr.bf16.mxu0 %v417
  %1246 = vmatmul.mubr.bf16.gmra.mrb[0].mxu0 %v416
  %v1247 = vpop.f32.mrb[0].mxu0
  %v1248 = vadd.f32 %v1151, %v1247
  %v1249 = vpop.f32.mrb[0].mxu0
  %v1250 = vpop.f32.mrb[0].mxu0
  %v1251 = vadd.f32 %v1154, %v1250
  %v1252 = vpop.f32.mrb[0].mxu0
  %1253 = vmatprep.mubr.bf16.mxu0 %v425
  %1254 = vmatmul.mubr.bf16.gmra.mrb[0].mxu0 %v424
  %v1255 = vpop.f32.mrb[0].mxu0
  %v1256 = vadd.f32 %v1159, %v1255
  %v1257 = vpop.f32.mrb[0].mxu0
  %v1258 = vpop.f32.mrb[0].mxu0
  %v1259 = vadd.f32 %v1162, %v1258
  %v1260 = vpop.f32.mrb[0].mxu0
  %1261 = vmatprep.mubr.bf16.mxu0 %v433
  %1262 = vmatmul.mubr.bf16.gmra.mrb[0].mxu0 %v432
  %v1263 = vpop.f32.mrb[0].mxu0
  %v1264 = vadd.f32 %v1167, %v1263
  %v1265 = vpop.f32.mrb[0].mxu0
  %v1266 = vpop.f32.mrb[0].mxu0
  %v1267 = vadd.f32 %v1170, %v1266
  %v1268 = vpop.f32.mrb[0].mxu0
  %1269 = vmatprep.mubr.bf16.mxu0 %v441
  %1270 = vmatmul.mubr.bf16.gmra.mrb[0].mxu0 %v440
  %v1271 = vpop.f32.mrb[0].mxu0
  %v1272 = vadd.f32 %v1175, %v1271
  %v1273 = vpop.f32.mrb[0].mxu0
  %v1274 = vpop.f32.mrb[0].mxu0
  %v1275 = vadd.f32 %v1178, %v1274
  %v1276 = vpop.f32.mrb[0].mxu0
  %1277 = vmatprep.mubr.bf16.mxu0 %v449
  %1278 = vmatmul.mubr.bf16.gmra.mrb[0].mxu0 %v448
  %v1279 = vpop.f32.mrb[0].mxu0
  %v1280 = vadd.f32 %v1183, %v1279
  %v1281 = vpop.f32.mrb[0].mxu0
  %v1282 = vpop.f32.mrb[0].mxu0
  %v1283 = vadd.f32 %v1186, %v1282
  %v1284 = vpop.f32.mrb[0].mxu0
  %1285 = vmatprep.mubr.bf16.mxu0 %v457
  %1286 = vmatmul.mubr.bf16.gmra.mrb[0].mxu0 %v456
  %v1287 = vpop.f32.mrb[0].mxu0
  %v1288 = vadd.f32 %v1191, %v1287
  %v1289 = vpop.f32.mrb[0].mxu0
  %v1290 = vpop.f32.mrb[0].mxu0
  %v1291 = vadd.f32 %v1194, %v1290
  %v1292 = vpop.f32.mrb[0].mxu0
  %1293 = vmatprep.mubr.bf16.mxu0 %v465
  %1294 = vmatmul.mubr.bf16.gmra.mrb[0].mxu0 %v464
  %v1295 = vpop.f32.mrb[0].mxu0
  %v1296 = vadd.f32 %v1199, %v1295
  %v1297 = vpop.f32.mrb[0].mxu0
  %v1298 = vpop.f32.mrb[0].mxu0
  %v1299 = vadd.f32 %v1202, %v1298
  %v1300 = vpop.f32.mrb[0].mxu0
  %1301 = vdwg.mxu0
  %v1302 = vadd.f32 %v1240, %v1243
  %v1303 = vadd.f32 %v1302, %v1248
  %v1304 = vadd.f32 %v1303, %v1251
  %v1305 = vadd.f32 %v1304, %v1256
  %v1306 = vadd.f32 %v1305, %v1259
  %v1307 = vadd.f32 %v1306, %v1264
  %v1308 = vadd.f32 %v1307, %v1267
  %v1309 = vadd.f32 %v1308, %v1272
  %v1310 = vadd.f32 %v1309, %v1275
  %v1311 = vadd.f32 %v1310, %v1280
  %v1312 = vadd.f32 %v1311, %v1283
  %v1313 = vadd.f32 %v1312, %v1288
  %v1314 = vadd.f32 %v1313, %v1291
  %v1315 = vadd.f32 %v1314, %v1296
  %v1316 = vadd.f32 %v1315, %v1299
  %v1317 = vrot.slane %v1316, 4
  %v1318 = vadd.f32 %v1316, %v1317
  %v1319 = vrot.slane %v1318, 2
  %v1320 = vadd.f32 %v1318, %v1319
  %v1321 = vrot.slane %v1320, 1
  %v1322 = vadd.f32 %v1320, %v1321
  %1323 = vst [vmem:[%s4] sm:$0x1] %v1322
  %v1324 = vmul.f32 %v1240, %v1240
  %v1325 = vmul.f32 %v1243, %v1243
  %v1326 = vmul.f32 %v1248, %v1248
  %v1327 = vmul.f32 %v1251, %v1251
  %v1328 = vmul.f32 %v1256, %v1256
  %v1329 = vmul.f32 %v1259, %v1259
  %v1330 = vmul.f32 %v1264, %v1264
  %v1331 = vmul.f32 %v1267, %v1267
  %v1332 = vmul.f32 %v1272, %v1272
  %v1333 = vmul.f32 %v1275, %v1275
  %v1334 = vmul.f32 %v1280, %v1280
  %v1335 = vmul.f32 %v1283, %v1283
  %v1336 = vmul.f32 %v1288, %v1288
  %v1337 = vmul.f32 %v1291, %v1291
  %v1338 = vmul.f32 %v1296, %v1296
  %v1339 = vmul.f32 %v1299, %v1299
  %v1340 = vadd.f32 %v1324, %v1325
  %v1341 = vadd.f32 %v1340, %v1326
  %v1342 = vadd.f32 %v1341, %v1327
  %v1343 = vadd.f32 %v1342, %v1328
  %v1344 = vadd.f32 %v1343, %v1329
  %v1345 = vadd.f32 %v1344, %v1330
  %v1346 = vadd.f32 %v1345, %v1331
  %v1347 = vadd.f32 %v1346, %v1332
  %v1348 = vadd.f32 %v1347, %v1333
  %v1349 = vadd.f32 %v1348, %v1334
  %v1350 = vadd.f32 %v1349, %v1335
  %v1351 = vadd.f32 %v1350, %v1336
  %v1352 = vadd.f32 %v1351, %v1337
  %v1353 = vadd.f32 %v1352, %v1338
  %v1354 = vadd.f32 %v1353, %v1339
  %v1355 = vrot.slane %v1354, 4
  %v1356 = vadd.f32 %v1354, %v1355
  %v1357 = vrot.slane %v1356, 2
  %v1358 = vadd.f32 %v1356, %v1357
  %v1359 = vrot.slane %v1358, 1
  %v1360 = vadd.f32 %v1358, %v1359
  %1361 = vst [vmem:[%s5] sm:$0x1] %v1360
  %v1362 = vld [vmem:[%s2] sm:$0x1]
  %v1364 = vlaneseq
  %v1365 = vshrl.u32 %v1364, 7
  %v1366 = vsub.s32 0, %v1365
  %v1367 = vrot.slane %v1362, %v1366
  %v1369 = vadd.f32 %v1240, %v1367
  %v1370 = vadd.f32 %v1243, %v1367
  %v1371 = vadd.f32 %v1248, %v1367
  %v1372 = vadd.f32 %v1251, %v1367
  %v1373 = vadd.f32 %v1256, %v1367
  %v1374 = vadd.f32 %v1259, %v1367
  %v1375 = vadd.f32 %v1264, %v1367
  %v1376 = vadd.f32 %v1267, %v1367
  %v1377 = vadd.f32 %v1272, %v1367
  %v1378 = vadd.f32 %v1275, %v1367
  %v1379 = vadd.f32 %v1280, %v1367
  %v1380 = vadd.f32 %v1283, %v1367
  %v1381 = vadd.f32 %v1288, %v1367
  %v1382 = vadd.f32 %v1291, %v1367
  %v1383 = vadd.f32 %v1296, %v1367
  %v1384 = vadd.f32 %v1299, %v1367
  %v1385 = vpack.c.bf16 %v1370, %v1369
  %v1386 = vpack.c.bf16 %v1372, %v1371
  %v1387 = vpack.c.bf16 %v1374, %v1373
  %v1388 = vpack.c.bf16 %v1376, %v1375
  %v1389 = vpack.c.bf16 %v1378, %v1377
  %v1390 = vpack.c.bf16 %v1380, %v1379
  %v1391 = vpack.c.bf16 %v1382, %v1381
  %v1392 = vpack.c.bf16 %v1384, %v1383
  %v1401 = vunpack.c.l.b16 %v1385
  %v1402 = vunpack.c.h.b16 %v1385
  %v1403 = vunpack.c.l.b16 %v1386
  %v1404 = vunpack.c.h.b16 %v1386
  %v1405 = vunpack.c.l.b16 %v1387
  %v1406 = vunpack.c.h.b16 %v1387
  %v1407 = vunpack.c.l.b16 %v1388
  %v1408 = vunpack.c.h.b16 %v1388
  %v1409 = vunpack.c.l.b16 %v1389
  %v1410 = vunpack.c.h.b16 %v1389
  %v1411 = vunpack.c.l.b16 %v1390
  %v1412 = vunpack.c.h.b16 %v1390
  %v1413 = vunpack.c.l.b16 %v1391
  %v1414 = vunpack.c.h.b16 %v1391
  %v1415 = vunpack.c.l.b16 %v1392
  %v1416 = vunpack.c.h.b16 %v1392
  %v1417 = vpack.c.b16 %v1401, %v1401
  %v1418 = vpack.c.b16 %v1402, %v1402
  %v1419 = vpack.c.b16 %v1403, %v1403
  %v1420 = vpack.c.b16 %v1404, %v1404
  %v1421 = vpack.c.b16 %v1405, %v1405
  %v1422 = vpack.c.b16 %v1406, %v1406
  %v1423 = vpack.c.b16 %v1407, %v1407
  %v1424 = vpack.c.b16 %v1408, %v1408
  %v1425 = vpack.c.b16 %v1409, %v1409
  %v1426 = vpack.c.b16 %v1410, %v1410
  %v1427 = vpack.c.b16 %v1411, %v1411
  %v1428 = vpack.c.b16 %v1412, %v1412
  %v1429 = vpack.c.b16 %v1413, %v1413
  %v1430 = vpack.c.b16 %v1414, %v1414
  %v1431 = vpack.c.b16 %v1415, %v1415
  %v1432 = vpack.c.b16 %v1416, %v1416
  %1449 = vst [vmem:[%s3] sm:$0xf] %v1417
  %1450 = vst [vmem:[%s3 + $0x4] sm:$0xf] %v1418
  %1451 = vst [vmem:[%s3 + $0x8] sm:$0xf] %v1419
  %1452 = vst [vmem:[%s3 + $0xc] sm:$0xf] %v1420
  %1453 = vst [vmem:[%s3 + $0x10] sm:$0xf] %v1421
  %1454 = vst [vmem:[%s3 + $0x14] sm:$0xf] %v1422
  %1455 = vst [vmem:[%s3 + $0x18] sm:$0xf] %v1423
  %1456 = vst [vmem:[%s3 + $0x1c] sm:$0xf] %v1424
  %1457 = vst [vmem:[%s3 + $0x20] sm:$0xf] %v1425
  %1458 = vst [vmem:[%s3 + $0x24] sm:$0xf] %v1426
  %1459 = vst [vmem:[%s3 + $0x28] sm:$0xf] %v1427
  %1460 = vst [vmem:[%s3 + $0x2c] sm:$0xf] %v1428
  %1461 = vst [vmem:[%s3 + $0x30] sm:$0xf] %v1429
  %1462 = vst [vmem:[%s3 + $0x34] sm:$0xf] %v1430
  %1463 = vst [vmem:[%s3 + $0x38] sm:$0xf] %v1431
  %1464 = vst [vmem:[%s3 + $0x3c] sm:$0xf] %v1432
  // Predicated region
  $region14: #{a_call__.41} parent=0 // pred_check
    _
  $region15: #{a_call__.41} parent=0 // pred_check_branch
    %1466 = sbr.rel (0) target = $region17
  $region16: #{a_call__.41} parent=0 // pred_region
    _
  $region17: #{a_call__.41} parent=0 // pred_fallthru
    _
  // Predicated region
  $region18: #{a_call__.41} parent=0 // pred_check
    _
  $region19: #{a_call__.41} parent=0 // pred_check_branch
    %1468 = sbr.rel (0) target = $region21
  $region20: #{a_call__.41} parent=0 // pred_region
    _
  $region21: #{a_call__.41} parent=0 // pred_fallthru
    _
  // Predicated region
  $region22: #{a_call__.41} parent=0 // pred_check
    _
  $region23: #{a_call__.41} parent=0 // pred_check_branch
    %1470 = sbr.rel (0) target = $region25
  $region24: #{a_call__.41} parent=0 // pred_region
    _
  $region25: #{a_call__.41} parent=0 // pred_fallthru
    _
  // Predicated region
  $region26: #{a_call__.41} parent=0 // pred_check
    _
  $region27: #{a_call__.41} parent=0 // pred_check_branch
    %1472 = sbr.rel (0) target = $region29
  $region28: #{a_call__.41} parent=0 // pred_region
    _
  $region29: #{a_call__.41} parent=0 // pred_fallthru
    _
  // Predicated region
  $region30: #{a_call__.41} parent=0 // pred_check
    _
  $region31: #{a_call__.41} parent=0 // pred_check_branch
    %1474 = sbr.rel (0) target = $region33
  $region32: #{a_call__.41} parent=0 // pred_region
    _
  $region33: #{a_call__.41} parent=0 // pred_fallthru
    _
  // Predicated region
  $region34: #{a_call__.41} parent=0 // pred_check
    _
  $region35: #{a_call__.41} parent=0 // pred_check_branch
    %1476 = sbr.rel (0) target = $region37
  $region36: #{a_call__.41} parent=0 // pred_region
    _
  $region37: #{a_call__.41} parent=0 // pred_fallthru
    _

// kernel: a_call__.49
$region0: #{a_call__.49}
  #allocation0 [shape = 'u32[]', space=smem, size = 0x4, offset = 0x4, fixed_abs, tag = 'smem constant byte address 0x4 - core index']
  #allocation1 [shape = 'u32[144,128]{1,0:T(1,128)}', space=vmem, size = 0x12000, scoped, tag = 'internal scratch']
  %s0 = inlined_call_operand.vmem [shape: bf16[512,512], index: 0, kind: input, shape index: {}]
  %s1 = inlined_call_operand.vmem [shape: bf16[512,128], index: 1, kind: input, shape index: {}]
  %s2 = inlined_call_operand.vmem [shape: f32[1,128], index: 2, kind: input, shape index: {}]
  %s3 = inlined_call_operand.vmem [shape: bf16[512,128], index: 3, kind: output, shape index: {0}]
  %s4 = inlined_call_operand.vmem [shape: f32[4,1,128], index: 4, kind: output, shape index: {1}]
  %s5 = inlined_call_operand.vmem [shape: f32[4,1,128], index: 5, kind: output, shape index: {2}]
  %6 = xla_tuple %s3, %s4, %s5
  %s7 = sld [smem:[#allocation0]]
  $region61: #{a_call__.49} parent=0
    _
  %s9 = ssub.s32 1, %s7
  %s10 = scalar_select 0, %s9, %s7
  loop: start=0, step=1, limit=6
  $region2: #{a_call__.49} parent=0 // loop_pre_header
    _
  $region3: #{a_call__.49} parent=0 // loop_header
    %s12 = sphi 0, %s16
    %p13 = scmp.ge.s32.totalorder %s12, 6
    %s19 = sphi 0, %s31
    %s20 = sphi 0, %s27
    %s21 = sphi 0, %s19
    %s22 = sphi 0, %s20
    %s23 = sphi 0, %s21
    %s24 = sphi 0, %s22
    %s34 = sphi 0, %s36
    %s37 = sphi 0, %s34
    %s38 = sphi 0, %s37
    %s54 = sphi 0, %s38
    %s60 = sphi 0, %s62
    %s63 = sphi 0, %s60
    %s64 = sphi 0, %s63
    %s80 = sphi 0, %s64
    %s86 = sphi 0, %s88
    %s89 = sphi 0, %s86
    %s90 = sphi 0, %s89
    %s106 = sphi 0, %s90
    %s114 = sphi 0, %s116
    %s117 = sphi 0, %s114
    %s118 = sphi 0, %s117
    %s134 = sphi 0, %s118
    %s142 = sphi 0, %s144
    %s145 = sphi 0, %s142
    %s146 = sphi 0, %s145
    %s162 = sphi 0, %s146
    %s170 = sphi 0, %s172
    %s173 = sphi 0, %s170
    %s174 = sphi 0, %s173
    %s190 = sphi 0, %s174
  $region4: #{a_call__.49} parent=0 // loop_header_branch
    %15 = sbr.rel (%p13) target = $region8
  $region5: #{a_call__.49} parent=0 // loop_body
    %s17 = ssub.s32 %s12, 1
    %s18 = ssub.s32 %s12, 2
    %s25 = sadd.s32 1, %s20
    %p26 = scmp.ge.s32.totalorder %s25, 1
    %s27 = scalar_select %p26, 0, %s25
    %s28 = sadd.s32 1, %s19
    %s29 = scalar_select %p26, %s28, %s19
    %p30 = scmp.ge.s32.totalorder %s29, 4
    %s31 = scalar_select %p30, 0, %s29
    %s32 = ssub.s32 %s19, %s31
    %p33 = scmp.eq.s32.totalorder %s32, 0
    %s35 = sadd.s32 %s34, 1
    %s36 = scalar_select %p33, %s34, %s35
    %p39 = pneg %p33
    %p40 = scmp.eq.s32.totalorder %s12, 3
    %p41 = por %p39, %p40
    %p42 = scmp.ne.s32.totalorder %s34, %s37
    %p43 = scmp.eq.s32.totalorder %s12, 0
    %p44 = por %p42, %p43
    %p45 = scmp.ne.s32.totalorder %s34, %s37
    %p46 = scmp.eq.s32.totalorder %s17, 3
    %p47 = por %p45, %p46
    %p48 = scmp.ne.s32.totalorder %s37, %s38
    %p49 = scmp.eq.s32.totalorder %s17, 0
    %p50 = por %p48, %p49
    %p51 = scmp.ne.s32.totalorder %s37, %s38
    %p52 = scmp.eq.s32.totalorder %s18, 3
    %p53 = por %p51, %p52
    %p55 = scmp.ne.s32.totalorder %s38, %s54
    %p56 = scmp.eq.s32.totalorder %s18, 0
    %p57 = por %p55, %p56
    %s58 = ssub.s32 %s20, %s27
    %p59 = scmp.eq.s32.totalorder %s58, 0
    %s61 = sadd.s32 %s60, 1
    %s62 = scalar_select %p59, %s60, %s61
    %p65 = pneg %p59
    %p66 = scmp.eq.s32.totalorder %s12, 3
    %p67 = por %p65, %p66
    %p68 = scmp.ne.s32.totalorder %s60, %s63
    %p69 = scmp.eq.s32.totalorder %s12, 0
    %p70 = por %p68, %p69
    %p71 = scmp.ne.s32.totalorder %s60, %s63
    %p72 = scmp.eq.s32.totalorder %s17, 3
    %p73 = por %p71, %p72
    %p74 = scmp.ne.s32.totalorder %s63, %s64
    %p75 = scmp.eq.s32.totalorder %s17, 0
    %p76 = por %p74, %p75
    %p77 = scmp.ne.s32.totalorder %s63, %s64
    %p78 = scmp.eq.s32.totalorder %s18, 3
    %p79 = por %p77, %p78
    %p81 = scmp.ne.s32.totalorder %s64, %s80
    %p82 = scmp.eq.s32.totalorder %s18, 0
    %p83 = por %p81, %p82
    %s84 = ssub.s32 %s20, %s27
    %p85 = scmp.eq.s32.totalorder %s84, 0
    %s87 = sadd.s32 %s86, 1
    %s88 = scalar_select %p85, %s86, %s87
    %p91 = pneg %p85
    %p92 = scmp.eq.s32.totalorder %s12, 3
    %p93 = por %p91, %p92
    %p94 = scmp.ne.s32.totalorder %s86, %s89
    %p95 = scmp.eq.s32.totalorder %s12, 0
    %p96 = por %p94, %p95
    %p97 = scmp.ne.s32.totalorder %s86, %s89
    %p98 = scmp.eq.s32.totalorder %s17, 3
    %p99 = por %p97, %p98
    %p100 = scmp.ne.s32.totalorder %s89, %s90
    %p101 = scmp.eq.s32.totalorder %s17, 0
    %p102 = por %p100, %p101
    %p103 = scmp.ne.s32.totalorder %s89, %s90
    %p104 = scmp.eq.s32.totalorder %s18, 3
    %p105 = por %p103, %p104
    %p107 = scmp.ne.s32.totalorder %s90, %s106
    %p108 = scmp.eq.s32.totalorder %s18, 0
    %p109 = por %p107, %p108
    %s110 = ssub.s32 %s19, %s31
    %s111 = ssub.s32 %s20, %s27
    %s112 = sor.u32 %s110, %s111
    %p113 = scmp.eq.s32.totalorder %s112, 0
    %s115 = sadd.s32 %s114, 1
    %s116 = scalar_select %p113, %s114, %s115
    %p119 = pneg %p113
    %p120 = scmp.eq.s32.totalorder %s12, 3
    %p121 = por %p119, %p120
    %p122 = scmp.ne.s32.totalorder %s114, %s117
    %p123 = scmp.eq.s32.totalorder %s12, 0
    %p124 = por %p122, %p123
    %p125 = scmp.ne.s32.totalorder %s114, %s117
    %p126 = scmp.eq.s32.totalorder %s17, 3
    %p127 = por %p125, %p126
    %p128 = scmp.ne.s32.totalorder %s117, %s118
    %p129 = scmp.eq.s32.totalorder %s17, 0
    %p130 = por %p128, %p129
    %p131 = scmp.ne.s32.totalorder %s117, %s118
    %p132 = scmp.eq.s32.totalorder %s18, 3
    %p133 = por %p131, %p132
    %p135 = scmp.ne.s32.totalorder %s118, %s134
    %p136 = scmp.eq.s32.totalorder %s18, 0
    %p137 = por %p135, %p136
    %s138 = ssub.s32 %s19, %s31
    %s139 = ssub.s32 %s20, %s27
    %s140 = sor.u32 %s138, %s139
    %p141 = scmp.eq.s32.totalorder %s140, 0
    %s143 = sadd.s32 %s142, 1
    %s144 = scalar_select %p141, %s142, %s143
    %p147 = pneg %p141
    %p148 = scmp.eq.s32.totalorder %s12, 3
    %p149 = por %p147, %p148
    %p150 = scmp.ne.s32.totalorder %s142, %s145
    %p151 = scmp.eq.s32.totalorder %s12, 0
    %p152 = por %p150, %p151
    %p153 = scmp.ne.s32.totalorder %s142, %s145
    %p154 = scmp.eq.s32.totalorder %s17, 3
    %p155 = por %p153, %p154
    %p156 = scmp.ne.s32.totalorder %s145, %s146
    %p157 = scmp.eq.s32.totalorder %s17, 0
    %p158 = por %p156, %p157
    %p159 = scmp.ne.s32.totalorder %s145, %s146
    %p160 = scmp.eq.s32.totalorder %s18, 3
    %p161 = por %p159, %p160
    %p163 = scmp.ne.s32.totalorder %s146, %s162
    %p164 = scmp.eq.s32.totalorder %s18, 0
    %p165 = por %p163, %p164
    %s166 = ssub.s32 %s19, %s31
    %s167 = ssub.s32 %s20, %s27
    %s168 = sor.u32 %s166, %s167
    %p169 = scmp.eq.s32.totalorder %s168, 0
    %s171 = sadd.s32 %s170, 1
    %s172 = scalar_select %p169, %s170, %s171
    %p175 = pneg %p169
    %p176 = scmp.eq.s32.totalorder %s12, 3
    %p177 = por %p175, %p176
    %p178 = scmp.ne.s32.totalorder %s170, %s173
    %p179 = scmp.eq.s32.totalorder %s12, 0
    %p180 = por %p178, %p179
    %p181 = scmp.ne.s32.totalorder %s170, %s173
    %p182 = scmp.eq.s32.totalorder %s17, 3
    %p183 = por %p181, %p182
    %p184 = scmp.ne.s32.totalorder %s173, %s174
    %p185 = scmp.eq.s32.totalorder %s17, 0
    %p186 = por %p184, %p185
    %p187 = scmp.ne.s32.totalorder %s173, %s174
    %p188 = scmp.eq.s32.totalorder %s18, 3
    %p189 = por %p187, %p188
    %p191 = scmp.ne.s32.totalorder %s174, %s190
    %p192 = scmp.eq.s32.totalorder %s18, 0
    %p193 = por %p191, %p192
    %p194 = scmp.le.s32.totalorder 1, %s12
    %p195 = scmp.lt.s32.totalorder %s12, 5
    %p196 = pnand %p194, %p195
    %p197 = pneg %p196
    // Predicated region
    $region9: #{a_call__.49} parent=5 // pred_check
      _
    $region10: #{a_call__.49} parent=5 // pred_check_branch
      %199 = sbr.rel (%p196) target = $region12
    $region11: #{a_call__.49} parent=5 // pred_region
      %s200 = ssub.s32 %s12, 1
      // Predicated region
      $region13: #{a_call__.49} parent=11 // pred_check
        %p201 = pneg %p76
      $region14: #{a_call__.49} parent=11 // pred_check_branch
        %203 = sbr.rel (%p201) target = $region16
      $region15: #{a_call__.49} parent=11 // pred_region
        %p204 = scmp.lt.s32.totalorder %s22, 0
        %s205 = scalar_select %p204, %s22, 0
        %s206 = smul.addr %s205, 4
        %s207 = scalar_lea.vmem %s1, %s206
      $region16: #{a_call__.49} parent=11 // pred_fallthru
        _
      // Predicated region
      $region17: #{a_call__.49} parent=11 // pred_check
        %p208 = pneg %p102
      $region18: #{a_call__.49} parent=11 // pred_check_branch
        %210 = sbr.rel (%p208) target = $region20
      $region19: #{a_call__.49} parent=11 // pred_region
        %p211 = scmp.lt.s32.totalorder %s22, 0
        %s212 = scalar_select %p211, %s22, 0
        %s213 = scalar_lea.vmem %s2, %s212
      $region20: #{a_call__.49} parent=11 // pred_fallthru
        _
    $region12: #{a_call__.49} parent=5 // pred_fallthru
      _
    %p214 = scmp.lt.s32.totalorder %s12, 4
    // Predicated region
    $region21: #{a_call__.49} parent=5 // pred_check
      %p215 = pneg %p214
    $region22: #{a_call__.49} parent=5 // pred_check_branch
      %217 = sbr.rel (%p215) target = $region24
    $region23: #{a_call__.49} parent=5 // pred_region
      // Predicated region
      $region25: #{a_call__.49} parent=23 // pred_check
        %p218 = pneg %p44
      $region26: #{a_call__.49} parent=23 // pred_check_branch
        %220 = sbr.rel (%p218) target = $region28
      $region27: #{a_call__.49} parent=23 // pred_region
        %s221 = smul.u32 16, %s19
        %p222 = scmp.lt.s32.totalorder %s221, 63
        %s223 = scalar_select %p222, %s221, 63
        %s224 = smul.addr %s223, 4
        %s225 = smul.addr %s224, 4
        %s226 = scalar_lea.vmem %s0, %s225
        %s227 = smul.u32 16, %s19
      $region28: #{a_call__.49} parent=23 // pred_fallthru
        _
    $region24: #{a_call__.49} parent=5 // pred_fallthru
      _
    %p228 = scmp.le.s32.totalorder 1, %s12
    %p229 = scmp.lt.s32.totalorder %s12, 5
    %p230 = pnand %p228, %p229
    %p231 = pneg %p230
    // Predicated region
    $region29: #{a_call__.49} parent=5 // pred_check
      _
    $region30: #{a_call__.49} parent=5 // pred_check_branch
      %233 = sbr.rel (%p230) target = $region32
    $region31: #{a_call__.49} parent=5 // pred_region
      %s234 = ssub.s32 %s12, 1
      %s235 = smul.u32 16, %s21
      %p236 = scmp.lt.s32.totalorder %s235, 63
      %s237 = scalar_select %p236, %s235, 63
      %s238 = smul.addr %s237, 4
      %s239 = smul.addr %s238, 4
      %s240 = scalar_lea.vmem %s0, %s239
      %p241 = pneg %p50
      %p242 = pneg %p47
      %p243 = scmp.lt.s32.totalorder %s22, 0
      %s244 = scalar_select %p243, %s22, 0
      %s245 = smul.addr %s244, 4
      %s246 = scalar_lea.vmem %s1, %s245
      %p247 = pneg %p76
      %p248 = pneg %p73
      %p249 = scmp.lt.s32.totalorder %s22, 0
      %s250 = scalar_select %p249, %s22, 0
      %s251 = scalar_lea.vmem %s2, %s250
      %p252 = pneg %p102
      %p253 = pneg %p99
      %p254 = pneg %p130
      %p255 = pneg %p127
      %s256 = smul.u32 16, %s21
      %p257 = scmp.lt.s32.totalorder %s256, 63
      %s258 = scalar_select %p257, %s256, 63
      %p259 = scmp.lt.s32.totalorder %s22, 0
      %s260 = scalar_select %p259, %s22, 0
      %s261 = sadd.s32 %s260, %s258
      %s262 = smul.addr %s261, 4
      %s263 = scalar_lea.vmem %s3, %s262
      %p264 = pneg %p158
      %p265 = pneg %p155
      %p266 = scmp.lt.s32.totalorder %s21, 3
      %s267 = scalar_select %p266, %s21, 3
      %p268 = scmp.lt.s32.totalorder %s22, 0
      %s269 = scalar_select %p268, %s22, 0
      %s270 = sadd.s32 %s269, %s267
      %s271 = scalar_lea.vmem %s4, %s270
      %p272 = pneg %p186
      %p273 = pneg %p183
      %p274 = scmp.lt.s32.totalorder %s21, 3
      %s275 = scalar_select %p274, %s21, 3
      %p276 = scmp.lt.s32.totalorder %s22, 0
      %s277 = scalar_select %p276, %s22, 0
      %s278 = sadd.s32 %s277, %s275
      %s279 = scalar_lea.vmem %s5, %s278
      %s280 = smul.u32 16, %s21
      %p281 = scmp.lt.s32.totalorder %s280, 63
      %s282 = scalar_select %p281, %s280, 63
      %s283 = smul.addr %s282, 4
      %s284 = smul.addr %s283, 4
      %s285 = scalar_lea.vmem %s0, %s284
      %s286 = smul.u32 16, %s21
      %p287 = scmp.lt.s32.totalorder %s22, 0
      %s288 = scalar_select %p287, %s22, 0
      %s289 = smul.addr %s288, 4
      %s290 = scalar_lea.vmem %s1, %s289
      %p291 = scmp.lt.s32.totalorder %s22, 0
      %s292 = scalar_select %p291, %s22, 0
      %s293 = scalar_lea.vmem %s2, %s292
      %s294 = smul.u32 16, %s21
      %p295 = scmp.lt.s32.totalorder %s294, 63
      %s296 = scalar_select %p295, %s294, 63
      %p297 = scmp.lt.s32.totalorder %s22, 0
      %s298 = scalar_select %p297, %s22, 0
      %s299 = sadd.s32 %s298, %s296
      %s300 = smul.addr %s299, 4
      %s301 = scalar_lea.vmem %s3, %s300
      %s302 = smul.u32 16, %s21
      %p303 = scmp.lt.s32.totalorder %s21, 3
      %s304 = scalar_select %p303, %s21, 3
      %p305 = scmp.lt.s32.totalorder %s22, 0
      %s306 = scalar_select %p305, %s22, 0
      %s307 = sadd.s32 %s306, %s304
      %s308 = scalar_lea.vmem %s4, %s307
      %p309 = scmp.lt.s32.totalorder %s21, 3
      %s310 = scalar_select %p309, %s21, 3
      %p311 = scmp.lt.s32.totalorder %s22, 0
      %s312 = scalar_select %p311, %s22, 0
      %s313 = sadd.s32 %s312, %s310
      %s314 = scalar_lea.vmem %s5, %s313
      %v316 = vld [vmem:[%s285] sm:$0xff]
      %v317 = vld [vmem:[%s285 + $0x8] sm:$0xff]
      %v318 = vld [vmem:[%s285 + $0x10] sm:$0xff]
      %v319 = vld [vmem:[%s285 + $0x18] sm:$0xff]
      %v320 = vld [vmem:[%s285 + $0x20] sm:$0xff]
      %v321 = vld [vmem:[%s285 + $0x28] sm:$0xff]
      %v322 = vld [vmem:[%s285 + $0x30] sm:$0xff]
      %v323 = vld [vmem:[%s285 + $0x38] sm:$0xff]
      %v324 = vld [vmem:[%s285 + $0x40] sm:$0xff]
      %v325 = vld [vmem:[%s285 + $0x48] sm:$0xff]
      %v326 = vld [vmem:[%s285 + $0x50] sm:$0xff]
      %v327 = vld [vmem:[%s285 + $0x58] sm:$0xff]
      %v328 = vld [vmem:[%s285 + $0x60] sm:$0xff]
      %v329 = vld [vmem:[%s285 + $0x68] sm:$0xff]
      %v330 = vld [vmem:[%s285 + $0x70] sm:$0xff]
      %v331 = vld [vmem:[%s285 + $0x78] sm:$0xff]
      %v332 = vld [vmem:[%s285 + $0x80] sm:$0xff]
      %v333 = vld [vmem:[%s285 + $0x88] sm:$0xff]
      %v334 = vld [vmem:[%s285 + $0x90] sm:$0xff]
      %v335 = vld [vmem:[%s285 + $0x98] sm:$0xff]
      %v336 = vld [vmem:[%s285 + $0xa0] sm:$0xff]
      %v337 = vld [vmem:[%s285 + $0xa8] sm:$0xff]
      %v338 = vld [vmem:[%s285 + $0xb0] sm:$0xff]
      %v339 = vld [vmem:[%s285 + $0xb8] sm:$0xff]
      %v340 = vld [vmem:[%s285 + $0xc0] sm:$0xff]
      %v341 = vld [vmem:[%s285 + $0xc8] sm:$0xff]
      %v342 = vld [vmem:[%s285 + $0xd0] sm:$0xff]
      %v343 = vld [vmem:[%s285 + $0xd8] sm:$0xff]
      %v344 = vld [vmem:[%s285 + $0xe0] sm:$0xff]
      %v345 = vld [vmem:[%s285 + $0xe8] sm:$0xff]
      %v346 = vld [vmem:[%s285 + $0xf0] sm:$0xff]
      %v347 = vld [vmem:[%s285 + $0xf8] sm:$0xff]
      %v348 = vld [vmem:[%s290] sm:$0xf]
      %v349 = vld [vmem:[%s290 + $0x4] sm:$0xf]
      %v350 = vld [vmem:[%s290 + $0x8] sm:$0xf]
      %v351 = vld [vmem:[%s290 + $0xc] sm:$0xf]
      %v352 = vld [vmem:[%s290 + $0x10] sm:$0xf]
      %v353 = vld [vmem:[%s290 + $0x14] sm:$0xf]
      %v354 = vld [vmem:[%s290 + $0x18] sm:$0xf]
      %v355 = vld [vmem:[%s290 + $0x1c] sm:$0xf]
      %v356 = vld [vmem:[%s290 + $0x20] sm:$0xf]
      %v357 = vld [vmem:[%s290 + $0x24] sm:$0xf]
      %v358 = vld [vmem:[%s290 + $0x28] sm:$0xf]
      %v359 = vld [vmem:[%s290 + $0x2c] sm:$0xf]
      %v360 = vld [vmem:[%s290 + $0x30] sm:$0xf]
      %v361 = vld [vmem:[%s290 + $0x34] sm:$0xf]
      %v362 = vld [vmem:[%s290 + $0x38] sm:$0xf]
      %v363 = vld [vmem:[%s290 + $0x3c] sm:$0xf]
      %v364 = vld [vmem:[%s290 + $0x40] sm:$0xf]
      %v365 = vld [vmem:[%s290 + $0x44] sm:$0xf]
      %v366 = vld [vmem:[%s290 + $0x48] sm:$0xf]
      %v367 = vld [vmem:[%s290 + $0x4c] sm:$0xf]
      %v368 = vld [vmem:[%s290 + $0x50] sm:$0xf]
      %v369 = vld [vmem:[%s290 + $0x54] sm:$0xf]
      %v370 = vld [vmem:[%s290 + $0x58] sm:$0xf]
      %v371 = vld [vmem:[%s290 + $0x5c] sm:$0xf]
      %v372 = vld [vmem:[%s290 + $0x60] sm:$0xf]
      %v373 = vld [vmem:[%s290 + $0x64] sm:$0xf]
      %v374 = vld [vmem:[%s290 + $0x68] sm:$0xf]
      %v375 = vld [vmem:[%s290 + $0x6c] sm:$0xf]
      %v376 = vld [vmem:[%s290 + $0x70] sm:$0xf]
      %v377 = vld [vmem:[%s290 + $0x74] sm:$0xf]
      %v378 = vld [vmem:[%s290 + $0x78] sm:$0xf]
      %v379 = vld [vmem:[%s290 + $0x7c] sm:$0xf]
      %v380 = vld [vmem:[%s290 + $0x80] sm:$0xf]
      %v381 = vld [vmem:[%s290 + $0x84] sm:$0xf]
      %v382 = vld [vmem:[%s290 + $0x88] sm:$0xf]
      %v383 = vld [vmem:[%s290 + $0x8c] sm:$0xf]
      %v384 = vld [vmem:[%s290 + $0x90] sm:$0xf]
      %v385 = vld [vmem:[%s290 + $0x94] sm:$0xf]
      %v386 = vld [vmem:[%s290 + $0x98] sm:$0xf]
      %v387 = vld [vmem:[%s290 + $0x9c] sm:$0xf]
      %v388 = vld [vmem:[%s290 + $0xa0] sm:$0xf]
      %v389 = vld [vmem:[%s290 + $0xa4] sm:$0xf]
      %v390 = vld [vmem:[%s290 + $0xa8] sm:$0xf]
      %v391 = vld [vmem:[%s290 + $0xac] sm:$0xf]
      %v392 = vld [vmem:[%s290 + $0xb0] sm:$0xf]
      %v393 = vld [vmem:[%s290 + $0xb4] sm:$0xf]
      %v394 = vld [vmem:[%s290 + $0xb8] sm:$0xf]
      %v395 = vld [vmem:[%s290 + $0xbc] sm:$0xf]
      %v396 = vld [vmem:[%s290 + $0xc0] sm:$0xf]
      %v397 = vld [vmem:[%s290 + $0xc4] sm:$0xf]
      %v398 = vld [vmem:[%s290 + $0xc8] sm:$0xf]
      %v399 = vld [vmem:[%s290 + $0xcc] sm:$0xf]
      %v400 = vld [vmem:[%s290 + $0xd0] sm:$0xf]
      %v401 = vld [vmem:[%s290 + $0xd4] sm:$0xf]
      %v402 = vld [vmem:[%s290 + $0xd8] sm:$0xf]
      %v403 = vld [vmem:[%s290 + $0xdc] sm:$0xf]
      %v404 = vld [vmem:[%s290 + $0xe0] sm:$0xf]
      %v405 = vld [vmem:[%s290 + $0xe4] sm:$0xf]
      %v406 = vld [vmem:[%s290 + $0xe8] sm:$0xf]
      %v407 = vld [vmem:[%s290 + $0xec] sm:$0xf]
      %v408 = vld [vmem:[%s290 + $0xf0] sm:$0xf]
      %v409 = vld [vmem:[%s290 + $0xf4] sm:$0xf]
      %v410 = vld [vmem:[%s290 + $0xf8] sm:$0xf]
      %v411 = vld [vmem:[%s290 + $0xfc] sm:$0xf]
      %v444 = vunpack.c.l.b16 %v316
      %v445 = vunpack.c.h.b16 %v316
      %v446 = vunpack.c.l.b16 %v317
      %v447 = vunpack.c.h.b16 %v317
      %v448 = vunpack.c.l.b16 %v318
      %v449 = vunpack.c.h.b16 %v318
      %v450 = vunpack.c.l.b16 %v319
      %v451 = vunpack.c.h.b16 %v319
      %v452 = vunpack.c.l.b16 %v320
      %v453 = vunpack.c.h.b16 %v320
      %v454 = vunpack.c.l.b16 %v321
      %v455 = vunpack.c.h.b16 %v321
      %v456 = vunpack.c.l.b16 %v322
      %v457 = vunpack.c.h.b16 %v322
      %v458 = vunpack.c.l.b16 %v323
      %v459 = vunpack.c.h.b16 %v323
      %v460 = vunpack.c.l.b16 %v324
      %v461 = vunpack.c.h.b16 %v324
      %v462 = vunpack.c.l.b16 %v325
      %v463 = vunpack.c.h.b16 %v325
      %v464 = vunpack.c.l.b16 %v326
      %v465 = vunpack.c.h.b16 %v326
      %v466 = vunpack.c.l.b16 %v327
      %v467 = vunpack.c.h.b16 %v327
      %v468 = vunpack.c.l.b16 %v328
      %v469 = vunpack.c.h.b16 %v328
      %v470 = vunpack.c.l.b16 %v329
      %v471 = vunpack.c.h.b16 %v329
      %v472 = vunpack.c.l.b16 %v330
      %v473 = vunpack.c.h.b16 %v330
      %v474 = vunpack.c.l.b16 %v331
      %v475 = vunpack.c.h.b16 %v331
      %v476 = vunpack.c.l.b16 %v332
      %v477 = vunpack.c.h.b16 %v332
      %v478 = vunpack.c.l.b16 %v333
      %v479 = vunpack.c.h.b16 %v333
      %v480 = vunpack.c.l.b16 %v334
      %v481 = vunpack.c.h.b16 %v334
      %v482 = vunpack.c.l.b16 %v335
      %v483 = vunpack.c.h.b16 %v335
      %v484 = vunpack.c.l.b16 %v336
      %v485 = vunpack.c.h.b16 %v336
      %v486 = vunpack.c.l.b16 %v337
      %v487 = vunpack.c.h.b16 %v337
      %v488 = vunpack.c.l.b16 %v338
      %v489 = vunpack.c.h.b16 %v338
      %v490 = vunpack.c.l.b16 %v339
      %v491 = vunpack.c.h.b16 %v339
      %v492 = vunpack.c.l.b16 %v340
      %v493 = vunpack.c.h.b16 %v340
      %v494 = vunpack.c.l.b16 %v341
      %v495 = vunpack.c.h.b16 %v341
      %v496 = vunpack.c.l.b16 %v342
      %v497 = vunpack.c.h.b16 %v342
      %v498 = vunpack.c.l.b16 %v343
      %v499 = vunpack.c.h.b16 %v343
      %v500 = vunpack.c.l.b16 %v344
      %v501 = vunpack.c.h.b16 %v344
      %v502 = vunpack.c.l.b16 %v345
      %v503 = vunpack.c.h.b16 %v345
      %v504 = vunpack.c.l.b16 %v346
      %v505 = vunpack.c.h.b16 %v346
      %v506 = vunpack.c.l.b16 %v347
      %v507 = vunpack.c.h.b16 %v347
      %v508 = vpack.c.b16 %v448, %v444
      %v509 = vpack.c.b16 %v449, %v445
      %v510 = vpack.c.b16 %v450, %v446
      %v511 = vpack.c.b16 %v451, %v447
      %v512 = vpack.c.b16 %v456, %v452
      %v513 = vpack.c.b16 %v457, %v453
      %v514 = vpack.c.b16 %v458, %v454
      %v515 = vpack.c.b16 %v459, %v455
      %v516 = vpack.c.b16 %v464, %v460
      %v517 = vpack.c.b16 %v465, %v461
      %v518 = vpack.c.b16 %v466, %v462
      %v519 = vpack.c.b16 %v467, %v463
      %v520 = vpack.c.b16 %v472, %v468
      %v521 = vpack.c.b16 %v473, %v469
      %v522 = vpack.c.b16 %v474, %v470
      %v523 = vpack.c.b16 %v475, %v471
      %v524 = vpack.c.b16 %v480, %v476
      %v525 = vpack.c.b16 %v481, %v477
      %v526 = vpack.c.b16 %v482, %v478
      %v527 = vpack.c.b16 %v483, %v479
      %v528 = vpack.c.b16 %v488, %v484
      %v529 = vpack.c.b16 %v489, %v485
      %v530 = vpack.c.b16 %v490, %v486
      %v531 = vpack.c.b16 %v491, %v487
      %v532 = vpack.c.b16 %v496, %v492
      %v533 = vpack.c.b16 %v497, %v493
      %v534 = vpack.c.b16 %v498, %v494
      %v535 = vpack.c.b16 %v499, %v495
      %v536 = vpack.c.b16 %v504, %v500
      %v537 = vpack.c.b16 %v505, %v501
      %v538 = vpack.c.b16 %v506, %v502
      %v539 = vpack.c.b16 %v507, %v503
      %v636 = vunpack.c.l.b16 %v348
      %v637 = vunpack.c.l.b16 %v349
      %v638 = vunpack.c.l.b16 %v350
      %v639 = vunpack.c.l.b16 %v351
      %v640 = vunpack.c.l.b16 %v352
      %v641 = vunpack.c.l.b16 %v353
      %v642 = vunpack.c.l.b16 %v354
      %v643 = vunpack.c.l.b16 %v355
      %v644 = vunpack.c.l.b16 %v356
      %v645 = vunpack.c.l.b16 %v357
      %v646 = vunpack.c.l.b16 %v358
      %v647 = vunpack.c.l.b16 %v359
      %v648 = vunpack.c.l.b16 %v360
      %v649 = vunpack.c.l.b16 %v361
      %v650 = vunpack.c.l.b16 %v362
      %v651 = vunpack.c.l.b16 %v363
      %v652 = vunpack.c.l.b16 %v364
      %v653 = vunpack.c.l.b16 %v365
      %v654 = vunpack.c.l.b16 %v366
      %v655 = vunpack.c.l.b16 %v367
      %v656 = vunpack.c.l.b16 %v368
      %v657 = vunpack.c.l.b16 %v369
      %v658 = vunpack.c.l.b16 %v370
      %v659 = vunpack.c.l.b16 %v371
      %v660 = vunpack.c.l.b16 %v372
      %v661 = vunpack.c.l.b16 %v373
      %v662 = vunpack.c.l.b16 %v374
      %v663 = vunpack.c.l.b16 %v375
      %v664 = vunpack.c.l.b16 %v376
      %v665 = vunpack.c.l.b16 %v377
      %v666 = vunpack.c.l.b16 %v378
      %v667 = vunpack.c.l.b16 %v379
      %v668 = vunpack.c.l.b16 %v380
      %v669 = vunpack.c.l.b16 %v381
      %v670 = vunpack.c.l.b16 %v382
      %v671 = vunpack.c.l.b16 %v383
      %v672 = vunpack.c.l.b16 %v384
      %v673 = vunpack.c.l.b16 %v385
      %v674 = vunpack.c.l.b16 %v386
      %v675 = vunpack.c.l.b16 %v387
      %v676 = vunpack.c.l.b16 %v388
      %v677 = vunpack.c.l.b16 %v389
      %v678 = vunpack.c.l.b16 %v390
      %v679 = vunpack.c.l.b16 %v391
      %v680 = vunpack.c.l.b16 %v392
      %v681 = vunpack.c.l.b16 %v393
      %v682 = vunpack.c.l.b16 %v394
      %v683 = vunpack.c.l.b16 %v395
      %v684 = vunpack.c.l.b16 %v396
      %v685 = vunpack.c.l.b16 %v397
      %v686 = vunpack.c.l.b16 %v398
      %v687 = vunpack.c.l.b16 %v399
      %v688 = vunpack.c.l.b16 %v400
      %v689 = vunpack.c.l.b16 %v401
      %v690 = vunpack.c.l.b16 %v402
      %v691 = vunpack.c.l.b16 %v403
      %v692 = vunpack.c.l.b16 %v404
      %v693 = vunpack.c.l.b16 %v405
      %v694 = vunpack.c.l.b16 %v406
      %v695 = vunpack.c.l.b16 %v407
      %v696 = vunpack.c.l.b16 %v408
      %v697 = vunpack.c.l.b16 %v409
      %v698 = vunpack.c.l.b16 %v410
      %v699 = vunpack.c.l.b16 %v411
      %v700 = vpack.c.b16 %v637, %v636
      %v701 = vpack.c.b16 %v639, %v638
      %v702 = vpack.c.b16 %v641, %v640
      %v703 = vpack.c.b16 %v643, %v642
      %v704 = vpack.c.b16 %v645, %v644
      %v705 = vpack.c.b16 %v647, %v646
      %v706 = vpack.c.b16 %v649, %v648
      %v707 = vpack.c.b16 %v651, %v650
      %v708 = vpack.c.b16 %v653, %v652
      %v709 = vpack.c.b16 %v655, %v654
      %v710 = vpack.c.b16 %v657, %v656
      %v711 = vpack.c.b16 %v659, %v658
      %v712 = vpack.c.b16 %v661, %v660
      %v713 = vpack.c.b16 %v663, %v662
      %v714 = vpack.c.b16 %v665, %v664
      %v715 = vpack.c.b16 %v667, %v666
      %v716 = vpack.c.b16 %v669, %v668
      %v717 = vpack.c.b16 %v671, %v670
      %v718 = vpack.c.b16 %v673, %v672
      %v719 = vpack.c.b16 %v675, %v674
      %v720 = vpack.c.b16 %v677, %v676
      %v721 = vpack.c.b16 %v679, %v678
      %v722 = vpack.c.b16 %v681, %v680
      %v723 = vpack.c.b16 %v683, %v682
      %v724 = vpack.c.b16 %v685, %v684
      %v725 = vpack.c.b16 %v687, %v686
      %v726 = vpack.c.b16 %v689, %v688
      %v727 = vpack.c.b16 %v691, %v690
      %v728 = vpack.c.b16 %v693, %v692
      %v729 = vpack.c.b16 %v695, %v694
      %v730 = vpack.c.b16 %v697, %v696
      %v731 = vpack.c.b16 %v699, %v698
      %764 = vmatprep.subr.bf16.mxu0 0
      %765 = vmatpush1.bf16.msra.mxu0 %v700
      %766 = vmatprep.subr.bf16.mxu0 0
      %767 = vmatpush1.bf16.msra.mxu0 %v701
      %768 = vmatprep.subr.bf16.mxu0 0
      %769 = vmatpush1.bf16.msra.mxu0 %v702
      %770 = vmatprep.subr.bf16.mxu0 0
      %771 = vmatpush1.bf16.msra.mxu0 %v703
      %772 = vmatprep.subr.bf16.mxu0 0
      %773 = vmatpush1.bf16.msra.mxu0 %v704
      %774 = vmatprep.subr.bf16.mxu0 0
      %775 = vmatpush1.bf16.msra.mxu0 %v705
      %776 = vmatprep.subr.bf16.mxu0 0
      %777 = vmatpush1.bf16.msra.mxu0 %v706
      %778 = vmatprep.subr.bf16.mxu0 0
      %779 = vmatpush1.bf16.msra.mxu0 %v707
      %780 = vmatprep.subr.bf16.mxu0 0
      %781 = vmatpush1.bf16.msra.mxu0 %v708
      %782 = vmatprep.subr.bf16.mxu0 0
      %783 = vmatpush1.bf16.msra.mxu0 %v709
      %784 = vmatprep.subr.bf16.mxu0 0
      %785 = vmatpush1.bf16.msra.mxu0 %v710
      %786 = vmatprep.subr.bf16.mxu0 0
      %787 = vmatpush1.bf16.msra.mxu0 %v711
      %788 = vmatprep.subr.bf16.mxu0 0
      %789 = vmatpush1.bf16.msra.mxu0 %v712
      %790 = vmatprep.subr.bf16.mxu0 0
      %791 = vmatpush1.bf16.msra.mxu0 %v713
      %792 = vmatprep.subr.bf16.mxu0 0
      %793 = vmatpush1.bf16.msra.mxu0 %v714
      %794 = vmatprep.subr.bf16.mxu0 0
      %795 = vmatpush1.bf16.msra.mxu0 %v715
      %796 = vmatprep.mubr.bf16.mxu0 %v509
      %797 = vmatmul.mubr.bf16.gmra.mrb[0].mxu0 %v508
      %v798 = vpop.f32.mrb[0].mxu0
      %v799 = vadd.f32 0.0, %v798
      %v800 = vpop.f32.mrb[0].mxu0
      %v801 = vpop.f32.mrb[0].mxu0
      %v802 = vadd.f32 0.0, %v801
      %v803 = vpop.f32.mrb[0].mxu0
      %804 = vmatprep.mubr.bf16.mxu0 %v513
      %805 = vmatmul.mubr.bf16.gmra.mrb[0].mxu0 %v512
      %v806 = vpop.f32.mrb[0].mxu0
      %v807 = vadd.f32 0.0, %v806
      %v808 = vpop.f32.mrb[0].mxu0
      %v809 = vpop.f32.mrb[0].mxu0
      %v810 = vadd.f32 0.0, %v809
      %v811 = vpop.f32.mrb[0].mxu0
      %812 = vmatprep.mubr.bf16.mxu0 %v517
      %813 = vmatmul.mubr.bf16.gmra.mrb[0].mxu0 %v516
      %v814 = vpop.f32.mrb[0].mxu0
      %v815 = vadd.f32 0.0, %v814
      %v816 = vpop.f32.mrb[0].mxu0
      %v817 = vpop.f32.mrb[0].mxu0
      %v818 = vadd.f32 0.0, %v817
      %v819 = vpop.f32.mrb[0].mxu0
      %820 = vmatprep.mubr.bf16.mxu0 %v521
      %821 = vmatmul.mubr.bf16.gmra.mrb[0].mxu0 %v520
      %v822 = vpop.f32.mrb[0].mxu0
      %v823 = vadd.f32 0.0, %v822
      %v824 = vpop.f32.mrb[0].mxu0
      %v825 = vpop.f32.mrb[0].mxu0
      %v826 = vadd.f32 0.0, %v825
      %v827 = vpop.f32.mrb[0].mxu0
      %828 = vmatprep.mubr.bf16.mxu0 %v525
      %829 = vmatmul.mubr.bf16.gmra.mrb[0].mxu0 %v524
      %v830 = vpop.f32.mrb[0].mxu0
      %v831 = vadd.f32 0.0, %v830
      %v832 = vpop.f32.mrb[0].mxu0
      %v833 = vpop.f32.mrb[0].mxu0
      %v834 = vadd.f32 0.0, %v833
      %v835 = vpop.f32.mrb[0].mxu0
      %836 = vmatprep.mubr.bf16.mxu0 %v529
      %837 = vmatmul.mubr.bf16.gmra.mrb[0].mxu0 %v528
      %v838 = vpop.f32.mrb[0].mxu0
      %v839 = vadd.f32 0.0, %v838
      %v840 = vpop.f32.mrb[0].mxu0
      %v841 = vpop.f32.mrb[0].mxu0
      %v842 = vadd.f32 0.0, %v841
      %v843 = vpop.f32.mrb[0].mxu0
      %844 = vmatprep.mubr.bf16.mxu0 %v533
      %845 = vmatmul.mubr.bf16.gmra.mrb[0].mxu0 %v532
      %v846 = vpop.f32.mrb[0].mxu0
      %v847 = vadd.f32 0.0, %v846
      %v848 = vpop.f32.mrb[0].mxu0
      %v849 = vpop.f32.mrb[0].mxu0
      %v850 = vadd.f32 0.0, %v849
      %v851 = vpop.f32.mrb[0].mxu0
      %852 = vmatprep.mubr.bf16.mxu0 %v537
      %853 = vmatmul.mubr.bf16.gmra.mrb[0].mxu0 %v536
      %v854 = vpop.f32.mrb[0].mxu0
      %v855 = vadd.f32 0.0, %v854
      %v856 = vpop.f32.mrb[0].mxu0
      %v857 = vpop.f32.mrb[0].mxu0
      %v858 = vadd.f32 0.0, %v857
      %v859 = vpop.f32.mrb[0].mxu0
      %860 = vdwg.mxu0
      %861 = vmatprep.subr.bf16.mxu0 0
      %862 = vmatpush1.bf16.msra.mxu0 %v716
      %863 = vmatprep.subr.bf16.mxu0 0
      %864 = vmatpush1.bf16.msra.mxu0 %v717
      %865 = vmatprep.subr.bf16.mxu0 0
      %866 = vmatpush1.bf16.msra.mxu0 %v718
      %867 = vmatprep.subr.bf16.mxu0 0
      %868 = vmatpush1.bf16.msra.mxu0 %v719
      %869 = vmatprep.subr.bf16.mxu0 0
      %870 = vmatpush1.bf16.msra.mxu0 %v720
      %871 = vmatprep.subr.bf16.mxu0 0
      %872 = vmatpush1.bf16.msra.mxu0 %v721
      %873 = vmatprep.subr.bf16.mxu0 0
      %874 = vmatpush1.bf16.msra.mxu0 %v722
      %875 = vmatprep.subr.bf16.mxu0 0
      %876 = vmatpush1.bf16.msra.mxu0 %v723
      %877 = vmatprep.subr.bf16.mxu0 0
      %878 = vmatpush1.bf16.msra.mxu0 %v724
      %879 = vmatprep.subr.bf16.mxu0 0
      %880 = vmatpush1.bf16.msra.mxu0 %v725
      %881 = vmatprep.subr.bf16.mxu0 0
      %882 = vmatpush1.bf16.msra.mxu0 %v726
      %883 = vmatprep.subr.bf16.mxu0 0
      %884 = vmatpush1.bf16.msra.mxu0 %v727
      %885 = vmatprep.subr.bf16.mxu0 0
      %886 = vmatpush1.bf16.msra.mxu0 %v728
      %887 = vmatprep.subr.bf16.mxu0 0
      %888 = vmatpush1.bf16.msra.mxu0 %v729
      %889 = vmatprep.subr.bf16.mxu0 0
      %890 = vmatpush1.bf16.msra.mxu0 %v730
      %891 = vmatprep.subr.bf16.mxu0 0
      %892 = vmatpush1.bf16.msra.mxu0 %v731
      %893 = vmatprep.mubr.bf16.mxu0 %v511
      %894 = vmatmul.mubr.bf16.gmra.mrb[0].mxu0 %v510
      %v895 = vpop.f32.mrb[0].mxu0
      %v896 = vadd.f32 %v799, %v895
      %v897 = vpop.f32.mrb[0].mxu0
      %v898 = vpop.f32.mrb[0].mxu0
      %v899 = vadd.f32 %v802, %v898
      %v900 = vpop.f32.mrb[0].mxu0
      %901 = vmatprep.mubr.bf16.mxu0 %v515
      %902 = vmatmul.mubr.bf16.gmra.mrb[0].mxu0 %v514
      %v903 = vpop.f32.mrb[0].mxu0
      %v904 = vadd.f32 %v807, %v903
      %v905 = vpop.f32.mrb[0].mxu0
      %v906 = vpop.f32.mrb[0].mxu0
      %v907 = vadd.f32 %v810, %v906
      %v908 = vpop.f32.mrb[0].mxu0
      %909 = vmatprep.mubr.bf16.mxu0 %v519
      %910 = vmatmul.mubr.bf16.gmra.mrb[0].mxu0 %v518
      %v911 = vpop.f32.mrb[0].mxu0
      %v912 = vadd.f32 %v815, %v911
      %v913 = vpop.f32.mrb[0].mxu0
      %v914 = vpop.f32.mrb[0].mxu0
      %v915 = vadd.f32 %v818, %v914
      %v916 = vpop.f32.mrb[0].mxu0
      %917 = vmatprep.mubr.bf16.mxu0 %v523
      %918 = vmatmul.mubr.bf16.gmra.mrb[0].mxu0 %v522
      %v919 = vpop.f32.mrb[0].mxu0
      %v920 = vadd.f32 %v823, %v919
      %v921 = vpop.f32.mrb[0].mxu0
      %v922 = vpop.f32.mrb[0].mxu0
      %v923 = vadd.f32 %v826, %v922
      %v924 = vpop.f32.mrb[0].mxu0
      %925 = vmatprep.mubr.bf16.mxu0 %v527
      %926 = vmatmul.mubr.bf16.gmra.mrb[0].mxu0 %v526
      %v927 = vpop.f32.mrb[0].mxu0
      %v928 = vadd.f32 %v831, %v927
      %v929 = vpop.f32.mrb[0].mxu0
      %v930 = vpop.f32.mrb[0].mxu0
      %v931 = vadd.f32 %v834, %v930
      %v932 = vpop.f32.mrb[0].mxu0
      %933 = vmatprep.mubr.bf16.mxu0 %v531
      %934 = vmatmul.mubr.bf16.gmra.mrb[0].mxu0 %v530
      %v935 = vpop.f32.mrb[0].mxu0
      %v936 = vadd.f32 %v839, %v935
      %v937 = vpop.f32.mrb[0].mxu0
      %v938 = vpop.f32.mrb[0].mxu0
      %v939 = vadd.f32 %v842, %v938
      %v940 = vpop.f32.mrb[0].mxu0
      %941 = vmatprep.mubr.bf16.mxu0 %v535
      %942 = vmatmul.mubr.bf16.gmra.mrb[0].mxu0 %v534
      %v943 = vpop.f32.mrb[0].mxu0
      %v944 = vadd.f32 %v847, %v943
      %v945 = vpop.f32.mrb[0].mxu0
      %v946 = vpop.f32.mrb[0].mxu0
      %v947 = vadd.f32 %v850, %v946
      %v948 = vpop.f32.mrb[0].mxu0
      %949 = vmatprep.mubr.bf16.mxu0 %v539
      %950 = vmatmul.mubr.bf16.gmra.mrb[0].mxu0 %v538
      %v951 = vpop.f32.mrb[0].mxu0
      %v952 = vadd.f32 %v855, %v951
      %v953 = vpop.f32.mrb[0].mxu0
      %v954 = vpop.f32.mrb[0].mxu0
      %v955 = vadd.f32 %v858, %v954
      %v956 = vpop.f32.mrb[0].mxu0
      %957 = vdwg.mxu0
      %v958 = vadd.f32 %v896, %v899
      %v959 = vadd.f32 %v958, %v904
      %v960 = vadd.f32 %v959, %v907
      %v961 = vadd.f32 %v960, %v912
      %v962 = vadd.f32 %v961, %v915
      %v963 = vadd.f32 %v962, %v920
      %v964 = vadd.f32 %v963, %v923
      %v965 = vadd.f32 %v964, %v928
      %v966 = vadd.f32 %v965, %v931
      %v967 = vadd.f32 %v966, %v936
      %v968 = vadd.f32 %v967, %v939
      %v969 = vadd.f32 %v968, %v944
      %v970 = vadd.f32 %v969, %v947
      %v971 = vadd.f32 %v970, %v952
      %v972 = vadd.f32 %v971, %v955
      %v973 = vrot.slane %v972, 4
      %v974 = vadd.f32 %v972, %v973
      %v975 = vrot.slane %v974, 2
      %v976 = vadd.f32 %v974, %v975
      %v977 = vrot.slane %v976, 1
      %v978 = vadd.f32 %v976, %v977
      %979 = vst [vmem:[%s308] sm:$0x1] %v978
      %v980 = vmul.f32 %v896, %v896
      %v981 = vmul.f32 %v899, %v899
      %v982 = vmul.f32 %v904, %v904
      %v983 = vmul.f32 %v907, %v907
      %v984 = vmul.f32 %v912, %v912
      %v985 = vmul.f32 %v915, %v915
      %v986 = vmul.f32 %v920, %v920
      %v987 = vmul.f32 %v923, %v923
      %v988 = vmul.f32 %v928, %v928
      %v989 = vmul.f32 %v931, %v931
      %v990 = vmul.f32 %v936, %v936
      %v991 = vmul.f32 %v939, %v939
      %v992 = vmul.f32 %v944, %v944
      %v993 = vmul.f32 %v947, %v947
      %v994 = vmul.f32 %v952, %v952
      %v995 = vmul.f32 %v955, %v955
      %v996 = vadd.f32 %v980, %v981
      %v997 = vadd.f32 %v996, %v982
      %v998 = vadd.f32 %v997, %v983
      %v999 = vadd.f32 %v998, %v984
      %v1000 = vadd.f32 %v999, %v985
      %v1001 = vadd.f32 %v1000, %v986
      %v1002 = vadd.f32 %v1001, %v987
      %v1003 = vadd.f32 %v1002, %v988
      %v1004 = vadd.f32 %v1003, %v989
      %v1005 = vadd.f32 %v1004, %v990
      %v1006 = vadd.f32 %v1005, %v991
      %v1007 = vadd.f32 %v1006, %v992
      %v1008 = vadd.f32 %v1007, %v993
      %v1009 = vadd.f32 %v1008, %v994
      %v1010 = vadd.f32 %v1009, %v995
      %v1011 = vrot.slane %v1010, 4
      %v1012 = vadd.f32 %v1010, %v1011
      %v1013 = vrot.slane %v1012, 2
      %v1014 = vadd.f32 %v1012, %v1013
      %v1015 = vrot.slane %v1014, 1
      %v1016 = vadd.f32 %v1014, %v1015
      %1017 = vst [vmem:[%s314] sm:$0x1] %v1016
      %v1018 = vld [vmem:[%s293] sm:$0x1]
      %v1020 = vlaneseq
      %v1021 = vshrl.u32 %v1020, 7
      %v1022 = vsub.s32 0, %v1021
      %v1023 = vrot.slane %v1018, %v1022
      %v1025 = vadd.f32 %v896, %v1023
      %v1026 = vadd.f32 %v899, %v1023
      %v1027 = vadd.f32 %v904, %v1023
      %v1028 = vadd.f32 %v907, %v1023
      %v1029 = vadd.f32 %v912, %v1023
      %v1030 = vadd.f32 %v915, %v1023
      %v1031 = vadd.f32 %v920, %v1023
      %v1032 = vadd.f32 %v923, %v1023
      %v1033 = vadd.f32 %v928, %v1023
      %v1034 = vadd.f32 %v931, %v1023
      %v1035 = vadd.f32 %v936, %v1023
      %v1036 = vadd.f32 %v939, %v1023
      %v1037 = vadd.f32 %v944, %v1023
      %v1038 = vadd.f32 %v947, %v1023
      %v1039 = vadd.f32 %v952, %v1023
      %v1040 = vadd.f32 %v955, %v1023
      %v1041 = vpack.c.bf16 %v1026, %v1025
      %v1042 = vpack.c.bf16 %v1028, %v1027
      %v1043 = vpack.c.bf16 %v1030, %v1029
      %v1044 = vpack.c.bf16 %v1032, %v1031
      %v1045 = vpack.c.bf16 %v1034, %v1033
      %v1046 = vpack.c.bf16 %v1036, %v1035
      %v1047 = vpack.c.bf16 %v1038, %v1037
      %v1048 = vpack.c.bf16 %v1040, %v1039
      %v1057 = vunpack.c.l.b16 %v1041
      %v1058 = vunpack.c.h.b16 %v1041
      %v1059 = vunpack.c.l.b16 %v1042
      %v1060 = vunpack.c.h.b16 %v1042
      %v1061 = vunpack.c.l.b16 %v1043
      %v1062 = vunpack.c.h.b16 %v1043
      %v1063 = vunpack.c.l.b16 %v1044
      %v1064 = vunpack.c.h.b16 %v1044
      %v1065 = vunpack.c.l.b16 %v1045
      %v1066 = vunpack.c.h.b16 %v1045
      %v1067 = vunpack.c.l.b16 %v1046
      %v1068 = vunpack.c.h.b16 %v1046
      %v1069 = vunpack.c.l.b16 %v1047
      %v1070 = vunpack.c.h.b16 %v1047
      %v1071 = vunpack.c.l.b16 %v1048
      %v1072 = vunpack.c.h.b16 %v1048
      %v1073 = vpack.c.b16 %v1057, %v1057
      %v1074 = vpack.c.b16 %v1058, %v1058
      %v1075 = vpack.c.b16 %v1059, %v1059
      %v1076 = vpack.c.b16 %v1060, %v1060
      %v1077 = vpack.c.b16 %v1061, %v1061
      %v1078 = vpack.c.b16 %v1062, %v1062
      %v1079 = vpack.c.b16 %v1063, %v1063
      %v1080 = vpack.c.b16 %v1064, %v1064
      %v1081 = vpack.c.b16 %v1065, %v1065
      %v1082 = vpack.c.b16 %v1066, %v1066
      %v1083 = vpack.c.b16 %v1067, %v1067
      %v1084 = vpack.c.b16 %v1068, %v1068
      %v1085 = vpack.c.b16 %v1069, %v1069
      %v1086 = vpack.c.b16 %v1070, %v1070
      %v1087 = vpack.c.b16 %v1071, %v1071
      %v1088 = vpack.c.b16 %v1072, %v1072
      %1105 = vst [vmem:[%s301] sm:$0xf] %v1073
      %1106 = vst [vmem:[%s301 + $0x4] sm:$0xf] %v1074
      %1107 = vst [vmem:[%s301 + $0x8] sm:$0xf] %v1075
      %1108 = vst [vmem:[%s301 + $0xc] sm:$0xf] %v1076
      %1109 = vst [vmem:[%s301 + $0x10] sm:$0xf] %v1077
      %1110 = vst [vmem:[%s301 + $0x14] sm:$0xf] %v1078
      %1111 = vst [vmem:[%s301 + $0x18] sm:$0xf] %v1079
      %1112 = vst [vmem:[%s301 + $0x1c] sm:$0xf] %v1080
      %1113 = vst [vmem:[%s301 + $0x20] sm:$0xf] %v1081
      %1114 = vst [vmem:[%s301 + $0x24] sm:$0xf] %v1082
      %1115 = vst [vmem:[%s301 + $0x28] sm:$0xf] %v1083
      %1116 = vst [vmem:[%s301 + $0x2c] sm:$0xf] %v1084
      %1117 = vst [vmem:[%s301 + $0x30] sm:$0xf] %v1085
      %1118 = vst [vmem:[%s301 + $0x34] sm:$0xf] %v1086
      %1119 = vst [vmem:[%s301 + $0x38] sm:$0xf] %v1087
      %1120 = vst [vmem:[%s301 + $0x3c] sm:$0xf] %v1088
      %s1121 = smul.u32 16, %s21
      %p1122 = scmp.lt.s32.totalorder %s1121, 63
      %s1123 = scalar_select %p1122, %s1121, 63
      %p1124 = scmp.lt.s32.totalorder %s22, 0
      %s1125 = scalar_select %p1124, %s22, 0
      %s1126 = sadd.s32 %s1125, %s1123
      %s1127 = smul.addr %s1126, 4
      %s1128 = scalar_lea.vmem %s3, %s1127
      %p1129 = scmp.lt.s32.totalorder %s21, 3
      %s1130 = scalar_select %p1129, %s21, 3
      %p1131 = scmp.lt.s32.totalorder %s22, 0
      %s1132 = scalar_select %p1131, %s22, 0
      %s1133 = sadd.s32 %s1132, %s1130
      %s1134 = scalar_lea.vmem %s4, %s1133
      %p1135 = scmp.lt.s32.totalorder %s21, 3
      %s1136 = scalar_select %p1135, %s21, 3
      %p1137 = scmp.lt.s32.totalorder %s22, 0
      %s1138 = scalar_select %p1137, %s22, 0
      %s1139 = sadd.s32 %s1138, %s1136
      %s1140 = scalar_lea.vmem %s5, %s1139
      // Predicated region
      $region33: #{a_call__.49} parent=31 // pred_check
        %p1141 = pneg %p127
      $region34: #{a_call__.49} parent=31 // pred_check_branch
        %1143 = sbr.rel (%p1141) target = $region36
      $region35: #{a_call__.49} parent=31 // pred_region
        %s1144 = smul.u32 16, %s21
      $region36: #{a_call__.49} parent=31 // pred_fallthru
        _
      // Predicated region
      $region37: #{a_call__.49} parent=31 // pred_check
        %p1145 = pneg %p155
      $region38: #{a_call__.49} parent=31 // pred_check_branch
        %1147 = sbr.rel (%p1145) target = $region40
      $region39: #{a_call__.49} parent=31 // pred_region
        _
      $region40: #{a_call__.49} parent=31 // pred_fallthru
        _
      // Predicated region
      $region41: #{a_call__.49} parent=31 // pred_check
        %p1148 = pneg %p183
      $region42: #{a_call__.49} parent=31 // pred_check_branch
        %1150 = sbr.rel (%p1148) target = $region44
      $region43: #{a_call__.49} parent=31 // pred_region
        _
      $region44: #{a_call__.49} parent=31 // pred_fallthru
        _
    $region32: #{a_call__.49} parent=5 // pred_fallthru
      _
    %p1151 = scmp.le.s32.totalorder 2, %s12
    // Predicated region
    $region45: #{a_call__.49} parent=5 // pred_check
      %p1152 = pneg %p1151
    $region46: #{a_call__.49} parent=5 // pred_check_branch
      %1154 = sbr.rel (%p1152) target = $region48
    $region47: #{a_call__.49} parent=5 // pred_region
      %s1155 = ssub.s32 %s12, 2
      // Predicated region
      $region49: #{a_call__.49} parent=47 // pred_check
        %p1156 = pneg %p133
      $region50: #{a_call__.49} parent=47 // pred_check_branch
        %1158 = sbr.rel (%p1156) target = $region52
      $region51: #{a_call__.49} parent=47 // pred_region
        %s1159 = smul.u32 16, %s23
        %p1160 = scmp.lt.s32.totalorder %s1159, 63
        %s1161 = scalar_select %p1160, %s1159, 63
        %p1162 = scmp.lt.s32.totalorder %s24, 0
        %s1163 = scalar_select %p1162, %s24, 0
        %s1164 = sadd.s32 %s1163, %s1161
        %s1165 = smul.addr %s1164, 4
        %s1166 = scalar_lea.vmem %s3, %s1165
      $region52: #{a_call__.49} parent=47 // pred_fallthru
        _
      // Predicated region
      $region53: #{a_call__.49} parent=47 // pred_check
        %p1167 = pneg %p161
      $region54: #{a_call__.49} parent=47 // pred_check_branch
        %1169 = sbr.rel (%p1167) target = $region56
      $region55: #{a_call__.49} parent=47 // pred_region
        %p1170 = scmp.lt.s32.totalorder %s23, 3
        %s1171 = scalar_select %p1170, %s23, 3
        %p1172 = scmp.lt.s32.totalorder %s24, 0
        %s1173 = scalar_select %p1172, %s24, 0
        %s1174 = sadd.s32 %s1173, %s1171
        %s1175 = scalar_lea.vmem %s4, %s1174
      $region56: #{a_call__.49} parent=47 // pred_fallthru
        _
      // Predicated region
      $region57: #{a_call__.49} parent=47 // pred_check
        %p1176 = pneg %p189
      $region58: #{a_call__.49} parent=47 // pred_check_branch
        %1178 = sbr.rel (%p1176) target = $region60
      $region59: #{a_call__.49} parent=47 // pred_region
        %p1179 = scmp.lt.s32.totalorder %s23, 3
        %s1180 = scalar_select %p1179, %s23, 3
        %p1181 = scmp.lt.s32.totalorder %s24, 0
        %s1182 = scalar_select %p1181, %s24, 0
        %s1183 = sadd.s32 %s1182, %s1180
        %s1184 = scalar_lea.vmem %s5, %s1183
      $region60: #{a_call__.49} parent=47 // pred_fallthru
        _
    $region48: #{a_call__.49} parent=5 // pred_fallthru
      _
  $region6: #{a_call__.49} parent=0 // loop_footer
    %s16 = sadd.s32 1, %s12
  $region7: #{a_call__.49} parent=0 // loop_footer_branch
    %11 = sbr.rel target = $region3
  $region8: #{a_call__.49} parent=0 // loop_exit
    _

// kernel: a_call__.55
$region0: #{a_call__.55}
  #allocation0 [shape = 'u32[]', space=smem, size = 0x4, offset = 0x4, fixed_abs, tag = 'smem constant byte address 0x4 - core index']
  #allocation1 [shape = 'u32[144,128]{1,0:T(1,128)}', space=vmem, size = 0x12000, scoped, tag = 'internal scratch']
  %s0 = inlined_call_operand.vmem [shape: bf16[512,128], index: 0, kind: input, shape index: {}]
  %s1 = inlined_call_operand.vmem [shape: f32[1,128], index: 1, kind: input, shape index: {}]
  %s2 = inlined_call_operand.vmem [shape: f32[1,128], index: 2, kind: input, shape index: {}]
  %s3 = inlined_call_operand.vmem [shape: bf16[512,128], index: 3, kind: output, shape index: {}]
  %s4 = sld [smem:[#allocation0]]
  $region22: #{a_call__.55} parent=0
    _
  %s6 = ssub.s32 1, %s4
  %s7 = scalar_select 0, %s6, %s4
  // Predicated region
  $region2: #{a_call__.55} parent=0 // pred_check
    _
  $region3: #{a_call__.55} parent=0 // pred_check_branch
    %9 = sbr.rel (0) target = $region5
  $region4: #{a_call__.55} parent=0 // pred_region
    _
  $region5: #{a_call__.55} parent=0 // pred_fallthru
    _
  // Predicated region
  $region6: #{a_call__.55} parent=0 // pred_check
    _
  $region7: #{a_call__.55} parent=0 // pred_check_branch
    %11 = sbr.rel (0) target = $region9
  $region8: #{a_call__.55} parent=0 // pred_region
    _
  $region9: #{a_call__.55} parent=0 // pred_fallthru
    _
  // Predicated region
  $region10: #{a_call__.55} parent=0 // pred_check
    _
  $region11: #{a_call__.55} parent=0 // pred_check_branch
    %13 = sbr.rel (0) target = $region13
  $region12: #{a_call__.55} parent=0 // pred_region
    _
  $region13: #{a_call__.55} parent=0 // pred_fallthru
    _
  %v14 = vld [vmem:[%s0] sm:$0xf]
  %v15 = vld [vmem:[%s0 + $0x4] sm:$0xf]
  %v16 = vld [vmem:[%s0 + $0x8] sm:$0xf]
  %v17 = vld [vmem:[%s0 + $0xc] sm:$0xf]
  %v18 = vld [vmem:[%s0 + $0x10] sm:$0xf]
  %v19 = vld [vmem:[%s0 + $0x14] sm:$0xf]
  %v20 = vld [vmem:[%s0 + $0x18] sm:$0xf]
  %v21 = vld [vmem:[%s0 + $0x1c] sm:$0xf]
  %v22 = vld [vmem:[%s0 + $0x20] sm:$0xf]
  %v23 = vld [vmem:[%s0 + $0x24] sm:$0xf]
  %v24 = vld [vmem:[%s0 + $0x28] sm:$0xf]
  %v25 = vld [vmem:[%s0 + $0x2c] sm:$0xf]
  %v26 = vld [vmem:[%s0 + $0x30] sm:$0xf]
  %v27 = vld [vmem:[%s0 + $0x34] sm:$0xf]
  %v28 = vld [vmem:[%s0 + $0x38] sm:$0xf]
  %v29 = vld [vmem:[%s0 + $0x3c] sm:$0xf]
  %v30 = vld [vmem:[%s0 + $0x40] sm:$0xf]
  %v31 = vld [vmem:[%s0 + $0x44] sm:$0xf]
  %v32 = vld [vmem:[%s0 + $0x48] sm:$0xf]
  %v33 = vld [vmem:[%s0 + $0x4c] sm:$0xf]
  %v34 = vld [vmem:[%s0 + $0x50] sm:$0xf]
  %v35 = vld [vmem:[%s0 + $0x54] sm:$0xf]
  %v36 = vld [vmem:[%s0 + $0x58] sm:$0xf]
  %v37 = vld [vmem:[%s0 + $0x5c] sm:$0xf]
  %v38 = vld [vmem:[%s0 + $0x60] sm:$0xf]
  %v39 = vld [vmem:[%s0 + $0x64] sm:$0xf]
  %v40 = vld [vmem:[%s0 + $0x68] sm:$0xf]
  %v41 = vld [vmem:[%s0 + $0x6c] sm:$0xf]
  %v42 = vld [vmem:[%s0 + $0x70] sm:$0xf]
  %v43 = vld [vmem:[%s0 + $0x74] sm:$0xf]
  %v44 = vld [vmem:[%s0 + $0x78] sm:$0xf]
  %v45 = vld [vmem:[%s0 + $0x7c] sm:$0xf]
  %v46 = vld [vmem:[%s0 + $0x80] sm:$0xf]
  %v47 = vld [vmem:[%s0 + $0x84] sm:$0xf]
  %v48 = vld [vmem:[%s0 + $0x88] sm:$0xf]
  %v49 = vld [vmem:[%s0 + $0x8c] sm:$0xf]
  %v50 = vld [vmem:[%s0 + $0x90] sm:$0xf]
  %v51 = vld [vmem:[%s0 + $0x94] sm:$0xf]
  %v52 = vld [vmem:[%s0 + $0x98] sm:$0xf]
  %v53 = vld [vmem:[%s0 + $0x9c] sm:$0xf]
  %v54 = vld [vmem:[%s0 + $0xa0] sm:$0xf]
  %v55 = vld [vmem:[%s0 + $0xa4] sm:$0xf]
  %v56 = vld [vmem:[%s0 + $0xa8] sm:$0xf]
  %v57 = vld [vmem:[%s0 + $0xac] sm:$0xf]
  %v58 = vld [vmem:[%s0 + $0xb0] sm:$0xf]
  %v59 = vld [vmem:[%s0 + $0xb4] sm:$0xf]
  %v60 = vld [vmem:[%s0 + $0xb8] sm:$0xf]
  %v61 = vld [vmem:[%s0 + $0xbc] sm:$0xf]
  %v62 = vld [vmem:[%s0 + $0xc0] sm:$0xf]
  %v63 = vld [vmem:[%s0 + $0xc4] sm:$0xf]
  %v64 = vld [vmem:[%s0 + $0xc8] sm:$0xf]
  %v65 = vld [vmem:[%s0 + $0xcc] sm:$0xf]
  %v66 = vld [vmem:[%s0 + $0xd0] sm:$0xf]
  %v67 = vld [vmem:[%s0 + $0xd4] sm:$0xf]
  %v68 = vld [vmem:[%s0 + $0xd8] sm:$0xf]
  %v69 = vld [vmem:[%s0 + $0xdc] sm:$0xf]
  %v70 = vld [vmem:[%s0 + $0xe0] sm:$0xf]
  %v71 = vld [vmem:[%s0 + $0xe4] sm:$0xf]
  %v72 = vld [vmem:[%s0 + $0xe8] sm:$0xf]
  %v73 = vld [vmem:[%s0 + $0xec] sm:$0xf]
  %v74 = vld [vmem:[%s0 + $0xf0] sm:$0xf]
  %v75 = vld [vmem:[%s0 + $0xf4] sm:$0xf]
  %v76 = vld [vmem:[%s0 + $0xf8] sm:$0xf]
  %v77 = vld [vmem:[%s0 + $0xfc] sm:$0xf]
  %v78 = vunpack.c.l.bf16 %v14
  %v79 = vunpack.c.l.bf16 %v15
  %v80 = vunpack.c.l.bf16 %v16
  %v81 = vunpack.c.l.bf16 %v17
  %v82 = vunpack.c.l.bf16 %v18
  %v83 = vunpack.c.l.bf16 %v19
  %v84 = vunpack.c.l.bf16 %v20
  %v85 = vunpack.c.l.bf16 %v21
  %v86 = vunpack.c.l.bf16 %v22
  %v87 = vunpack.c.l.bf16 %v23
  %v88 = vunpack.c.l.bf16 %v24
  %v89 = vunpack.c.l.bf16 %v25
  %v90 = vunpack.c.l.bf16 %v26
  %v91 = vunpack.c.l.bf16 %v27
  %v92 = vunpack.c.l.bf16 %v28
  %v93 = vunpack.c.l.bf16 %v29
  %v94 = vunpack.c.l.bf16 %v30
  %v95 = vunpack.c.l.bf16 %v31
  %v96 = vunpack.c.l.bf16 %v32
  %v97 = vunpack.c.l.bf16 %v33
  %v98 = vunpack.c.l.bf16 %v34
  %v99 = vunpack.c.l.bf16 %v35
  %v100 = vunpack.c.l.bf16 %v36
  %v101 = vunpack.c.l.bf16 %v37
  %v102 = vunpack.c.l.bf16 %v38
  %v103 = vunpack.c.l.bf16 %v39
  %v104 = vunpack.c.l.bf16 %v40
  %v105 = vunpack.c.l.bf16 %v41
  %v106 = vunpack.c.l.bf16 %v42
  %v107 = vunpack.c.l.bf16 %v43
  %v108 = vunpack.c.l.bf16 %v44
  %v109 = vunpack.c.l.bf16 %v45
  %v110 = vunpack.c.l.bf16 %v46
  %v111 = vunpack.c.l.bf16 %v47
  %v112 = vunpack.c.l.bf16 %v48
  %v113 = vunpack.c.l.bf16 %v49
  %v114 = vunpack.c.l.bf16 %v50
  %v115 = vunpack.c.l.bf16 %v51
  %v116 = vunpack.c.l.bf16 %v52
  %v117 = vunpack.c.l.bf16 %v53
  %v118 = vunpack.c.l.bf16 %v54
  %v119 = vunpack.c.l.bf16 %v55
  %v120 = vunpack.c.l.bf16 %v56
  %v121 = vunpack.c.l.bf16 %v57
  %v122 = vunpack.c.l.bf16 %v58
  %v123 = vunpack.c.l.bf16 %v59
  %v124 = vunpack.c.l.bf16 %v60
  %v125 = vunpack.c.l.bf16 %v61
  %v126 = vunpack.c.l.bf16 %v62
  %v127 = vunpack.c.l.bf16 %v63
  %v128 = vunpack.c.l.bf16 %v64
  %v129 = vunpack.c.l.bf16 %v65
  %v130 = vunpack.c.l.bf16 %v66
  %v131 = vunpack.c.l.bf16 %v67
  %v132 = vunpack.c.l.bf16 %v68
  %v133 = vunpack.c.l.bf16 %v69
  %v134 = vunpack.c.l.bf16 %v70
  %v135 = vunpack.c.l.bf16 %v71
  %v136 = vunpack.c.l.bf16 %v72
  %v137 = vunpack.c.l.bf16 %v73
  %v138 = vunpack.c.l.bf16 %v74
  %v139 = vunpack.c.l.bf16 %v75
  %v140 = vunpack.c.l.bf16 %v76
  %v141 = vunpack.c.l.bf16 %v77
  %v142 = vld [vmem:[%s1] sm:$0x1]
  %v144 = vlaneseq
  %v145 = vshrl.u32 %v144, 7
  %v146 = vsub.s32 0, %v145
  %v147 = vrot.slane %v142, %v146
  %v149 = vmul.f32 %v78, %v147
  %v150 = vmul.f32 %v79, %v147
  %v151 = vmul.f32 %v80, %v147
  %v152 = vmul.f32 %v81, %v147
  %v153 = vmul.f32 %v82, %v147
  %v154 = vmul.f32 %v83, %v147
  %v155 = vmul.f32 %v84, %v147
  %v156 = vmul.f32 %v85, %v147
  %v157 = vmul.f32 %v86, %v147
  %v158 = vmul.f32 %v87, %v147
  %v159 = vmul.f32 %v88, %v147
  %v160 = vmul.f32 %v89, %v147
  %v161 = vmul.f32 %v90, %v147
  %v162 = vmul.f32 %v91, %v147
  %v163 = vmul.f32 %v92, %v147
  %v164 = vmul.f32 %v93, %v147
  %v165 = vmul.f32 %v94, %v147
  %v166 = vmul.f32 %v95, %v147
  %v167 = vmul.f32 %v96, %v147
  %v168 = vmul.f32 %v97, %v147
  %v169 = vmul.f32 %v98, %v147
  %v170 = vmul.f32 %v99, %v147
  %v171 = vmul.f32 %v100, %v147
  %v172 = vmul.f32 %v101, %v147
  %v173 = vmul.f32 %v102, %v147
  %v174 = vmul.f32 %v103, %v147
  %v175 = vmul.f32 %v104, %v147
  %v176 = vmul.f32 %v105, %v147
  %v177 = vmul.f32 %v106, %v147
  %v178 = vmul.f32 %v107, %v147
  %v179 = vmul.f32 %v108, %v147
  %v180 = vmul.f32 %v109, %v147
  %v181 = vmul.f32 %v110, %v147
  %v182 = vmul.f32 %v111, %v147
  %v183 = vmul.f32 %v112, %v147
  %v184 = vmul.f32 %v113, %v147
  %v185 = vmul.f32 %v114, %v147
  %v186 = vmul.f32 %v115, %v147
  %v187 = vmul.f32 %v116, %v147
  %v188 = vmul.f32 %v117, %v147
  %v189 = vmul.f32 %v118, %v147
  %v190 = vmul.f32 %v119, %v147
  %v191 = vmul.f32 %v120, %v147
  %v192 = vmul.f32 %v121, %v147
  %v193 = vmul.f32 %v122, %v147
  %v194 = vmul.f32 %v123, %v147
  %v195 = vmul.f32 %v124, %v147
  %v196 = vmul.f32 %v125, %v147
  %v197 = vmul.f32 %v126, %v147
  %v198 = vmul.f32 %v127, %v147
  %v199 = vmul.f32 %v128, %v147
  %v200 = vmul.f32 %v129, %v147
  %v201 = vmul.f32 %v130, %v147
  %v202 = vmul.f32 %v131, %v147
  %v203 = vmul.f32 %v132, %v147
  %v204 = vmul.f32 %v133, %v147
  %v205 = vmul.f32 %v134, %v147
  %v206 = vmul.f32 %v135, %v147
  %v207 = vmul.f32 %v136, %v147
  %v208 = vmul.f32 %v137, %v147
  %v209 = vmul.f32 %v138, %v147
  %v210 = vmul.f32 %v139, %v147
  %v211 = vmul.f32 %v140, %v147
  %v212 = vmul.f32 %v141, %v147
  %v213 = vld [vmem:[%s2] sm:$0x1]
  %v215 = vlaneseq
  %v216 = vshrl.u32 %v215, 7
  %v217 = vsub.s32 0, %v216
  %v218 = vrot.slane %v213, %v217
  %v220 = vadd.f32 %v149, %v218
  %v221 = vadd.f32 %v150, %v218
  %v222 = vadd.f32 %v151, %v218
  %v223 = vadd.f32 %v152, %v218
  %v224 = vadd.f32 %v153, %v218
  %v225 = vadd.f32 %v154, %v218
  %v226 = vadd.f32 %v155, %v218
  %v227 = vadd.f32 %v156, %v218
  %v228 = vadd.f32 %v157, %v218
  %v229 = vadd.f32 %v158, %v218
  %v230 = vadd.f32 %v159, %v218
  %v231 = vadd.f32 %v160, %v218
  %v232 = vadd.f32 %v161, %v218
  %v233 = vadd.f32 %v162, %v218
  %v234 = vadd.f32 %v163, %v218
  %v235 = vadd.f32 %v164, %v218
  %v236 = vadd.f32 %v165, %v218
  %v237 = vadd.f32 %v166, %v218
  %v238 = vadd.f32 %v167, %v218
  %v239 = vadd.f32 %v168, %v218
  %v240 = vadd.f32 %v169, %v218
  %v241 = vadd.f32 %v170, %v218
  %v242 = vadd.f32 %v171, %v218
  %v243 = vadd.f32 %v172, %v218
  %v244 = vadd.f32 %v173, %v218
  %v245 = vadd.f32 %v174, %v218
  %v246 = vadd.f32 %v175, %v218
  %v247 = vadd.f32 %v176, %v218
  %v248 = vadd.f32 %v177, %v218
  %v249 = vadd.f32 %v178, %v218
  %v250 = vadd.f32 %v179, %v218
  %v251 = vadd.f32 %v180, %v218
  %v252 = vadd.f32 %v181, %v218
  %v253 = vadd.f32 %v182, %v218
  %v254 = vadd.f32 %v183, %v218
  %v255 = vadd.f32 %v184, %v218
  %v256 = vadd.f32 %v185, %v218
  %v257 = vadd.f32 %v186, %v218
  %v258 = vadd.f32 %v187, %v218
  %v259 = vadd.f32 %v188, %v218
  %v260 = vadd.f32 %v189, %v218
  %v261 = vadd.f32 %v190, %v218
  %v262 = vadd.f32 %v191, %v218
  %v263 = vadd.f32 %v192, %v218
  %v264 = vadd.f32 %v193, %v218
  %v265 = vadd.f32 %v194, %v218
  %v266 = vadd.f32 %v195, %v218
  %v267 = vadd.f32 %v196, %v218
  %v268 = vadd.f32 %v197, %v218
  %v269 = vadd.f32 %v198, %v218
  %v270 = vadd.f32 %v199, %v218
  %v271 = vadd.f32 %v200, %v218
  %v272 = vadd.f32 %v201, %v218
  %v273 = vadd.f32 %v202, %v218
  %v274 = vadd.f32 %v203, %v218
  %v275 = vadd.f32 %v204, %v218
  %v276 = vadd.f32 %v205, %v218
  %v277 = vadd.f32 %v206, %v218
  %v278 = vadd.f32 %v207, %v218
  %v279 = vadd.f32 %v208, %v218
  %v280 = vadd.f32 %v209, %v218
  %v281 = vadd.f32 %v210, %v218
  %v282 = vadd.f32 %v211, %v218
  %v283 = vadd.f32 %v212, %v218
  %v284 = vmax.f32 %v220, 0.0
  %v285 = vmax.f32 %v221, 0.0
  %v286 = vmax.f32 %v222, 0.0
  %v287 = vmax.f32 %v223, 0.0
  %v288 = vmax.f32 %v224, 0.0
  %v289 = vmax.f32 %v225, 0.0
  %v290 = vmax.f32 %v226, 0.0
  %v291 = vmax.f32 %v227, 0.0
  %v292 = vmax.f32 %v228, 0.0
  %v293 = vmax.f32 %v229, 0.0
  %v294 = vmax.f32 %v230, 0.0
  %v295 = vmax.f32 %v231, 0.0
  %v296 = vmax.f32 %v232, 0.0
  %v297 = vmax.f32 %v233, 0.0
  %v298 = vmax.f32 %v234, 0.0
  %v299 = vmax.f32 %v235, 0.0
  %v300 = vmax.f32 %v236, 0.0
  %v301 = vmax.f32 %v237, 0.0
  %v302 = vmax.f32 %v238, 0.0
  %v303 = vmax.f32 %v239, 0.0
  %v304 = vmax.f32 %v240, 0.0
  %v305 = vmax.f32 %v241, 0.0
  %v306 = vmax.f32 %v242, 0.0
  %v307 = vmax.f32 %v243, 0.0
  %v308 = vmax.f32 %v244, 0.0
  %v309 = vmax.f32 %v245, 0.0
  %v310 = vmax.f32 %v246, 0.0
  %v311 = vmax.f32 %v247, 0.0
  %v312 = vmax.f32 %v248, 0.0
  %v313 = vmax.f32 %v249, 0.0
  %v314 = vmax.f32 %v250, 0.0
  %v315 = vmax.f32 %v251, 0.0
  %v316 = vmax.f32 %v252, 0.0
  %v317 = vmax.f32 %v253, 0.0
  %v318 = vmax.f32 %v254, 0.0
  %v319 = vmax.f32 %v255, 0.0
  %v320 = vmax.f32 %v256, 0.0
  %v321 = vmax.f32 %v257, 0.0
  %v322 = vmax.f32 %v258, 0.0
  %v323 = vmax.f32 %v259, 0.0
  %v324 = vmax.f32 %v260, 0.0
  %v325 = vmax.f32 %v261, 0.0
  %v326 = vmax.f32 %v262, 0.0
  %v327 = vmax.f32 %v263, 0.0
  %v328 = vmax.f32 %v264, 0.0
  %v329 = vmax.f32 %v265, 0.0
  %v330 = vmax.f32 %v266, 0.0
  %v331 = vmax.f32 %v267, 0.0
  %v332 = vmax.f32 %v268, 0.0
  %v333 = vmax.f32 %v269, 0.0
  %v334 = vmax.f32 %v270, 0.0
  %v335 = vmax.f32 %v271, 0.0
  %v336 = vmax.f32 %v272, 0.0
  %v337 = vmax.f32 %v273, 0.0
  %v338 = vmax.f32 %v274, 0.0
  %v339 = vmax.f32 %v275, 0.0
  %v340 = vmax.f32 %v276, 0.0
  %v341 = vmax.f32 %v277, 0.0
  %v342 = vmax.f32 %v278, 0.0
  %v343 = vmax.f32 %v279, 0.0
  %v344 = vmax.f32 %v280, 0.0
  %v345 = vmax.f32 %v281, 0.0
  %v346 = vmax.f32 %v282, 0.0
  %v347 = vmax.f32 %v283, 0.0
  %v348 = vpack.c.bf16 %v285, %v284
  %v349 = vpack.c.bf16 %v287, %v286
  %v350 = vpack.c.bf16 %v289, %v288
  %v351 = vpack.c.bf16 %v291, %v290
  %v352 = vpack.c.bf16 %v293, %v292
  %v353 = vpack.c.bf16 %v295, %v294
  %v354 = vpack.c.bf16 %v297, %v296
  %v355 = vpack.c.bf16 %v299, %v298
  %v356 = vpack.c.bf16 %v301, %v300
  %v357 = vpack.c.bf16 %v303, %v302
  %v358 = vpack.c.bf16 %v305, %v304
  %v359 = vpack.c.bf16 %v307, %v306
  %v360 = vpack.c.bf16 %v309, %v308
  %v361 = vpack.c.bf16 %v311, %v310
  %v362 = vpack.c.bf16 %v313, %v312
  %v363 = vpack.c.bf16 %v315, %v314
  %v364 = vpack.c.bf16 %v317, %v316
  %v365 = vpack.c.bf16 %v319, %v318
  %v366 = vpack.c.bf16 %v321, %v320
  %v367 = vpack.c.bf16 %v323, %v322
  %v368 = vpack.c.bf16 %v325, %v324
  %v369 = vpack.c.bf16 %v327, %v326
  %v370 = vpack.c.bf16 %v329, %v328
  %v371 = vpack.c.bf16 %v331, %v330
  %v372 = vpack.c.bf16 %v333, %v332
  %v373 = vpack.c.bf16 %v335, %v334
  %v374 = vpack.c.bf16 %v337, %v336
  %v375 = vpack.c.bf16 %v339, %v338
  %v376 = vpack.c.bf16 %v341, %v340
  %v377 = vpack.c.bf16 %v343, %v342
  %v378 = vpack.c.bf16 %v345, %v344
  %v379 = vpack.c.bf16 %v347, %v346
  %v412 = vunpack.c.l.b16 %v348
  %v413 = vunpack.c.h.b16 %v348
  %v414 = vunpack.c.l.b16 %v349
  %v415 = vunpack.c.h.b16 %v349
  %v416 = vunpack.c.l.b16 %v350
  %v417 = vunpack.c.h.b16 %v350
  %v418 = vunpack.c.l.b16 %v351
  %v419 = vunpack.c.h.b16 %v351
  %v420 = vunpack.c.l.b16 %v352
  %v421 = vunpack.c.h.b16 %v352
  %v422 = vunpack.c.l.b16 %v353
  %v423 = vunpack.c.h.b16 %v353
  %v424 = vunpack.c.l.b16 %v354
  %v425 = vunpack.c.h.b16 %v354
  %v426 = vunpack.c.l.b16 %v355
  %v427 = vunpack.c.h.b16 %v355
  %v428 = vunpack.c.l.b16 %v356
  %v429 = vunpack.c.h.b16 %v356
  %v430 = vunpack.c.l.b16 %v357
  %v431 = vunpack.c.h.b16 %v357
  %v432 = vunpack.c.l.b16 %v358
  %v433 = vunpack.c.h.b16 %v358
  %v434 = vunpack.c.l.b16 %v359
  %v435 = vunpack.c.h.b16 %v359
  %v436 = vunpack.c.l.b16 %v360
  %v437 = vunpack.c.h.b16 %v360
  %v438 = vunpack.c.l.b16 %v361
  %v439 = vunpack.c.h.b16 %v361
  %v440 = vunpack.c.l.b16 %v362
  %v441 = vunpack.c.h.b16 %v362
  %v442 = vunpack.c.l.b16 %v363
  %v443 = vunpack.c.h.b16 %v363
  %v444 = vunpack.c.l.b16 %v364
  %v445 = vunpack.c.h.b16 %v364
  %v446 = vunpack.c.l.b16 %v365
  %v447 = vunpack.c.h.b16 %v365
  %v448 = vunpack.c.l.b16 %v366
  %v449 = vunpack.c.h.b16 %v366
  %v450 = vunpack.c.l.b16 %v367
  %v451 = vunpack.c.h.b16 %v367
  %v452 = vunpack.c.l.b16 %v368
  %v453 = vunpack.c.h.b16 %v368
  %v454 = vunpack.c.l.b16 %v369
  %v455 = vunpack.c.h.b16 %v369
  %v456 = vunpack.c.l.b16 %v370
  %v457 = vunpack.c.h.b16 %v370
  %v458 = vunpack.c.l.b16 %v371
  %v459 = vunpack.c.h.b16 %v371
  %v460 = vunpack.c.l.b16 %v372
  %v461 = vunpack.c.h.b16 %v372
  %v462 = vunpack.c.l.b16 %v373
  %v463 = vunpack.c.h.b16 %v373
  %v464 = vunpack.c.l.b16 %v374
  %v465 = vunpack.c.h.b16 %v374
  %v466 = vunpack.c.l.b16 %v375
  %v467 = vunpack.c.h.b16 %v375
  %v468 = vunpack.c.l.b16 %v376
  %v469 = vunpack.c.h.b16 %v376
  %v470 = vunpack.c.l.b16 %v377
  %v471 = vunpack.c.h.b16 %v377
  %v472 = vunpack.c.l.b16 %v378
  %v473 = vunpack.c.h.b16 %v378
  %v474 = vunpack.c.l.b16 %v379
  %v475 = vunpack.c.h.b16 %v379
  %v476 = vpack.c.b16 %v412, %v412
  %v477 = vpack.c.b16 %v413, %v413
  %v478 = vpack.c.b16 %v414, %v414
  %v479 = vpack.c.b16 %v415, %v415
  %v480 = vpack.c.b16 %v416, %v416
  %v481 = vpack.c.b16 %v417, %v417
  %v482 = vpack.c.b16 %v418, %v418
  %v483 = vpack.c.b16 %v419, %v419
  %v484 = vpack.c.b16 %v420, %v420
  %v485 = vpack.c.b16 %v421, %v421
  %v486 = vpack.c.b16 %v422, %v422
  %v487 = vpack.c.b16 %v423, %v423
  %v488 = vpack.c.b16 %v424, %v424
  %v489 = vpack.c.b16 %v425, %v425
  %v490 = vpack.c.b16 %v426, %v426
  %v491 = vpack.c.b16 %v427, %v427
  %v492 = vpack.c.b16 %v428, %v428
  %v493 = vpack.c.b16 %v429, %v429
  %v494 = vpack.c.b16 %v430, %v430
  %v495 = vpack.c.b16 %v431, %v431
  %v496 = vpack.c.b16 %v432, %v432
  %v497 = vpack.c.b16 %v433, %v433
  %v498 = vpack.c.b16 %v434, %v434
  %v499 = vpack.c.b16 %v435, %v435
  %v500 = vpack.c.b16 %v436, %v436
  %v501 = vpack.c.b16 %v437, %v437
  %v502 = vpack.c.b16 %v438, %v438
  %v503 = vpack.c.b16 %v439, %v439
  %v504 = vpack.c.b16 %v440, %v440
  %v505 = vpack.c.b16 %v441, %v441
  %v506 = vpack.c.b16 %v442, %v442
  %v507 = vpack.c.b16 %v443, %v443
  %v508 = vpack.c.b16 %v444, %v444
  %v509 = vpack.c.b16 %v445, %v445
  %v510 = vpack.c.b16 %v446, %v446
  %v511 = vpack.c.b16 %v447, %v447
  %v512 = vpack.c.b16 %v448, %v448
  %v513 = vpack.c.b16 %v449, %v449
  %v514 = vpack.c.b16 %v450, %v450
  %v515 = vpack.c.b16 %v451, %v451
  %v516 = vpack.c.b16 %v452, %v452
  %v517 = vpack.c.b16 %v453, %v453
  %v518 = vpack.c.b16 %v454, %v454
  %v519 = vpack.c.b16 %v455, %v455
  %v520 = vpack.c.b16 %v456, %v456
  %v521 = vpack.c.b16 %v457, %v457
  %v522 = vpack.c.b16 %v458, %v458
  %v523 = vpack.c.b16 %v459, %v459
  %v524 = vpack.c.b16 %v460, %v460
  %v525 = vpack.c.b16 %v461, %v461
  %v526 = vpack.c.b16 %v462, %v462
  %v527 = vpack.c.b16 %v463, %v463
  %v528 = vpack.c.b16 %v464, %v464
  %v529 = vpack.c.b16 %v465, %v465
  %v530 = vpack.c.b16 %v466, %v466
  %v531 = vpack.c.b16 %v467, %v467
  %v532 = vpack.c.b16 %v468, %v468
  %v533 = vpack.c.b16 %v469, %v469
  %v534 = vpack.c.b16 %v470, %v470
  %v535 = vpack.c.b16 %v471, %v471
  %v536 = vpack.c.b16 %v472, %v472
  %v537 = vpack.c.b16 %v473, %v473
  %v538 = vpack.c.b16 %v474, %v474
  %v539 = vpack.c.b16 %v475, %v475
  %604 = vst [vmem:[%s3] sm:$0xf] %v476
  %605 = vst [vmem:[%s3 + $0x4] sm:$0xf] %v477
  %606 = vst [vmem:[%s3 + $0x8] sm:$0xf] %v478
  %607 = vst [vmem:[%s3 + $0xc] sm:$0xf] %v479
  %608 = vst [vmem:[%s3 + $0x10] sm:$0xf] %v480
  %609 = vst [vmem:[%s3 + $0x14] sm:$0xf] %v481
  %610 = vst [vmem:[%s3 + $0x18] sm:$0xf] %v482
  %611 = vst [vmem:[%s3 + $0x1c] sm:$0xf] %v483
  %612 = vst [vmem:[%s3 + $0x20] sm:$0xf] %v484
  %613 = vst [vmem:[%s3 + $0x24] sm:$0xf] %v485
  %614 = vst [vmem:[%s3 + $0x28] sm:$0xf] %v486
  %615 = vst [vmem:[%s3 + $0x2c] sm:$0xf] %v487
  %616 = vst [vmem:[%s3 + $0x30] sm:$0xf] %v488
  %617 = vst [vmem:[%s3 + $0x34] sm:$0xf] %v489
  %618 = vst [vmem:[%s3 + $0x38] sm:$0xf] %v490
  %619 = vst [vmem:[%s3 + $0x3c] sm:$0xf] %v491
  %620 = vst [vmem:[%s3 + $0x40] sm:$0xf] %v492
  %621 = vst [vmem:[%s3 + $0x44] sm:$0xf] %v493
  %622 = vst [vmem:[%s3 + $0x48] sm:$0xf] %v494
  %623 = vst [vmem:[%s3 + $0x4c] sm:$0xf] %v495
  %624 = vst [vmem:[%s3 + $0x50] sm:$0xf] %v496
  %625 = vst [vmem:[%s3 + $0x54] sm:$0xf] %v497
  %626 = vst [vmem:[%s3 + $0x58] sm:$0xf] %v498
  %627 = vst [vmem:[%s3 + $0x5c] sm:$0xf] %v499
  %628 = vst [vmem:[%s3 + $0x60] sm:$0xf] %v500
  %629 = vst [vmem:[%s3 + $0x64] sm:$0xf] %v501
  %630 = vst [vmem:[%s3 + $0x68] sm:$0xf] %v502
  %631 = vst [vmem:[%s3 + $0x6c] sm:$0xf] %v503
  %632 = vst [vmem:[%s3 + $0x70] sm:$0xf] %v504
  %633 = vst [vmem:[%s3 + $0x74] sm:$0xf] %v505
  %634 = vst [vmem:[%s3 + $0x78] sm:$0xf] %v506
  %635 = vst [vmem:[%s3 + $0x7c] sm:$0xf] %v507
  %636 = vst [vmem:[%s3 + $0x80] sm:$0xf] %v508
  %637 = vst [vmem:[%s3 + $0x84] sm:$0xf] %v509
  %638 = vst [vmem:[%s3 + $0x88] sm:$0xf] %v510
  %639 = vst [vmem:[%s3 + $0x8c] sm:$0xf] %v511
  %640 = vst [vmem:[%s3 + $0x90] sm:$0xf] %v512
  %641 = vst [vmem:[%s3 + $0x94] sm:$0xf] %v513
  %642 = vst [vmem:[%s3 + $0x98] sm:$0xf] %v514
  %643 = vst [vmem:[%s3 + $0x9c] sm:$0xf] %v515
  %644 = vst [vmem:[%s3 + $0xa0] sm:$0xf] %v516
  %645 = vst [vmem:[%s3 + $0xa4] sm:$0xf] %v517
  %646 = vst [vmem:[%s3 + $0xa8] sm:$0xf] %v518
  %647 = vst [vmem:[%s3 + $0xac] sm:$0xf] %v519
  %648 = vst [vmem:[%s3 + $0xb0] sm:$0xf] %v520
  %649 = vst [vmem:[%s3 + $0xb4] sm:$0xf] %v521
  %650 = vst [vmem:[%s3 + $0xb8] sm:$0xf] %v522
  %651 = vst [vmem:[%s3 + $0xbc] sm:$0xf] %v523
  %652 = vst [vmem:[%s3 + $0xc0] sm:$0xf] %v524
  %653 = vst [vmem:[%s3 + $0xc4] sm:$0xf] %v525
  %654 = vst [vmem:[%s3 + $0xc8] sm:$0xf] %v526
  %655 = vst [vmem:[%s3 + $0xcc] sm:$0xf] %v527
  %656 = vst [vmem:[%s3 + $0xd0] sm:$0xf] %v528
  %657 = vst [vmem:[%s3 + $0xd4] sm:$0xf] %v529
  %658 = vst [vmem:[%s3 + $0xd8] sm:$0xf] %v530
  %659 = vst [vmem:[%s3 + $0xdc] sm:$0xf] %v531
  %660 = vst [vmem:[%s3 + $0xe0] sm:$0xf] %v532
  %661 = vst [vmem:[%s3 + $0xe4] sm:$0xf] %v533
  %662 = vst [vmem:[%s3 + $0xe8] sm:$0xf] %v534
  %663 = vst [vmem:[%s3 + $0xec] sm:$0xf] %v535
  %664 = vst [vmem:[%s3 + $0xf0] sm:$0xf] %v536
  %665 = vst [vmem:[%s3 + $0xf4] sm:$0xf] %v537
  %666 = vst [vmem:[%s3 + $0xf8] sm:$0xf] %v538
  %667 = vst [vmem:[%s3 + $0xfc] sm:$0xf] %v539
  // Predicated region
  $region14: #{a_call__.55} parent=0 // pred_check
    _
  $region15: #{a_call__.55} parent=0 // pred_check_branch
    %669 = sbr.rel (0) target = $region17
  $region16: #{a_call__.55} parent=0 // pred_region
    _
  $region17: #{a_call__.55} parent=0 // pred_fallthru
    _
  // Predicated region
  $region18: #{a_call__.55} parent=0 // pred_check
    _
  $region19: #{a_call__.55} parent=0 // pred_check_branch
    %671 = sbr.rel (0) target = $region21
  $region20: #{a_call__.55} parent=0 // pred_region
    _
  $region21: #{a_call__.55} parent=0 // pred_fallthru
    _

// kernel: a_call__.56
$region0: #{a_call__.56}
  #allocation0 [shape = 'u32[]', space=smem, size = 0x4, offset = 0x4, fixed_abs, tag = 'smem constant byte address 0x4 - core index']
  #allocation1 [shape = 'u32[144,128]{1,0:T(1,128)}', space=vmem, size = 0x12000, scoped, tag = 'internal scratch']
  %s0 = inlined_call_operand.vmem [shape: bf16[2048,256], index: 0, kind: input, shape index: {}]
  %s1 = inlined_call_operand.vmem [shape: bf16[256,128], index: 1, kind: input, shape index: {}]
  %s2 = inlined_call_operand.vmem [shape: f32[1,128], index: 2, kind: input, shape index: {}]
  %s3 = inlined_call_operand.vmem [shape: f32[2048,128], index: 3, kind: output, shape index: {}]
  %s4 = sld [smem:[#allocation0]]
  $region45: #{a_call__.56} parent=0
    _
  %s6 = ssub.s32 1, %s4
  %s7 = scalar_select 0, %s6, %s4
  loop: start=0, step=1, limit=10
  $region2: #{a_call__.56} parent=0 // loop_pre_header
    _
  $region3: #{a_call__.56} parent=0 // loop_header
    %s9 = sphi 0, %s13
    %p10 = scmp.ge.s32.totalorder %s9, 10
    %s16 = sphi 0, %s28
    %s17 = sphi 0, %s24
    %s18 = sphi 0, %s16
    %s19 = sphi 0, %s17
    %s20 = sphi 0, %s18
    %s21 = sphi 0, %s19
    %s31 = sphi 0, %s33
    %s34 = sphi 0, %s31
    %s35 = sphi 0, %s34
    %s51 = sphi 0, %s35
    %s57 = sphi 0, %s59
    %s60 = sphi 0, %s57
    %s61 = sphi 0, %s60
    %s77 = sphi 0, %s61
    %s83 = sphi 0, %s85
    %s86 = sphi 0, %s83
    %s87 = sphi 0, %s86
    %s103 = sphi 0, %s87
    %s111 = sphi 0, %s113
    %s114 = sphi 0, %s111
    %s115 = sphi 0, %s114
    %s131 = sphi 0, %s115
  $region4: #{a_call__.56} parent=0 // loop_header_branch
    %12 = sbr.rel (%p10) target = $region8
  $region5: #{a_call__.56} parent=0 // loop_body
    %s14 = ssub.s32 %s9, 1
    %s15 = ssub.s32 %s9, 2
    %s22 = sadd.s32 1, %s17
    %p23 = scmp.ge.s32.totalorder %s22, 1
    %s24 = scalar_select %p23, 0, %s22
    %s25 = sadd.s32 1, %s16
    %s26 = scalar_select %p23, %s25, %s16
    %p27 = scmp.ge.s32.totalorder %s26, 8
    %s28 = scalar_select %p27, 0, %s26
    %s29 = ssub.s32 %s16, %s28
    %p30 = scmp.eq.s32.totalorder %s29, 0
    %s32 = sadd.s32 %s31, 1
    %s33 = scalar_select %p30, %s31, %s32
    %p36 = pneg %p30
    %p37 = scmp.eq.s32.totalorder %s9, 7
    %p38 = por %p36, %p37
    %p39 = scmp.ne.s32.totalorder %s31, %s34
    %p40 = scmp.eq.s32.totalorder %s9, 0
    %p41 = por %p39, %p40
    %p42 = scmp.ne.s32.totalorder %s31, %s34
    %p43 = scmp.eq.s32.totalorder %s14, 7
    %p44 = por %p42, %p43
    %p45 = scmp.ne.s32.totalorder %s34, %s35
    %p46 = scmp.eq.s32.totalorder %s14, 0
    %p47 = por %p45, %p46
    %p48 = scmp.ne.s32.totalorder %s34, %s35
    %p49 = scmp.eq.s32.totalorder %s15, 7
    %p50 = por %p48, %p49
    %p52 = scmp.ne.s32.totalorder %s35, %s51
    %p53 = scmp.eq.s32.totalorder %s15, 0
    %p54 = por %p52, %p53
    %s55 = ssub.s32 %s17, %s24
    %p56 = scmp.eq.s32.totalorder %s55, 0
    %s58 = sadd.s32 %s57, 1
    %s59 = scalar_select %p56, %s57, %s58
    %p62 = pneg %p56
    %p63 = scmp.eq.s32.totalorder %s9, 7
    %p64 = por %p62, %p63
    %p65 = scmp.ne.s32.totalorder %s57, %s60
    %p66 = scmp.eq.s32.totalorder %s9, 0
    %p67 = por %p65, %p66
    %p68 = scmp.ne.s32.totalorder %s57, %s60
    %p69 = scmp.eq.s32.totalorder %s14, 7
    %p70 = por %p68, %p69
    %p71 = scmp.ne.s32.totalorder %s60, %s61
    %p72 = scmp.eq.s32.totalorder %s14, 0
    %p73 = por %p71, %p72
    %p74 = scmp.ne.s32.totalorder %s60, %s61
    %p75 = scmp.eq.s32.totalorder %s15, 7
    %p76 = por %p74, %p75
    %p78 = scmp.ne.s32.totalorder %s61, %s77
    %p79 = scmp.eq.s32.totalorder %s15, 0
    %p80 = por %p78, %p79
    %s81 = ssub.s32 %s17, %s24
    %p82 = scmp.eq.s32.totalorder %s81, 0
    %s84 = sadd.s32 %s83, 1
    %s85 = scalar_select %p82, %s83, %s84
    %p88 = pneg %p82
    %p89 = scmp.eq.s32.totalorder %s9, 7
    %p90 = por %p88, %p89
    %p91 = scmp.ne.s32.totalorder %s83, %s86
    %p92 = scmp.eq.s32.totalorder %s9, 0
    %p93 = por %p91, %p92
    %p94 = scmp.ne.s32.totalorder %s83, %s86
    %p95 = scmp.eq.s32.totalorder %s14, 7
    %p96 = por %p94, %p95
    %p97 = scmp.ne.s32.totalorder %s86, %s87
    %p98 = scmp.eq.s32.totalorder %s14, 0
    %p99 = por %p97, %p98
    %p100 = scmp.ne.s32.totalorder %s86, %s87
    %p101 = scmp.eq.s32.totalorder %s15, 7
    %p102 = por %p100, %p101
    %p104 = scmp.ne.s32.totalorder %s87, %s103
    %p105 = scmp.eq.s32.totalorder %s15, 0
    %p106 = por %p104, %p105
    %s107 = ssub.s32 %s16, %s28
    %s108 = ssub.s32 %s17, %s24
    %s109 = sor.u32 %s107, %s108
    %p110 = scmp.eq.s32.totalorder %s109, 0
    %s112 = sadd.s32 %s111, 1
    %s113 = scalar_select %p110, %s111, %s112
    %p116 = pneg %p110
    %p117 = scmp.eq.s32.totalorder %s9, 7
    %p118 = por %p116, %p117
    %p119 = scmp.ne.s32.totalorder %s111, %s114
    %p120 = scmp.eq.s32.totalorder %s9, 0
    %p121 = por %p119, %p120
    %p122 = scmp.ne.s32.totalorder %s111, %s114
    %p123 = scmp.eq.s32.totalorder %s14, 7
    %p124 = por %p122, %p123
    %p125 = scmp.ne.s32.totalorder %s114, %s115
    %p126 = scmp.eq.s32.totalorder %s14, 0
    %p127 = por %p125, %p126
    %p128 = scmp.ne.s32.totalorder %s114, %s115
    %p129 = scmp.eq.s32.totalorder %s15, 7
    %p130 = por %p128, %p129
    %p132 = scmp.ne.s32.totalorder %s115, %s131
    %p133 = scmp.eq.s32.totalorder %s15, 0
    %p134 = por %p132, %p133
    %p135 = scmp.le.s32.totalorder 1, %s9
    %p136 = scmp.lt.s32.totalorder %s9, 9
    %p137 = pnand %p135, %p136
    %p138 = pneg %p137
    // Predicated region
    $region9: #{a_call__.56} parent=5 // pred_check
      _
    $region10: #{a_call__.56} parent=5 // pred_check_branch
      %140 = sbr.rel (%p137) target = $region12
    $region11: #{a_call__.56} parent=5 // pred_region
      %s141 = ssub.s32 %s9, 1
      // Predicated region
      $region13: #{a_call__.56} parent=11 // pred_check
        %p142 = pneg %p73
      $region14: #{a_call__.56} parent=11 // pred_check_branch
        %144 = sbr.rel (%p142) target = $region16
      $region15: #{a_call__.56} parent=11 // pred_region
        %p145 = scmp.lt.s32.totalorder %s19, 0
        %s146 = scalar_select %p145, %s19, 0
        %s147 = smul.addr %s146, 4
        %s148 = scalar_lea.vmem %s1, %s147
      $region16: #{a_call__.56} parent=11 // pred_fallthru
        _
      // Predicated region
      $region17: #{a_call__.56} parent=11 // pred_check
        %p149 = pneg %p99
      $region18: #{a_call__.56} parent=11 // pred_check_branch
        %151 = sbr.rel (%p149) target = $region20
      $region19: #{a_call__.56} parent=11 // pred_region
        %p152 = scmp.lt.s32.totalorder %s19, 0
        %s153 = scalar_select %p152, %s19, 0
        %s154 = scalar_lea.vmem %s2, %s153
      $region20: #{a_call__.56} parent=11 // pred_fallthru
        _
    $region12: #{a_call__.56} parent=5 // pred_fallthru
      _
    %p155 = scmp.lt.s32.totalorder %s9, 8
    // Predicated region
    $region21: #{a_call__.56} parent=5 // pred_check
      %p156 = pneg %p155
    $region22: #{a_call__.56} parent=5 // pred_check_branch
      %158 = sbr.rel (%p156) target = $region24
    $region23: #{a_call__.56} parent=5 // pred_region
      // Predicated region
      $region25: #{a_call__.56} parent=23 // pred_check
        %p159 = pneg %p41
      $region26: #{a_call__.56} parent=23 // pred_check_branch
        %161 = sbr.rel (%p159) target = $region28
      $region27: #{a_call__.56} parent=23 // pred_region
        %s162 = smul.u32 32, %s16
        %p163 = scmp.lt.s32.totalorder %s162, 255
        %s164 = scalar_select %p163, %s162, 255
        %s165 = smul.addr %s164, 2
        %s166 = smul.addr %s165, 4
        %s167 = scalar_lea.vmem %s0, %s166
        %s168 = smul.u32 32, %s16
      $region28: #{a_call__.56} parent=23 // pred_fallthru
        _
    $region24: #{a_call__.56} parent=5 // pred_fallthru
      _
    %p169 = scmp.le.s32.totalorder 1, %s9
    %p170 = scmp.lt.s32.totalorder %s9, 9
    %p171 = pnand %p169, %p170
    %p172 = pneg %p171
    // Predicated region
    $region29: #{a_call__.56} parent=5 // pred_check
      _
    $region30: #{a_call__.56} parent=5 // pred_check_branch
      %174 = sbr.rel (%p171) target = $region32
    $region31: #{a_call__.56} parent=5 // pred_region
      %s175 = ssub.s32 %s9, 1
      %s176 = smul.u32 32, %s18
      %p177 = scmp.lt.s32.totalorder %s176, 255
      %s178 = scalar_select %p177, %s176, 255
      %s179 = smul.addr %s178, 2
      %s180 = smul.addr %s179, 4
      %s181 = scalar_lea.vmem %s0, %s180
      %p182 = pneg %p47
      %p183 = pneg %p44
      %p184 = scmp.lt.s32.totalorder %s19, 0
      %s185 = scalar_select %p184, %s19, 0
      %s186 = smul.addr %s185, 4
      %s187 = scalar_lea.vmem %s1, %s186
      %p188 = pneg %p73
      %p189 = pneg %p70
      %p190 = scmp.lt.s32.totalorder %s19, 0
      %s191 = scalar_select %p190, %s19, 0
      %s192 = scalar_lea.vmem %s2, %s191
      %p193 = pneg %p99
      %p194 = pneg %p96
      %p195 = pneg %p127
      %p196 = pneg %p124
      %s197 = smul.u32 32, %s18
      %p198 = scmp.lt.s32.totalorder %s197, 255
      %s199 = scalar_select %p198, %s197, 255
      %p200 = scmp.lt.s32.totalorder %s19, 0
      %s201 = scalar_select %p200, %s19, 0
      %s202 = sadd.s32 %s201, %s199
      %s203 = smul.addr %s202, 8
      %s204 = scalar_lea.vmem %s3, %s203
      %s205 = smul.u32 32, %s18
      %p206 = scmp.lt.s32.totalorder %s205, 255
      %s207 = scalar_select %p206, %s205, 255
      %s208 = smul.addr %s207, 2
      %s209 = smul.addr %s208, 4
      %s210 = scalar_lea.vmem %s0, %s209
      %s211 = smul.u32 32, %s18
      %p212 = scmp.lt.s32.totalorder %s19, 0
      %s213 = scalar_select %p212, %s19, 0
      %s214 = smul.addr %s213, 4
      %s215 = scalar_lea.vmem %s1, %s214
      %p216 = scmp.lt.s32.totalorder %s19, 0
      %s217 = scalar_select %p216, %s19, 0
      %s218 = scalar_lea.vmem %s2, %s217
      %s219 = smul.u32 32, %s18
      %p220 = scmp.lt.s32.totalorder %s219, 255
      %s221 = scalar_select %p220, %s219, 255
      %p222 = scmp.lt.s32.totalorder %s19, 0
      %s223 = scalar_select %p222, %s19, 0
      %s224 = sadd.s32 %s223, %s221
      %s225 = smul.addr %s224, 8
      %s226 = scalar_lea.vmem %s3, %s225
      %s227 = smul.u32 32, %s18
      %v229 = vld [vmem:[%s210] sm:$0xff]
      %v230 = vld [vmem:[%s210 + $0x8] sm:$0xff]
      %v231 = vld [vmem:[%s210 + $0x10] sm:$0xff]
      %v232 = vld [vmem:[%s210 + $0x18] sm:$0xff]
      %v233 = vld [vmem:[%s210 + $0x20] sm:$0xff]
      %v234 = vld [vmem:[%s210 + $0x28] sm:$0xff]
      %v235 = vld [vmem:[%s210 + $0x30] sm:$0xff]
      %v236 = vld [vmem:[%s210 + $0x38] sm:$0xff]
      %v237 = vld [vmem:[%s210 + $0x40] sm:$0xff]
      %v238 = vld [vmem:[%s210 + $0x48] sm:$0xff]
      %v239 = vld [vmem:[%s210 + $0x50] sm:$0xff]
      %v240 = vld [vmem:[%s210 + $0x58] sm:$0xff]
      %v241 = vld [vmem:[%s210 + $0x60] sm:$0xff]
      %v242 = vld [vmem:[%s210 + $0x68] sm:$0xff]
      %v243 = vld [vmem:[%s210 + $0x70] sm:$0xff]
      %v244 = vld [vmem:[%s210 + $0x78] sm:$0xff]
      %v245 = vld [vmem:[%s210 + $0x80] sm:$0xff]
      %v246 = vld [vmem:[%s210 + $0x88] sm:$0xff]
      %v247 = vld [vmem:[%s210 + $0x90] sm:$0xff]
      %v248 = vld [vmem:[%s210 + $0x98] sm:$0xff]
      %v249 = vld [vmem:[%s210 + $0xa0] sm:$0xff]
      %v250 = vld [vmem:[%s210 + $0xa8] sm:$0xff]
      %v251 = vld [vmem:[%s210 + $0xb0] sm:$0xff]
      %v252 = vld [vmem:[%s210 + $0xb8] sm:$0xff]
      %v253 = vld [vmem:[%s210 + $0xc0] sm:$0xff]
      %v254 = vld [vmem:[%s210 + $0xc8] sm:$0xff]
      %v255 = vld [vmem:[%s210 + $0xd0] sm:$0xff]
      %v256 = vld [vmem:[%s210 + $0xd8] sm:$0xff]
      %v257 = vld [vmem:[%s210 + $0xe0] sm:$0xff]
      %v258 = vld [vmem:[%s210 + $0xe8] sm:$0xff]
      %v259 = vld [vmem:[%s210 + $0xf0] sm:$0xff]
      %v260 = vld [vmem:[%s210 + $0xf8] sm:$0xff]
      %v261 = vld [vmem:[%s215] sm:$0xf]
      %v262 = vld [vmem:[%s215 + $0x4] sm:$0xf]
      %v263 = vld [vmem:[%s215 + $0x8] sm:$0xf]
      %v264 = vld [vmem:[%s215 + $0xc] sm:$0xf]
      %v265 = vld [vmem:[%s215 + $0x10] sm:$0xf]
      %v266 = vld [vmem:[%s215 + $0x14] sm:$0xf]
      %v267 = vld [vmem:[%s215 + $0x18] sm:$0xf]
      %v268 = vld [vmem:[%s215 + $0x1c] sm:$0xf]
      %v269 = vld [vmem:[%s215 + $0x20] sm:$0xf]
      %v270 = vld [vmem:[%s215 + $0x24] sm:$0xf]
      %v271 = vld [vmem:[%s215 + $0x28] sm:$0xf]
      %v272 = vld [vmem:[%s215 + $0x2c] sm:$0xf]
      %v273 = vld [vmem:[%s215 + $0x30] sm:$0xf]
      %v274 = vld [vmem:[%s215 + $0x34] sm:$0xf]
      %v275 = vld [vmem:[%s215 + $0x38] sm:$0xf]
      %v276 = vld [vmem:[%s215 + $0x3c] sm:$0xf]
      %v277 = vld [vmem:[%s215 + $0x40] sm:$0xf]
      %v278 = vld [vmem:[%s215 + $0x44] sm:$0xf]
      %v279 = vld [vmem:[%s215 + $0x48] sm:$0xf]
      %v280 = vld [vmem:[%s215 + $0x4c] sm:$0xf]
      %v281 = vld [vmem:[%s215 + $0x50] sm:$0xf]
      %v282 = vld [vmem:[%s215 + $0x54] sm:$0xf]
      %v283 = vld [vmem:[%s215 + $0x58] sm:$0xf]
      %v284 = vld [vmem:[%s215 + $0x5c] sm:$0xf]
      %v285 = vld [vmem:[%s215 + $0x60] sm:$0xf]
      %v286 = vld [vmem:[%s215 + $0x64] sm:$0xf]
      %v287 = vld [vmem:[%s215 + $0x68] sm:$0xf]
      %v288 = vld [vmem:[%s215 + $0x6c] sm:$0xf]
      %v289 = vld [vmem:[%s215 + $0x70] sm:$0xf]
      %v290 = vld [vmem:[%s215 + $0x74] sm:$0xf]
      %v291 = vld [vmem:[%s215 + $0x78] sm:$0xf]
      %v292 = vld [vmem:[%s215 + $0x7c] sm:$0xf]
      %v293 = vld [vmem:[%s218] sm:$0x1]
      %v295 = vlaneseq
      %v296 = vshrl.u32 %v295, 7
      %v297 = vsub.s32 0, %v296
      %v298 = vrot.slane %v293, %v297
      %v332 = vunpack.c.l.b16 %v229
      %v333 = vunpack.c.h.b16 %v229
      %v334 = vunpack.c.l.b16 %v230
      %v335 = vunpack.c.h.b16 %v230
      %v336 = vunpack.c.l.b16 %v231
      %v337 = vunpack.c.h.b16 %v231
      %v338 = vunpack.c.l.b16 %v232
      %v339 = vunpack.c.h.b16 %v232
      %v340 = vunpack.c.l.b16 %v233
      %v341 = vunpack.c.h.b16 %v233
      %v342 = vunpack.c.l.b16 %v234
      %v343 = vunpack.c.h.b16 %v234
      %v344 = vunpack.c.l.b16 %v235
      %v345 = vunpack.c.h.b16 %v235
      %v346 = vunpack.c.l.b16 %v236
      %v347 = vunpack.c.h.b16 %v236
      %v348 = vunpack.c.l.b16 %v237
      %v349 = vunpack.c.h.b16 %v237
      %v350 = vunpack.c.l.b16 %v238
      %v351 = vunpack.c.h.b16 %v238
      %v352 = vunpack.c.l.b16 %v239
      %v353 = vunpack.c.h.b16 %v239
      %v354 = vunpack.c.l.b16 %v240
      %v355 = vunpack.c.h.b16 %v240
      %v356 = vunpack.c.l.b16 %v241
      %v357 = vunpack.c.h.b16 %v241
      %v358 = vunpack.c.l.b16 %v242
      %v359 = vunpack.c.h.b16 %v242
      %v360 = vunpack.c.l.b16 %v243
      %v361 = vunpack.c.h.b16 %v243
      %v362 = vunpack.c.l.b16 %v244
      %v363 = vunpack.c.h.b16 %v244
      %v364 = vunpack.c.l.b16 %v245
      %v365 = vunpack.c.h.b16 %v245
      %v366 = vunpack.c.l.b16 %v246
      %v367 = vunpack.c.h.b16 %v246
      %v368 = vunpack.c.l.b16 %v247
      %v369 = vunpack.c.h.b16 %v247
      %v370 = vunpack.c.l.b16 %v248
      %v371 = vunpack.c.h.b16 %v248
      %v372 = vunpack.c.l.b16 %v249
      %v373 = vunpack.c.h.b16 %v249
      %v374 = vunpack.c.l.b16 %v250
      %v375 = vunpack.c.h.b16 %v250
      %v376 = vunpack.c.l.b16 %v251
      %v377 = vunpack.c.h.b16 %v251
      %v378 = vunpack.c.l.b16 %v252
      %v379 = vunpack.c.h.b16 %v252
      %v380 = vunpack.c.l.b16 %v253
      %v381 = vunpack.c.h.b16 %v253
      %v382 = vunpack.c.l.b16 %v254
      %v383 = vunpack.c.h.b16 %v254
      %v384 = vunpack.c.l.b16 %v255
      %v385 = vunpack.c.h.b16 %v255
      %v386 = vunpack.c.l.b16 %v256
      %v387 = vunpack.c.h.b16 %v256
      %v388 = vunpack.c.l.b16 %v257
      %v389 = vunpack.c.h.b16 %v257
      %v390 = vunpack.c.l.b16 %v258
      %v391 = vunpack.c.h.b16 %v258
      %v392 = vunpack.c.l.b16 %v259
      %v393 = vunpack.c.h.b16 %v259
      %v394 = vunpack.c.l.b16 %v260
      %v395 = vunpack.c.h.b16 %v260
      %v396 = vpack.c.b16 %v334, %v332
      %v397 = vpack.c.b16 %v335, %v333
      %v398 = vpack.c.b16 %v338, %v336
      %v399 = vpack.c.b16 %v339, %v337
      %v400 = vpack.c.b16 %v342, %v340
      %v401 = vpack.c.b16 %v343, %v341
      %v402 = vpack.c.b16 %v346, %v344
      %v403 = vpack.c.b16 %v347, %v345
      %v404 = vpack.c.b16 %v350, %v348
      %v405 = vpack.c.b16 %v351, %v349
      %v406 = vpack.c.b16 %v354, %v352
      %v407 = vpack.c.b16 %v355, %v353
      %v408 = vpack.c.b16 %v358, %v356
      %v409 = vpack.c.b16 %v359, %v357
      %v410 = vpack.c.b16 %v362, %v360
      %v411 = vpack.c.b16 %v363, %v361
      %v412 = vpack.c.b16 %v366, %v364
      %v413 = vpack.c.b16 %v367, %v365
      %v414 = vpack.c.b16 %v370, %v368
      %v415 = vpack.c.b16 %v371, %v369
      %v416 = vpack.c.b16 %v374, %v372
      %v417 = vpack.c.b16 %v375, %v373
      %v418 = vpack.c.b16 %v378, %v376
      %v419 = vpack.c.b16 %v379, %v377
      %v420 = vpack.c.b16 %v382, %v380
      %v421 = vpack.c.b16 %v383, %v381
      %v422 = vpack.c.b16 %v386, %v384
      %v423 = vpack.c.b16 %v387, %v385
      %v424 = vpack.c.b16 %v390, %v388
      %v425 = vpack.c.b16 %v391, %v389
      %v426 = vpack.c.b16 %v394, %v392
      %v427 = vpack.c.b16 %v395, %v393
      %v492 = vunpack.c.l.b16 %v261
      %v493 = vunpack.c.l.b16 %v262
      %v494 = vunpack.c.l.b16 %v263
      %v495 = vunpack.c.l.b16 %v264
      %v496 = vunpack.c.l.b16 %v265
      %v497 = vunpack.c.l.b16 %v266
      %v498 = vunpack.c.l.b16 %v267
      %v499 = vunpack.c.l.b16 %v268
      %v500 = vunpack.c.l.b16 %v269
      %v501 = vunpack.c.l.b16 %v270
      %v502 = vunpack.c.l.b16 %v271
      %v503 = vunpack.c.l.b16 %v272
      %v504 = vunpack.c.l.b16 %v273
      %v505 = vunpack.c.l.b16 %v274
      %v506 = vunpack.c.l.b16 %v275
      %v507 = vunpack.c.l.b16 %v276
      %v508 = vunpack.c.l.b16 %v277
      %v509 = vunpack.c.l.b16 %v278
      %v510 = vunpack.c.l.b16 %v279
      %v511 = vunpack.c.l.b16 %v280
      %v512 = vunpack.c.l.b16 %v281
      %v513 = vunpack.c.l.b16 %v282
      %v514 = vunpack.c.l.b16 %v283
      %v515 = vunpack.c.l.b16 %v284
      %v516 = vunpack.c.l.b16 %v285
      %v517 = vunpack.c.l.b16 %v286
      %v518 = vunpack.c.l.b16 %v287
      %v519 = vunpack.c.l.b16 %v288
      %v520 = vunpack.c.l.b16 %v289
      %v521 = vunpack.c.l.b16 %v290
      %v522 = vunpack.c.l.b16 %v291
      %v523 = vunpack.c.l.b16 %v292
      %v524 = vpack.c.b16 %v493, %v492
      %v525 = vpack.c.b16 %v495, %v494
      %v526 = vpack.c.b16 %v497, %v496
      %v527 = vpack.c.b16 %v499, %v498
      %v528 = vpack.c.b16 %v501, %v500
      %v529 = vpack.c.b16 %v503, %v502
      %v530 = vpack.c.b16 %v505, %v504
      %v531 = vpack.c.b16 %v507, %v506
      %v532 = vpack.c.b16 %v509, %v508
      %v533 = vpack.c.b16 %v511, %v510
      %v534 = vpack.c.b16 %v513, %v512
      %v535 = vpack.c.b16 %v515, %v514
      %v536 = vpack.c.b16 %v517, %v516
      %v537 = vpack.c.b16 %v519, %v518
      %v538 = vpack.c.b16 %v521, %v520
      %v539 = vpack.c.b16 %v523, %v522
      %556 = vmatprep.subr.bf16.mxu0 0
      %557 = vmatpush1.bf16.msra.mxu0 %v524
      %558 = vmatprep.subr.bf16.mxu0 0
      %559 = vmatpush1.bf16.msra.mxu0 %v525
      %560 = vmatprep.subr.bf16.mxu0 0
      %561 = vmatpush1.bf16.msra.mxu0 %v526
      %562 = vmatprep.subr.bf16.mxu0 0
      %563 = vmatpush1.bf16.msra.mxu0 %v527
      %564 = vmatprep.subr.bf16.mxu0 0
      %565 = vmatpush1.bf16.msra.mxu0 %v528
      %566 = vmatprep.subr.bf16.mxu0 0
      %567 = vmatpush1.bf16.msra.mxu0 %v529
      %568 = vmatprep.subr.bf16.mxu0 0
      %569 = vmatpush1.bf16.msra.mxu0 %v530
      %570 = vmatprep.subr.bf16.mxu0 0
      %571 = vmatpush1.bf16.msra.mxu0 %v531
      %572 = vmatprep.subr.bf16.mxu0 0
      %573 = vmatpush1.bf16.msra.mxu0 %v532
      %574 = vmatprep.subr.bf16.mxu0 0
      %575 = vmatpush1.bf16.msra.mxu0 %v533
      %576 = vmatprep.subr.bf16.mxu0 0
      %577 = vmatpush1.bf16.msra.mxu0 %v534
      %578 = vmatprep.subr.bf16.mxu0 0
      %579 = vmatpush1.bf16.msra.mxu0 %v535
      %580 = vmatprep.subr.bf16.mxu0 0
      %581 = vmatpush1.bf16.msra.mxu0 %v536
      %582 = vmatprep.subr.bf16.mxu0 0
      %583 = vmatpush1.bf16.msra.mxu0 %v537
      %584 = vmatprep.subr.bf16.mxu0 0
      %585 = vmatpush1.bf16.msra.mxu0 %v538
      %586 = vmatprep.subr.bf16.mxu0 0
      %587 = vmatpush1.bf16.msra.mxu0 %v539
      %588 = vmatprep.mubr.bf16.mxu0 %v397
      %589 = vmatmul.mubr.bf16.gmra.mrb[0].mxu0 %v396
      %v590 = vpop.f32.mrb[0].mxu0
      %v591 = vadd.f32 %v298, %v590
      %v592 = vpop.f32.mrb[0].mxu0
      %v593 = vpop.f32.mrb[0].mxu0
      %v594 = vadd.f32 %v298, %v593
      %v595 = vpop.f32.mrb[0].mxu0
      %596 = vmatprep.mubr.bf16.mxu0 %v399
      %597 = vmatmul.mubr.bf16.gmra.mrb[0].mxu0 %v398
      %v598 = vpop.f32.mrb[0].mxu0
      %v599 = vadd.f32 %v298, %v598
      %v600 = vpop.f32.mrb[0].mxu0
      %v601 = vpop.f32.mrb[0].mxu0
      %v602 = vadd.f32 %v298, %v601
      %v603 = vpop.f32.mrb[0].mxu0
      %604 = vmatprep.mubr.bf16.mxu0 %v401
      %605 = vmatmul.mubr.bf16.gmra.mrb[0].mxu0 %v400
      %v606 = vpop.f32.mrb[0].mxu0
      %v607 = vadd.f32 %v298, %v606
      %v608 = vpop.f32.mrb[0].mxu0
      %v609 = vpop.f32.mrb[0].mxu0
      %v610 = vadd.f32 %v298, %v609
      %v611 = vpop.f32.mrb[0].mxu0
      %612 = vmatprep.mubr.bf16.mxu0 %v403
      %613 = vmatmul.mubr.bf16.gmra.mrb[0].mxu0 %v402
      %v614 = vpop.f32.mrb[0].mxu0
      %v615 = vadd.f32 %v298, %v614
      %v616 = vpop.f32.mrb[0].mxu0
      %v617 = vpop.f32.mrb[0].mxu0
      %v618 = vadd.f32 %v298, %v617
      %v619 = vpop.f32.mrb[0].mxu0
      %620 = vmatprep.mubr.bf16.mxu0 %v405
      %621 = vmatmul.mubr.bf16.gmra.mrb[0].mxu0 %v404
      %v622 = vpop.f32.mrb[0].mxu0
      %v623 = vadd.f32 %v298, %v622
      %v624 = vpop.f32.mrb[0].mxu0
      %v625 = vpop.f32.mrb[0].mxu0
      %v626 = vadd.f32 %v298, %v625
      %v627 = vpop.f32.mrb[0].mxu0
      %628 = vmatprep.mubr.bf16.mxu0 %v407
      %629 = vmatmul.mubr.bf16.gmra.mrb[0].mxu0 %v406
      %v630 = vpop.f32.mrb[0].mxu0
      %v631 = vadd.f32 %v298, %v630
      %v632 = vpop.f32.mrb[0].mxu0
      %v633 = vpop.f32.mrb[0].mxu0
      %v634 = vadd.f32 %v298, %v633
      %v635 = vpop.f32.mrb[0].mxu0
      %636 = vmatprep.mubr.bf16.mxu0 %v409
      %637 = vmatmul.mubr.bf16.gmra.mrb[0].mxu0 %v408
      %v638 = vpop.f32.mrb[0].mxu0
      %v639 = vadd.f32 %v298, %v638
      %v640 = vpop.f32.mrb[0].mxu0
      %v641 = vpop.f32.mrb[0].mxu0
      %v642 = vadd.f32 %v298, %v641
      %v643 = vpop.f32.mrb[0].mxu0
      %644 = vmatprep.mubr.bf16.mxu0 %v411
      %645 = vmatmul.mubr.bf16.gmra.mrb[0].mxu0 %v410
      %v646 = vpop.f32.mrb[0].mxu0
      %v647 = vadd.f32 %v298, %v646
      %v648 = vpop.f32.mrb[0].mxu0
      %v649 = vpop.f32.mrb[0].mxu0
      %v650 = vadd.f32 %v298, %v649
      %v651 = vpop.f32.mrb[0].mxu0
      %652 = vmatprep.mubr.bf16.mxu0 %v413
      %653 = vmatmul.mubr.bf16.gmra.mrb[0].mxu0 %v412
      %v654 = vpop.f32.mrb[0].mxu0
      %v655 = vadd.f32 %v298, %v654
      %v656 = vpop.f32.mrb[0].mxu0
      %v657 = vpop.f32.mrb[0].mxu0
      %v658 = vadd.f32 %v298, %v657
      %v659 = vpop.f32.mrb[0].mxu0
      %660 = vmatprep.mubr.bf16.mxu0 %v415
      %661 = vmatmul.mubr.bf16.gmra.mrb[0].mxu0 %v414
      %v662 = vpop.f32.mrb[0].mxu0
      %v663 = vadd.f32 %v298, %v662
      %v664 = vpop.f32.mrb[0].mxu0
      %v665 = vpop.f32.mrb[0].mxu0
      %v666 = vadd.f32 %v298, %v665
      %v667 = vpop.f32.mrb[0].mxu0
      %668 = vmatprep.mubr.bf16.mxu0 %v417
      %669 = vmatmul.mubr.bf16.gmra.mrb[0].mxu0 %v416
      %v670 = vpop.f32.mrb[0].mxu0
      %v671 = vadd.f32 %v298, %v670
      %v672 = vpop.f32.mrb[0].mxu0
      %v673 = vpop.f32.mrb[0].mxu0
      %v674 = vadd.f32 %v298, %v673
      %v675 = vpop.f32.mrb[0].mxu0
      %676 = vmatprep.mubr.bf16.mxu0 %v419
      %677 = vmatmul.mubr.bf16.gmra.mrb[0].mxu0 %v418
      %v678 = vpop.f32.mrb[0].mxu0
      %v679 = vadd.f32 %v298, %v678
      %v680 = vpop.f32.mrb[0].mxu0
      %v681 = vpop.f32.mrb[0].mxu0
      %v682 = vadd.f32 %v298, %v681
      %v683 = vpop.f32.mrb[0].mxu0
      %684 = vmatprep.mubr.bf16.mxu0 %v421
      %685 = vmatmul.mubr.bf16.gmra.mrb[0].mxu0 %v420
      %v686 = vpop.f32.mrb[0].mxu0
      %v687 = vadd.f32 %v298, %v686
      %v688 = vpop.f32.mrb[0].mxu0
      %v689 = vpop.f32.mrb[0].mxu0
      %v690 = vadd.f32 %v298, %v689
      %v691 = vpop.f32.mrb[0].mxu0
      %692 = vmatprep.mubr.bf16.mxu0 %v423
      %693 = vmatmul.mubr.bf16.gmra.mrb[0].mxu0 %v422
      %v694 = vpop.f32.mrb[0].mxu0
      %v695 = vadd.f32 %v298, %v694
      %v696 = vpop.f32.mrb[0].mxu0
      %v697 = vpop.f32.mrb[0].mxu0
      %v698 = vadd.f32 %v298, %v697
      %v699 = vpop.f32.mrb[0].mxu0
      %700 = vmatprep.mubr.bf16.mxu0 %v425
      %701 = vmatmul.mubr.bf16.gmra.mrb[0].mxu0 %v424
      %v702 = vpop.f32.mrb[0].mxu0
      %v703 = vadd.f32 %v298, %v702
      %v704 = vpop.f32.mrb[0].mxu0
      %v705 = vpop.f32.mrb[0].mxu0
      %v706 = vadd.f32 %v298, %v705
      %v707 = vpop.f32.mrb[0].mxu0
      %708 = vmatprep.mubr.bf16.mxu0 %v427
      %709 = vmatmul.mubr.bf16.gmra.mrb[0].mxu0 %v426
      %v710 = vpop.f32.mrb[0].mxu0
      %v711 = vadd.f32 %v298, %v710
      %v712 = vpop.f32.mrb[0].mxu0
      %v713 = vpop.f32.mrb[0].mxu0
      %v714 = vadd.f32 %v298, %v713
      %v715 = vpop.f32.mrb[0].mxu0
      %716 = vdwg.mxu0
      %v717 = vtanh.pop %v591
      %v718 = vtanh.pop %v594
      %v719 = vtanh.pop %v599
      %v720 = vtanh.pop %v602
      %v721 = vtanh.pop %v607
      %v722 = vtanh.pop %v610
      %v723 = vtanh.pop %v615
      %v724 = vtanh.pop %v618
      %v725 = vtanh.pop %v623
      %v726 = vtanh.pop %v626
      %v727 = vtanh.pop %v631
      %v728 = vtanh.pop %v634
      %v729 = vtanh.pop %v639
      %v730 = vtanh.pop %v642
      %v731 = vtanh.pop %v647
      %v732 = vtanh.pop %v650
      %v733 = vtanh.pop %v655
      %v734 = vtanh.pop %v658
      %v735 = vtanh.pop %v663
      %v736 = vtanh.pop %v666
      %v737 = vtanh.pop %v671
      %v738 = vtanh.pop %v674
      %v739 = vtanh.pop %v679
      %v740 = vtanh.pop %v682
      %v741 = vtanh.pop %v687
      %v742 = vtanh.pop %v690
      %v743 = vtanh.pop %v695
      %v744 = vtanh.pop %v698
      %v745 = vtanh.pop %v703
      %v746 = vtanh.pop %v706
      %v747 = vtanh.pop %v711
      %v748 = vtanh.pop %v714
      %749 = vst [vmem:[%s226] sm:$0xff] %v717
      %750 = vst [vmem:[%s226 + $0x8] sm:$0xff] %v718
      %751 = vst [vmem:[%s226 + $0x10] sm:$0xff] %v719
      %752 = vst [vmem:[%s226 + $0x18] sm:$0xff] %v720
      %753 = vst [vmem:[%s226 + $0x20] sm:$0xff] %v721
      %754 = vst [vmem:[%s226 + $0x28] sm:$0xff] %v722
      %755 = vst [vmem:[%s226 + $0x30] sm:$0xff] %v723
      %756 = vst [vmem:[%s226 + $0x38] sm:$0xff] %v724
      %757 = vst [vmem:[%s226 + $0x40] sm:$0xff] %v725
      %758 = vst [vmem:[%s226 + $0x48] sm:$0xff] %v726
      %759 = vst [vmem:[%s226 + $0x50] sm:$0xff] %v727
      %760 = vst [vmem:[%s226 + $0x58] sm:$0xff] %v728
      %761 = vst [vmem:[%s226 + $0x60] sm:$0xff] %v729
      %762 = vst [vmem:[%s226 + $0x68] sm:$0xff] %v730
      %763 = vst [vmem:[%s226 + $0x70] sm:$0xff] %v731
      %764 = vst [vmem:[%s226 + $0x78] sm:$0xff] %v732
      %765 = vst [vmem:[%s226 + $0x80] sm:$0xff] %v733
      %766 = vst [vmem:[%s226 + $0x88] sm:$0xff] %v734
      %767 = vst [vmem:[%s226 + $0x90] sm:$0xff] %v735
      %768 = vst [vmem:[%s226 + $0x98] sm:$0xff] %v736
      %769 = vst [vmem:[%s226 + $0xa0] sm:$0xff] %v737
      %770 = vst [vmem:[%s226 + $0xa8] sm:$0xff] %v738
      %771 = vst [vmem:[%s226 + $0xb0] sm:$0xff] %v739
      %772 = vst [vmem:[%s226 + $0xb8] sm:$0xff] %v740
      %773 = vst [vmem:[%s226 + $0xc0] sm:$0xff] %v741
      %774 = vst [vmem:[%s226 + $0xc8] sm:$0xff] %v742
      %775 = vst [vmem:[%s226 + $0xd0] sm:$0xff] %v743
      %776 = vst [vmem:[%s226 + $0xd8] sm:$0xff] %v744
      %777 = vst [vmem:[%s226 + $0xe0] sm:$0xff] %v745
      %778 = vst [vmem:[%s226 + $0xe8] sm:$0xff] %v746
      %779 = vst [vmem:[%s226 + $0xf0] sm:$0xff] %v747
      %780 = vst [vmem:[%s226 + $0xf8] sm:$0xff] %v748
      %s781 = smul.u32 32, %s18
      %p782 = scmp.lt.s32.totalorder %s781, 255
      %s783 = scalar_select %p782, %s781, 255
      %p784 = scmp.lt.s32.totalorder %s19, 0
      %s785 = scalar_select %p784, %s19, 0
      %s786 = sadd.s32 %s785, %s783
      %s787 = smul.addr %s786, 8
      %s788 = scalar_lea.vmem %s3, %s787
      // Predicated region
      $region33: #{a_call__.56} parent=31 // pred_check
        %p789 = pneg %p124
      $region34: #{a_call__.56} parent=31 // pred_check_branch
        %791 = sbr.rel (%p789) target = $region36
      $region35: #{a_call__.56} parent=31 // pred_region
        %s792 = smul.u32 32, %s18
      $region36: #{a_call__.56} parent=31 // pred_fallthru
        _
    $region32: #{a_call__.56} parent=5 // pred_fallthru
      _
    %p793 = scmp.le.s32.totalorder 2, %s9
    // Predicated region
    $region37: #{a_call__.56} parent=5 // pred_check
      %p794 = pneg %p793
    $region38: #{a_call__.56} parent=5 // pred_check_branch
      %796 = sbr.rel (%p794) target = $region40
    $region39: #{a_call__.56} parent=5 // pred_region
      %s797 = ssub.s32 %s9, 2
      // Predicated region
      $region41: #{a_call__.56} parent=39 // pred_check
        %p798 = pneg %p130
      $region42: #{a_call__.56} parent=39 // pred_check_branch
        %800 = sbr.rel (%p798) target = $region44
      $region43: #{a_call__.56} parent=39 // pred_region
        %s801 = smul.u32 32, %s20
        %p802 = scmp.lt.s32.totalorder %s801, 255
        %s803 = scalar_select %p802, %s801, 255
        %p804 = scmp.lt.s32.totalorder %s21, 0
        %s805 = scalar_select %p804, %s21, 0
        %s806 = sadd.s32 %s805, %s803
        %s807 = smul.addr %s806, 8
        %s808 = scalar_lea.vmem %s3, %s807
      $region44: #{a_call__.56} parent=39 // pred_fallthru
        _
    $region40: #{a_call__.56} parent=5 // pred_fallthru
      _
  $region6: #{a_call__.56} parent=0 // loop_footer
    %s13 = sadd.s32 1, %s9
  $region7: #{a_call__.56} parent=0 // loop_footer_branch
    %8 = sbr.rel target = $region3
  $region8: #{a_call__.56} parent=0 // loop_exit
    _

</llo_original>
